<compile_context>
chip_gen: v7x
topology: tpu7x:2x2x1
jax: 0.10.0
libtpu: 0.0.40
codegen_flags: <defaults>
</compile_context>

<pallas_src>
import functools

import jax
import jax.numpy as jnp
from jax.experimental import pallas as pl
from jax.experimental.pallas import tpu as pltpu


def silu(a):
    """Elementwise SiLU, traceable inside the Pallas kernel."""
    return a * (1.0 / (1.0 + jnp.exp(-a)))


def _residual_block_kernel(x_ref, w1_ref, b1_ref, w2_ref, b2_ref, o_ref,
                           xpad_ref, hpad_ref, *, C, H, W, activation):
    """One batch element: act(bn2(conv2(act(bn1(conv1(x))))) + x), BN folded.

    x_ref:   (1, C, H, W) VMEM input block (this batch element)
    w*_ref:  (C*C*9,) SMEM, BN-folded conv weights, index ((co*C+ci)*3+ky)*3+kx
    b*_ref:  (C,)     SMEM, BN-folded conv biases
    o_ref:   (1, C, H, W) VMEM output block
    xpad_ref, hpad_ref: (C, H+2, W+2) f32 VMEM scratch (zero-padded planes)
    """
    # Zero-fill the padded scratch planes and copy the input into their
    # interior => implicit zero padding for both 3x3 convs, done entirely in
    # VMEM (no HBM-side padding passes).
    xpad_ref[...] = jnp.zeros_like(xpad_ref)
    hpad_ref[...] = jnp.zeros_like(hpad_ref)
    x = x_ref[0].astype(jnp.float32)                       # (C, H, W)
    xpad_ref[:, 1:H + 1, 1:W + 1] = x

    def conv3x3_channel(src_ref, w_ref, co):
        # out[h, w] = sum_{ci, ky, kx} w[co, ci, ky, kx] * src[ci, h+ky, w+kx]
        # (cross-correlation, matching nn.Conv2d). Scalar weights from SMEM
        # broadcast against shifted (H, W) planes -> pure VPU work.
        acc = jnp.zeros((H, W), jnp.float32)
        for ci in range(C):
            for ky in range(3):
                for kx in range(3):
                    wv = w_ref[((co * C + ci) * 3 + ky) * 3 + kx]
                    acc = acc + wv * src_ref[ci, ky:ky + H, kx:kx + W]
        return acc

    # conv1 + folded bn1 + activation -> interior of hpad (padded for conv2).
    for co in range(C):
        h1 = activation(conv3x3_channel(xpad_ref, w1_ref, co) + b1_ref[co])
        hpad_ref[co, 1:H + 1, 1:W + 1] = h1

    # conv2 + folded bn2 + residual add + activation -> output block.
    for co in range(C):
        h2 = conv3x3_channel(hpad_ref, w2_ref, co) + b2_ref[co]
        o_ref[0, co, :, :] = activation(h2 + x[co]).astype(o_ref.dtype)


def residual_block_forward(x, w1_flat, b1, w2_flat, b2, *, activation):
    """Single fused pallas_call over the whole residual block."""
    N, C, H, W = x.shape
    kernel = functools.partial(_residual_block_kernel,
                               C=C, H=H, W=W, activation=activation)
    smem_spec = pl.BlockSpec(memory_space=pltpu.MemorySpace.SMEM)
    return pl.pallas_call(
        kernel,
        out_shape=jax.ShapeDtypeStruct((N, C, H, W), x.dtype),
        grid_spec=pltpu.PrefetchScalarGridSpec(
            num_scalar_prefetch=0,
            grid=(N,),                                   # >=2 parallel steps
            in_specs=[
                pl.BlockSpec((1, C, H, W), lambda n: (n, 0, 0, 0)),
                smem_spec,   # w1 (folded), flattened
                smem_spec,   # b1 (folded)
                smem_spec,   # w2 (folded), flattened
                smem_spec,   # b2 (folded)
            ],
            out_specs=pl.BlockSpec((1, C, H, W), lambda n: (n, 0, 0, 0)),
            scratch_shapes=[
                pltpu.VMEM((C, H + 2, W + 2), jnp.float32),   # padded x
                pltpu.VMEM((C, H + 2, W + 2), jnp.float32),   # padded act(bn1(conv1))
            ],
        ),
        compiler_params=pltpu.CompilerParams(
            dimension_semantics=("parallel",),
        ),
    )(x, w1_flat, b1, w2_flat, b2)


class ResidualBlock:
    """Pallas-backed analogue of the PyTorch ResidualBlock (inference mode)."""

    def __init__(self, num_channels, activation, use_padding=True, *, key,
                 eps=1e-5):
        if not use_padding:
            # TODO(synk): use_padding=False (valid conv + residual[:, :, 2:-2, 2:-2]) not implemented.
            raise NotImplementedError("use_padding=False is not implemented")
        self.num_channels = num_channels
        self.activation = activation
        self.eps = eps

        C = num_channels
        keys = jax.random.split(key, 12)
        bound = (1.0 / (C * 9)) ** 0.5   # PyTorch Conv2d default init bound

        def conv_init(kw, kb):
            w = jax.random.uniform(kw, (C, C, 3, 3), jnp.float32, -bound, bound)
            b = jax.random.uniform(kb, (C,), jnp.float32, -bound, bound)
            return w, b

        self.w1, self.cb1 = conv_init(keys[0], keys[1])
        self.w2, self.cb2 = conv_init(keys[2], keys[3])
        # Non-trivial BatchNorm parameters / running statistics (inference).
        self.g1 = 1.0 + 0.1 * jax.random.normal(keys[4], (C,), jnp.float32)
        self.beta1 = 0.1 * jax.random.normal(keys[5], (C,), jnp.float32)
        self.m1 = 0.1 * jax.random.normal(keys[6], (C,), jnp.float32)
        self.v1 = 1.0 + 0.5 * jax.random.uniform(keys[7], (C,), jnp.float32)
        self.g2 = 1.0 + 0.1 * jax.random.normal(keys[8], (C,), jnp.float32)
        self.beta2 = 0.1 * jax.random.normal(keys[9], (C,), jnp.float32)
        self.m2 = 0.1 * jax.random.normal(keys[10], (C,), jnp.float32)
        self.v2 = 1.0 + 0.5 * jax.random.uniform(keys[11], (C,), jnp.float32)

        # Fold BN (inference mode) into the convs once, parameter-side only.
        self.w1f, self.b1f = self._fold(self.w1, self.cb1, self.g1, self.beta1,
                                        self.m1, self.v1)
        self.w2f, self.b2f = self._fold(self.w2, self.cb2, self.g2, self.beta2,
                                        self.m2, self.v2)

    def _fold(self, w, b, gamma, beta, mean, var):
        scale = gamma / jnp.sqrt(var + self.eps)                  # (C,)
        w_f = (w * scale[:, None, None, None]).reshape(-1)        # (C*C*9,)
        b_f = (b - mean) * scale + beta                           # (C,)
        return w_f, b_f

    def __call__(self, x):
        return residual_block_forward(x, self.w1f, self.b1f, self.w2f, self.b2f,
                                      activation=self.activation)


def reference_forward(block, x):
    """Pure-JAX reference: unfolded conv -> BN -> act, NCHW."""
    eps = block.eps

    def conv(h, w, b):
        y = jax.lax.conv_general_dilated(
            h, w, window_strides=(1, 1), padding=((1, 1), (1, 1)),
            dimension_numbers=("NCHW", "OIHW", "NCHW"))
        return y + b[None, :, None, None]

    def bn(h, g, beta, m, v):
        inv = (g / jnp.sqrt(v + eps))[None, :, None, None]
        return (h - m[None, :, None, None]) * inv + beta[None, :, None, None]

    act = lambda a: a * jax.nn.sigmoid(a)
    h = act(bn(conv(x, block.w1, block.cb1), block.g1, block.beta1, block.m1, block.v1))
    h = bn(conv(h, block.w2, block.cb2), block.g2, block.beta2, block.m2, block.v2)
    return act(h + x)


if __name__ == "__main__":
    key = jax.random.PRNGKey(0)
    key_params, key_x = jax.random.split(key)

    N, C, H, W = 2, 4, 16, 16
    x = jax.random.normal(key_x, (N, C, H, W), dtype=jnp.float32)

    block = ResidualBlock(C, activation=silu, use_padding=True, key=key_params)
    out = block(x)
    out = jax.block_until_ready(out)

    ref = reference_forward(block, x)
    assert out.shape == x.shape and out.dtype == x.dtype
    max_err = float(jnp.max(jnp.abs(out - ref)))
    assert max_err < 1e-4, f"max abs error {max_err}"
    print("KERNEL_OK")
</pallas_src>

<mosaic_0001>
module attributes {stable_mosaic.version = 11 : i64} {
  func.func @_residual_block_kernel(%arg0: i32, %arg1: memref<1x4x16x16xf32, #tpu.memory_space<vmem>>, %arg2: memref<144xf32, #tpu.memory_space<smem>>, %arg3: memref<4xf32, #tpu.memory_space<smem>>, %arg4: memref<144xf32, #tpu.memory_space<smem>>, %arg5: memref<4xf32, #tpu.memory_space<smem>>, %arg6: memref<1x4x16x16xf32, #tpu.memory_space<vmem>>, %arg7: memref<4x18x18xf32, #tpu.memory_space<vmem>>, %arg8: memref<4x18x18xf32, #tpu.memory_space<vmem>>) attributes {dimension_semantics = [#tpu.dimension_semantics<parallel>], iteration_bounds = array<i64: 2>, scalar_prefetch = 0 : i64, scratch_operands = 2 : i64, tpu.core_type = #tpu.core_type<tc>, window_params = [{transform_indices = @transform_0, window_bounds = array<i64: 1, 4, 16, 16>}, {transform_indices = @transform_1, window_bounds = array<i64: 144>}, {transform_indices = @transform_2, window_bounds = array<i64: 4>}, {transform_indices = @transform_3, window_bounds = array<i64: 144>}, {transform_indices = @transform_4, window_bounds = array<i64: 4>}, {transform_indices = @transform_5, window_bounds = array<i64: 1, 4, 16, 16>}]} {
    %cst = arith.constant 0.000000e+00 : f32
    %0 = vector.broadcast %cst : f32 to vector<4x18x18xf32>
    %c0 = arith.constant 0 : index
    %c0_0 = arith.constant 0 : index
    %c0_1 = arith.constant 0 : index
    %1 = vector.load %arg7[%c0, %c0_0, %c0_1] : memref<4x18x18xf32, #tpu.memory_space<vmem>>, vector<4x18x18xf32>
    tpu.vector_store %arg7[%c0, %c0_0, %c0_1], %0 {strides = array<i32>} : memref<4x18x18xf32, #tpu.memory_space<vmem>>, vector<4x18x18xf32>,
    %cst_2 = arith.constant 0.000000e+00 : f32
    %2 = vector.broadcast %cst_2 : f32 to vector<4x18x18xf32>
    %c0_3 = arith.constant 0 : index
    %c0_4 = arith.constant 0 : index
    %c0_5 = arith.constant 0 : index
    %3 = vector.load %arg8[%c0_3, %c0_4, %c0_5] : memref<4x18x18xf32, #tpu.memory_space<vmem>>, vector<4x18x18xf32>
    tpu.vector_store %arg8[%c0_3, %c0_4, %c0_5], %2 {strides = array<i32>} : memref<4x18x18xf32, #tpu.memory_space<vmem>>, vector<4x18x18xf32>,
    %c0_6 = arith.constant 0 : index
    %c0_7 = arith.constant 0 : index
    %c0_8 = arith.constant 0 : index
    %c0_9 = arith.constant 0 : index
    %4 = vector.load %arg1[%c0_6, %c0_7, %c0_8, %c0_9] : memref<1x4x16x16xf32, #tpu.memory_space<vmem>>, vector<1x4x16x16xf32>
    %5 = vector.shape_cast %4 : vector<1x4x16x16xf32> to vector<4x16x16xf32>
    %c0_10 = arith.constant 0 : index
    %c1 = arith.constant 1 : index
    %c1_11 = arith.constant 1 : index
    %6 = vector.load %arg7[%c0_10, %c1, %c1_11] : memref<4x18x18xf32, #tpu.memory_space<vmem>>, vector<4x16x16xf32>
    tpu.vector_store %arg7[%c0_10, %c1, %c1_11], %5 {strides = array<i32>} : memref<4x18x18xf32, #tpu.memory_space<vmem>>, vector<4x16x16xf32>,
    %cst_12 = arith.constant 0.000000e+00 : f32
    %7 = vector.broadcast %cst_12 : f32 to vector<16x16xf32>
    %c0_13 = arith.constant 0 : index
    %8 = memref.load %arg2[%c0_13] : memref<144xf32, #tpu.memory_space<smem>>
    %c0_14 = arith.constant 0 : index
    %c0_15 = arith.constant 0 : index
    %c0_16 = arith.constant 0 : index
    %9 = vector.load %arg7[%c0_14, %c0_15, %c0_16] : memref<4x18x18xf32, #tpu.memory_space<vmem>>, vector<1x16x16xf32>
    %10 = vector.shape_cast %9 : vector<1x16x16xf32> to vector<16x16xf32>
    %11 = vector.broadcast %8 : f32 to vector<16x16xf32>
    %12 = arith.mulf %11, %10 : vector<16x16xf32>
    %13 = arith.addf %7, %12 : vector<16x16xf32>
    %c1_17 = arith.constant 1 : index
    %14 = memref.load %arg2[%c1_17] : memref<144xf32, #tpu.memory_space<smem>>
    %c0_18 = arith.constant 0 : index
    %c0_19 = arith.constant 0 : index
    %c1_20 = arith.constant 1 : index
    %15 = vector.load %arg7[%c0_18, %c0_19, %c1_20] : memref<4x18x18xf32, #tpu.memory_space<vmem>>, vector<1x16x16xf32>
    %16 = vector.shape_cast %15 : vector<1x16x16xf32> to vector<16x16xf32>
    %17 = vector.broadcast %14 : f32 to vector<16x16xf32>
    %18 = arith.mulf %17, %16 : vector<16x16xf32>
    %19 = arith.addf %13, %18 : vector<16x16xf32>
    %c2 = arith.constant 2 : index
    %20 = memref.load %arg2[%c2] : memref<144xf32, #tpu.memory_space<smem>>
    %c0_21 = arith.constant 0 : index
    %c0_22 = arith.constant 0 : index
    %c2_23 = arith.constant 2 : index
    %21 = vector.load %arg7[%c0_21, %c0_22, %c2_23] : memref<4x18x18xf32, #tpu.memory_space<vmem>>, vector<1x16x16xf32>
    %22 = vector.shape_cast %21 : vector<1x16x16xf32> to vector<16x16xf32>
    %23 = vector.broadcast %20 : f32 to vector<16x16xf32>
    %24 = arith.mulf %23, %22 : vector<16x16xf32>
    %25 = arith.addf %19, %24 : vector<16x16xf32>
    %c3 = arith.constant 3 : index
    %26 = memref.load %arg2[%c3] : memref<144xf32, #tpu.memory_space<smem>>
    %c0_24 = arith.constant 0 : index
    %c1_25 = arith.constant 1 : index
    %c0_26 = arith.constant 0 : index
    %27 = vector.load %arg7[%c0_24, %c1_25, %c0_26] : memref<4x18x18xf32, #tpu.memory_space<vmem>>, vector<1x16x16xf32>
    %28 = vector.shape_cast %27 : vector<1x16x16xf32> to vector<16x16xf32>
    %29 = vector.broadcast %26 : f32 to vector<16x16xf32>
    %30 = arith.mulf %29, %28 : vector<16x16xf32>
    %31 = arith.addf %25, %30 : vector<16x16xf32>
    %c4 = arith.constant 4 : index
    %32 = memref.load %arg2[%c4] : memref<144xf32, #tpu.memory_space<smem>>
    %c0_27 = arith.constant 0 : index
    %c1_28 = arith.constant 1 : index
    %c1_29 = arith.constant 1 : index
    %33 = vector.load %arg7[%c0_27, %c1_28, %c1_29] : memref<4x18x18xf32, #tpu.memory_space<vmem>>, vector<1x16x16xf32>
    %34 = vector.shape_cast %33 : vector<1x16x16xf32> to vector<16x16xf32>
    %35 = vector.broadcast %32 : f32 to vector<16x16xf32>
    %36 = arith.mulf %35, %34 : vector<16x16xf32>
    %37 = arith.addf %31, %36 : vector<16x16xf32>
    %c5 = arith.constant 5 : index
    %38 = memref.load %arg2[%c5] : memref<144xf32, #tpu.memory_space<smem>>
    %c0_30 = arith.constant 0 : index
    %c1_31 = arith.constant 1 : index
    %c2_32 = arith.constant 2 : index
    %39 = vector.load %arg7[%c0_30, %c1_31, %c2_32] : memref<4x18x18xf32, #tpu.memory_space<vmem>>, vector<1x16x16xf32>
    %40 = vector.shape_cast %39 : vector<1x16x16xf32> to vector<16x16xf32>
    %41 = vector.broadcast %38 : f32 to vector<16x16xf32>
    %42 = arith.mulf %41, %40 : vector<16x16xf32>
    %43 = arith.addf %37, %42 : vector<16x16xf32>
    %c6 = arith.constant 6 : index
    %44 = memref.load %arg2[%c6] : memref<144xf32, #tpu.memory_space<smem>>
    %c0_33 = arith.constant 0 : index
    %c2_34 = arith.constant 2 : index
    %c0_35 = arith.constant 0 : index
    %45 = vector.load %arg7[%c0_33, %c2_34, %c0_35] : memref<4x18x18xf32, #tpu.memory_space<vmem>>, vector<1x16x16xf32>
    %46 = vector.shape_cast %45 : vector<1x16x16xf32> to vector<16x16xf32>
    %47 = vector.broadcast %44 : f32 to vector<16x16xf32>
    %48 = arith.mulf %47, %46 : vector<16x16xf32>
    %49 = arith.addf %43, %48 : vector<16x16xf32>
    %c7 = arith.constant 7 : index
    %50 = memref.load %arg2[%c7] : memref<144xf32, #tpu.memory_space<smem>>
    %c0_36 = arith.constant 0 : index
    %c2_37 = arith.constant 2 : index
    %c1_38 = arith.constant 1 : index
    %51 = vector.load %arg7[%c0_36, %c2_37, %c1_38] : memref<4x18x18xf32, #tpu.memory_space<vmem>>, vector<1x16x16xf32>
    %52 = vector.shape_cast %51 : vector<1x16x16xf32> to vector<16x16xf32>
    %53 = vector.broadcast %50 : f32 to vector<16x16xf32>
    %54 = arith.mulf %53, %52 : vector<16x16xf32>
    %55 = arith.addf %49, %54 : vector<16x16xf32>
    %c8 = arith.constant 8 : index
    %56 = memref.load %arg2[%c8] : memref<144xf32, #tpu.memory_space<smem>>
    %c0_39 = arith.constant 0 : index
    %c2_40 = arith.constant 2 : index
    %c2_41 = arith.constant 2 : index
    %57 = vector.load %arg7[%c0_39, %c2_40, %c2_41] : memref<4x18x18xf32, #tpu.memory_space<vmem>>, vector<1x16x16xf32>
    %58 = vector.shape_cast %57 : vector<1x16x16xf32> to vector<16x16xf32>
    %59 = vector.broadcast %56 : f32 to vector<16x16xf32>
    %60 = arith.mulf %59, %58 : vector<16x16xf32>
    %61 = arith.addf %55, %60 : vector<16x16xf32>
    %c9 = arith.constant 9 : index
    %62 = memref.load %arg2[%c9] : memref<144xf32, #tpu.memory_space<smem>>
    %c1_42 = arith.constant 1 : index
    %c0_43 = arith.constant 0 : index
    %c0_44 = arith.constant 0 : index
    %63 = vector.load %arg7[%c1_42, %c0_43, %c0_44] : memref<4x18x18xf32, #tpu.memory_space<vmem>>, vector<1x16x16xf32>
    %64 = vector.shape_cast %63 : vector<1x16x16xf32> to vector<16x16xf32>
    %65 = vector.broadcast %62 : f32 to vector<16x16xf32>
    %66 = arith.mulf %65, %64 : vector<16x16xf32>
    %67 = arith.addf %61, %66 : vector<16x16xf32>
    %c10 = arith.constant 10 : index
    %68 = memref.load %arg2[%c10] : memref<144xf32, #tpu.memory_space<smem>>
    %c1_45 = arith.constant 1 : index
    %c0_46 = arith.constant 0 : index
    %c1_47 = arith.constant 1 : index
    %69 = vector.load %arg7[%c1_45, %c0_46, %c1_47] : memref<4x18x18xf32, #tpu.memory_space<vmem>>, vector<1x16x16xf32>
    %70 = vector.shape_cast %69 : vector<1x16x16xf32> to vector<16x16xf32>
    %71 = vector.broadcast %68 : f32 to vector<16x16xf32>
    %72 = arith.mulf %71, %70 : vector<16x16xf32>
    %73 = arith.addf %67, %72 : vector<16x16xf32>
    %c11 = arith.constant 11 : index
    %74 = memref.load %arg2[%c11] : memref<144xf32, #tpu.memory_space<smem>>
    %c1_48 = arith.constant 1 : index
    %c0_49 = arith.constant 0 : index
    %c2_50 = arith.constant 2 : index
    %75 = vector.load %arg7[%c1_48, %c0_49, %c2_50] : memref<4x18x18xf32, #tpu.memory_space<vmem>>, vector<1x16x16xf32>
    %76 = vector.shape_cast %75 : vector<1x16x16xf32> to vector<16x16xf32>
    %77 = vector.broadcast %74 : f32 to vector<16x16xf32>
    %78 = arith.mulf %77, %76 : vector<16x16xf32>
    %79 = arith.addf %73, %78 : vector<16x16xf32>
    %c12 = arith.constant 12 : index
    %80 = memref.load %arg2[%c12] : memref<144xf32, #tpu.memory_space<smem>>
    %c1_51 = arith.constant 1 : index
    %c1_52 = arith.constant 1 : index
    %c0_53 = arith.constant 0 : index
    %81 = vector.load %arg7[%c1_51, %c1_52, %c0_53] : memref<4x18x18xf32, #tpu.memory_space<vmem>>, vector<1x16x16xf32>
    %82 = vector.shape_cast %81 : vector<1x16x16xf32> to vector<16x16xf32>
    %83 = vector.broadcast %80 : f32 to vector<16x16xf32>
    %84 = arith.mulf %83, %82 : vector<16x16xf32>
    %85 = arith.addf %79, %84 : vector<16x16xf32>
    %c13 = arith.constant 13 : index
    %86 = memref.load %arg2[%c13] : memref<144xf32, #tpu.memory_space<smem>>
    %c1_54 = arith.constant 1 : index
    %c1_55 = arith.constant 1 : index
    %c1_56 = arith.constant 1 : index
    %87 = vector.load %arg7[%c1_54, %c1_55, %c1_56] : memref<4x18x18xf32, #tpu.memory_space<vmem>>, vector<1x16x16xf32>
    %88 = vector.shape_cast %87 : vector<1x16x16xf32> to vector<16x16xf32>
    %89 = vector.broadcast %86 : f32 to vector<16x16xf32>
    %90 = arith.mulf %89, %88 : vector<16x16xf32>
    %91 = arith.addf %85, %90 : vector<16x16xf32>
    %c14 = arith.constant 14 : index
    %92 = memref.load %arg2[%c14] : memref<144xf32, #tpu.memory_space<smem>>
    %c1_57 = arith.constant 1 : index
    %c1_58 = arith.constant 1 : index
    %c2_59 = arith.constant 2 : index
    %93 = vector.load %arg7[%c1_57, %c1_58, %c2_59] : memref<4x18x18xf32, #tpu.memory_space<vmem>>, vector<1x16x16xf32>
    %94 = vector.shape_cast %93 : vector<1x16x16xf32> to vector<16x16xf32>
    %95 = vector.broadcast %92 : f32 to vector<16x16xf32>
    %96 = arith.mulf %95, %94 : vector<16x16xf32>
    %97 = arith.addf %91, %96 : vector<16x16xf32>
    %c15 = arith.constant 15 : index
    %98 = memref.load %arg2[%c15] : memref<144xf32, #tpu.memory_space<smem>>
    %c1_60 = arith.constant 1 : index
    %c2_61 = arith.constant 2 : index
    %c0_62 = arith.constant 0 : index
    %99 = vector.load %arg7[%c1_60, %c2_61, %c0_62] : memref<4x18x18xf32, #tpu.memory_space<vmem>>, vector<1x16x16xf32>
    %100 = vector.shape_cast %99 : vector<1x16x16xf32> to vector<16x16xf32>
    %101 = vector.broadcast %98 : f32 to vector<16x16xf32>
    %102 = arith.mulf %101, %100 : vector<16x16xf32>
    %103 = arith.addf %97, %102 : vector<16x16xf32>
    %c16 = arith.constant 16 : index
    %104 = memref.load %arg2[%c16] : memref<144xf32, #tpu.memory_space<smem>>
    %c1_63 = arith.constant 1 : index
    %c2_64 = arith.constant 2 : index
    %c1_65 = arith.constant 1 : index
    %105 = vector.load %arg7[%c1_63, %c2_64, %c1_65] : memref<4x18x18xf32, #tpu.memory_space<vmem>>, vector<1x16x16xf32>
    %106 = vector.shape_cast %105 : vector<1x16x16xf32> to vector<16x16xf32>
    %107 = vector.broadcast %104 : f32 to vector<16x16xf32>
    %108 = arith.mulf %107, %106 : vector<16x16xf32>
    %109 = arith.addf %103, %108 : vector<16x16xf32>
    %c17 = arith.constant 17 : index
    %110 = memref.load %arg2[%c17] : memref<144xf32, #tpu.memory_space<smem>>
    %c1_66 = arith.constant 1 : index
    %c2_67 = arith.constant 2 : index
    %c2_68 = arith.constant 2 : index
    %111 = vector.load %arg7[%c1_66, %c2_67, %c2_68] : memref<4x18x18xf32, #tpu.memory_space<vmem>>, vector<1x16x16xf32>
    %112 = vector.shape_cast %111 : vector<1x16x16xf32> to vector<16x16xf32>
    %113 = vector.broadcast %110 : f32 to vector<16x16xf32>
    %114 = arith.mulf %113, %112 : vector<16x16xf32>
    %115 = arith.addf %109, %114 : vector<16x16xf32>
    %c18 = arith.constant 18 : index
    %116 = memref.load %arg2[%c18] : memref<144xf32, #tpu.memory_space<smem>>
    %c2_69 = arith.constant 2 : index
    %c0_70 = arith.constant 0 : index
    %c0_71 = arith.constant 0 : index
    %117 = vector.load %arg7[%c2_69, %c0_70, %c0_71] : memref<4x18x18xf32, #tpu.memory_space<vmem>>, vector<1x16x16xf32>
    %118 = vector.shape_cast %117 : vector<1x16x16xf32> to vector<16x16xf32>
    %119 = vector.broadcast %116 : f32 to vector<16x16xf32>
    %120 = arith.mulf %119, %118 : vector<16x16xf32>
    %121 = arith.addf %115, %120 : vector<16x16xf32>
    %c19 = arith.constant 19 : index
    %122 = memref.load %arg2[%c19] : memref<144xf32, #tpu.memory_space<smem>>
    %c2_72 = arith.constant 2 : index
    %c0_73 = arith.constant 0 : index
    %c1_74 = arith.constant 1 : index
    %123 = vector.load %arg7[%c2_72, %c0_73, %c1_74] : memref<4x18x18xf32, #tpu.memory_space<vmem>>, vector<1x16x16xf32>
    %124 = vector.shape_cast %123 : vector<1x16x16xf32> to vector<16x16xf32>
    %125 = vector.broadcast %122 : f32 to vector<16x16xf32>
    %126 = arith.mulf %125, %124 : vector<16x16xf32>
    %127 = arith.addf %121, %126 : vector<16x16xf32>
    %c20 = arith.constant 20 : index
    %128 = memref.load %arg2[%c20] : memref<144xf32, #tpu.memory_space<smem>>
    %c2_75 = arith.constant 2 : index
    %c0_76 = arith.constant 0 : index
    %c2_77 = arith.constant 2 : index
    %129 = vector.load %arg7[%c2_75, %c0_76, %c2_77] : memref<4x18x18xf32, #tpu.memory_space<vmem>>, vector<1x16x16xf32>
    %130 = vector.shape_cast %129 : vector<1x16x16xf32> to vector<16x16xf32>
    %131 = vector.broadcast %128 : f32 to vector<16x16xf32>
    %132 = arith.mulf %131, %130 : vector<16x16xf32>
    %133 = arith.addf %127, %132 : vector<16x16xf32>
    %c21 = arith.constant 21 : index
    %134 = memref.load %arg2[%c21] : memref<144xf32, #tpu.memory_space<smem>>
    %c2_78 = arith.constant 2 : index
    %c1_79 = arith.constant 1 : index
    %c0_80 = arith.constant 0 : index
    %135 = vector.load %arg7[%c2_78, %c1_79, %c0_80] : memref<4x18x18xf32, #tpu.memory_space<vmem>>, vector<1x16x16xf32>
    %136 = vector.shape_cast %135 : vector<1x16x16xf32> to vector<16x16xf32>
    %137 = vector.broadcast %134 : f32 to vector<16x16xf32>
    %138 = arith.mulf %137, %136 : vector<16x16xf32>
    %139 = arith.addf %133, %138 : vector<16x16xf32>
    %c22 = arith.constant 22 : index
    %140 = memref.load %arg2[%c22] : memref<144xf32, #tpu.memory_space<smem>>
    %c2_81 = arith.constant 2 : index
    %c1_82 = arith.constant 1 : index
    %c1_83 = arith.constant 1 : index
    %141 = vector.load %arg7[%c2_81, %c1_82, %c1_83] : memref<4x18x18xf32, #tpu.memory_space<vmem>>, vector<1x16x16xf32>
    %142 = vector.shape_cast %141 : vector<1x16x16xf32> to vector<16x16xf32>
    %143 = vector.broadcast %140 : f32 to vector<16x16xf32>
    %144 = arith.mulf %143, %142 : vector<16x16xf32>
    %145 = arith.addf %139, %144 : vector<16x16xf32>
    %c23 = arith.constant 23 : index
    %146 = memref.load %arg2[%c23] : memref<144xf32, #tpu.memory_space<smem>>
    %c2_84 = arith.constant 2 : index
    %c1_85 = arith.constant 1 : index
    %c2_86 = arith.constant 2 : index
    %147 = vector.load %arg7[%c2_84, %c1_85, %c2_86] : memref<4x18x18xf32, #tpu.memory_space<vmem>>, vector<1x16x16xf32>
    %148 = vector.shape_cast %147 : vector<1x16x16xf32> to vector<16x16xf32>
    %149 = vector.broadcast %146 : f32 to vector<16x16xf32>
    %150 = arith.mulf %149, %148 : vector<16x16xf32>
    %151 = arith.addf %145, %150 : vector<16x16xf32>
    %c24 = arith.constant 24 : index
    %152 = memref.load %arg2[%c24] : memref<144xf32, #tpu.memory_space<smem>>
    %c2_87 = arith.constant 2 : index
    %c2_88 = arith.constant 2 : index
    %c0_89 = arith.constant 0 : index
    %153 = vector.load %arg7[%c2_87, %c2_88, %c0_89] : memref<4x18x18xf32, #tpu.memory_space<vmem>>, vector<1x16x16xf32>
    %154 = vector.shape_cast %153 : vector<1x16x16xf32> to vector<16x16xf32>
    %155 = vector.broadcast %152 : f32 to vector<16x16xf32>
    %156 = arith.mulf %155, %154 : vector<16x16xf32>
    %157 = arith.addf %151, %156 : vector<16x16xf32>
    %c25 = arith.constant 25 : index
    %158 = memref.load %arg2[%c25] : memref<144xf32, #tpu.memory_space<smem>>
    %c2_90 = arith.constant 2 : index
    %c2_91 = arith.constant 2 : index
    %c1_92 = arith.constant 1 : index
    %159 = vector.load %arg7[%c2_90, %c2_91, %c1_92] : memref<4x18x18xf32, #tpu.memory_space<vmem>>, vector<1x16x16xf32>
    %160 = vector.shape_cast %159 : vector<1x16x16xf32> to vector<16x16xf32>
    %161 = vector.broadcast %158 : f32 to vector<16x16xf32>
    %162 = arith.mulf %161, %160 : vector<16x16xf32>
    %163 = arith.addf %157, %162 : vector<16x16xf32>
    %c26 = arith.constant 26 : index
    %164 = memref.load %arg2[%c26] : memref<144xf32, #tpu.memory_space<smem>>
    %c2_93 = arith.constant 2 : index
    %c2_94 = arith.constant 2 : index
    %c2_95 = arith.constant 2 : index
    %165 = vector.load %arg7[%c2_93, %c2_94, %c2_95] : memref<4x18x18xf32, #tpu.memory_space<vmem>>, vector<1x16x16xf32>
    %166 = vector.shape_cast %165 : vector<1x16x16xf32> to vector<16x16xf32>
    %167 = vector.broadcast %164 : f32 to vector<16x16xf32>
    %168 = arith.mulf %167, %166 : vector<16x16xf32>
    %169 = arith.addf %163, %168 : vector<16x16xf32>
    %c27 = arith.constant 27 : index
    %170 = memref.load %arg2[%c27] : memref<144xf32, #tpu.memory_space<smem>>
    %c3_96 = arith.constant 3 : index
    %c0_97 = arith.constant 0 : index
    %c0_98 = arith.constant 0 : index
    %171 = vector.load %arg7[%c3_96, %c0_97, %c0_98] : memref<4x18x18xf32, #tpu.memory_space<vmem>>, vector<1x16x16xf32>
    %172 = vector.shape_cast %171 : vector<1x16x16xf32> to vector<16x16xf32>
    %173 = vector.broadcast %170 : f32 to vector<16x16xf32>
    %174 = arith.mulf %173, %172 : vector<16x16xf32>
    %175 = arith.addf %169, %174 : vector<16x16xf32>
    %c28 = arith.constant 28 : index
    %176 = memref.load %arg2[%c28] : memref<144xf32, #tpu.memory_space<smem>>
    %c3_99 = arith.constant 3 : index
    %c0_100 = arith.constant 0 : index
    %c1_101 = arith.constant 1 : index
    %177 = vector.load %arg7[%c3_99, %c0_100, %c1_101] : memref<4x18x18xf32, #tpu.memory_space<vmem>>, vector<1x16x16xf32>
    %178 = vector.shape_cast %177 : vector<1x16x16xf32> to vector<16x16xf32>
    %179 = vector.broadcast %176 : f32 to vector<16x16xf32>
    %180 = arith.mulf %179, %178 : vector<16x16xf32>
    %181 = arith.addf %175, %180 : vector<16x16xf32>
    %c29 = arith.constant 29 : index
    %182 = memref.load %arg2[%c29] : memref<144xf32, #tpu.memory_space<smem>>
    %c3_102 = arith.constant 3 : index
    %c0_103 = arith.constant 0 : index
    %c2_104 = arith.constant 2 : index
    %183 = vector.load %arg7[%c3_102, %c0_103, %c2_104] : memref<4x18x18xf32, #tpu.memory_space<vmem>>, vector<1x16x16xf32>
    %184 = vector.shape_cast %183 : vector<1x16x16xf32> to vector<16x16xf32>
    %185 = vector.broadcast %182 : f32 to vector<16x16xf32>
    %186 = arith.mulf %185, %184 : vector<16x16xf32>
    %187 = arith.addf %181, %186 : vector<16x16xf32>
    %c30 = arith.constant 30 : index
    %188 = memref.load %arg2[%c30] : memref<144xf32, #tpu.memory_space<smem>>
    %c3_105 = arith.constant 3 : index
    %c1_106 = arith.constant 1 : index
    %c0_107 = arith.constant 0 : index
    %189 = vector.load %arg7[%c3_105, %c1_106, %c0_107] : memref<4x18x18xf32, #tpu.memory_space<vmem>>, vector<1x16x16xf32>
    %190 = vector.shape_cast %189 : vector<1x16x16xf32> to vector<16x16xf32>
    %191 = vector.broadcast %188 : f32 to vector<16x16xf32>
    %192 = arith.mulf %191, %190 : vector<16x16xf32>
    %193 = arith.addf %187, %192 : vector<16x16xf32>
    %c31 = arith.constant 31 : index
    %194 = memref.load %arg2[%c31] : memref<144xf32, #tpu.memory_space<smem>>
    %c3_108 = arith.constant 3 : index
    %c1_109 = arith.constant 1 : index
    %c1_110 = arith.constant 1 : index
    %195 = vector.load %arg7[%c3_108, %c1_109, %c1_110] : memref<4x18x18xf32, #tpu.memory_space<vmem>>, vector<1x16x16xf32>
    %196 = vector.shape_cast %195 : vector<1x16x16xf32> to vector<16x16xf32>
    %197 = vector.broadcast %194 : f32 to vector<16x16xf32>
    %198 = arith.mulf %197, %196 : vector<16x16xf32>
    %199 = arith.addf %193, %198 : vector<16x16xf32>
    %c32 = arith.constant 32 : index
    %200 = memref.load %arg2[%c32] : memref<144xf32, #tpu.memory_space<smem>>
    %c3_111 = arith.constant 3 : index
    %c1_112 = arith.constant 1 : index
    %c2_113 = arith.constant 2 : index
    %201 = vector.load %arg7[%c3_111, %c1_112, %c2_113] : memref<4x18x18xf32, #tpu.memory_space<vmem>>, vector<1x16x16xf32>
    %202 = vector.shape_cast %201 : vector<1x16x16xf32> to vector<16x16xf32>
    %203 = vector.broadcast %200 : f32 to vector<16x16xf32>
    %204 = arith.mulf %203, %202 : vector<16x16xf32>
    %205 = arith.addf %199, %204 : vector<16x16xf32>
    %c33 = arith.constant 33 : index
    %206 = memref.load %arg2[%c33] : memref<144xf32, #tpu.memory_space<smem>>
    %c3_114 = arith.constant 3 : index
    %c2_115 = arith.constant 2 : index
    %c0_116 = arith.constant 0 : index
    %207 = vector.load %arg7[%c3_114, %c2_115, %c0_116] : memref<4x18x18xf32, #tpu.memory_space<vmem>>, vector<1x16x16xf32>
    %208 = vector.shape_cast %207 : vector<1x16x16xf32> to vector<16x16xf32>
    %209 = vector.broadcast %206 : f32 to vector<16x16xf32>
    %210 = arith.mulf %209, %208 : vector<16x16xf32>
    %211 = arith.addf %205, %210 : vector<16x16xf32>
    %c34 = arith.constant 34 : index
    %212 = memref.load %arg2[%c34] : memref<144xf32, #tpu.memory_space<smem>>
    %c3_117 = arith.constant 3 : index
    %c2_118 = arith.constant 2 : index
    %c1_119 = arith.constant 1 : index
    %213 = vector.load %arg7[%c3_117, %c2_118, %c1_119] : memref<4x18x18xf32, #tpu.memory_space<vmem>>, vector<1x16x16xf32>
    %214 = vector.shape_cast %213 : vector<1x16x16xf32> to vector<16x16xf32>
    %215 = vector.broadcast %212 : f32 to vector<16x16xf32>
    %216 = arith.mulf %215, %214 : vector<16x16xf32>
    %217 = arith.addf %211, %216 : vector<16x16xf32>
    %c35 = arith.constant 35 : index
    %218 = memref.load %arg2[%c35] : memref<144xf32, #tpu.memory_space<smem>>
    %c3_120 = arith.constant 3 : index
    %c2_121 = arith.constant 2 : index
    %c2_122 = arith.constant 2 : index
    %219 = vector.load %arg7[%c3_120, %c2_121, %c2_122] : memref<4x18x18xf32, #tpu.memory_space<vmem>>, vector<1x16x16xf32>
    %220 = vector.shape_cast %219 : vector<1x16x16xf32> to vector<16x16xf32>
    %221 = vector.broadcast %218 : f32 to vector<16x16xf32>
    %222 = arith.mulf %221, %220 : vector<16x16xf32>
    %223 = arith.addf %217, %222 : vector<16x16xf32>
    %c0_123 = arith.constant 0 : index
    %224 = memref.load %arg3[%c0_123] : memref<4xf32, #tpu.memory_space<smem>>
    %225 = vector.broadcast %224 : f32 to vector<16x16xf32>
    %226 = arith.addf %223, %225 : vector<16x16xf32>
    %cst_124 = arith.constant 0.000000e+00 : f32
    %227 = vector.broadcast %cst_124 : f32 to vector<16x16xf32>
    %228 = arith.subf %227, %226 : vector<16x16xf32>
    %229 = math.exp %228 : vector<16x16xf32>
    %cst_125 = arith.constant 1.000000e+00 : f32
    %230 = vector.broadcast %cst_125 : f32 to vector<16x16xf32>
    %231 = arith.addf %230, %229 : vector<16x16xf32>
    %cst_126 = arith.constant 1.000000e+00 : f32
    %232 = vector.broadcast %cst_126 : f32 to vector<16x16xf32>
    %233 = arith.divf %232, %231 : vector<16x16xf32>
    %234 = arith.mulf %226, %233 : vector<16x16xf32>
    %c0_127 = arith.constant 0 : index
    %c1_128 = arith.constant 1 : index
    %c1_129 = arith.constant 1 : index
    %235 = vector.load %arg8[%c0_127, %c1_128, %c1_129] : memref<4x18x18xf32, #tpu.memory_space<vmem>>, vector<1x16x16xf32>
    %236 = vector.shape_cast %235 : vector<1x16x16xf32> to vector<16x16xf32>
    %237 = vector.shape_cast %234 : vector<16x16xf32> to vector<1x16x16xf32>
    tpu.vector_store %arg8[%c0_127, %c1_128, %c1_129], %237 {strides = array<i32>} : memref<4x18x18xf32, #tpu.memory_space<vmem>>, vector<1x16x16xf32>,
    %cst_130 = arith.constant 0.000000e+00 : f32
    %238 = vector.broadcast %cst_130 : f32 to vector<16x16xf32>
    %c36 = arith.constant 36 : index
    %239 = memref.load %arg2[%c36] : memref<144xf32, #tpu.memory_space<smem>>
    %c0_131 = arith.constant 0 : index
    %c0_132 = arith.constant 0 : index
    %c0_133 = arith.constant 0 : index
    %240 = vector.load %arg7[%c0_131, %c0_132, %c0_133] : memref<4x18x18xf32, #tpu.memory_space<vmem>>, vector<1x16x16xf32>
    %241 = vector.shape_cast %240 : vector<1x16x16xf32> to vector<16x16xf32>
    %242 = vector.broadcast %239 : f32 to vector<16x16xf32>
    %243 = arith.mulf %242, %241 : vector<16x16xf32>
    %244 = arith.addf %238, %243 : vector<16x16xf32>
    %c37 = arith.constant 37 : index
    %245 = memref.load %arg2[%c37] : memref<144xf32, #tpu.memory_space<smem>>
    %c0_134 = arith.constant 0 : index
    %c0_135 = arith.constant 0 : index
    %c1_136 = arith.constant 1 : index
    %246 = vector.load %arg7[%c0_134, %c0_135, %c1_136] : memref<4x18x18xf32, #tpu.memory_space<vmem>>, vector<1x16x16xf32>
    %247 = vector.shape_cast %246 : vector<1x16x16xf32> to vector<16x16xf32>
    %248 = vector.broadcast %245 : f32 to vector<16x16xf32>
    %249 = arith.mulf %248, %247 : vector<16x16xf32>
    %250 = arith.addf %244, %249 : vector<16x16xf32>
    %c38 = arith.constant 38 : index
    %251 = memref.load %arg2[%c38] : memref<144xf32, #tpu.memory_space<smem>>
    %c0_137 = arith.constant 0 : index
    %c0_138 = arith.constant 0 : index
    %c2_139 = arith.constant 2 : index
    %252 = vector.load %arg7[%c0_137, %c0_138, %c2_139] : memref<4x18x18xf32, #tpu.memory_space<vmem>>, vector<1x16x16xf32>
    %253 = vector.shape_cast %252 : vector<1x16x16xf32> to vector<16x16xf32>
    %254 = vector.broadcast %251 : f32 to vector<16x16xf32>
    %255 = arith.mulf %254, %253 : vector<16x16xf32>
    %256 = arith.addf %250, %255 : vector<16x16xf32>
    %c39 = arith.constant 39 : index
    %257 = memref.load %arg2[%c39] : memref<144xf32, #tpu.memory_space<smem>>
    %c0_140 = arith.constant 0 : index
    %c1_141 = arith.constant 1 : index
    %c0_142 = arith.constant 0 : index
    %258 = vector.load %arg7[%c0_140, %c1_141, %c0_142] : memref<4x18x18xf32, #tpu.memory_space<vmem>>, vector<1x16x16xf32>
    %259 = vector.shape_cast %258 : vector<1x16x16xf32> to vector<16x16xf32>
    %260 = vector.broadcast %257 : f32 to vector<16x16xf32>
    %261 = arith.mulf %260, %259 : vector<16x16xf32>
    %262 = arith.addf %256, %261 : vector<16x16xf32>
    %c40 = arith.constant 40 : index
    %263 = memref.load %arg2[%c40] : memref<144xf32, #tpu.memory_space<smem>>
    %c0_143 = arith.constant 0 : index
    %c1_144 = arith.constant 1 : index
    %c1_145 = arith.constant 1 : index
    %264 = vector.load %arg7[%c0_143, %c1_144, %c1_145] : memref<4x18x18xf32, #tpu.memory_space<vmem>>, vector<1x16x16xf32>
    %265 = vector.shape_cast %264 : vector<1x16x16xf32> to vector<16x16xf32>
    %266 = vector.broadcast %263 : f32 to vector<16x16xf32>
    %267 = arith.mulf %266, %265 : vector<16x16xf32>
    %268 = arith.addf %262, %267 : vector<16x16xf32>
    %c41 = arith.constant 41 : index
    %269 = memref.load %arg2[%c41] : memref<144xf32, #tpu.memory_space<smem>>
    %c0_146 = arith.constant 0 : index
    %c1_147 = arith.constant 1 : index
    %c2_148 = arith.constant 2 : index
    %270 = vector.load %arg7[%c0_146, %c1_147, %c2_148] : memref<4x18x18xf32, #tpu.memory_space<vmem>>, vector<1x16x16xf32>
    %271 = vector.shape_cast %270 : vector<1x16x16xf32> to vector<16x16xf32>
    %272 = vector.broadcast %269 : f32 to vector<16x16xf32>
    %273 = arith.mulf %272, %271 : vector<16x16xf32>
    %274 = arith.addf %268, %273 : vector<16x16xf32>
    %c42 = arith.constant 42 : index
    %275 = memref.load %arg2[%c42] : memref<144xf32, #tpu.memory_space<smem>>
    %c0_149 = arith.constant 0 : index
    %c2_150 = arith.constant 2 : index
    %c0_151 = arith.constant 0 : index
    %276 = vector.load %arg7[%c0_149, %c2_150, %c0_151] : memref<4x18x18xf32, #tpu.memory_space<vmem>>, vector<1x16x16xf32>
    %277 = vector.shape_cast %276 : vector<1x16x16xf32> to vector<16x16xf32>
    %278 = vector.broadcast %275 : f32 to vector<16x16xf32>
    %279 = arith.mulf %278, %277 : vector<16x16xf32>
    %280 = arith.addf %274, %279 : vector<16x16xf32>
    %c43 = arith.constant 43 : index
    %281 = memref.load %arg2[%c43] : memref<144xf32, #tpu.memory_space<smem>>
    %c0_152 = arith.constant 0 : index
    %c2_153 = arith.constant 2 : index
    %c1_154 = arith.constant 1 : index
    %282 = vector.load %arg7[%c0_152, %c2_153, %c1_154] : memref<4x18x18xf32, #tpu.memory_space<vmem>>, vector<1x16x16xf32>
    %283 = vector.shape_cast %282 : vector<1x16x16xf32> to vector<16x16xf32>
    %284 = vector.broadcast %281 : f32 to vector<16x16xf32>
    %285 = arith.mulf %284, %283 : vector<16x16xf32>
    %286 = arith.addf %280, %285 : vector<16x16xf32>
    %c44 = arith.constant 44 : index
    %287 = memref.load %arg2[%c44] : memref<144xf32, #tpu.memory_space<smem>>
    %c0_155 = arith.constant 0 : index
    %c2_156 = arith.constant 2 : index
    %c2_157 = arith.constant 2 : index
    %288 = vector.load %arg7[%c0_155, %c2_156, %c2_157] : memref<4x18x18xf32, #tpu.memory_space<vmem>>, vector<1x16x16xf32>
    %289 = vector.shape_cast %288 : vector<1x16x16xf32> to vector<16x16xf32>
    %290 = vector.broadcast %287 : f32 to vector<16x16xf32>
    %291 = arith.mulf %290, %289 : vector<16x16xf32>
    %292 = arith.addf %286, %291 : vector<16x16xf32>
    %c45 = arith.constant 45 : index
    %293 = memref.load %arg2[%c45] : memref<144xf32, #tpu.memory_space<smem>>
    %c1_158 = arith.constant 1 : index
    %c0_159 = arith.constant 0 : index
    %c0_160 = arith.constant 0 : index
    %294 = vector.load %arg7[%c1_158, %c0_159, %c0_160] : memref<4x18x18xf32, #tpu.memory_space<vmem>>, vector<1x16x16xf32>
    %295 = vector.shape_cast %294 : vector<1x16x16xf32> to vector<16x16xf32>
    %296 = vector.broadcast %293 : f32 to vector<16x16xf32>
    %297 = arith.mulf %296, %295 : vector<16x16xf32>
    %298 = arith.addf %292, %297 : vector<16x16xf32>
    %c46 = arith.constant 46 : index
    %299 = memref.load %arg2[%c46] : memref<144xf32, #tpu.memory_space<smem>>
    %c1_161 = arith.constant 1 : index
    %c0_162 = arith.constant 0 : index
    %c1_163 = arith.constant 1 : index
    %300 = vector.load %arg7[%c1_161, %c0_162, %c1_163] : memref<4x18x18xf32, #tpu.memory_space<vmem>>, vector<1x16x16xf32>
    %301 = vector.shape_cast %300 : vector<1x16x16xf32> to vector<16x16xf32>
    %302 = vector.broadcast %299 : f32 to vector<16x16xf32>
    %303 = arith.mulf %302, %301 : vector<16x16xf32>
    %304 = arith.addf %298, %303 : vector<16x16xf32>
    %c47 = arith.constant 47 : index
    %305 = memref.load %arg2[%c47] : memref<144xf32, #tpu.memory_space<smem>>
    %c1_164 = arith.constant 1 : index
    %c0_165 = arith.constant 0 : index
    %c2_166 = arith.constant 2 : index
    %306 = vector.load %arg7[%c1_164, %c0_165, %c2_166] : memref<4x18x18xf32, #tpu.memory_space<vmem>>, vector<1x16x16xf32>
    %307 = vector.shape_cast %306 : vector<1x16x16xf32> to vector<16x16xf32>
    %308 = vector.broadcast %305 : f32 to vector<16x16xf32>
    %309 = arith.mulf %308, %307 : vector<16x16xf32>
    %310 = arith.addf %304, %309 : vector<16x16xf32>
    %c48 = arith.constant 48 : index
    %311 = memref.load %arg2[%c48] : memref<144xf32, #tpu.memory_space<smem>>
    %c1_167 = arith.constant 1 : index
    %c1_168 = arith.constant 1 : index
    %c0_169 = arith.constant 0 : index
    %312 = vector.load %arg7[%c1_167, %c1_168, %c0_169] : memref<4x18x18xf32, #tpu.memory_space<vmem>>, vector<1x16x16xf32>
    %313 = vector.shape_cast %312 : vector<1x16x16xf32> to vector<16x16xf32>
    %314 = vector.broadcast %311 : f32 to vector<16x16xf32>
    %315 = arith.mulf %314, %313 : vector<16x16xf32>
    %316 = arith.addf %310, %315 : vector<16x16xf32>
    %c49 = arith.constant 49 : index
    %317 = memref.load %arg2[%c49] : memref<144xf32, #tpu.memory_space<smem>>
    %c1_170 = arith.constant 1 : index
    %c1_171 = arith.constant 1 : index
    %c1_172 = arith.constant 1 : index
    %318 = vector.load %arg7[%c1_170, %c1_171, %c1_172] : memref<4x18x18xf32, #tpu.memory_space<vmem>>, vector<1x16x16xf32>
    %319 = vector.shape_cast %318 : vector<1x16x16xf32> to vector<16x16xf32>
    %320 = vector.broadcast %317 : f32 to vector<16x16xf32>
    %321 = arith.mulf %320, %319 : vector<16x16xf32>
    %322 = arith.addf %316, %321 : vector<16x16xf32>
    %c50 = arith.constant 50 : index
    %323 = memref.load %arg2[%c50] : memref<144xf32, #tpu.memory_space<smem>>
    %c1_173 = arith.constant 1 : index
    %c1_174 = arith.constant 1 : index
    %c2_175 = arith.constant 2 : index
    %324 = vector.load %arg7[%c1_173, %c1_174, %c2_175] : memref<4x18x18xf32, #tpu.memory_space<vmem>>, vector<1x16x16xf32>
    %325 = vector.shape_cast %324 : vector<1x16x16xf32> to vector<16x16xf32>
    %326 = vector.broadcast %323 : f32 to vector<16x16xf32>
    %327 = arith.mulf %326, %325 : vector<16x16xf32>
    %328 = arith.addf %322, %327 : vector<16x16xf32>
    %c51 = arith.constant 51 : index
    %329 = memref.load %arg2[%c51] : memref<144xf32, #tpu.memory_space<smem>>
    %c1_176 = arith.constant 1 : index
    %c2_177 = arith.constant 2 : index
    %c0_178 = arith.constant 0 : index
    %330 = vector.load %arg7[%c1_176, %c2_177, %c0_178] : memref<4x18x18xf32, #tpu.memory_space<vmem>>, vector<1x16x16xf32>
    %331 = vector.shape_cast %330 : vector<1x16x16xf32> to vector<16x16xf32>
    %332 = vector.broadcast %329 : f32 to vector<16x16xf32>
    %333 = arith.mulf %332, %331 : vector<16x16xf32>
    %334 = arith.addf %328, %333 : vector<16x16xf32>
    %c52 = arith.constant 52 : index
    %335 = memref.load %arg2[%c52] : memref<144xf32, #tpu.memory_space<smem>>
    %c1_179 = arith.constant 1 : index
    %c2_180 = arith.constant 2 : index
    %c1_181 = arith.constant 1 : index
    %336 = vector.load %arg7[%c1_179, %c2_180, %c1_181] : memref<4x18x18xf32, #tpu.memory_space<vmem>>, vector<1x16x16xf32>
    %337 = vector.shape_cast %336 : vector<1x16x16xf32> to vector<16x16xf32>
    %338 = vector.broadcast %335 : f32 to vector<16x16xf32>
    %339 = arith.mulf %338, %337 : vector<16x16xf32>
    %340 = arith.addf %334, %339 : vector<16x16xf32>
    %c53 = arith.constant 53 : index
    %341 = memref.load %arg2[%c53] : memref<144xf32, #tpu.memory_space<smem>>
    %c1_182 = arith.constant 1 : index
    %c2_183 = arith.constant 2 : index
    %c2_184 = arith.constant 2 : index
    %342 = vector.load %arg7[%c1_182, %c2_183, %c2_184] : memref<4x18x18xf32, #tpu.memory_space<vmem>>, vector<1x16x16xf32>
    %343 = vector.shape_cast %342 : vector<1x16x16xf32> to vector<16x16xf32>
    %344 = vector.broadcast %341 : f32 to vector<16x16xf32>
    %345 = arith.mulf %344, %343 : vector<16x16xf32>
    %346 = arith.addf %340, %345 : vector<16x16xf32>
    %c54 = arith.constant 54 : index
    %347 = memref.load %arg2[%c54] : memref<144xf32, #tpu.memory_space<smem>>
    %c2_185 = arith.constant 2 : index
    %c0_186 = arith.constant 0 : index
    %c0_187 = arith.constant 0 : index
    %348 = vector.load %arg7[%c2_185, %c0_186, %c0_187] : memref<4x18x18xf32, #tpu.memory_space<vmem>>, vector<1x16x16xf32>
    %349 = vector.shape_cast %348 : vector<1x16x16xf32> to vector<16x16xf32>
    %350 = vector.broadcast %347 : f32 to vector<16x16xf32>
    %351 = arith.mulf %350, %349 : vector<16x16xf32>
    %352 = arith.addf %346, %351 : vector<16x16xf32>
    %c55 = arith.constant 55 : index
    %353 = memref.load %arg2[%c55] : memref<144xf32, #tpu.memory_space<smem>>
    %c2_188 = arith.constant 2 : index
    %c0_189 = arith.constant 0 : index
    %c1_190 = arith.constant 1 : index
    %354 = vector.load %arg7[%c2_188, %c0_189, %c1_190] : memref<4x18x18xf32, #tpu.memory_space<vmem>>, vector<1x16x16xf32>
    %355 = vector.shape_cast %354 : vector<1x16x16xf32> to vector<16x16xf32>
    %356 = vector.broadcast %353 : f32 to vector<16x16xf32>
    %357 = arith.mulf %356, %355 : vector<16x16xf32>
    %358 = arith.addf %352, %357 : vector<16x16xf32>
    %c56 = arith.constant 56 : index
    %359 = memref.load %arg2[%c56] : memref<144xf32, #tpu.memory_space<smem>>
    %c2_191 = arith.constant 2 : index
    %c0_192 = arith.constant 0 : index
    %c2_193 = arith.constant 2 : index
    %360 = vector.load %arg7[%c2_191, %c0_192, %c2_193] : memref<4x18x18xf32, #tpu.memory_space<vmem>>, vector<1x16x16xf32>
    %361 = vector.shape_cast %360 : vector<1x16x16xf32> to vector<16x16xf32>
    %362 = vector.broadcast %359 : f32 to vector<16x16xf32>
    %363 = arith.mulf %362, %361 : vector<16x16xf32>
    %364 = arith.addf %358, %363 : vector<16x16xf32>
    %c57 = arith.constant 57 : index
    %365 = memref.load %arg2[%c57] : memref<144xf32, #tpu.memory_space<smem>>
    %c2_194 = arith.constant 2 : index
    %c1_195 = arith.constant 1 : index
    %c0_196 = arith.constant 0 : index
    %366 = vector.load %arg7[%c2_194, %c1_195, %c0_196] : memref<4x18x18xf32, #tpu.memory_space<vmem>>, vector<1x16x16xf32>
    %367 = vector.shape_cast %366 : vector<1x16x16xf32> to vector<16x16xf32>
    %368 = vector.broadcast %365 : f32 to vector<16x16xf32>
    %369 = arith.mulf %368, %367 : vector<16x16xf32>
    %370 = arith.addf %364, %369 : vector<16x16xf32>
    %c58 = arith.constant 58 : index
    %371 = memref.load %arg2[%c58] : memref<144xf32, #tpu.memory_space<smem>>
    %c2_197 = arith.constant 2 : index
    %c1_198 = arith.constant 1 : index
    %c1_199 = arith.constant 1 : index
    %372 = vector.load %arg7[%c2_197, %c1_198, %c1_199] : memref<4x18x18xf32, #tpu.memory_space<vmem>>, vector<1x16x16xf32>
    %373 = vector.shape_cast %372 : vector<1x16x16xf32> to vector<16x16xf32>
    %374 = vector.broadcast %371 : f32 to vector<16x16xf32>
    %375 = arith.mulf %374, %373 : vector<16x16xf32>
    %376 = arith.addf %370, %375 : vector<16x16xf32>
    %c59 = arith.constant 59 : index
    %377 = memref.load %arg2[%c59] : memref<144xf32, #tpu.memory_space<smem>>
    %c2_200 = arith.constant 2 : index
    %c1_201 = arith.constant 1 : index
    %c2_202 = arith.constant 2 : index
    %378 = vector.load %arg7[%c2_200, %c1_201, %c2_202] : memref<4x18x18xf32, #tpu.memory_space<vmem>>, vector<1x16x16xf32>
    %379 = vector.shape_cast %378 : vector<1x16x16xf32> to vector<16x16xf32>
    %380 = vector.broadcast %377 : f32 to vector<16x16xf32>
    %381 = arith.mulf %380, %379 : vector<16x16xf32>
    %382 = arith.addf %376, %381 : vector<16x16xf32>
    %c60 = arith.constant 60 : index
    %383 = memref.load %arg2[%c60] : memref<144xf32, #tpu.memory_space<smem>>
    %c2_203 = arith.constant 2 : index
    %c2_204 = arith.constant 2 : index
    %c0_205 = arith.constant 0 : index
    %384 = vector.load %arg7[%c2_203, %c2_204, %c0_205] : memref<4x18x18xf32, #tpu.memory_space<vmem>>, vector<1x16x16xf32>
    %385 = vector.shape_cast %384 : vector<1x16x16xf32> to vector<16x16xf32>
    %386 = vector.broadcast %383 : f32 to vector<16x16xf32>
    %387 = arith.mulf %386, %385 : vector<16x16xf32>
    %388 = arith.addf %382, %387 : vector<16x16xf32>
    %c61 = arith.constant 61 : index
    %389 = memref.load %arg2[%c61] : memref<144xf32, #tpu.memory_space<smem>>
    %c2_206 = arith.constant 2 : index
    %c2_207 = arith.constant 2 : index
    %c1_208 = arith.constant 1 : index
    %390 = vector.load %arg7[%c2_206, %c2_207, %c1_208] : memref<4x18x18xf32, #tpu.memory_space<vmem>>, vector<1x16x16xf32>
    %391 = vector.shape_cast %390 : vector<1x16x16xf32> to vector<16x16xf32>
    %392 = vector.broadcast %389 : f32 to vector<16x16xf32>
    %393 = arith.mulf %392, %391 : vector<16x16xf32>
    %394 = arith.addf %388, %393 : vector<16x16xf32>
    %c62 = arith.constant 62 : index
    %395 = memref.load %arg2[%c62] : memref<144xf32, #tpu.memory_space<smem>>
    %c2_209 = arith.constant 2 : index
    %c2_210 = arith.constant 2 : index
    %c2_211 = arith.constant 2 : index
    %396 = vector.load %arg7[%c2_209, %c2_210, %c2_211] : memref<4x18x18xf32, #tpu.memory_space<vmem>>, vector<1x16x16xf32>
    %397 = vector.shape_cast %396 : vector<1x16x16xf32> to vector<16x16xf32>
    %398 = vector.broadcast %395 : f32 to vector<16x16xf32>
    %399 = arith.mulf %398, %397 : vector<16x16xf32>
    %400 = arith.addf %394, %399 : vector<16x16xf32>
    %c63 = arith.constant 63 : index
    %401 = memref.load %arg2[%c63] : memref<144xf32, #tpu.memory_space<smem>>
    %c3_212 = arith.constant 3 : index
    %c0_213 = arith.constant 0 : index
    %c0_214 = arith.constant 0 : index
    %402 = vector.load %arg7[%c3_212, %c0_213, %c0_214] : memref<4x18x18xf32, #tpu.memory_space<vmem>>, vector<1x16x16xf32>
    %403 = vector.shape_cast %402 : vector<1x16x16xf32> to vector<16x16xf32>
    %404 = vector.broadcast %401 : f32 to vector<16x16xf32>
    %405 = arith.mulf %404, %403 : vector<16x16xf32>
    %406 = arith.addf %400, %405 : vector<16x16xf32>
    %c64 = arith.constant 64 : index
    %407 = memref.load %arg2[%c64] : memref<144xf32, #tpu.memory_space<smem>>
    %c3_215 = arith.constant 3 : index
    %c0_216 = arith.constant 0 : index
    %c1_217 = arith.constant 1 : index
    %408 = vector.load %arg7[%c3_215, %c0_216, %c1_217] : memref<4x18x18xf32, #tpu.memory_space<vmem>>, vector<1x16x16xf32>
    %409 = vector.shape_cast %408 : vector<1x16x16xf32> to vector<16x16xf32>
    %410 = vector.broadcast %407 : f32 to vector<16x16xf32>
    %411 = arith.mulf %410, %409 : vector<16x16xf32>
    %412 = arith.addf %406, %411 : vector<16x16xf32>
    %c65 = arith.constant 65 : index
    %413 = memref.load %arg2[%c65] : memref<144xf32, #tpu.memory_space<smem>>
    %c3_218 = arith.constant 3 : index
    %c0_219 = arith.constant 0 : index
    %c2_220 = arith.constant 2 : index
    %414 = vector.load %arg7[%c3_218, %c0_219, %c2_220] : memref<4x18x18xf32, #tpu.memory_space<vmem>>, vector<1x16x16xf32>
    %415 = vector.shape_cast %414 : vector<1x16x16xf32> to vector<16x16xf32>
    %416 = vector.broadcast %413 : f32 to vector<16x16xf32>
    %417 = arith.mulf %416, %415 : vector<16x16xf32>
    %418 = arith.addf %412, %417 : vector<16x16xf32>
    %c66 = arith.constant 66 : index
    %419 = memref.load %arg2[%c66] : memref<144xf32, #tpu.memory_space<smem>>
    %c3_221 = arith.constant 3 : index
    %c1_222 = arith.constant 1 : index
    %c0_223 = arith.constant 0 : index
    %420 = vector.load %arg7[%c3_221, %c1_222, %c0_223] : memref<4x18x18xf32, #tpu.memory_space<vmem>>, vector<1x16x16xf32>
    %421 = vector.shape_cast %420 : vector<1x16x16xf32> to vector<16x16xf32>
    %422 = vector.broadcast %419 : f32 to vector<16x16xf32>
    %423 = arith.mulf %422, %421 : vector<16x16xf32>
    %424 = arith.addf %418, %423 : vector<16x16xf32>
    %c67 = arith.constant 67 : index
    %425 = memref.load %arg2[%c67] : memref<144xf32, #tpu.memory_space<smem>>
    %c3_224 = arith.constant 3 : index
    %c1_225 = arith.constant 1 : index
    %c1_226 = arith.constant 1 : index
    %426 = vector.load %arg7[%c3_224, %c1_225, %c1_226] : memref<4x18x18xf32, #tpu.memory_space<vmem>>, vector<1x16x16xf32>
    %427 = vector.shape_cast %426 : vector<1x16x16xf32> to vector<16x16xf32>
    %428 = vector.broadcast %425 : f32 to vector<16x16xf32>
    %429 = arith.mulf %428, %427 : vector<16x16xf32>
    %430 = arith.addf %424, %429 : vector<16x16xf32>
    %c68 = arith.constant 68 : index
    %431 = memref.load %arg2[%c68] : memref<144xf32, #tpu.memory_space<smem>>
    %c3_227 = arith.constant 3 : index
    %c1_228 = arith.constant 1 : index
    %c2_229 = arith.constant 2 : index
    %432 = vector.load %arg7[%c3_227, %c1_228, %c2_229] : memref<4x18x18xf32, #tpu.memory_space<vmem>>, vector<1x16x16xf32>
    %433 = vector.shape_cast %432 : vector<1x16x16xf32> to vector<16x16xf32>
    %434 = vector.broadcast %431 : f32 to vector<16x16xf32>
    %435 = arith.mulf %434, %433 : vector<16x16xf32>
    %436 = arith.addf %430, %435 : vector<16x16xf32>
    %c69 = arith.constant 69 : index
    %437 = memref.load %arg2[%c69] : memref<144xf32, #tpu.memory_space<smem>>
    %c3_230 = arith.constant 3 : index
    %c2_231 = arith.constant 2 : index
    %c0_232 = arith.constant 0 : index
    %438 = vector.load %arg7[%c3_230, %c2_231, %c0_232] : memref<4x18x18xf32, #tpu.memory_space<vmem>>, vector<1x16x16xf32>
    %439 = vector.shape_cast %438 : vector<1x16x16xf32> to vector<16x16xf32>
    %440 = vector.broadcast %437 : f32 to vector<16x16xf32>
    %441 = arith.mulf %440, %439 : vector<16x16xf32>
    %442 = arith.addf %436, %441 : vector<16x16xf32>
    %c70 = arith.constant 70 : index
    %443 = memref.load %arg2[%c70] : memref<144xf32, #tpu.memory_space<smem>>
    %c3_233 = arith.constant 3 : index
    %c2_234 = arith.constant 2 : index
    %c1_235 = arith.constant 1 : index
    %444 = vector.load %arg7[%c3_233, %c2_234, %c1_235] : memref<4x18x18xf32, #tpu.memory_space<vmem>>, vector<1x16x16xf32>
    %445 = vector.shape_cast %444 : vector<1x16x16xf32> to vector<16x16xf32>
    %446 = vector.broadcast %443 : f32 to vector<16x16xf32>
    %447 = arith.mulf %446, %445 : vector<16x16xf32>
    %448 = arith.addf %442, %447 : vector<16x16xf32>
    %c71 = arith.constant 71 : index
    %449 = memref.load %arg2[%c71] : memref<144xf32, #tpu.memory_space<smem>>
    %c3_236 = arith.constant 3 : index
    %c2_237 = arith.constant 2 : index
    %c2_238 = arith.constant 2 : index
    %450 = vector.load %arg7[%c3_236, %c2_237, %c2_238] : memref<4x18x18xf32, #tpu.memory_space<vmem>>, vector<1x16x16xf32>
    %451 = vector.shape_cast %450 : vector<1x16x16xf32> to vector<16x16xf32>
    %452 = vector.broadcast %449 : f32 to vector<16x16xf32>
    %453 = arith.mulf %452, %451 : vector<16x16xf32>
    %454 = arith.addf %448, %453 : vector<16x16xf32>
    %c1_239 = arith.constant 1 : index
    %455 = memref.load %arg3[%c1_239] : memref<4xf32, #tpu.memory_space<smem>>
    %456 = vector.broadcast %455 : f32 to vector<16x16xf32>
    %457 = arith.addf %454, %456 : vector<16x16xf32>
    %cst_240 = arith.constant 0.000000e+00 : f32
    %458 = vector.broadcast %cst_240 : f32 to vector<16x16xf32>
    %459 = arith.subf %458, %457 : vector<16x16xf32>
    %460 = math.exp %459 : vector<16x16xf32>
    %cst_241 = arith.constant 1.000000e+00 : f32
    %461 = vector.broadcast %cst_241 : f32 to vector<16x16xf32>
    %462 = arith.addf %461, %460 : vector<16x16xf32>
    %cst_242 = arith.constant 1.000000e+00 : f32
    %463 = vector.broadcast %cst_242 : f32 to vector<16x16xf32>
    %464 = arith.divf %463, %462 : vector<16x16xf32>
    %465 = arith.mulf %457, %464 : vector<16x16xf32>
    %c1_243 = arith.constant 1 : index
    %c1_244 = arith.constant 1 : index
    %c1_245 = arith.constant 1 : index
    %466 = vector.load %arg8[%c1_243, %c1_244, %c1_245] : memref<4x18x18xf32, #tpu.memory_space<vmem>>, vector<1x16x16xf32>
    %467 = vector.shape_cast %466 : vector<1x16x16xf32> to vector<16x16xf32>
    %468 = vector.shape_cast %465 : vector<16x16xf32> to vector<1x16x16xf32>
    tpu.vector_store %arg8[%c1_243, %c1_244, %c1_245], %468 {strides = array<i32>} : memref<4x18x18xf32, #tpu.memory_space<vmem>>, vector<1x16x16xf32>,
    %cst_246 = arith.constant 0.000000e+00 : f32
    %469 = vector.broadcast %cst_246 : f32 to vector<16x16xf32>
    %c72 = arith.constant 72 : index
    %470 = memref.load %arg2[%c72] : memref<144xf32, #tpu.memory_space<smem>>
    %c0_247 = arith.constant 0 : index
    %c0_248 = arith.constant 0 : index
    %c0_249 = arith.constant 0 : index
    %471 = vector.load %arg7[%c0_247, %c0_248, %c0_249] : memref<4x18x18xf32, #tpu.memory_space<vmem>>, vector<1x16x16xf32>
    %472 = vector.shape_cast %471 : vector<1x16x16xf32> to vector<16x16xf32>
    %473 = vector.broadcast %470 : f32 to vector<16x16xf32>
    %474 = arith.mulf %473, %472 : vector<16x16xf32>
    %475 = arith.addf %469, %474 : vector<16x16xf32>
    %c73 = arith.constant 73 : index
    %476 = memref.load %arg2[%c73] : memref<144xf32, #tpu.memory_space<smem>>
    %c0_250 = arith.constant 0 : index
    %c0_251 = arith.constant 0 : index
    %c1_252 = arith.constant 1 : index
    %477 = vector.load %arg7[%c0_250, %c0_251, %c1_252] : memref<4x18x18xf32, #tpu.memory_space<vmem>>, vector<1x16x16xf32>
    %478 = vector.shape_cast %477 : vector<1x16x16xf32> to vector<16x16xf32>
    %479 = vector.broadcast %476 : f32 to vector<16x16xf32>
    %480 = arith.mulf %479, %478 : vector<16x16xf32>
    %481 = arith.addf %475, %480 : vector<16x16xf32>
    %c74 = arith.constant 74 : index
    %482 = memref.load %arg2[%c74] : memref<144xf32, #tpu.memory_space<smem>>
    %c0_253 = arith.constant 0 : index
    %c0_254 = arith.constant 0 : index
    %c2_255 = arith.constant 2 : index
    %483 = vector.load %arg7[%c0_253, %c0_254, %c2_255] : memref<4x18x18xf32, #tpu.memory_space<vmem>>, vector<1x16x16xf32>
    %484 = vector.shape_cast %483 : vector<1x16x16xf32> to vector<16x16xf32>
    %485 = vector.broadcast %482 : f32 to vector<16x16xf32>
    %486 = arith.mulf %485, %484 : vector<16x16xf32>
    %487 = arith.addf %481, %486 : vector<16x16xf32>
    %c75 = arith.constant 75 : index
    %488 = memref.load %arg2[%c75] : memref<144xf32, #tpu.memory_space<smem>>
    %c0_256 = arith.constant 0 : index
    %c1_257 = arith.constant 1 : index
    %c0_258 = arith.constant 0 : index
    %489 = vector.load %arg7[%c0_256, %c1_257, %c0_258] : memref<4x18x18xf32, #tpu.memory_space<vmem>>, vector<1x16x16xf32>
    %490 = vector.shape_cast %489 : vector<1x16x16xf32> to vector<16x16xf32>
    %491 = vector.broadcast %488 : f32 to vector<16x16xf32>
    %492 = arith.mulf %491, %490 : vector<16x16xf32>
    %493 = arith.addf %487, %492 : vector<16x16xf32>
    %c76 = arith.constant 76 : index
    %494 = memref.load %arg2[%c76] : memref<144xf32, #tpu.memory_space<smem>>
    %c0_259 = arith.constant 0 : index
    %c1_260 = arith.constant 1 : index
    %c1_261 = arith.constant 1 : index
    %495 = vector.load %arg7[%c0_259, %c1_260, %c1_261] : memref<4x18x18xf32, #tpu.memory_space<vmem>>, vector<1x16x16xf32>
    %496 = vector.shape_cast %495 : vector<1x16x16xf32> to vector<16x16xf32>
    %497 = vector.broadcast %494 : f32 to vector<16x16xf32>
    %498 = arith.mulf %497, %496 : vector<16x16xf32>
    %499 = arith.addf %493, %498 : vector<16x16xf32>
    %c77 = arith.constant 77 : index
    %500 = memref.load %arg2[%c77] : memref<144xf32, #tpu.memory_space<smem>>
    %c0_262 = arith.constant 0 : index
    %c1_263 = arith.constant 1 : index
    %c2_264 = arith.constant 2 : index
    %501 = vector.load %arg7[%c0_262, %c1_263, %c2_264] : memref<4x18x18xf32, #tpu.memory_space<vmem>>, vector<1x16x16xf32>
    %502 = vector.shape_cast %501 : vector<1x16x16xf32> to vector<16x16xf32>
    %503 = vector.broadcast %500 : f32 to vector<16x16xf32>
    %504 = arith.mulf %503, %502 : vector<16x16xf32>
    %505 = arith.addf %499, %504 : vector<16x16xf32>
    %c78 = arith.constant 78 : index
    %506 = memref.load %arg2[%c78] : memref<144xf32, #tpu.memory_space<smem>>
    %c0_265 = arith.constant 0 : index
    %c2_266 = arith.constant 2 : index
    %c0_267 = arith.constant 0 : index
    %507 = vector.load %arg7[%c0_265, %c2_266, %c0_267] : memref<4x18x18xf32, #tpu.memory_space<vmem>>, vector<1x16x16xf32>
    %508 = vector.shape_cast %507 : vector<1x16x16xf32> to vector<16x16xf32>
    %509 = vector.broadcast %506 : f32 to vector<16x16xf32>
    %510 = arith.mulf %509, %508 : vector<16x16xf32>
    %511 = arith.addf %505, %510 : vector<16x16xf32>
    %c79 = arith.constant 79 : index
    %512 = memref.load %arg2[%c79] : memref<144xf32, #tpu.memory_space<smem>>
    %c0_268 = arith.constant 0 : index
    %c2_269 = arith.constant 2 : index
    %c1_270 = arith.constant 1 : index
    %513 = vector.load %arg7[%c0_268, %c2_269, %c1_270] : memref<4x18x18xf32, #tpu.memory_space<vmem>>, vector<1x16x16xf32>
    %514 = vector.shape_cast %513 : vector<1x16x16xf32> to vector<16x16xf32>
    %515 = vector.broadcast %512 : f32 to vector<16x16xf32>
    %516 = arith.mulf %515, %514 : vector<16x16xf32>
    %517 = arith.addf %511, %516 : vector<16x16xf32>
    %c80 = arith.constant 80 : index
    %518 = memref.load %arg2[%c80] : memref<144xf32, #tpu.memory_space<smem>>
    %c0_271 = arith.constant 0 : index
    %c2_272 = arith.constant 2 : index
    %c2_273 = arith.constant 2 : index
    %519 = vector.load %arg7[%c0_271, %c2_272, %c2_273] : memref<4x18x18xf32, #tpu.memory_space<vmem>>, vector<1x16x16xf32>
    %520 = vector.shape_cast %519 : vector<1x16x16xf32> to vector<16x16xf32>
    %521 = vector.broadcast %518 : f32 to vector<16x16xf32>
    %522 = arith.mulf %521, %520 : vector<16x16xf32>
    %523 = arith.addf %517, %522 : vector<16x16xf32>
    %c81 = arith.constant 81 : index
    %524 = memref.load %arg2[%c81] : memref<144xf32, #tpu.memory_space<smem>>
    %c1_274 = arith.constant 1 : index
    %c0_275 = arith.constant 0 : index
    %c0_276 = arith.constant 0 : index
    %525 = vector.load %arg7[%c1_274, %c0_275, %c0_276] : memref<4x18x18xf32, #tpu.memory_space<vmem>>, vector<1x16x16xf32>
    %526 = vector.shape_cast %525 : vector<1x16x16xf32> to vector<16x16xf32>
    %527 = vector.broadcast %524 : f32 to vector<16x16xf32>
    %528 = arith.mulf %527, %526 : vector<16x16xf32>
    %529 = arith.addf %523, %528 : vector<16x16xf32>
    %c82 = arith.constant 82 : index
    %530 = memref.load %arg2[%c82] : memref<144xf32, #tpu.memory_space<smem>>
    %c1_277 = arith.constant 1 : index
    %c0_278 = arith.constant 0 : index
    %c1_279 = arith.constant 1 : index
    %531 = vector.load %arg7[%c1_277, %c0_278, %c1_279] : memref<4x18x18xf32, #tpu.memory_space<vmem>>, vector<1x16x16xf32>
    %532 = vector.shape_cast %531 : vector<1x16x16xf32> to vector<16x16xf32>
    %533 = vector.broadcast %530 : f32 to vector<16x16xf32>
    %534 = arith.mulf %533, %532 : vector<16x16xf32>
    %535 = arith.addf %529, %534 : vector<16x16xf32>
    %c83 = arith.constant 83 : index
    %536 = memref.load %arg2[%c83] : memref<144xf32, #tpu.memory_space<smem>>
    %c1_280 = arith.constant 1 : index
    %c0_281 = arith.constant 0 : index
    %c2_282 = arith.constant 2 : index
    %537 = vector.load %arg7[%c1_280, %c0_281, %c2_282] : memref<4x18x18xf32, #tpu.memory_space<vmem>>, vector<1x16x16xf32>
    %538 = vector.shape_cast %537 : vector<1x16x16xf32> to vector<16x16xf32>
    %539 = vector.broadcast %536 : f32 to vector<16x16xf32>
    %540 = arith.mulf %539, %538 : vector<16x16xf32>
    %541 = arith.addf %535, %540 : vector<16x16xf32>
    %c84 = arith.constant 84 : index
    %542 = memref.load %arg2[%c84] : memref<144xf32, #tpu.memory_space<smem>>
    %c1_283 = arith.constant 1 : index
    %c1_284 = arith.constant 1 : index
    %c0_285 = arith.constant 0 : index
    %543 = vector.load %arg7[%c1_283, %c1_284, %c0_285] : memref<4x18x18xf32, #tpu.memory_space<vmem>>, vector<1x16x16xf32>
    %544 = vector.shape_cast %543 : vector<1x16x16xf32> to vector<16x16xf32>
    %545 = vector.broadcast %542 : f32 to vector<16x16xf32>
    %546 = arith.mulf %545, %544 : vector<16x16xf32>
    %547 = arith.addf %541, %546 : vector<16x16xf32>
    %c85 = arith.constant 85 : index
    %548 = memref.load %arg2[%c85] : memref<144xf32, #tpu.memory_space<smem>>
    %c1_286 = arith.constant 1 : index
    %c1_287 = arith.constant 1 : index
    %c1_288 = arith.constant 1 : index
    %549 = vector.load %arg7[%c1_286, %c1_287, %c1_288] : memref<4x18x18xf32, #tpu.memory_space<vmem>>, vector<1x16x16xf32>
    %550 = vector.shape_cast %549 : vector<1x16x16xf32> to vector<16x16xf32>
    %551 = vector.broadcast %548 : f32 to vector<16x16xf32>
    %552 = arith.mulf %551, %550 : vector<16x16xf32>
    %553 = arith.addf %547, %552 : vector<16x16xf32>
    %c86 = arith.constant 86 : index
    %554 = memref.load %arg2[%c86] : memref<144xf32, #tpu.memory_space<smem>>
    %c1_289 = arith.constant 1 : index
    %c1_290 = arith.constant 1 : index
    %c2_291 = arith.constant 2 : index
    %555 = vector.load %arg7[%c1_289, %c1_290, %c2_291] : memref<4x18x18xf32, #tpu.memory_space<vmem>>, vector<1x16x16xf32>
    %556 = vector.shape_cast %555 : vector<1x16x16xf32> to vector<16x16xf32>
    %557 = vector.broadcast %554 : f32 to vector<16x16xf32>
    %558 = arith.mulf %557, %556 : vector<16x16xf32>
    %559 = arith.addf %553, %558 : vector<16x16xf32>
    %c87 = arith.constant 87 : index
    %560 = memref.load %arg2[%c87] : memref<144xf32, #tpu.memory_space<smem>>
    %c1_292 = arith.constant 1 : index
    %c2_293 = arith.constant 2 : index
    %c0_294 = arith.constant 0 : index
    %561 = vector.load %arg7[%c1_292, %c2_293, %c0_294] : memref<4x18x18xf32, #tpu.memory_space<vmem>>, vector<1x16x16xf32>
    %562 = vector.shape_cast %561 : vector<1x16x16xf32> to vector<16x16xf32>
    %563 = vector.broadcast %560 : f32 to vector<16x16xf32>
    %564 = arith.mulf %563, %562 : vector<16x16xf32>
    %565 = arith.addf %559, %564 : vector<16x16xf32>
    %c88 = arith.constant 88 : index
    %566 = memref.load %arg2[%c88] : memref<144xf32, #tpu.memory_space<smem>>
    %c1_295 = arith.constant 1 : index
    %c2_296 = arith.constant 2 : index
    %c1_297 = arith.constant 1 : index
    %567 = vector.load %arg7[%c1_295, %c2_296, %c1_297] : memref<4x18x18xf32, #tpu.memory_space<vmem>>, vector<1x16x16xf32>
    %568 = vector.shape_cast %567 : vector<1x16x16xf32> to vector<16x16xf32>
    %569 = vector.broadcast %566 : f32 to vector<16x16xf32>
    %570 = arith.mulf %569, %568 : vector<16x16xf32>
    %571 = arith.addf %565, %570 : vector<16x16xf32>
    %c89 = arith.constant 89 : index
    %572 = memref.load %arg2[%c89] : memref<144xf32, #tpu.memory_space<smem>>
    %c1_298 = arith.constant 1 : index
    %c2_299 = arith.constant 2 : index
    %c2_300 = arith.constant 2 : index
    %573 = vector.load %arg7[%c1_298, %c2_299, %c2_300] : memref<4x18x18xf32, #tpu.memory_space<vmem>>, vector<1x16x16xf32>
    %574 = vector.shape_cast %573 : vector<1x16x16xf32> to vector<16x16xf32>
    %575 = vector.broadcast %572 : f32 to vector<16x16xf32>
    %576 = arith.mulf %575, %574 : vector<16x16xf32>
    %577 = arith.addf %571, %576 : vector<16x16xf32>
    %c90 = arith.constant 90 : index
    %578 = memref.load %arg2[%c90] : memref<144xf32, #tpu.memory_space<smem>>
    %c2_301 = arith.constant 2 : index
    %c0_302 = arith.constant 0 : index
    %c0_303 = arith.constant 0 : index
    %579 = vector.load %arg7[%c2_301, %c0_302, %c0_303] : memref<4x18x18xf32, #tpu.memory_space<vmem>>, vector<1x16x16xf32>
    %580 = vector.shape_cast %579 : vector<1x16x16xf32> to vector<16x16xf32>
    %581 = vector.broadcast %578 : f32 to vector<16x16xf32>
    %582 = arith.mulf %581, %580 : vector<16x16xf32>
    %583 = arith.addf %577, %582 : vector<16x16xf32>
    %c91 = arith.constant 91 : index
    %584 = memref.load %arg2[%c91] : memref<144xf32, #tpu.memory_space<smem>>
    %c2_304 = arith.constant 2 : index
    %c0_305 = arith.constant 0 : index
    %c1_306 = arith.constant 1 : index
    %585 = vector.load %arg7[%c2_304, %c0_305, %c1_306] : memref<4x18x18xf32, #tpu.memory_space<vmem>>, vector<1x16x16xf32>
    %586 = vector.shape_cast %585 : vector<1x16x16xf32> to vector<16x16xf32>
    %587 = vector.broadcast %584 : f32 to vector<16x16xf32>
    %588 = arith.mulf %587, %586 : vector<16x16xf32>
    %589 = arith.addf %583, %588 : vector<16x16xf32>
    %c92 = arith.constant 92 : index
    %590 = memref.load %arg2[%c92] : memref<144xf32, #tpu.memory_space<smem>>
    %c2_307 = arith.constant 2 : index
    %c0_308 = arith.constant 0 : index
    %c2_309 = arith.constant 2 : index
    %591 = vector.load %arg7[%c2_307, %c0_308, %c2_309] : memref<4x18x18xf32, #tpu.memory_space<vmem>>, vector<1x16x16xf32>
    %592 = vector.shape_cast %591 : vector<1x16x16xf32> to vector<16x16xf32>
    %593 = vector.broadcast %590 : f32 to vector<16x16xf32>
    %594 = arith.mulf %593, %592 : vector<16x16xf32>
    %595 = arith.addf %589, %594 : vector<16x16xf32>
    %c93 = arith.constant 93 : index
    %596 = memref.load %arg2[%c93] : memref<144xf32, #tpu.memory_space<smem>>
    %c2_310 = arith.constant 2 : index
    %c1_311 = arith.constant 1 : index
    %c0_312 = arith.constant 0 : index
    %597 = vector.load %arg7[%c2_310, %c1_311, %c0_312] : memref<4x18x18xf32, #tpu.memory_space<vmem>>, vector<1x16x16xf32>
    %598 = vector.shape_cast %597 : vector<1x16x16xf32> to vector<16x16xf32>
    %599 = vector.broadcast %596 : f32 to vector<16x16xf32>
    %600 = arith.mulf %599, %598 : vector<16x16xf32>
    %601 = arith.addf %595, %600 : vector<16x16xf32>
    %c94 = arith.constant 94 : index
    %602 = memref.load %arg2[%c94] : memref<144xf32, #tpu.memory_space<smem>>
    %c2_313 = arith.constant 2 : index
    %c1_314 = arith.constant 1 : index
    %c1_315 = arith.constant 1 : index
    %603 = vector.load %arg7[%c2_313, %c1_314, %c1_315] : memref<4x18x18xf32, #tpu.memory_space<vmem>>, vector<1x16x16xf32>
    %604 = vector.shape_cast %603 : vector<1x16x16xf32> to vector<16x16xf32>
    %605 = vector.broadcast %602 : f32 to vector<16x16xf32>
    %606 = arith.mulf %605, %604 : vector<16x16xf32>
    %607 = arith.addf %601, %606 : vector<16x16xf32>
    %c95 = arith.constant 95 : index
    %608 = memref.load %arg2[%c95] : memref<144xf32, #tpu.memory_space<smem>>
    %c2_316 = arith.constant 2 : index
    %c1_317 = arith.constant 1 : index
    %c2_318 = arith.constant 2 : index
    %609 = vector.load %arg7[%c2_316, %c1_317, %c2_318] : memref<4x18x18xf32, #tpu.memory_space<vmem>>, vector<1x16x16xf32>
    %610 = vector.shape_cast %609 : vector<1x16x16xf32> to vector<16x16xf32>
    %611 = vector.broadcast %608 : f32 to vector<16x16xf32>
    %612 = arith.mulf %611, %610 : vector<16x16xf32>
    %613 = arith.addf %607, %612 : vector<16x16xf32>
    %c96 = arith.constant 96 : index
    %614 = memref.load %arg2[%c96] : memref<144xf32, #tpu.memory_space<smem>>
    %c2_319 = arith.constant 2 : index
    %c2_320 = arith.constant 2 : index
    %c0_321 = arith.constant 0 : index
    %615 = vector.load %arg7[%c2_319, %c2_320, %c0_321] : memref<4x18x18xf32, #tpu.memory_space<vmem>>, vector<1x16x16xf32>
    %616 = vector.shape_cast %615 : vector<1x16x16xf32> to vector<16x16xf32>
    %617 = vector.broadcast %614 : f32 to vector<16x16xf32>
    %618 = arith.mulf %617, %616 : vector<16x16xf32>
    %619 = arith.addf %613, %618 : vector<16x16xf32>
    %c97 = arith.constant 97 : index
    %620 = memref.load %arg2[%c97] : memref<144xf32, #tpu.memory_space<smem>>
    %c2_322 = arith.constant 2 : index
    %c2_323 = arith.constant 2 : index
    %c1_324 = arith.constant 1 : index
    %621 = vector.load %arg7[%c2_322, %c2_323, %c1_324] : memref<4x18x18xf32, #tpu.memory_space<vmem>>, vector<1x16x16xf32>
    %622 = vector.shape_cast %621 : vector<1x16x16xf32> to vector<16x16xf32>
    %623 = vector.broadcast %620 : f32 to vector<16x16xf32>
    %624 = arith.mulf %623, %622 : vector<16x16xf32>
    %625 = arith.addf %619, %624 : vector<16x16xf32>
    %c98 = arith.constant 98 : index
    %626 = memref.load %arg2[%c98] : memref<144xf32, #tpu.memory_space<smem>>
    %c2_325 = arith.constant 2 : index
    %c2_326 = arith.constant 2 : index
    %c2_327 = arith.constant 2 : index
    %627 = vector.load %arg7[%c2_325, %c2_326, %c2_327] : memref<4x18x18xf32, #tpu.memory_space<vmem>>, vector<1x16x16xf32>
    %628 = vector.shape_cast %627 : vector<1x16x16xf32> to vector<16x16xf32>
    %629 = vector.broadcast %626 : f32 to vector<16x16xf32>
    %630 = arith.mulf %629, %628 : vector<16x16xf32>
    %631 = arith.addf %625, %630 : vector<16x16xf32>
    %c99 = arith.constant 99 : index
    %632 = memref.load %arg2[%c99] : memref<144xf32, #tpu.memory_space<smem>>
    %c3_328 = arith.constant 3 : index
    %c0_329 = arith.constant 0 : index
    %c0_330 = arith.constant 0 : index
    %633 = vector.load %arg7[%c3_328, %c0_329, %c0_330] : memref<4x18x18xf32, #tpu.memory_space<vmem>>, vector<1x16x16xf32>
    %634 = vector.shape_cast %633 : vector<1x16x16xf32> to vector<16x16xf32>
    %635 = vector.broadcast %632 : f32 to vector<16x16xf32>
    %636 = arith.mulf %635, %634 : vector<16x16xf32>
    %637 = arith.addf %631, %636 : vector<16x16xf32>
    %c100 = arith.constant 100 : index
    %638 = memref.load %arg2[%c100] : memref<144xf32, #tpu.memory_space<smem>>
    %c3_331 = arith.constant 3 : index
    %c0_332 = arith.constant 0 : index
    %c1_333 = arith.constant 1 : index
    %639 = vector.load %arg7[%c3_331, %c0_332, %c1_333] : memref<4x18x18xf32, #tpu.memory_space<vmem>>, vector<1x16x16xf32>
    %640 = vector.shape_cast %639 : vector<1x16x16xf32> to vector<16x16xf32>
    %641 = vector.broadcast %638 : f32 to vector<16x16xf32>
    %642 = arith.mulf %641, %640 : vector<16x16xf32>
    %643 = arith.addf %637, %642 : vector<16x16xf32>
    %c101 = arith.constant 101 : index
    %644 = memref.load %arg2[%c101] : memref<144xf32, #tpu.memory_space<smem>>
    %c3_334 = arith.constant 3 : index
    %c0_335 = arith.constant 0 : index
    %c2_336 = arith.constant 2 : index
    %645 = vector.load %arg7[%c3_334, %c0_335, %c2_336] : memref<4x18x18xf32, #tpu.memory_space<vmem>>, vector<1x16x16xf32>
    %646 = vector.shape_cast %645 : vector<1x16x16xf32> to vector<16x16xf32>
    %647 = vector.broadcast %644 : f32 to vector<16x16xf32>
    %648 = arith.mulf %647, %646 : vector<16x16xf32>
    %649 = arith.addf %643, %648 : vector<16x16xf32>
    %c102 = arith.constant 102 : index
    %650 = memref.load %arg2[%c102] : memref<144xf32, #tpu.memory_space<smem>>
    %c3_337 = arith.constant 3 : index
    %c1_338 = arith.constant 1 : index
    %c0_339 = arith.constant 0 : index
    %651 = vector.load %arg7[%c3_337, %c1_338, %c0_339] : memref<4x18x18xf32, #tpu.memory_space<vmem>>, vector<1x16x16xf32>
    %652 = vector.shape_cast %651 : vector<1x16x16xf32> to vector<16x16xf32>
    %653 = vector.broadcast %650 : f32 to vector<16x16xf32>
    %654 = arith.mulf %653, %652 : vector<16x16xf32>
    %655 = arith.addf %649, %654 : vector<16x16xf32>
    %c103 = arith.constant 103 : index
    %656 = memref.load %arg2[%c103] : memref<144xf32, #tpu.memory_space<smem>>
    %c3_340 = arith.constant 3 : index
    %c1_341 = arith.constant 1 : index
    %c1_342 = arith.constant 1 : index
    %657 = vector.load %arg7[%c3_340, %c1_341, %c1_342] : memref<4x18x18xf32, #tpu.memory_space<vmem>>, vector<1x16x16xf32>
    %658 = vector.shape_cast %657 : vector<1x16x16xf32> to vector<16x16xf32>
    %659 = vector.broadcast %656 : f32 to vector<16x16xf32>
    %660 = arith.mulf %659, %658 : vector<16x16xf32>
    %661 = arith.addf %655, %660 : vector<16x16xf32>
    %c104 = arith.constant 104 : index
    %662 = memref.load %arg2[%c104] : memref<144xf32, #tpu.memory_space<smem>>
    %c3_343 = arith.constant 3 : index
    %c1_344 = arith.constant 1 : index
    %c2_345 = arith.constant 2 : index
    %663 = vector.load %arg7[%c3_343, %c1_344, %c2_345] : memref<4x18x18xf32, #tpu.memory_space<vmem>>, vector<1x16x16xf32>
    %664 = vector.shape_cast %663 : vector<1x16x16xf32> to vector<16x16xf32>
    %665 = vector.broadcast %662 : f32 to vector<16x16xf32>
    %666 = arith.mulf %665, %664 : vector<16x16xf32>
    %667 = arith.addf %661, %666 : vector<16x16xf32>
    %c105 = arith.constant 105 : index
    %668 = memref.load %arg2[%c105] : memref<144xf32, #tpu.memory_space<smem>>
    %c3_346 = arith.constant 3 : index
    %c2_347 = arith.constant 2 : index
    %c0_348 = arith.constant 0 : index
    %669 = vector.load %arg7[%c3_346, %c2_347, %c0_348] : memref<4x18x18xf32, #tpu.memory_space<vmem>>, vector<1x16x16xf32>
    %670 = vector.shape_cast %669 : vector<1x16x16xf32> to vector<16x16xf32>
    %671 = vector.broadcast %668 : f32 to vector<16x16xf32>
    %672 = arith.mulf %671, %670 : vector<16x16xf32>
    %673 = arith.addf %667, %672 : vector<16x16xf32>
    %c106 = arith.constant 106 : index
    %674 = memref.load %arg2[%c106] : memref<144xf32, #tpu.memory_space<smem>>
    %c3_349 = arith.constant 3 : index
    %c2_350 = arith.constant 2 : index
    %c1_351 = arith.constant 1 : index
    %675 = vector.load %arg7[%c3_349, %c2_350, %c1_351] : memref<4x18x18xf32, #tpu.memory_space<vmem>>, vector<1x16x16xf32>
    %676 = vector.shape_cast %675 : vector<1x16x16xf32> to vector<16x16xf32>
    %677 = vector.broadcast %674 : f32 to vector<16x16xf32>
    %678 = arith.mulf %677, %676 : vector<16x16xf32>
    %679 = arith.addf %673, %678 : vector<16x16xf32>
    %c107 = arith.constant 107 : index
    %680 = memref.load %arg2[%c107] : memref<144xf32, #tpu.memory_space<smem>>
    %c3_352 = arith.constant 3 : index
    %c2_353 = arith.constant 2 : index
    %c2_354 = arith.constant 2 : index
    %681 = vector.load %arg7[%c3_352, %c2_353, %c2_354] : memref<4x18x18xf32, #tpu.memory_space<vmem>>, vector<1x16x16xf32>
    %682 = vector.shape_cast %681 : vector<1x16x16xf32> to vector<16x16xf32>
    %683 = vector.broadcast %680 : f32 to vector<16x16xf32>
    %684 = arith.mulf %683, %682 : vector<16x16xf32>
    %685 = arith.addf %679, %684 : vector<16x16xf32>
    %c2_355 = arith.constant 2 : index
    %686 = memref.load %arg3[%c2_355] : memref<4xf32, #tpu.memory_space<smem>>
    %687 = vector.broadcast %686 : f32 to vector<16x16xf32>
    %688 = arith.addf %685, %687 : vector<16x16xf32>
    %cst_356 = arith.constant 0.000000e+00 : f32
    %689 = vector.broadcast %cst_356 : f32 to vector<16x16xf32>
    %690 = arith.subf %689, %688 : vector<16x16xf32>
    %691 = math.exp %690 : vector<16x16xf32>
    %cst_357 = arith.constant 1.000000e+00 : f32
    %692 = vector.broadcast %cst_357 : f32 to vector<16x16xf32>
    %693 = arith.addf %692, %691 : vector<16x16xf32>
    %cst_358 = arith.constant 1.000000e+00 : f32
    %694 = vector.broadcast %cst_358 : f32 to vector<16x16xf32>
    %695 = arith.divf %694, %693 : vector<16x16xf32>
    %696 = arith.mulf %688, %695 : vector<16x16xf32>
    %c2_359 = arith.constant 2 : index
    %c1_360 = arith.constant 1 : index
    %c1_361 = arith.constant 1 : index
    %697 = vector.load %arg8[%c2_359, %c1_360, %c1_361] : memref<4x18x18xf32, #tpu.memory_space<vmem>>, vector<1x16x16xf32>
    %698 = vector.shape_cast %697 : vector<1x16x16xf32> to vector<16x16xf32>
    %699 = vector.shape_cast %696 : vector<16x16xf32> to vector<1x16x16xf32>
    tpu.vector_store %arg8[%c2_359, %c1_360, %c1_361], %699 {strides = array<i32>} : memref<4x18x18xf32, #tpu.memory_space<vmem>>, vector<1x16x16xf32>,
    %cst_362 = arith.constant 0.000000e+00 : f32
    %700 = vector.broadcast %cst_362 : f32 to vector<16x16xf32>
    %c108 = arith.constant 108 : index
    %701 = memref.load %arg2[%c108] : memref<144xf32, #tpu.memory_space<smem>>
    %c0_363 = arith.constant 0 : index
    %c0_364 = arith.constant 0 : index
    %c0_365 = arith.constant 0 : index
    %702 = vector.load %arg7[%c0_363, %c0_364, %c0_365] : memref<4x18x18xf32, #tpu.memory_space<vmem>>, vector<1x16x16xf32>
    %703 = vector.shape_cast %702 : vector<1x16x16xf32> to vector<16x16xf32>
    %704 = vector.broadcast %701 : f32 to vector<16x16xf32>
    %705 = arith.mulf %704, %703 : vector<16x16xf32>
    %706 = arith.addf %700, %705 : vector<16x16xf32>
    %c109 = arith.constant 109 : index
    %707 = memref.load %arg2[%c109] : memref<144xf32, #tpu.memory_space<smem>>
    %c0_366 = arith.constant 0 : index
    %c0_367 = arith.constant 0 : index
    %c1_368 = arith.constant 1 : index
    %708 = vector.load %arg7[%c0_366, %c0_367, %c1_368] : memref<4x18x18xf32, #tpu.memory_space<vmem>>, vector<1x16x16xf32>
    %709 = vector.shape_cast %708 : vector<1x16x16xf32> to vector<16x16xf32>
    %710 = vector.broadcast %707 : f32 to vector<16x16xf32>
    %711 = arith.mulf %710, %709 : vector<16x16xf32>
    %712 = arith.addf %706, %711 : vector<16x16xf32>
    %c110 = arith.constant 110 : index
    %713 = memref.load %arg2[%c110] : memref<144xf32, #tpu.memory_space<smem>>
    %c0_369 = arith.constant 0 : index
    %c0_370 = arith.constant 0 : index
    %c2_371 = arith.constant 2 : index
    %714 = vector.load %arg7[%c0_369, %c0_370, %c2_371] : memref<4x18x18xf32, #tpu.memory_space<vmem>>, vector<1x16x16xf32>
    %715 = vector.shape_cast %714 : vector<1x16x16xf32> to vector<16x16xf32>
    %716 = vector.broadcast %713 : f32 to vector<16x16xf32>
    %717 = arith.mulf %716, %715 : vector<16x16xf32>
    %718 = arith.addf %712, %717 : vector<16x16xf32>
    %c111 = arith.constant 111 : index
    %719 = memref.load %arg2[%c111] : memref<144xf32, #tpu.memory_space<smem>>
    %c0_372 = arith.constant 0 : index
    %c1_373 = arith.constant 1 : index
    %c0_374 = arith.constant 0 : index
    %720 = vector.load %arg7[%c0_372, %c1_373, %c0_374] : memref<4x18x18xf32, #tpu.memory_space<vmem>>, vector<1x16x16xf32>
    %721 = vector.shape_cast %720 : vector<1x16x16xf32> to vector<16x16xf32>
    %722 = vector.broadcast %719 : f32 to vector<16x16xf32>
    %723 = arith.mulf %722, %721 : vector<16x16xf32>
    %724 = arith.addf %718, %723 : vector<16x16xf32>
    %c112 = arith.constant 112 : index
    %725 = memref.load %arg2[%c112] : memref<144xf32, #tpu.memory_space<smem>>
    %c0_375 = arith.constant 0 : index
    %c1_376 = arith.constant 1 : index
    %c1_377 = arith.constant 1 : index
    %726 = vector.load %arg7[%c0_375, %c1_376, %c1_377] : memref<4x18x18xf32, #tpu.memory_space<vmem>>, vector<1x16x16xf32>
    %727 = vector.shape_cast %726 : vector<1x16x16xf32> to vector<16x16xf32>
    %728 = vector.broadcast %725 : f32 to vector<16x16xf32>
    %729 = arith.mulf %728, %727 : vector<16x16xf32>
    %730 = arith.addf %724, %729 : vector<16x16xf32>
    %c113 = arith.constant 113 : index
    %731 = memref.load %arg2[%c113] : memref<144xf32, #tpu.memory_space<smem>>
    %c0_378 = arith.constant 0 : index
    %c1_379 = arith.constant 1 : index
    %c2_380 = arith.constant 2 : index
    %732 = vector.load %arg7[%c0_378, %c1_379, %c2_380] : memref<4x18x18xf32, #tpu.memory_space<vmem>>, vector<1x16x16xf32>
    %733 = vector.shape_cast %732 : vector<1x16x16xf32> to vector<16x16xf32>
    %734 = vector.broadcast %731 : f32 to vector<16x16xf32>
    %735 = arith.mulf %734, %733 : vector<16x16xf32>
    %736 = arith.addf %730, %735 : vector<16x16xf32>
    %c114 = arith.constant 114 : index
    %737 = memref.load %arg2[%c114] : memref<144xf32, #tpu.memory_space<smem>>
    %c0_381 = arith.constant 0 : index
    %c2_382 = arith.constant 2 : index
    %c0_383 = arith.constant 0 : index
    %738 = vector.load %arg7[%c0_381, %c2_382, %c0_383] : memref<4x18x18xf32, #tpu.memory_space<vmem>>, vector<1x16x16xf32>
    %739 = vector.shape_cast %738 : vector<1x16x16xf32> to vector<16x16xf32>
    %740 = vector.broadcast %737 : f32 to vector<16x16xf32>
    %741 = arith.mulf %740, %739 : vector<16x16xf32>
    %742 = arith.addf %736, %741 : vector<16x16xf32>
    %c115 = arith.constant 115 : index
    %743 = memref.load %arg2[%c115] : memref<144xf32, #tpu.memory_space<smem>>
    %c0_384 = arith.constant 0 : index
    %c2_385 = arith.constant 2 : index
    %c1_386 = arith.constant 1 : index
    %744 = vector.load %arg7[%c0_384, %c2_385, %c1_386] : memref<4x18x18xf32, #tpu.memory_space<vmem>>, vector<1x16x16xf32>
    %745 = vector.shape_cast %744 : vector<1x16x16xf32> to vector<16x16xf32>
    %746 = vector.broadcast %743 : f32 to vector<16x16xf32>
    %747 = arith.mulf %746, %745 : vector<16x16xf32>
    %748 = arith.addf %742, %747 : vector<16x16xf32>
    %c116 = arith.constant 116 : index
    %749 = memref.load %arg2[%c116] : memref<144xf32, #tpu.memory_space<smem>>
    %c0_387 = arith.constant 0 : index
    %c2_388 = arith.constant 2 : index
    %c2_389 = arith.constant 2 : index
    %750 = vector.load %arg7[%c0_387, %c2_388, %c2_389] : memref<4x18x18xf32, #tpu.memory_space<vmem>>, vector<1x16x16xf32>
    %751 = vector.shape_cast %750 : vector<1x16x16xf32> to vector<16x16xf32>
    %752 = vector.broadcast %749 : f32 to vector<16x16xf32>
    %753 = arith.mulf %752, %751 : vector<16x16xf32>
    %754 = arith.addf %748, %753 : vector<16x16xf32>
    %c117 = arith.constant 117 : index
    %755 = memref.load %arg2[%c117] : memref<144xf32, #tpu.memory_space<smem>>
    %c1_390 = arith.constant 1 : index
    %c0_391 = arith.constant 0 : index
    %c0_392 = arith.constant 0 : index
    %756 = vector.load %arg7[%c1_390, %c0_391, %c0_392] : memref<4x18x18xf32, #tpu.memory_space<vmem>>, vector<1x16x16xf32>
    %757 = vector.shape_cast %756 : vector<1x16x16xf32> to vector<16x16xf32>
    %758 = vector.broadcast %755 : f32 to vector<16x16xf32>
    %759 = arith.mulf %758, %757 : vector<16x16xf32>
    %760 = arith.addf %754, %759 : vector<16x16xf32>
    %c118 = arith.constant 118 : index
    %761 = memref.load %arg2[%c118] : memref<144xf32, #tpu.memory_space<smem>>
    %c1_393 = arith.constant 1 : index
    %c0_394 = arith.constant 0 : index
    %c1_395 = arith.constant 1 : index
    %762 = vector.load %arg7[%c1_393, %c0_394, %c1_395] : memref<4x18x18xf32, #tpu.memory_space<vmem>>, vector<1x16x16xf32>
    %763 = vector.shape_cast %762 : vector<1x16x16xf32> to vector<16x16xf32>
    %764 = vector.broadcast %761 : f32 to vector<16x16xf32>
    %765 = arith.mulf %764, %763 : vector<16x16xf32>
    %766 = arith.addf %760, %765 : vector<16x16xf32>
    %c119 = arith.constant 119 : index
    %767 = memref.load %arg2[%c119] : memref<144xf32, #tpu.memory_space<smem>>
    %c1_396 = arith.constant 1 : index
    %c0_397 = arith.constant 0 : index
    %c2_398 = arith.constant 2 : index
    %768 = vector.load %arg7[%c1_396, %c0_397, %c2_398] : memref<4x18x18xf32, #tpu.memory_space<vmem>>, vector<1x16x16xf32>
    %769 = vector.shape_cast %768 : vector<1x16x16xf32> to vector<16x16xf32>
    %770 = vector.broadcast %767 : f32 to vector<16x16xf32>
    %771 = arith.mulf %770, %769 : vector<16x16xf32>
    %772 = arith.addf %766, %771 : vector<16x16xf32>
    %c120 = arith.constant 120 : index
    %773 = memref.load %arg2[%c120] : memref<144xf32, #tpu.memory_space<smem>>
    %c1_399 = arith.constant 1 : index
    %c1_400 = arith.constant 1 : index
    %c0_401 = arith.constant 0 : index
    %774 = vector.load %arg7[%c1_399, %c1_400, %c0_401] : memref<4x18x18xf32, #tpu.memory_space<vmem>>, vector<1x16x16xf32>
    %775 = vector.shape_cast %774 : vector<1x16x16xf32> to vector<16x16xf32>
    %776 = vector.broadcast %773 : f32 to vector<16x16xf32>
    %777 = arith.mulf %776, %775 : vector<16x16xf32>
    %778 = arith.addf %772, %777 : vector<16x16xf32>
    %c121 = arith.constant 121 : index
    %779 = memref.load %arg2[%c121] : memref<144xf32, #tpu.memory_space<smem>>
    %c1_402 = arith.constant 1 : index
    %c1_403 = arith.constant 1 : index
    %c1_404 = arith.constant 1 : index
    %780 = vector.load %arg7[%c1_402, %c1_403, %c1_404] : memref<4x18x18xf32, #tpu.memory_space<vmem>>, vector<1x16x16xf32>
    %781 = vector.shape_cast %780 : vector<1x16x16xf32> to vector<16x16xf32>
    %782 = vector.broadcast %779 : f32 to vector<16x16xf32>
    %783 = arith.mulf %782, %781 : vector<16x16xf32>
    %784 = arith.addf %778, %783 : vector<16x16xf32>
    %c122 = arith.constant 122 : index
    %785 = memref.load %arg2[%c122] : memref<144xf32, #tpu.memory_space<smem>>
    %c1_405 = arith.constant 1 : index
    %c1_406 = arith.constant 1 : index
    %c2_407 = arith.constant 2 : index
    %786 = vector.load %arg7[%c1_405, %c1_406, %c2_407] : memref<4x18x18xf32, #tpu.memory_space<vmem>>, vector<1x16x16xf32>
    %787 = vector.shape_cast %786 : vector<1x16x16xf32> to vector<16x16xf32>
    %788 = vector.broadcast %785 : f32 to vector<16x16xf32>
    %789 = arith.mulf %788, %787 : vector<16x16xf32>
    %790 = arith.addf %784, %789 : vector<16x16xf32>
    %c123 = arith.constant 123 : index
    %791 = memref.load %arg2[%c123] : memref<144xf32, #tpu.memory_space<smem>>
    %c1_408 = arith.constant 1 : index
    %c2_409 = arith.constant 2 : index
    %c0_410 = arith.constant 0 : index
    %792 = vector.load %arg7[%c1_408, %c2_409, %c0_410] : memref<4x18x18xf32, #tpu.memory_space<vmem>>, vector<1x16x16xf32>
    %793 = vector.shape_cast %792 : vector<1x16x16xf32> to vector<16x16xf32>
    %794 = vector.broadcast %791 : f32 to vector<16x16xf32>
    %795 = arith.mulf %794, %793 : vector<16x16xf32>
    %796 = arith.addf %790, %795 : vector<16x16xf32>
    %c124 = arith.constant 124 : index
    %797 = memref.load %arg2[%c124] : memref<144xf32, #tpu.memory_space<smem>>
    %c1_411 = arith.constant 1 : index
    %c2_412 = arith.constant 2 : index
    %c1_413 = arith.constant 1 : index
    %798 = vector.load %arg7[%c1_411, %c2_412, %c1_413] : memref<4x18x18xf32, #tpu.memory_space<vmem>>, vector<1x16x16xf32>
    %799 = vector.shape_cast %798 : vector<1x16x16xf32> to vector<16x16xf32>
    %800 = vector.broadcast %797 : f32 to vector<16x16xf32>
    %801 = arith.mulf %800, %799 : vector<16x16xf32>
    %802 = arith.addf %796, %801 : vector<16x16xf32>
    %c125 = arith.constant 125 : index
    %803 = memref.load %arg2[%c125] : memref<144xf32, #tpu.memory_space<smem>>
    %c1_414 = arith.constant 1 : index
    %c2_415 = arith.constant 2 : index
    %c2_416 = arith.constant 2 : index
    %804 = vector.load %arg7[%c1_414, %c2_415, %c2_416] : memref<4x18x18xf32, #tpu.memory_space<vmem>>, vector<1x16x16xf32>
    %805 = vector.shape_cast %804 : vector<1x16x16xf32> to vector<16x16xf32>
    %806 = vector.broadcast %803 : f32 to vector<16x16xf32>
    %807 = arith.mulf %806, %805 : vector<16x16xf32>
    %808 = arith.addf %802, %807 : vector<16x16xf32>
    %c126 = arith.constant 126 : index
    %809 = memref.load %arg2[%c126] : memref<144xf32, #tpu.memory_space<smem>>
    %c2_417 = arith.constant 2 : index
    %c0_418 = arith.constant 0 : index
    %c0_419 = arith.constant 0 : index
    %810 = vector.load %arg7[%c2_417, %c0_418, %c0_419] : memref<4x18x18xf32, #tpu.memory_space<vmem>>, vector<1x16x16xf32>
    %811 = vector.shape_cast %810 : vector<1x16x16xf32> to vector<16x16xf32>
    %812 = vector.broadcast %809 : f32 to vector<16x16xf32>
    %813 = arith.mulf %812, %811 : vector<16x16xf32>
    %814 = arith.addf %808, %813 : vector<16x16xf32>
    %c127 = arith.constant 127 : index
    %815 = memref.load %arg2[%c127] : memref<144xf32, #tpu.memory_space<smem>>
    %c2_420 = arith.constant 2 : index
    %c0_421 = arith.constant 0 : index
    %c1_422 = arith.constant 1 : index
    %816 = vector.load %arg7[%c2_420, %c0_421, %c1_422] : memref<4x18x18xf32, #tpu.memory_space<vmem>>, vector<1x16x16xf32>
    %817 = vector.shape_cast %816 : vector<1x16x16xf32> to vector<16x16xf32>
    %818 = vector.broadcast %815 : f32 to vector<16x16xf32>
    %819 = arith.mulf %818, %817 : vector<16x16xf32>
    %820 = arith.addf %814, %819 : vector<16x16xf32>
    %c128 = arith.constant 128 : index
    %821 = memref.load %arg2[%c128] : memref<144xf32, #tpu.memory_space<smem>>
    %c2_423 = arith.constant 2 : index
    %c0_424 = arith.constant 0 : index
    %c2_425 = arith.constant 2 : index
    %822 = vector.load %arg7[%c2_423, %c0_424, %c2_425] : memref<4x18x18xf32, #tpu.memory_space<vmem>>, vector<1x16x16xf32>
    %823 = vector.shape_cast %822 : vector<1x16x16xf32> to vector<16x16xf32>
    %824 = vector.broadcast %821 : f32 to vector<16x16xf32>
    %825 = arith.mulf %824, %823 : vector<16x16xf32>
    %826 = arith.addf %820, %825 : vector<16x16xf32>
    %c129 = arith.constant 129 : index
    %827 = memref.load %arg2[%c129] : memref<144xf32, #tpu.memory_space<smem>>
    %c2_426 = arith.constant 2 : index
    %c1_427 = arith.constant 1 : index
    %c0_428 = arith.constant 0 : index
    %828 = vector.load %arg7[%c2_426, %c1_427, %c0_428] : memref<4x18x18xf32, #tpu.memory_space<vmem>>, vector<1x16x16xf32>
    %829 = vector.shape_cast %828 : vector<1x16x16xf32> to vector<16x16xf32>
    %830 = vector.broadcast %827 : f32 to vector<16x16xf32>
    %831 = arith.mulf %830, %829 : vector<16x16xf32>
    %832 = arith.addf %826, %831 : vector<16x16xf32>
    %c130 = arith.constant 130 : index
    %833 = memref.load %arg2[%c130] : memref<144xf32, #tpu.memory_space<smem>>
    %c2_429 = arith.constant 2 : index
    %c1_430 = arith.constant 1 : index
    %c1_431 = arith.constant 1 : index
    %834 = vector.load %arg7[%c2_429, %c1_430, %c1_431] : memref<4x18x18xf32, #tpu.memory_space<vmem>>, vector<1x16x16xf32>
    %835 = vector.shape_cast %834 : vector<1x16x16xf32> to vector<16x16xf32>
    %836 = vector.broadcast %833 : f32 to vector<16x16xf32>
    %837 = arith.mulf %836, %835 : vector<16x16xf32>
    %838 = arith.addf %832, %837 : vector<16x16xf32>
    %c131 = arith.constant 131 : index
    %839 = memref.load %arg2[%c131] : memref<144xf32, #tpu.memory_space<smem>>
    %c2_432 = arith.constant 2 : index
    %c1_433 = arith.constant 1 : index
    %c2_434 = arith.constant 2 : index
    %840 = vector.load %arg7[%c2_432, %c1_433, %c2_434] : memref<4x18x18xf32, #tpu.memory_space<vmem>>, vector<1x16x16xf32>
    %841 = vector.shape_cast %840 : vector<1x16x16xf32> to vector<16x16xf32>
    %842 = vector.broadcast %839 : f32 to vector<16x16xf32>
    %843 = arith.mulf %842, %841 : vector<16x16xf32>
    %844 = arith.addf %838, %843 : vector<16x16xf32>
    %c132 = arith.constant 132 : index
    %845 = memref.load %arg2[%c132] : memref<144xf32, #tpu.memory_space<smem>>
    %c2_435 = arith.constant 2 : index
    %c2_436 = arith.constant 2 : index
    %c0_437 = arith.constant 0 : index
    %846 = vector.load %arg7[%c2_435, %c2_436, %c0_437] : memref<4x18x18xf32, #tpu.memory_space<vmem>>, vector<1x16x16xf32>
    %847 = vector.shape_cast %846 : vector<1x16x16xf32> to vector<16x16xf32>
    %848 = vector.broadcast %845 : f32 to vector<16x16xf32>
    %849 = arith.mulf %848, %847 : vector<16x16xf32>
    %850 = arith.addf %844, %849 : vector<16x16xf32>
    %c133 = arith.constant 133 : index
    %851 = memref.load %arg2[%c133] : memref<144xf32, #tpu.memory_space<smem>>
    %c2_438 = arith.constant 2 : index
    %c2_439 = arith.constant 2 : index
    %c1_440 = arith.constant 1 : index
    %852 = vector.load %arg7[%c2_438, %c2_439, %c1_440] : memref<4x18x18xf32, #tpu.memory_space<vmem>>, vector<1x16x16xf32>
    %853 = vector.shape_cast %852 : vector<1x16x16xf32> to vector<16x16xf32>
    %854 = vector.broadcast %851 : f32 to vector<16x16xf32>
    %855 = arith.mulf %854, %853 : vector<16x16xf32>
    %856 = arith.addf %850, %855 : vector<16x16xf32>
    %c134 = arith.constant 134 : index
    %857 = memref.load %arg2[%c134] : memref<144xf32, #tpu.memory_space<smem>>
    %c2_441 = arith.constant 2 : index
    %c2_442 = arith.constant 2 : index
    %c2_443 = arith.constant 2 : index
    %858 = vector.load %arg7[%c2_441, %c2_442, %c2_443] : memref<4x18x18xf32, #tpu.memory_space<vmem>>, vector<1x16x16xf32>
    %859 = vector.shape_cast %858 : vector<1x16x16xf32> to vector<16x16xf32>
    %860 = vector.broadcast %857 : f32 to vector<16x16xf32>
    %861 = arith.mulf %860, %859 : vector<16x16xf32>
    %862 = arith.addf %856, %861 : vector<16x16xf32>
    %c135 = arith.constant 135 : index
    %863 = memref.load %arg2[%c135] : memref<144xf32, #tpu.memory_space<smem>>
    %c3_444 = arith.constant 3 : index
    %c0_445 = arith.constant 0 : index
    %c0_446 = arith.constant 0 : index
    %864 = vector.load %arg7[%c3_444, %c0_445, %c0_446] : memref<4x18x18xf32, #tpu.memory_space<vmem>>, vector<1x16x16xf32>
    %865 = vector.shape_cast %864 : vector<1x16x16xf32> to vector<16x16xf32>
    %866 = vector.broadcast %863 : f32 to vector<16x16xf32>
    %867 = arith.mulf %866, %865 : vector<16x16xf32>
    %868 = arith.addf %862, %867 : vector<16x16xf32>
    %c136 = arith.constant 136 : index
    %869 = memref.load %arg2[%c136] : memref<144xf32, #tpu.memory_space<smem>>
    %c3_447 = arith.constant 3 : index
    %c0_448 = arith.constant 0 : index
    %c1_449 = arith.constant 1 : index
    %870 = vector.load %arg7[%c3_447, %c0_448, %c1_449] : memref<4x18x18xf32, #tpu.memory_space<vmem>>, vector<1x16x16xf32>
    %871 = vector.shape_cast %870 : vector<1x16x16xf32> to vector<16x16xf32>
    %872 = vector.broadcast %869 : f32 to vector<16x16xf32>
    %873 = arith.mulf %872, %871 : vector<16x16xf32>
    %874 = arith.addf %868, %873 : vector<16x16xf32>
    %c137 = arith.constant 137 : index
    %875 = memref.load %arg2[%c137] : memref<144xf32, #tpu.memory_space<smem>>
    %c3_450 = arith.constant 3 : index
    %c0_451 = arith.constant 0 : index
    %c2_452 = arith.constant 2 : index
    %876 = vector.load %arg7[%c3_450, %c0_451, %c2_452] : memref<4x18x18xf32, #tpu.memory_space<vmem>>, vector<1x16x16xf32>
    %877 = vector.shape_cast %876 : vector<1x16x16xf32> to vector<16x16xf32>
    %878 = vector.broadcast %875 : f32 to vector<16x16xf32>
    %879 = arith.mulf %878, %877 : vector<16x16xf32>
    %880 = arith.addf %874, %879 : vector<16x16xf32>
    %c138 = arith.constant 138 : index
    %881 = memref.load %arg2[%c138] : memref<144xf32, #tpu.memory_space<smem>>
    %c3_453 = arith.constant 3 : index
    %c1_454 = arith.constant 1 : index
    %c0_455 = arith.constant 0 : index
    %882 = vector.load %arg7[%c3_453, %c1_454, %c0_455] : memref<4x18x18xf32, #tpu.memory_space<vmem>>, vector<1x16x16xf32>
    %883 = vector.shape_cast %882 : vector<1x16x16xf32> to vector<16x16xf32>
    %884 = vector.broadcast %881 : f32 to vector<16x16xf32>
    %885 = arith.mulf %884, %883 : vector<16x16xf32>
    %886 = arith.addf %880, %885 : vector<16x16xf32>
    %c139 = arith.constant 139 : index
    %887 = memref.load %arg2[%c139] : memref<144xf32, #tpu.memory_space<smem>>
    %c3_456 = arith.constant 3 : index
    %c1_457 = arith.constant 1 : index
    %c1_458 = arith.constant 1 : index
    %888 = vector.load %arg7[%c3_456, %c1_457, %c1_458] : memref<4x18x18xf32, #tpu.memory_space<vmem>>, vector<1x16x16xf32>
    %889 = vector.shape_cast %888 : vector<1x16x16xf32> to vector<16x16xf32>
    %890 = vector.broadcast %887 : f32 to vector<16x16xf32>
    %891 = arith.mulf %890, %889 : vector<16x16xf32>
    %892 = arith.addf %886, %891 : vector<16x16xf32>
    %c140 = arith.constant 140 : index
    %893 = memref.load %arg2[%c140] : memref<144xf32, #tpu.memory_space<smem>>
    %c3_459 = arith.constant 3 : index
    %c1_460 = arith.constant 1 : index
    %c2_461 = arith.constant 2 : index
    %894 = vector.load %arg7[%c3_459, %c1_460, %c2_461] : memref<4x18x18xf32, #tpu.memory_space<vmem>>, vector<1x16x16xf32>
    %895 = vector.shape_cast %894 : vector<1x16x16xf32> to vector<16x16xf32>
    %896 = vector.broadcast %893 : f32 to vector<16x16xf32>
    %897 = arith.mulf %896, %895 : vector<16x16xf32>
    %898 = arith.addf %892, %897 : vector<16x16xf32>
    %c141 = arith.constant 141 : index
    %899 = memref.load %arg2[%c141] : memref<144xf32, #tpu.memory_space<smem>>
    %c3_462 = arith.constant 3 : index
    %c2_463 = arith.constant 2 : index
    %c0_464 = arith.constant 0 : index
    %900 = vector.load %arg7[%c3_462, %c2_463, %c0_464] : memref<4x18x18xf32, #tpu.memory_space<vmem>>, vector<1x16x16xf32>
    %901 = vector.shape_cast %900 : vector<1x16x16xf32> to vector<16x16xf32>
    %902 = vector.broadcast %899 : f32 to vector<16x16xf32>
    %903 = arith.mulf %902, %901 : vector<16x16xf32>
    %904 = arith.addf %898, %903 : vector<16x16xf32>
    %c142 = arith.constant 142 : index
    %905 = memref.load %arg2[%c142] : memref<144xf32, #tpu.memory_space<smem>>
    %c3_465 = arith.constant 3 : index
    %c2_466 = arith.constant 2 : index
    %c1_467 = arith.constant 1 : index
    %906 = vector.load %arg7[%c3_465, %c2_466, %c1_467] : memref<4x18x18xf32, #tpu.memory_space<vmem>>, vector<1x16x16xf32>
    %907 = vector.shape_cast %906 : vector<1x16x16xf32> to vector<16x16xf32>
    %908 = vector.broadcast %905 : f32 to vector<16x16xf32>
    %909 = arith.mulf %908, %907 : vector<16x16xf32>
    %910 = arith.addf %904, %909 : vector<16x16xf32>
    %c143 = arith.constant 143 : index
    %911 = memref.load %arg2[%c143] : memref<144xf32, #tpu.memory_space<smem>>
    %c3_468 = arith.constant 3 : index
    %c2_469 = arith.constant 2 : index
    %c2_470 = arith.constant 2 : index
    %912 = vector.load %arg7[%c3_468, %c2_469, %c2_470] : memref<4x18x18xf32, #tpu.memory_space<vmem>>, vector<1x16x16xf32>
    %913 = vector.shape_cast %912 : vector<1x16x16xf32> to vector<16x16xf32>
    %914 = vector.broadcast %911 : f32 to vector<16x16xf32>
    %915 = arith.mulf %914, %913 : vector<16x16xf32>
    %916 = arith.addf %910, %915 : vector<16x16xf32>
    %c3_471 = arith.constant 3 : index
    %917 = memref.load %arg3[%c3_471] : memref<4xf32, #tpu.memory_space<smem>>
    %918 = vector.broadcast %917 : f32 to vector<16x16xf32>
    %919 = arith.addf %916, %918 : vector<16x16xf32>
    %cst_472 = arith.constant 0.000000e+00 : f32
    %920 = vector.broadcast %cst_472 : f32 to vector<16x16xf32>
    %921 = arith.subf %920, %919 : vector<16x16xf32>
    %922 = math.exp %921 : vector<16x16xf32>
    %cst_473 = arith.constant 1.000000e+00 : f32
    %923 = vector.broadcast %cst_473 : f32 to vector<16x16xf32>
    %924 = arith.addf %923, %922 : vector<16x16xf32>
    %cst_474 = arith.constant 1.000000e+00 : f32
    %925 = vector.broadcast %cst_474 : f32 to vector<16x16xf32>
    %926 = arith.divf %925, %924 : vector<16x16xf32>
    %927 = arith.mulf %919, %926 : vector<16x16xf32>
    %c3_475 = arith.constant 3 : index
    %c1_476 = arith.constant 1 : index
    %c1_477 = arith.constant 1 : index
    %928 = vector.load %arg8[%c3_475, %c1_476, %c1_477] : memref<4x18x18xf32, #tpu.memory_space<vmem>>, vector<1x16x16xf32>
    %929 = vector.shape_cast %928 : vector<1x16x16xf32> to vector<16x16xf32>
    %930 = vector.shape_cast %927 : vector<16x16xf32> to vector<1x16x16xf32>
    tpu.vector_store %arg8[%c3_475, %c1_476, %c1_477], %930 {strides = array<i32>} : memref<4x18x18xf32, #tpu.memory_space<vmem>>, vector<1x16x16xf32>,
    %cst_478 = arith.constant 0.000000e+00 : f32
    %931 = vector.broadcast %cst_478 : f32 to vector<16x16xf32>
    %c0_479 = arith.constant 0 : index
    %932 = memref.load %arg4[%c0_479] : memref<144xf32, #tpu.memory_space<smem>>
    %c0_480 = arith.constant 0 : index
    %c0_481 = arith.constant 0 : index
    %c0_482 = arith.constant 0 : index
    %933 = vector.load %arg8[%c0_480, %c0_481, %c0_482] : memref<4x18x18xf32, #tpu.memory_space<vmem>>, vector<1x16x16xf32>
    %934 = vector.shape_cast %933 : vector<1x16x16xf32> to vector<16x16xf32>
    %935 = vector.broadcast %932 : f32 to vector<16x16xf32>
    %936 = arith.mulf %935, %934 : vector<16x16xf32>
    %937 = arith.addf %931, %936 : vector<16x16xf32>
    %c1_483 = arith.constant 1 : index
    %938 = memref.load %arg4[%c1_483] : memref<144xf32, #tpu.memory_space<smem>>
    %c0_484 = arith.constant 0 : index
    %c0_485 = arith.constant 0 : index
    %c1_486 = arith.constant 1 : index
    %939 = vector.load %arg8[%c0_484, %c0_485, %c1_486] : memref<4x18x18xf32, #tpu.memory_space<vmem>>, vector<1x16x16xf32>
    %940 = vector.shape_cast %939 : vector<1x16x16xf32> to vector<16x16xf32>
    %941 = vector.broadcast %938 : f32 to vector<16x16xf32>
    %942 = arith.mulf %941, %940 : vector<16x16xf32>
    %943 = arith.addf %937, %942 : vector<16x16xf32>
    %c2_487 = arith.constant 2 : index
    %944 = memref.load %arg4[%c2_487] : memref<144xf32, #tpu.memory_space<smem>>
    %c0_488 = arith.constant 0 : index
    %c0_489 = arith.constant 0 : index
    %c2_490 = arith.constant 2 : index
    %945 = vector.load %arg8[%c0_488, %c0_489, %c2_490] : memref<4x18x18xf32, #tpu.memory_space<vmem>>, vector<1x16x16xf32>
    %946 = vector.shape_cast %945 : vector<1x16x16xf32> to vector<16x16xf32>
    %947 = vector.broadcast %944 : f32 to vector<16x16xf32>
    %948 = arith.mulf %947, %946 : vector<16x16xf32>
    %949 = arith.addf %943, %948 : vector<16x16xf32>
    %c3_491 = arith.constant 3 : index
    %950 = memref.load %arg4[%c3_491] : memref<144xf32, #tpu.memory_space<smem>>
    %c0_492 = arith.constant 0 : index
    %c1_493 = arith.constant 1 : index
    %c0_494 = arith.constant 0 : index
    %951 = vector.load %arg8[%c0_492, %c1_493, %c0_494] : memref<4x18x18xf32, #tpu.memory_space<vmem>>, vector<1x16x16xf32>
    %952 = vector.shape_cast %951 : vector<1x16x16xf32> to vector<16x16xf32>
    %953 = vector.broadcast %950 : f32 to vector<16x16xf32>
    %954 = arith.mulf %953, %952 : vector<16x16xf32>
    %955 = arith.addf %949, %954 : vector<16x16xf32>
    %c4_495 = arith.constant 4 : index
    %956 = memref.load %arg4[%c4_495] : memref<144xf32, #tpu.memory_space<smem>>
    %c0_496 = arith.constant 0 : index
    %c1_497 = arith.constant 1 : index
    %c1_498 = arith.constant 1 : index
    %957 = vector.load %arg8[%c0_496, %c1_497, %c1_498] : memref<4x18x18xf32, #tpu.memory_space<vmem>>, vector<1x16x16xf32>
    %958 = vector.shape_cast %957 : vector<1x16x16xf32> to vector<16x16xf32>
    %959 = vector.broadcast %956 : f32 to vector<16x16xf32>
    %960 = arith.mulf %959, %958 : vector<16x16xf32>
    %961 = arith.addf %955, %960 : vector<16x16xf32>
    %c5_499 = arith.constant 5 : index
    %962 = memref.load %arg4[%c5_499] : memref<144xf32, #tpu.memory_space<smem>>
    %c0_500 = arith.constant 0 : index
    %c1_501 = arith.constant 1 : index
    %c2_502 = arith.constant 2 : index
    %963 = vector.load %arg8[%c0_500, %c1_501, %c2_502] : memref<4x18x18xf32, #tpu.memory_space<vmem>>, vector<1x16x16xf32>
    %964 = vector.shape_cast %963 : vector<1x16x16xf32> to vector<16x16xf32>
    %965 = vector.broadcast %962 : f32 to vector<16x16xf32>
    %966 = arith.mulf %965, %964 : vector<16x16xf32>
    %967 = arith.addf %961, %966 : vector<16x16xf32>
    %c6_503 = arith.constant 6 : index
    %968 = memref.load %arg4[%c6_503] : memref<144xf32, #tpu.memory_space<smem>>
    %c0_504 = arith.constant 0 : index
    %c2_505 = arith.constant 2 : index
    %c0_506 = arith.constant 0 : index
    %969 = vector.load %arg8[%c0_504, %c2_505, %c0_506] : memref<4x18x18xf32, #tpu.memory_space<vmem>>, vector<1x16x16xf32>
    %970 = vector.shape_cast %969 : vector<1x16x16xf32> to vector<16x16xf32>
    %971 = vector.broadcast %968 : f32 to vector<16x16xf32>
    %972 = arith.mulf %971, %970 : vector<16x16xf32>
    %973 = arith.addf %967, %972 : vector<16x16xf32>
    %c7_507 = arith.constant 7 : index
    %974 = memref.load %arg4[%c7_507] : memref<144xf32, #tpu.memory_space<smem>>
    %c0_508 = arith.constant 0 : index
    %c2_509 = arith.constant 2 : index
    %c1_510 = arith.constant 1 : index
    %975 = vector.load %arg8[%c0_508, %c2_509, %c1_510] : memref<4x18x18xf32, #tpu.memory_space<vmem>>, vector<1x16x16xf32>
    %976 = vector.shape_cast %975 : vector<1x16x16xf32> to vector<16x16xf32>
    %977 = vector.broadcast %974 : f32 to vector<16x16xf32>
    %978 = arith.mulf %977, %976 : vector<16x16xf32>
    %979 = arith.addf %973, %978 : vector<16x16xf32>
    %c8_511 = arith.constant 8 : index
    %980 = memref.load %arg4[%c8_511] : memref<144xf32, #tpu.memory_space<smem>>
    %c0_512 = arith.constant 0 : index
    %c2_513 = arith.constant 2 : index
    %c2_514 = arith.constant 2 : index
    %981 = vector.load %arg8[%c0_512, %c2_513, %c2_514] : memref<4x18x18xf32, #tpu.memory_space<vmem>>, vector<1x16x16xf32>
    %982 = vector.shape_cast %981 : vector<1x16x16xf32> to vector<16x16xf32>
    %983 = vector.broadcast %980 : f32 to vector<16x16xf32>
    %984 = arith.mulf %983, %982 : vector<16x16xf32>
    %985 = arith.addf %979, %984 : vector<16x16xf32>
    %c9_515 = arith.constant 9 : index
    %986 = memref.load %arg4[%c9_515] : memref<144xf32, #tpu.memory_space<smem>>
    %c1_516 = arith.constant 1 : index
    %c0_517 = arith.constant 0 : index
    %c0_518 = arith.constant 0 : index
    %987 = vector.load %arg8[%c1_516, %c0_517, %c0_518] : memref<4x18x18xf32, #tpu.memory_space<vmem>>, vector<1x16x16xf32>
    %988 = vector.shape_cast %987 : vector<1x16x16xf32> to vector<16x16xf32>
    %989 = vector.broadcast %986 : f32 to vector<16x16xf32>
    %990 = arith.mulf %989, %988 : vector<16x16xf32>
    %991 = arith.addf %985, %990 : vector<16x16xf32>
    %c10_519 = arith.constant 10 : index
    %992 = memref.load %arg4[%c10_519] : memref<144xf32, #tpu.memory_space<smem>>
    %c1_520 = arith.constant 1 : index
    %c0_521 = arith.constant 0 : index
    %c1_522 = arith.constant 1 : index
    %993 = vector.load %arg8[%c1_520, %c0_521, %c1_522] : memref<4x18x18xf32, #tpu.memory_space<vmem>>, vector<1x16x16xf32>
    %994 = vector.shape_cast %993 : vector<1x16x16xf32> to vector<16x16xf32>
    %995 = vector.broadcast %992 : f32 to vector<16x16xf32>
    %996 = arith.mulf %995, %994 : vector<16x16xf32>
    %997 = arith.addf %991, %996 : vector<16x16xf32>
    %c11_523 = arith.constant 11 : index
    %998 = memref.load %arg4[%c11_523] : memref<144xf32, #tpu.memory_space<smem>>
    %c1_524 = arith.constant 1 : index
    %c0_525 = arith.constant 0 : index
    %c2_526 = arith.constant 2 : index
    %999 = vector.load %arg8[%c1_524, %c0_525, %c2_526] : memref<4x18x18xf32, #tpu.memory_space<vmem>>, vector<1x16x16xf32>
    %1000 = vector.shape_cast %999 : vector<1x16x16xf32> to vector<16x16xf32>
    %1001 = vector.broadcast %998 : f32 to vector<16x16xf32>
    %1002 = arith.mulf %1001, %1000 : vector<16x16xf32>
    %1003 = arith.addf %997, %1002 : vector<16x16xf32>
    %c12_527 = arith.constant 12 : index
    %1004 = memref.load %arg4[%c12_527] : memref<144xf32, #tpu.memory_space<smem>>
    %c1_528 = arith.constant 1 : index
    %c1_529 = arith.constant 1 : index
    %c0_530 = arith.constant 0 : index
    %1005 = vector.load %arg8[%c1_528, %c1_529, %c0_530] : memref<4x18x18xf32, #tpu.memory_space<vmem>>, vector<1x16x16xf32>
    %1006 = vector.shape_cast %1005 : vector<1x16x16xf32> to vector<16x16xf32>
    %1007 = vector.broadcast %1004 : f32 to vector<16x16xf32>
    %1008 = arith.mulf %1007, %1006 : vector<16x16xf32>
    %1009 = arith.addf %1003, %1008 : vector<16x16xf32>
    %c13_531 = arith.constant 13 : index
    %1010 = memref.load %arg4[%c13_531] : memref<144xf32, #tpu.memory_space<smem>>
    %c1_532 = arith.constant 1 : index
    %c1_533 = arith.constant 1 : index
    %c1_534 = arith.constant 1 : index
    %1011 = vector.load %arg8[%c1_532, %c1_533, %c1_534] : memref<4x18x18xf32, #tpu.memory_space<vmem>>, vector<1x16x16xf32>
    %1012 = vector.shape_cast %1011 : vector<1x16x16xf32> to vector<16x16xf32>
    %1013 = vector.broadcast %1010 : f32 to vector<16x16xf32>
    %1014 = arith.mulf %1013, %1012 : vector<16x16xf32>
    %1015 = arith.addf %1009, %1014 : vector<16x16xf32>
    %c14_535 = arith.constant 14 : index
    %1016 = memref.load %arg4[%c14_535] : memref<144xf32, #tpu.memory_space<smem>>
    %c1_536 = arith.constant 1 : index
    %c1_537 = arith.constant 1 : index
    %c2_538 = arith.constant 2 : index
    %1017 = vector.load %arg8[%c1_536, %c1_537, %c2_538] : memref<4x18x18xf32, #tpu.memory_space<vmem>>, vector<1x16x16xf32>
    %1018 = vector.shape_cast %1017 : vector<1x16x16xf32> to vector<16x16xf32>
    %1019 = vector.broadcast %1016 : f32 to vector<16x16xf32>
    %1020 = arith.mulf %1019, %1018 : vector<16x16xf32>
    %1021 = arith.addf %1015, %1020 : vector<16x16xf32>
    %c15_539 = arith.constant 15 : index
    %1022 = memref.load %arg4[%c15_539] : memref<144xf32, #tpu.memory_space<smem>>
    %c1_540 = arith.constant 1 : index
    %c2_541 = arith.constant 2 : index
    %c0_542 = arith.constant 0 : index
    %1023 = vector.load %arg8[%c1_540, %c2_541, %c0_542] : memref<4x18x18xf32, #tpu.memory_space<vmem>>, vector<1x16x16xf32>
    %1024 = vector.shape_cast %1023 : vector<1x16x16xf32> to vector<16x16xf32>
    %1025 = vector.broadcast %1022 : f32 to vector<16x16xf32>
    %1026 = arith.mulf %1025, %1024 : vector<16x16xf32>
    %1027 = arith.addf %1021, %1026 : vector<16x16xf32>
    %c16_543 = arith.constant 16 : index
    %1028 = memref.load %arg4[%c16_543] : memref<144xf32, #tpu.memory_space<smem>>
    %c1_544 = arith.constant 1 : index
    %c2_545 = arith.constant 2 : index
    %c1_546 = arith.constant 1 : index
    %1029 = vector.load %arg8[%c1_544, %c2_545, %c1_546] : memref<4x18x18xf32, #tpu.memory_space<vmem>>, vector<1x16x16xf32>
    %1030 = vector.shape_cast %1029 : vector<1x16x16xf32> to vector<16x16xf32>
    %1031 = vector.broadcast %1028 : f32 to vector<16x16xf32>
    %1032 = arith.mulf %1031, %1030 : vector<16x16xf32>
    %1033 = arith.addf %1027, %1032 : vector<16x16xf32>
    %c17_547 = arith.constant 17 : index
    %1034 = memref.load %arg4[%c17_547] : memref<144xf32, #tpu.memory_space<smem>>
    %c1_548 = arith.constant 1 : index
    %c2_549 = arith.constant 2 : index
    %c2_550 = arith.constant 2 : index
    %1035 = vector.load %arg8[%c1_548, %c2_549, %c2_550] : memref<4x18x18xf32, #tpu.memory_space<vmem>>, vector<1x16x16xf32>
    %1036 = vector.shape_cast %1035 : vector<1x16x16xf32> to vector<16x16xf32>
    %1037 = vector.broadcast %1034 : f32 to vector<16x16xf32>
    %1038 = arith.mulf %1037, %1036 : vector<16x16xf32>
    %1039 = arith.addf %1033, %1038 : vector<16x16xf32>
    %c18_551 = arith.constant 18 : index
    %1040 = memref.load %arg4[%c18_551] : memref<144xf32, #tpu.memory_space<smem>>
    %c2_552 = arith.constant 2 : index
    %c0_553 = arith.constant 0 : index
    %c0_554 = arith.constant 0 : index
    %1041 = vector.load %arg8[%c2_552, %c0_553, %c0_554] : memref<4x18x18xf32, #tpu.memory_space<vmem>>, vector<1x16x16xf32>
    %1042 = vector.shape_cast %1041 : vector<1x16x16xf32> to vector<16x16xf32>
    %1043 = vector.broadcast %1040 : f32 to vector<16x16xf32>
    %1044 = arith.mulf %1043, %1042 : vector<16x16xf32>
    %1045 = arith.addf %1039, %1044 : vector<16x16xf32>
    %c19_555 = arith.constant 19 : index
    %1046 = memref.load %arg4[%c19_555] : memref<144xf32, #tpu.memory_space<smem>>
    %c2_556 = arith.constant 2 : index
    %c0_557 = arith.constant 0 : index
    %c1_558 = arith.constant 1 : index
    %1047 = vector.load %arg8[%c2_556, %c0_557, %c1_558] : memref<4x18x18xf32, #tpu.memory_space<vmem>>, vector<1x16x16xf32>
    %1048 = vector.shape_cast %1047 : vector<1x16x16xf32> to vector<16x16xf32>
    %1049 = vector.broadcast %1046 : f32 to vector<16x16xf32>
    %1050 = arith.mulf %1049, %1048 : vector<16x16xf32>
    %1051 = arith.addf %1045, %1050 : vector<16x16xf32>
    %c20_559 = arith.constant 20 : index
    %1052 = memref.load %arg4[%c20_559] : memref<144xf32, #tpu.memory_space<smem>>
    %c2_560 = arith.constant 2 : index
    %c0_561 = arith.constant 0 : index
    %c2_562 = arith.constant 2 : index
    %1053 = vector.load %arg8[%c2_560, %c0_561, %c2_562] : memref<4x18x18xf32, #tpu.memory_space<vmem>>, vector<1x16x16xf32>
    %1054 = vector.shape_cast %1053 : vector<1x16x16xf32> to vector<16x16xf32>
    %1055 = vector.broadcast %1052 : f32 to vector<16x16xf32>
    %1056 = arith.mulf %1055, %1054 : vector<16x16xf32>
    %1057 = arith.addf %1051, %1056 : vector<16x16xf32>
    %c21_563 = arith.constant 21 : index
    %1058 = memref.load %arg4[%c21_563] : memref<144xf32, #tpu.memory_space<smem>>
    %c2_564 = arith.constant 2 : index
    %c1_565 = arith.constant 1 : index
    %c0_566 = arith.constant 0 : index
    %1059 = vector.load %arg8[%c2_564, %c1_565, %c0_566] : memref<4x18x18xf32, #tpu.memory_space<vmem>>, vector<1x16x16xf32>
    %1060 = vector.shape_cast %1059 : vector<1x16x16xf32> to vector<16x16xf32>
    %1061 = vector.broadcast %1058 : f32 to vector<16x16xf32>
    %1062 = arith.mulf %1061, %1060 : vector<16x16xf32>
    %1063 = arith.addf %1057, %1062 : vector<16x16xf32>
    %c22_567 = arith.constant 22 : index
    %1064 = memref.load %arg4[%c22_567] : memref<144xf32, #tpu.memory_space<smem>>
    %c2_568 = arith.constant 2 : index
    %c1_569 = arith.constant 1 : index
    %c1_570 = arith.constant 1 : index
    %1065 = vector.load %arg8[%c2_568, %c1_569, %c1_570] : memref<4x18x18xf32, #tpu.memory_space<vmem>>, vector<1x16x16xf32>
    %1066 = vector.shape_cast %1065 : vector<1x16x16xf32> to vector<16x16xf32>
    %1067 = vector.broadcast %1064 : f32 to vector<16x16xf32>
    %1068 = arith.mulf %1067, %1066 : vector<16x16xf32>
    %1069 = arith.addf %1063, %1068 : vector<16x16xf32>
    %c23_571 = arith.constant 23 : index
    %1070 = memref.load %arg4[%c23_571] : memref<144xf32, #tpu.memory_space<smem>>
    %c2_572 = arith.constant 2 : index
    %c1_573 = arith.constant 1 : index
    %c2_574 = arith.constant 2 : index
    %1071 = vector.load %arg8[%c2_572, %c1_573, %c2_574] : memref<4x18x18xf32, #tpu.memory_space<vmem>>, vector<1x16x16xf32>
    %1072 = vector.shape_cast %1071 : vector<1x16x16xf32> to vector<16x16xf32>
    %1073 = vector.broadcast %1070 : f32 to vector<16x16xf32>
    %1074 = arith.mulf %1073, %1072 : vector<16x16xf32>
    %1075 = arith.addf %1069, %1074 : vector<16x16xf32>
    %c24_575 = arith.constant 24 : index
    %1076 = memref.load %arg4[%c24_575] : memref<144xf32, #tpu.memory_space<smem>>
    %c2_576 = arith.constant 2 : index
    %c2_577 = arith.constant 2 : index
    %c0_578 = arith.constant 0 : index
    %1077 = vector.load %arg8[%c2_576, %c2_577, %c0_578] : memref<4x18x18xf32, #tpu.memory_space<vmem>>, vector<1x16x16xf32>
    %1078 = vector.shape_cast %1077 : vector<1x16x16xf32> to vector<16x16xf32>
    %1079 = vector.broadcast %1076 : f32 to vector<16x16xf32>
    %1080 = arith.mulf %1079, %1078 : vector<16x16xf32>
    %1081 = arith.addf %1075, %1080 : vector<16x16xf32>
    %c25_579 = arith.constant 25 : index
    %1082 = memref.load %arg4[%c25_579] : memref<144xf32, #tpu.memory_space<smem>>
    %c2_580 = arith.constant 2 : index
    %c2_581 = arith.constant 2 : index
    %c1_582 = arith.constant 1 : index
    %1083 = vector.load %arg8[%c2_580, %c2_581, %c1_582] : memref<4x18x18xf32, #tpu.memory_space<vmem>>, vector<1x16x16xf32>
    %1084 = vector.shape_cast %1083 : vector<1x16x16xf32> to vector<16x16xf32>
    %1085 = vector.broadcast %1082 : f32 to vector<16x16xf32>
    %1086 = arith.mulf %1085, %1084 : vector<16x16xf32>
    %1087 = arith.addf %1081, %1086 : vector<16x16xf32>
    %c26_583 = arith.constant 26 : index
    %1088 = memref.load %arg4[%c26_583] : memref<144xf32, #tpu.memory_space<smem>>
    %c2_584 = arith.constant 2 : index
    %c2_585 = arith.constant 2 : index
    %c2_586 = arith.constant 2 : index
    %1089 = vector.load %arg8[%c2_584, %c2_585, %c2_586] : memref<4x18x18xf32, #tpu.memory_space<vmem>>, vector<1x16x16xf32>
    %1090 = vector.shape_cast %1089 : vector<1x16x16xf32> to vector<16x16xf32>
    %1091 = vector.broadcast %1088 : f32 to vector<16x16xf32>
    %1092 = arith.mulf %1091, %1090 : vector<16x16xf32>
    %1093 = arith.addf %1087, %1092 : vector<16x16xf32>
    %c27_587 = arith.constant 27 : index
    %1094 = memref.load %arg4[%c27_587] : memref<144xf32, #tpu.memory_space<smem>>
    %c3_588 = arith.constant 3 : index
    %c0_589 = arith.constant 0 : index
    %c0_590 = arith.constant 0 : index
    %1095 = vector.load %arg8[%c3_588, %c0_589, %c0_590] : memref<4x18x18xf32, #tpu.memory_space<vmem>>, vector<1x16x16xf32>
    %1096 = vector.shape_cast %1095 : vector<1x16x16xf32> to vector<16x16xf32>
    %1097 = vector.broadcast %1094 : f32 to vector<16x16xf32>
    %1098 = arith.mulf %1097, %1096 : vector<16x16xf32>
    %1099 = arith.addf %1093, %1098 : vector<16x16xf32>
    %c28_591 = arith.constant 28 : index
    %1100 = memref.load %arg4[%c28_591] : memref<144xf32, #tpu.memory_space<smem>>
    %c3_592 = arith.constant 3 : index
    %c0_593 = arith.constant 0 : index
    %c1_594 = arith.constant 1 : index
    %1101 = vector.load %arg8[%c3_592, %c0_593, %c1_594] : memref<4x18x18xf32, #tpu.memory_space<vmem>>, vector<1x16x16xf32>
    %1102 = vector.shape_cast %1101 : vector<1x16x16xf32> to vector<16x16xf32>
    %1103 = vector.broadcast %1100 : f32 to vector<16x16xf32>
    %1104 = arith.mulf %1103, %1102 : vector<16x16xf32>
    %1105 = arith.addf %1099, %1104 : vector<16x16xf32>
    %c29_595 = arith.constant 29 : index
    %1106 = memref.load %arg4[%c29_595] : memref<144xf32, #tpu.memory_space<smem>>
    %c3_596 = arith.constant 3 : index
    %c0_597 = arith.constant 0 : index
    %c2_598 = arith.constant 2 : index
    %1107 = vector.load %arg8[%c3_596, %c0_597, %c2_598] : memref<4x18x18xf32, #tpu.memory_space<vmem>>, vector<1x16x16xf32>
    %1108 = vector.shape_cast %1107 : vector<1x16x16xf32> to vector<16x16xf32>
    %1109 = vector.broadcast %1106 : f32 to vector<16x16xf32>
    %1110 = arith.mulf %1109, %1108 : vector<16x16xf32>
    %1111 = arith.addf %1105, %1110 : vector<16x16xf32>
    %c30_599 = arith.constant 30 : index
    %1112 = memref.load %arg4[%c30_599] : memref<144xf32, #tpu.memory_space<smem>>
    %c3_600 = arith.constant 3 : index
    %c1_601 = arith.constant 1 : index
    %c0_602 = arith.constant 0 : index
    %1113 = vector.load %arg8[%c3_600, %c1_601, %c0_602] : memref<4x18x18xf32, #tpu.memory_space<vmem>>, vector<1x16x16xf32>
    %1114 = vector.shape_cast %1113 : vector<1x16x16xf32> to vector<16x16xf32>
    %1115 = vector.broadcast %1112 : f32 to vector<16x16xf32>
    %1116 = arith.mulf %1115, %1114 : vector<16x16xf32>
    %1117 = arith.addf %1111, %1116 : vector<16x16xf32>
    %c31_603 = arith.constant 31 : index
    %1118 = memref.load %arg4[%c31_603] : memref<144xf32, #tpu.memory_space<smem>>
    %c3_604 = arith.constant 3 : index
    %c1_605 = arith.constant 1 : index
    %c1_606 = arith.constant 1 : index
    %1119 = vector.load %arg8[%c3_604, %c1_605, %c1_606] : memref<4x18x18xf32, #tpu.memory_space<vmem>>, vector<1x16x16xf32>
    %1120 = vector.shape_cast %1119 : vector<1x16x16xf32> to vector<16x16xf32>
    %1121 = vector.broadcast %1118 : f32 to vector<16x16xf32>
    %1122 = arith.mulf %1121, %1120 : vector<16x16xf32>
    %1123 = arith.addf %1117, %1122 : vector<16x16xf32>
    %c32_607 = arith.constant 32 : index
    %1124 = memref.load %arg4[%c32_607] : memref<144xf32, #tpu.memory_space<smem>>
    %c3_608 = arith.constant 3 : index
    %c1_609 = arith.constant 1 : index
    %c2_610 = arith.constant 2 : index
    %1125 = vector.load %arg8[%c3_608, %c1_609, %c2_610] : memref<4x18x18xf32, #tpu.memory_space<vmem>>, vector<1x16x16xf32>
    %1126 = vector.shape_cast %1125 : vector<1x16x16xf32> to vector<16x16xf32>
    %1127 = vector.broadcast %1124 : f32 to vector<16x16xf32>
    %1128 = arith.mulf %1127, %1126 : vector<16x16xf32>
    %1129 = arith.addf %1123, %1128 : vector<16x16xf32>
    %c33_611 = arith.constant 33 : index
    %1130 = memref.load %arg4[%c33_611] : memref<144xf32, #tpu.memory_space<smem>>
    %c3_612 = arith.constant 3 : index
    %c2_613 = arith.constant 2 : index
    %c0_614 = arith.constant 0 : index
    %1131 = vector.load %arg8[%c3_612, %c2_613, %c0_614] : memref<4x18x18xf32, #tpu.memory_space<vmem>>, vector<1x16x16xf32>
    %1132 = vector.shape_cast %1131 : vector<1x16x16xf32> to vector<16x16xf32>
    %1133 = vector.broadcast %1130 : f32 to vector<16x16xf32>
    %1134 = arith.mulf %1133, %1132 : vector<16x16xf32>
    %1135 = arith.addf %1129, %1134 : vector<16x16xf32>
    %c34_615 = arith.constant 34 : index
    %1136 = memref.load %arg4[%c34_615] : memref<144xf32, #tpu.memory_space<smem>>
    %c3_616 = arith.constant 3 : index
    %c2_617 = arith.constant 2 : index
    %c1_618 = arith.constant 1 : index
    %1137 = vector.load %arg8[%c3_616, %c2_617, %c1_618] : memref<4x18x18xf32, #tpu.memory_space<vmem>>, vector<1x16x16xf32>
    %1138 = vector.shape_cast %1137 : vector<1x16x16xf32> to vector<16x16xf32>
    %1139 = vector.broadcast %1136 : f32 to vector<16x16xf32>
    %1140 = arith.mulf %1139, %1138 : vector<16x16xf32>
    %1141 = arith.addf %1135, %1140 : vector<16x16xf32>
    %c35_619 = arith.constant 35 : index
    %1142 = memref.load %arg4[%c35_619] : memref<144xf32, #tpu.memory_space<smem>>
    %c3_620 = arith.constant 3 : index
    %c2_621 = arith.constant 2 : index
    %c2_622 = arith.constant 2 : index
    %1143 = vector.load %arg8[%c3_620, %c2_621, %c2_622] : memref<4x18x18xf32, #tpu.memory_space<vmem>>, vector<1x16x16xf32>
    %1144 = vector.shape_cast %1143 : vector<1x16x16xf32> to vector<16x16xf32>
    %1145 = vector.broadcast %1142 : f32 to vector<16x16xf32>
    %1146 = arith.mulf %1145, %1144 : vector<16x16xf32>
    %1147 = arith.addf %1141, %1146 : vector<16x16xf32>
    %c0_623 = arith.constant 0 : index
    %1148 = memref.load %arg5[%c0_623] : memref<4xf32, #tpu.memory_space<smem>>
    %1149 = vector.broadcast %1148 : f32 to vector<16x16xf32>
    %1150 = arith.addf %1147, %1149 : vector<16x16xf32>
    %1151 = vector.extract_strided_slice %5 {offsets = [0, 0, 0], sizes = [1, 16, 16], strides = [1, 1, 1]} : vector<4x16x16xf32> to vector<1x16x16xf32>
    %1152 = vector.shape_cast %1151 : vector<1x16x16xf32> to vector<16x16xf32>
    %1153 = arith.addf %1150, %1152 : vector<16x16xf32>
    %cst_624 = arith.constant 0.000000e+00 : f32
    %1154 = vector.broadcast %cst_624 : f32 to vector<16x16xf32>
    %1155 = arith.subf %1154, %1153 : vector<16x16xf32>
    %1156 = math.exp %1155 : vector<16x16xf32>
    %cst_625 = arith.constant 1.000000e+00 : f32
    %1157 = vector.broadcast %cst_625 : f32 to vector<16x16xf32>
    %1158 = arith.addf %1157, %1156 : vector<16x16xf32>
    %cst_626 = arith.constant 1.000000e+00 : f32
    %1159 = vector.broadcast %cst_626 : f32 to vector<16x16xf32>
    %1160 = arith.divf %1159, %1158 : vector<16x16xf32>
    %1161 = arith.mulf %1153, %1160 : vector<16x16xf32>
    %c0_627 = arith.constant 0 : index
    %c0_628 = arith.constant 0 : index
    %c0_629 = arith.constant 0 : index
    %c0_630 = arith.constant 0 : index
    %1162 = vector.load %arg6[%c0_627, %c0_628, %c0_629, %c0_630] : memref<1x4x16x16xf32, #tpu.memory_space<vmem>>, vector<1x1x16x16xf32>
    %1163 = vector.shape_cast %1162 : vector<1x1x16x16xf32> to vector<16x16xf32>
    %1164 = vector.shape_cast %1161 : vector<16x16xf32> to vector<1x1x16x16xf32>
    tpu.vector_store %arg6[%c0_627, %c0_628, %c0_629, %c0_630], %1164 {strides = array<i32>} : memref<1x4x16x16xf32, #tpu.memory_space<vmem>>, vector<1x1x16x16xf32>,
    %cst_631 = arith.constant 0.000000e+00 : f32
    %1165 = vector.broadcast %cst_631 : f32 to vector<16x16xf32>
    %c36_632 = arith.constant 36 : index
    %1166 = memref.load %arg4[%c36_632] : memref<144xf32, #tpu.memory_space<smem>>
    %c0_633 = arith.constant 0 : index
    %c0_634 = arith.constant 0 : index
    %c0_635 = arith.constant 0 : index
    %1167 = vector.load %arg8[%c0_633, %c0_634, %c0_635] : memref<4x18x18xf32, #tpu.memory_space<vmem>>, vector<1x16x16xf32>
    %1168 = vector.shape_cast %1167 : vector<1x16x16xf32> to vector<16x16xf32>
    %1169 = vector.broadcast %1166 : f32 to vector<16x16xf32>
    %1170 = arith.mulf %1169, %1168 : vector<16x16xf32>
    %1171 = arith.addf %1165, %1170 : vector<16x16xf32>
    %c37_636 = arith.constant 37 : index
    %1172 = memref.load %arg4[%c37_636] : memref<144xf32, #tpu.memory_space<smem>>
    %c0_637 = arith.constant 0 : index
    %c0_638 = arith.constant 0 : index
    %c1_639 = arith.constant 1 : index
    %1173 = vector.load %arg8[%c0_637, %c0_638, %c1_639] : memref<4x18x18xf32, #tpu.memory_space<vmem>>, vector<1x16x16xf32>
    %1174 = vector.shape_cast %1173 : vector<1x16x16xf32> to vector<16x16xf32>
    %1175 = vector.broadcast %1172 : f32 to vector<16x16xf32>
    %1176 = arith.mulf %1175, %1174 : vector<16x16xf32>
    %1177 = arith.addf %1171, %1176 : vector<16x16xf32>
    %c38_640 = arith.constant 38 : index
    %1178 = memref.load %arg4[%c38_640] : memref<144xf32, #tpu.memory_space<smem>>
    %c0_641 = arith.constant 0 : index
    %c0_642 = arith.constant 0 : index
    %c2_643 = arith.constant 2 : index
    %1179 = vector.load %arg8[%c0_641, %c0_642, %c2_643] : memref<4x18x18xf32, #tpu.memory_space<vmem>>, vector<1x16x16xf32>
    %1180 = vector.shape_cast %1179 : vector<1x16x16xf32> to vector<16x16xf32>
    %1181 = vector.broadcast %1178 : f32 to vector<16x16xf32>
    %1182 = arith.mulf %1181, %1180 : vector<16x16xf32>
    %1183 = arith.addf %1177, %1182 : vector<16x16xf32>
    %c39_644 = arith.constant 39 : index
    %1184 = memref.load %arg4[%c39_644] : memref<144xf32, #tpu.memory_space<smem>>
    %c0_645 = arith.constant 0 : index
    %c1_646 = arith.constant 1 : index
    %c0_647 = arith.constant 0 : index
    %1185 = vector.load %arg8[%c0_645, %c1_646, %c0_647] : memref<4x18x18xf32, #tpu.memory_space<vmem>>, vector<1x16x16xf32>
    %1186 = vector.shape_cast %1185 : vector<1x16x16xf32> to vector<16x16xf32>
    %1187 = vector.broadcast %1184 : f32 to vector<16x16xf32>
    %1188 = arith.mulf %1187, %1186 : vector<16x16xf32>
    %1189 = arith.addf %1183, %1188 : vector<16x16xf32>
    %c40_648 = arith.constant 40 : index
    %1190 = memref.load %arg4[%c40_648] : memref<144xf32, #tpu.memory_space<smem>>
    %c0_649 = arith.constant 0 : index
    %c1_650 = arith.constant 1 : index
    %c1_651 = arith.constant 1 : index
    %1191 = vector.load %arg8[%c0_649, %c1_650, %c1_651] : memref<4x18x18xf32, #tpu.memory_space<vmem>>, vector<1x16x16xf32>
    %1192 = vector.shape_cast %1191 : vector<1x16x16xf32> to vector<16x16xf32>
    %1193 = vector.broadcast %1190 : f32 to vector<16x16xf32>
    %1194 = arith.mulf %1193, %1192 : vector<16x16xf32>
    %1195 = arith.addf %1189, %1194 : vector<16x16xf32>
    %c41_652 = arith.constant 41 : index
    %1196 = memref.load %arg4[%c41_652] : memref<144xf32, #tpu.memory_space<smem>>
    %c0_653 = arith.constant 0 : index
    %c1_654 = arith.constant 1 : index
    %c2_655 = arith.constant 2 : index
    %1197 = vector.load %arg8[%c0_653, %c1_654, %c2_655] : memref<4x18x18xf32, #tpu.memory_space<vmem>>, vector<1x16x16xf32>
    %1198 = vector.shape_cast %1197 : vector<1x16x16xf32> to vector<16x16xf32>
    %1199 = vector.broadcast %1196 : f32 to vector<16x16xf32>
    %1200 = arith.mulf %1199, %1198 : vector<16x16xf32>
    %1201 = arith.addf %1195, %1200 : vector<16x16xf32>
    %c42_656 = arith.constant 42 : index
    %1202 = memref.load %arg4[%c42_656] : memref<144xf32, #tpu.memory_space<smem>>
    %c0_657 = arith.constant 0 : index
    %c2_658 = arith.constant 2 : index
    %c0_659 = arith.constant 0 : index
    %1203 = vector.load %arg8[%c0_657, %c2_658, %c0_659] : memref<4x18x18xf32, #tpu.memory_space<vmem>>, vector<1x16x16xf32>
    %1204 = vector.shape_cast %1203 : vector<1x16x16xf32> to vector<16x16xf32>
    %1205 = vector.broadcast %1202 : f32 to vector<16x16xf32>
    %1206 = arith.mulf %1205, %1204 : vector<16x16xf32>
    %1207 = arith.addf %1201, %1206 : vector<16x16xf32>
    %c43_660 = arith.constant 43 : index
    %1208 = memref.load %arg4[%c43_660] : memref<144xf32, #tpu.memory_space<smem>>
    %c0_661 = arith.constant 0 : index
    %c2_662 = arith.constant 2 : index
    %c1_663 = arith.constant 1 : index
    %1209 = vector.load %arg8[%c0_661, %c2_662, %c1_663] : memref<4x18x18xf32, #tpu.memory_space<vmem>>, vector<1x16x16xf32>
    %1210 = vector.shape_cast %1209 : vector<1x16x16xf32> to vector<16x16xf32>
    %1211 = vector.broadcast %1208 : f32 to vector<16x16xf32>
    %1212 = arith.mulf %1211, %1210 : vector<16x16xf32>
    %1213 = arith.addf %1207, %1212 : vector<16x16xf32>
    %c44_664 = arith.constant 44 : index
    %1214 = memref.load %arg4[%c44_664] : memref<144xf32, #tpu.memory_space<smem>>
    %c0_665 = arith.constant 0 : index
    %c2_666 = arith.constant 2 : index
    %c2_667 = arith.constant 2 : index
    %1215 = vector.load %arg8[%c0_665, %c2_666, %c2_667] : memref<4x18x18xf32, #tpu.memory_space<vmem>>, vector<1x16x16xf32>
    %1216 = vector.shape_cast %1215 : vector<1x16x16xf32> to vector<16x16xf32>
    %1217 = vector.broadcast %1214 : f32 to vector<16x16xf32>
    %1218 = arith.mulf %1217, %1216 : vector<16x16xf32>
    %1219 = arith.addf %1213, %1218 : vector<16x16xf32>
    %c45_668 = arith.constant 45 : index
    %1220 = memref.load %arg4[%c45_668] : memref<144xf32, #tpu.memory_space<smem>>
    %c1_669 = arith.constant 1 : index
    %c0_670 = arith.constant 0 : index
    %c0_671 = arith.constant 0 : index
    %1221 = vector.load %arg8[%c1_669, %c0_670, %c0_671] : memref<4x18x18xf32, #tpu.memory_space<vmem>>, vector<1x16x16xf32>
    %1222 = vector.shape_cast %1221 : vector<1x16x16xf32> to vector<16x16xf32>
    %1223 = vector.broadcast %1220 : f32 to vector<16x16xf32>
    %1224 = arith.mulf %1223, %1222 : vector<16x16xf32>
    %1225 = arith.addf %1219, %1224 : vector<16x16xf32>
    %c46_672 = arith.constant 46 : index
    %1226 = memref.load %arg4[%c46_672] : memref<144xf32, #tpu.memory_space<smem>>
    %c1_673 = arith.constant 1 : index
    %c0_674 = arith.constant 0 : index
    %c1_675 = arith.constant 1 : index
    %1227 = vector.load %arg8[%c1_673, %c0_674, %c1_675] : memref<4x18x18xf32, #tpu.memory_space<vmem>>, vector<1x16x16xf32>
    %1228 = vector.shape_cast %1227 : vector<1x16x16xf32> to vector<16x16xf32>
    %1229 = vector.broadcast %1226 : f32 to vector<16x16xf32>
    %1230 = arith.mulf %1229, %1228 : vector<16x16xf32>
    %1231 = arith.addf %1225, %1230 : vector<16x16xf32>
    %c47_676 = arith.constant 47 : index
    %1232 = memref.load %arg4[%c47_676] : memref<144xf32, #tpu.memory_space<smem>>
    %c1_677 = arith.constant 1 : index
    %c0_678 = arith.constant 0 : index
    %c2_679 = arith.constant 2 : index
    %1233 = vector.load %arg8[%c1_677, %c0_678, %c2_679] : memref<4x18x18xf32, #tpu.memory_space<vmem>>, vector<1x16x16xf32>
    %1234 = vector.shape_cast %1233 : vector<1x16x16xf32> to vector<16x16xf32>
    %1235 = vector.broadcast %1232 : f32 to vector<16x16xf32>
    %1236 = arith.mulf %1235, %1234 : vector<16x16xf32>
    %1237 = arith.addf %1231, %1236 : vector<16x16xf32>
    %c48_680 = arith.constant 48 : index
    %1238 = memref.load %arg4[%c48_680] : memref<144xf32, #tpu.memory_space<smem>>
    %c1_681 = arith.constant 1 : index
    %c1_682 = arith.constant 1 : index
    %c0_683 = arith.constant 0 : index
    %1239 = vector.load %arg8[%c1_681, %c1_682, %c0_683] : memref<4x18x18xf32, #tpu.memory_space<vmem>>, vector<1x16x16xf32>
    %1240 = vector.shape_cast %1239 : vector<1x16x16xf32> to vector<16x16xf32>
    %1241 = vector.broadcast %1238 : f32 to vector<16x16xf32>
    %1242 = arith.mulf %1241, %1240 : vector<16x16xf32>
    %1243 = arith.addf %1237, %1242 : vector<16x16xf32>
    %c49_684 = arith.constant 49 : index
    %1244 = memref.load %arg4[%c49_684] : memref<144xf32, #tpu.memory_space<smem>>
    %c1_685 = arith.constant 1 : index
    %c1_686 = arith.constant 1 : index
    %c1_687 = arith.constant 1 : index
    %1245 = vector.load %arg8[%c1_685, %c1_686, %c1_687] : memref<4x18x18xf32, #tpu.memory_space<vmem>>, vector<1x16x16xf32>
    %1246 = vector.shape_cast %1245 : vector<1x16x16xf32> to vector<16x16xf32>
    %1247 = vector.broadcast %1244 : f32 to vector<16x16xf32>
    %1248 = arith.mulf %1247, %1246 : vector<16x16xf32>
    %1249 = arith.addf %1243, %1248 : vector<16x16xf32>
    %c50_688 = arith.constant 50 : index
    %1250 = memref.load %arg4[%c50_688] : memref<144xf32, #tpu.memory_space<smem>>
    %c1_689 = arith.constant 1 : index
    %c1_690 = arith.constant 1 : index
    %c2_691 = arith.constant 2 : index
    %1251 = vector.load %arg8[%c1_689, %c1_690, %c2_691] : memref<4x18x18xf32, #tpu.memory_space<vmem>>, vector<1x16x16xf32>
    %1252 = vector.shape_cast %1251 : vector<1x16x16xf32> to vector<16x16xf32>
    %1253 = vector.broadcast %1250 : f32 to vector<16x16xf32>
    %1254 = arith.mulf %1253, %1252 : vector<16x16xf32>
    %1255 = arith.addf %1249, %1254 : vector<16x16xf32>
    %c51_692 = arith.constant 51 : index
    %1256 = memref.load %arg4[%c51_692] : memref<144xf32, #tpu.memory_space<smem>>
    %c1_693 = arith.constant 1 : index
    %c2_694 = arith.constant 2 : index
    %c0_695 = arith.constant 0 : index
    %1257 = vector.load %arg8[%c1_693, %c2_694, %c0_695] : memref<4x18x18xf32, #tpu.memory_space<vmem>>, vector<1x16x16xf32>
    %1258 = vector.shape_cast %1257 : vector<1x16x16xf32> to vector<16x16xf32>
    %1259 = vector.broadcast %1256 : f32 to vector<16x16xf32>
    %1260 = arith.mulf %1259, %1258 : vector<16x16xf32>
    %1261 = arith.addf %1255, %1260 : vector<16x16xf32>
    %c52_696 = arith.constant 52 : index
    %1262 = memref.load %arg4[%c52_696] : memref<144xf32, #tpu.memory_space<smem>>
    %c1_697 = arith.constant 1 : index
    %c2_698 = arith.constant 2 : index
    %c1_699 = arith.constant 1 : index
    %1263 = vector.load %arg8[%c1_697, %c2_698, %c1_699] : memref<4x18x18xf32, #tpu.memory_space<vmem>>, vector<1x16x16xf32>
    %1264 = vector.shape_cast %1263 : vector<1x16x16xf32> to vector<16x16xf32>
    %1265 = vector.broadcast %1262 : f32 to vector<16x16xf32>
    %1266 = arith.mulf %1265, %1264 : vector<16x16xf32>
    %1267 = arith.addf %1261, %1266 : vector<16x16xf32>
    %c53_700 = arith.constant 53 : index
    %1268 = memref.load %arg4[%c53_700] : memref<144xf32, #tpu.memory_space<smem>>
    %c1_701 = arith.constant 1 : index
    %c2_702 = arith.constant 2 : index
    %c2_703 = arith.constant 2 : index
    %1269 = vector.load %arg8[%c1_701, %c2_702, %c2_703] : memref<4x18x18xf32, #tpu.memory_space<vmem>>, vector<1x16x16xf32>
    %1270 = vector.shape_cast %1269 : vector<1x16x16xf32> to vector<16x16xf32>
    %1271 = vector.broadcast %1268 : f32 to vector<16x16xf32>
    %1272 = arith.mulf %1271, %1270 : vector<16x16xf32>
    %1273 = arith.addf %1267, %1272 : vector<16x16xf32>
    %c54_704 = arith.constant 54 : index
    %1274 = memref.load %arg4[%c54_704] : memref<144xf32, #tpu.memory_space<smem>>
    %c2_705 = arith.constant 2 : index
    %c0_706 = arith.constant 0 : index
    %c0_707 = arith.constant 0 : index
    %1275 = vector.load %arg8[%c2_705, %c0_706, %c0_707] : memref<4x18x18xf32, #tpu.memory_space<vmem>>, vector<1x16x16xf32>
    %1276 = vector.shape_cast %1275 : vector<1x16x16xf32> to vector<16x16xf32>
    %1277 = vector.broadcast %1274 : f32 to vector<16x16xf32>
    %1278 = arith.mulf %1277, %1276 : vector<16x16xf32>
    %1279 = arith.addf %1273, %1278 : vector<16x16xf32>
    %c55_708 = arith.constant 55 : index
    %1280 = memref.load %arg4[%c55_708] : memref<144xf32, #tpu.memory_space<smem>>
    %c2_709 = arith.constant 2 : index
    %c0_710 = arith.constant 0 : index
    %c1_711 = arith.constant 1 : index
    %1281 = vector.load %arg8[%c2_709, %c0_710, %c1_711] : memref<4x18x18xf32, #tpu.memory_space<vmem>>, vector<1x16x16xf32>
    %1282 = vector.shape_cast %1281 : vector<1x16x16xf32> to vector<16x16xf32>
    %1283 = vector.broadcast %1280 : f32 to vector<16x16xf32>
    %1284 = arith.mulf %1283, %1282 : vector<16x16xf32>
    %1285 = arith.addf %1279, %1284 : vector<16x16xf32>
    %c56_712 = arith.constant 56 : index
    %1286 = memref.load %arg4[%c56_712] : memref<144xf32, #tpu.memory_space<smem>>
    %c2_713 = arith.constant 2 : index
    %c0_714 = arith.constant 0 : index
    %c2_715 = arith.constant 2 : index
    %1287 = vector.load %arg8[%c2_713, %c0_714, %c2_715] : memref<4x18x18xf32, #tpu.memory_space<vmem>>, vector<1x16x16xf32>
    %1288 = vector.shape_cast %1287 : vector<1x16x16xf32> to vector<16x16xf32>
    %1289 = vector.broadcast %1286 : f32 to vector<16x16xf32>
    %1290 = arith.mulf %1289, %1288 : vector<16x16xf32>
    %1291 = arith.addf %1285, %1290 : vector<16x16xf32>
    %c57_716 = arith.constant 57 : index
    %1292 = memref.load %arg4[%c57_716] : memref<144xf32, #tpu.memory_space<smem>>
    %c2_717 = arith.constant 2 : index
    %c1_718 = arith.constant 1 : index
    %c0_719 = arith.constant 0 : index
    %1293 = vector.load %arg8[%c2_717, %c1_718, %c0_719] : memref<4x18x18xf32, #tpu.memory_space<vmem>>, vector<1x16x16xf32>
    %1294 = vector.shape_cast %1293 : vector<1x16x16xf32> to vector<16x16xf32>
    %1295 = vector.broadcast %1292 : f32 to vector<16x16xf32>
    %1296 = arith.mulf %1295, %1294 : vector<16x16xf32>
    %1297 = arith.addf %1291, %1296 : vector<16x16xf32>
    %c58_720 = arith.constant 58 : index
    %1298 = memref.load %arg4[%c58_720] : memref<144xf32, #tpu.memory_space<smem>>
    %c2_721 = arith.constant 2 : index
    %c1_722 = arith.constant 1 : index
    %c1_723 = arith.constant 1 : index
    %1299 = vector.load %arg8[%c2_721, %c1_722, %c1_723] : memref<4x18x18xf32, #tpu.memory_space<vmem>>, vector<1x16x16xf32>
    %1300 = vector.shape_cast %1299 : vector<1x16x16xf32> to vector<16x16xf32>
    %1301 = vector.broadcast %1298 : f32 to vector<16x16xf32>
    %1302 = arith.mulf %1301, %1300 : vector<16x16xf32>
    %1303 = arith.addf %1297, %1302 : vector<16x16xf32>
    %c59_724 = arith.constant 59 : index
    %1304 = memref.load %arg4[%c59_724] : memref<144xf32, #tpu.memory_space<smem>>
    %c2_725 = arith.constant 2 : index
    %c1_726 = arith.constant 1 : index
    %c2_727 = arith.constant 2 : index
    %1305 = vector.load %arg8[%c2_725, %c1_726, %c2_727] : memref<4x18x18xf32, #tpu.memory_space<vmem>>, vector<1x16x16xf32>
    %1306 = vector.shape_cast %1305 : vector<1x16x16xf32> to vector<16x16xf32>
    %1307 = vector.broadcast %1304 : f32 to vector<16x16xf32>
    %1308 = arith.mulf %1307, %1306 : vector<16x16xf32>
    %1309 = arith.addf %1303, %1308 : vector<16x16xf32>
    %c60_728 = arith.constant 60 : index
    %1310 = memref.load %arg4[%c60_728] : memref<144xf32, #tpu.memory_space<smem>>
    %c2_729 = arith.constant 2 : index
    %c2_730 = arith.constant 2 : index
    %c0_731 = arith.constant 0 : index
    %1311 = vector.load %arg8[%c2_729, %c2_730, %c0_731] : memref<4x18x18xf32, #tpu.memory_space<vmem>>, vector<1x16x16xf32>
    %1312 = vector.shape_cast %1311 : vector<1x16x16xf32> to vector<16x16xf32>
    %1313 = vector.broadcast %1310 : f32 to vector<16x16xf32>
    %1314 = arith.mulf %1313, %1312 : vector<16x16xf32>
    %1315 = arith.addf %1309, %1314 : vector<16x16xf32>
    %c61_732 = arith.constant 61 : index
    %1316 = memref.load %arg4[%c61_732] : memref<144xf32, #tpu.memory_space<smem>>
    %c2_733 = arith.constant 2 : index
    %c2_734 = arith.constant 2 : index
    %c1_735 = arith.constant 1 : index
    %1317 = vector.load %arg8[%c2_733, %c2_734, %c1_735] : memref<4x18x18xf32, #tpu.memory_space<vmem>>, vector<1x16x16xf32>
    %1318 = vector.shape_cast %1317 : vector<1x16x16xf32> to vector<16x16xf32>
    %1319 = vector.broadcast %1316 : f32 to vector<16x16xf32>
    %1320 = arith.mulf %1319, %1318 : vector<16x16xf32>
    %1321 = arith.addf %1315, %1320 : vector<16x16xf32>
    %c62_736 = arith.constant 62 : index
    %1322 = memref.load %arg4[%c62_736] : memref<144xf32, #tpu.memory_space<smem>>
    %c2_737 = arith.constant 2 : index
    %c2_738 = arith.constant 2 : index
    %c2_739 = arith.constant 2 : index
    %1323 = vector.load %arg8[%c2_737, %c2_738, %c2_739] : memref<4x18x18xf32, #tpu.memory_space<vmem>>, vector<1x16x16xf32>
    %1324 = vector.shape_cast %1323 : vector<1x16x16xf32> to vector<16x16xf32>
    %1325 = vector.broadcast %1322 : f32 to vector<16x16xf32>
    %1326 = arith.mulf %1325, %1324 : vector<16x16xf32>
    %1327 = arith.addf %1321, %1326 : vector<16x16xf32>
    %c63_740 = arith.constant 63 : index
    %1328 = memref.load %arg4[%c63_740] : memref<144xf32, #tpu.memory_space<smem>>
    %c3_741 = arith.constant 3 : index
    %c0_742 = arith.constant 0 : index
    %c0_743 = arith.constant 0 : index
    %1329 = vector.load %arg8[%c3_741, %c0_742, %c0_743] : memref<4x18x18xf32, #tpu.memory_space<vmem>>, vector<1x16x16xf32>
    %1330 = vector.shape_cast %1329 : vector<1x16x16xf32> to vector<16x16xf32>
    %1331 = vector.broadcast %1328 : f32 to vector<16x16xf32>
    %1332 = arith.mulf %1331, %1330 : vector<16x16xf32>
    %1333 = arith.addf %1327, %1332 : vector<16x16xf32>
    %c64_744 = arith.constant 64 : index
    %1334 = memref.load %arg4[%c64_744] : memref<144xf32, #tpu.memory_space<smem>>
    %c3_745 = arith.constant 3 : index
    %c0_746 = arith.constant 0 : index
    %c1_747 = arith.constant 1 : index
    %1335 = vector.load %arg8[%c3_745, %c0_746, %c1_747] : memref<4x18x18xf32, #tpu.memory_space<vmem>>, vector<1x16x16xf32>
    %1336 = vector.shape_cast %1335 : vector<1x16x16xf32> to vector<16x16xf32>
    %1337 = vector.broadcast %1334 : f32 to vector<16x16xf32>
    %1338 = arith.mulf %1337, %1336 : vector<16x16xf32>
    %1339 = arith.addf %1333, %1338 : vector<16x16xf32>
    %c65_748 = arith.constant 65 : index
    %1340 = memref.load %arg4[%c65_748] : memref<144xf32, #tpu.memory_space<smem>>
    %c3_749 = arith.constant 3 : index
    %c0_750 = arith.constant 0 : index
    %c2_751 = arith.constant 2 : index
    %1341 = vector.load %arg8[%c3_749, %c0_750, %c2_751] : memref<4x18x18xf32, #tpu.memory_space<vmem>>, vector<1x16x16xf32>
    %1342 = vector.shape_cast %1341 : vector<1x16x16xf32> to vector<16x16xf32>
    %1343 = vector.broadcast %1340 : f32 to vector<16x16xf32>
    %1344 = arith.mulf %1343, %1342 : vector<16x16xf32>
    %1345 = arith.addf %1339, %1344 : vector<16x16xf32>
    %c66_752 = arith.constant 66 : index
    %1346 = memref.load %arg4[%c66_752] : memref<144xf32, #tpu.memory_space<smem>>
    %c3_753 = arith.constant 3 : index
    %c1_754 = arith.constant 1 : index
    %c0_755 = arith.constant 0 : index
    %1347 = vector.load %arg8[%c3_753, %c1_754, %c0_755] : memref<4x18x18xf32, #tpu.memory_space<vmem>>, vector<1x16x16xf32>
    %1348 = vector.shape_cast %1347 : vector<1x16x16xf32> to vector<16x16xf32>
    %1349 = vector.broadcast %1346 : f32 to vector<16x16xf32>
    %1350 = arith.mulf %1349, %1348 : vector<16x16xf32>
    %1351 = arith.addf %1345, %1350 : vector<16x16xf32>
    %c67_756 = arith.constant 67 : index
    %1352 = memref.load %arg4[%c67_756] : memref<144xf32, #tpu.memory_space<smem>>
    %c3_757 = arith.constant 3 : index
    %c1_758 = arith.constant 1 : index
    %c1_759 = arith.constant 1 : index
    %1353 = vector.load %arg8[%c3_757, %c1_758, %c1_759] : memref<4x18x18xf32, #tpu.memory_space<vmem>>, vector<1x16x16xf32>
    %1354 = vector.shape_cast %1353 : vector<1x16x16xf32> to vector<16x16xf32>
    %1355 = vector.broadcast %1352 : f32 to vector<16x16xf32>
    %1356 = arith.mulf %1355, %1354 : vector<16x16xf32>
    %1357 = arith.addf %1351, %1356 : vector<16x16xf32>
    %c68_760 = arith.constant 68 : index
    %1358 = memref.load %arg4[%c68_760] : memref<144xf32, #tpu.memory_space<smem>>
    %c3_761 = arith.constant 3 : index
    %c1_762 = arith.constant 1 : index
    %c2_763 = arith.constant 2 : index
    %1359 = vector.load %arg8[%c3_761, %c1_762, %c2_763] : memref<4x18x18xf32, #tpu.memory_space<vmem>>, vector<1x16x16xf32>
    %1360 = vector.shape_cast %1359 : vector<1x16x16xf32> to vector<16x16xf32>
    %1361 = vector.broadcast %1358 : f32 to vector<16x16xf32>
    %1362 = arith.mulf %1361, %1360 : vector<16x16xf32>
    %1363 = arith.addf %1357, %1362 : vector<16x16xf32>
    %c69_764 = arith.constant 69 : index
    %1364 = memref.load %arg4[%c69_764] : memref<144xf32, #tpu.memory_space<smem>>
    %c3_765 = arith.constant 3 : index
    %c2_766 = arith.constant 2 : index
    %c0_767 = arith.constant 0 : index
    %1365 = vector.load %arg8[%c3_765, %c2_766, %c0_767] : memref<4x18x18xf32, #tpu.memory_space<vmem>>, vector<1x16x16xf32>
    %1366 = vector.shape_cast %1365 : vector<1x16x16xf32> to vector<16x16xf32>
    %1367 = vector.broadcast %1364 : f32 to vector<16x16xf32>
    %1368 = arith.mulf %1367, %1366 : vector<16x16xf32>
    %1369 = arith.addf %1363, %1368 : vector<16x16xf32>
    %c70_768 = arith.constant 70 : index
    %1370 = memref.load %arg4[%c70_768] : memref<144xf32, #tpu.memory_space<smem>>
    %c3_769 = arith.constant 3 : index
    %c2_770 = arith.constant 2 : index
    %c1_771 = arith.constant 1 : index
    %1371 = vector.load %arg8[%c3_769, %c2_770, %c1_771] : memref<4x18x18xf32, #tpu.memory_space<vmem>>, vector<1x16x16xf32>
    %1372 = vector.shape_cast %1371 : vector<1x16x16xf32> to vector<16x16xf32>
    %1373 = vector.broadcast %1370 : f32 to vector<16x16xf32>
    %1374 = arith.mulf %1373, %1372 : vector<16x16xf32>
    %1375 = arith.addf %1369, %1374 : vector<16x16xf32>
    %c71_772 = arith.constant 71 : index
    %1376 = memref.load %arg4[%c71_772] : memref<144xf32, #tpu.memory_space<smem>>
    %c3_773 = arith.constant 3 : index
    %c2_774 = arith.constant 2 : index
    %c2_775 = arith.constant 2 : index
    %1377 = vector.load %arg8[%c3_773, %c2_774, %c2_775] : memref<4x18x18xf32, #tpu.memory_space<vmem>>, vector<1x16x16xf32>
    %1378 = vector.shape_cast %1377 : vector<1x16x16xf32> to vector<16x16xf32>
    %1379 = vector.broadcast %1376 : f32 to vector<16x16xf32>
    %1380 = arith.mulf %1379, %1378 : vector<16x16xf32>
    %1381 = arith.addf %1375, %1380 : vector<16x16xf32>
    %c1_776 = arith.constant 1 : index
    %1382 = memref.load %arg5[%c1_776] : memref<4xf32, #tpu.memory_space<smem>>
    %1383 = vector.broadcast %1382 : f32 to vector<16x16xf32>
    %1384 = arith.addf %1381, %1383 : vector<16x16xf32>
    %1385 = vector.extract_strided_slice %5 {offsets = [1, 0, 0], sizes = [1, 16, 16], strides = [1, 1, 1]} : vector<4x16x16xf32> to vector<1x16x16xf32>
    %1386 = vector.shape_cast %1385 : vector<1x16x16xf32> to vector<16x16xf32>
    %1387 = arith.addf %1384, %1386 : vector<16x16xf32>
    %cst_777 = arith.constant 0.000000e+00 : f32
    %1388 = vector.broadcast %cst_777 : f32 to vector<16x16xf32>
    %1389 = arith.subf %1388, %1387 : vector<16x16xf32>
    %1390 = math.exp %1389 : vector<16x16xf32>
    %cst_778 = arith.constant 1.000000e+00 : f32
    %1391 = vector.broadcast %cst_778 : f32 to vector<16x16xf32>
    %1392 = arith.addf %1391, %1390 : vector<16x16xf32>
    %cst_779 = arith.constant 1.000000e+00 : f32
    %1393 = vector.broadcast %cst_779 : f32 to vector<16x16xf32>
    %1394 = arith.divf %1393, %1392 : vector<16x16xf32>
    %1395 = arith.mulf %1387, %1394 : vector<16x16xf32>
    %c0_780 = arith.constant 0 : index
    %c1_781 = arith.constant 1 : index
    %c0_782 = arith.constant 0 : index
    %c0_783 = arith.constant 0 : index
    %1396 = vector.load %arg6[%c0_780, %c1_781, %c0_782, %c0_783] : memref<1x4x16x16xf32, #tpu.memory_space<vmem>>, vector<1x1x16x16xf32>
    %1397 = vector.shape_cast %1396 : vector<1x1x16x16xf32> to vector<16x16xf32>
    %1398 = vector.shape_cast %1395 : vector<16x16xf32> to vector<1x1x16x16xf32>
    tpu.vector_store %arg6[%c0_780, %c1_781, %c0_782, %c0_783], %1398 {strides = array<i32>} : memref<1x4x16x16xf32, #tpu.memory_space<vmem>>, vector<1x1x16x16xf32>,
    %cst_784 = arith.constant 0.000000e+00 : f32
    %1399 = vector.broadcast %cst_784 : f32 to vector<16x16xf32>
    %c72_785 = arith.constant 72 : index
    %1400 = memref.load %arg4[%c72_785] : memref<144xf32, #tpu.memory_space<smem>>
    %c0_786 = arith.constant 0 : index
    %c0_787 = arith.constant 0 : index
    %c0_788 = arith.constant 0 : index
    %1401 = vector.load %arg8[%c0_786, %c0_787, %c0_788] : memref<4x18x18xf32, #tpu.memory_space<vmem>>, vector<1x16x16xf32>
    %1402 = vector.shape_cast %1401 : vector<1x16x16xf32> to vector<16x16xf32>
    %1403 = vector.broadcast %1400 : f32 to vector<16x16xf32>
    %1404 = arith.mulf %1403, %1402 : vector<16x16xf32>
    %1405 = arith.addf %1399, %1404 : vector<16x16xf32>
    %c73_789 = arith.constant 73 : index
    %1406 = memref.load %arg4[%c73_789] : memref<144xf32, #tpu.memory_space<smem>>
    %c0_790 = arith.constant 0 : index
    %c0_791 = arith.constant 0 : index
    %c1_792 = arith.constant 1 : index
    %1407 = vector.load %arg8[%c0_790, %c0_791, %c1_792] : memref<4x18x18xf32, #tpu.memory_space<vmem>>, vector<1x16x16xf32>
    %1408 = vector.shape_cast %1407 : vector<1x16x16xf32> to vector<16x16xf32>
    %1409 = vector.broadcast %1406 : f32 to vector<16x16xf32>
    %1410 = arith.mulf %1409, %1408 : vector<16x16xf32>
    %1411 = arith.addf %1405, %1410 : vector<16x16xf32>
    %c74_793 = arith.constant 74 : index
    %1412 = memref.load %arg4[%c74_793] : memref<144xf32, #tpu.memory_space<smem>>
    %c0_794 = arith.constant 0 : index
    %c0_795 = arith.constant 0 : index
    %c2_796 = arith.constant 2 : index
    %1413 = vector.load %arg8[%c0_794, %c0_795, %c2_796] : memref<4x18x18xf32, #tpu.memory_space<vmem>>, vector<1x16x16xf32>
    %1414 = vector.shape_cast %1413 : vector<1x16x16xf32> to vector<16x16xf32>
    %1415 = vector.broadcast %1412 : f32 to vector<16x16xf32>
    %1416 = arith.mulf %1415, %1414 : vector<16x16xf32>
    %1417 = arith.addf %1411, %1416 : vector<16x16xf32>
    %c75_797 = arith.constant 75 : index
    %1418 = memref.load %arg4[%c75_797] : memref<144xf32, #tpu.memory_space<smem>>
    %c0_798 = arith.constant 0 : index
    %c1_799 = arith.constant 1 : index
    %c0_800 = arith.constant 0 : index
    %1419 = vector.load %arg8[%c0_798, %c1_799, %c0_800] : memref<4x18x18xf32, #tpu.memory_space<vmem>>, vector<1x16x16xf32>
    %1420 = vector.shape_cast %1419 : vector<1x16x16xf32> to vector<16x16xf32>
    %1421 = vector.broadcast %1418 : f32 to vector<16x16xf32>
    %1422 = arith.mulf %1421, %1420 : vector<16x16xf32>
    %1423 = arith.addf %1417, %1422 : vector<16x16xf32>
    %c76_801 = arith.constant 76 : index
    %1424 = memref.load %arg4[%c76_801] : memref<144xf32, #tpu.memory_space<smem>>
    %c0_802 = arith.constant 0 : index
    %c1_803 = arith.constant 1 : index
    %c1_804 = arith.constant 1 : index
    %1425 = vector.load %arg8[%c0_802, %c1_803, %c1_804] : memref<4x18x18xf32, #tpu.memory_space<vmem>>, vector<1x16x16xf32>
    %1426 = vector.shape_cast %1425 : vector<1x16x16xf32> to vector<16x16xf32>
    %1427 = vector.broadcast %1424 : f32 to vector<16x16xf32>
    %1428 = arith.mulf %1427, %1426 : vector<16x16xf32>
    %1429 = arith.addf %1423, %1428 : vector<16x16xf32>
    %c77_805 = arith.constant 77 : index
    %1430 = memref.load %arg4[%c77_805] : memref<144xf32, #tpu.memory_space<smem>>
    %c0_806 = arith.constant 0 : index
    %c1_807 = arith.constant 1 : index
    %c2_808 = arith.constant 2 : index
    %1431 = vector.load %arg8[%c0_806, %c1_807, %c2_808] : memref<4x18x18xf32, #tpu.memory_space<vmem>>, vector<1x16x16xf32>
    %1432 = vector.shape_cast %1431 : vector<1x16x16xf32> to vector<16x16xf32>
    %1433 = vector.broadcast %1430 : f32 to vector<16x16xf32>
    %1434 = arith.mulf %1433, %1432 : vector<16x16xf32>
    %1435 = arith.addf %1429, %1434 : vector<16x16xf32>
    %c78_809 = arith.constant 78 : index
    %1436 = memref.load %arg4[%c78_809] : memref<144xf32, #tpu.memory_space<smem>>
    %c0_810 = arith.constant 0 : index
    %c2_811 = arith.constant 2 : index
    %c0_812 = arith.constant 0 : index
    %1437 = vector.load %arg8[%c0_810, %c2_811, %c0_812] : memref<4x18x18xf32, #tpu.memory_space<vmem>>, vector<1x16x16xf32>
    %1438 = vector.shape_cast %1437 : vector<1x16x16xf32> to vector<16x16xf32>
    %1439 = vector.broadcast %1436 : f32 to vector<16x16xf32>
    %1440 = arith.mulf %1439, %1438 : vector<16x16xf32>
    %1441 = arith.addf %1435, %1440 : vector<16x16xf32>
    %c79_813 = arith.constant 79 : index
    %1442 = memref.load %arg4[%c79_813] : memref<144xf32, #tpu.memory_space<smem>>
    %c0_814 = arith.constant 0 : index
    %c2_815 = arith.constant 2 : index
    %c1_816 = arith.constant 1 : index
    %1443 = vector.load %arg8[%c0_814, %c2_815, %c1_816] : memref<4x18x18xf32, #tpu.memory_space<vmem>>, vector<1x16x16xf32>
    %1444 = vector.shape_cast %1443 : vector<1x16x16xf32> to vector<16x16xf32>
    %1445 = vector.broadcast %1442 : f32 to vector<16x16xf32>
    %1446 = arith.mulf %1445, %1444 : vector<16x16xf32>
    %1447 = arith.addf %1441, %1446 : vector<16x16xf32>
    %c80_817 = arith.constant 80 : index
    %1448 = memref.load %arg4[%c80_817] : memref<144xf32, #tpu.memory_space<smem>>
    %c0_818 = arith.constant 0 : index
    %c2_819 = arith.constant 2 : index
    %c2_820 = arith.constant 2 : index
    %1449 = vector.load %arg8[%c0_818, %c2_819, %c2_820] : memref<4x18x18xf32, #tpu.memory_space<vmem>>, vector<1x16x16xf32>
    %1450 = vector.shape_cast %1449 : vector<1x16x16xf32> to vector<16x16xf32>
    %1451 = vector.broadcast %1448 : f32 to vector<16x16xf32>
    %1452 = arith.mulf %1451, %1450 : vector<16x16xf32>
    %1453 = arith.addf %1447, %1452 : vector<16x16xf32>
    %c81_821 = arith.constant 81 : index
    %1454 = memref.load %arg4[%c81_821] : memref<144xf32, #tpu.memory_space<smem>>
    %c1_822 = arith.constant 1 : index
    %c0_823 = arith.constant 0 : index
    %c0_824 = arith.constant 0 : index
    %1455 = vector.load %arg8[%c1_822, %c0_823, %c0_824] : memref<4x18x18xf32, #tpu.memory_space<vmem>>, vector<1x16x16xf32>
    %1456 = vector.shape_cast %1455 : vector<1x16x16xf32> to vector<16x16xf32>
    %1457 = vector.broadcast %1454 : f32 to vector<16x16xf32>
    %1458 = arith.mulf %1457, %1456 : vector<16x16xf32>
    %1459 = arith.addf %1453, %1458 : vector<16x16xf32>
    %c82_825 = arith.constant 82 : index
    %1460 = memref.load %arg4[%c82_825] : memref<144xf32, #tpu.memory_space<smem>>
    %c1_826 = arith.constant 1 : index
    %c0_827 = arith.constant 0 : index
    %c1_828 = arith.constant 1 : index
    %1461 = vector.load %arg8[%c1_826, %c0_827, %c1_828] : memref<4x18x18xf32, #tpu.memory_space<vmem>>, vector<1x16x16xf32>
    %1462 = vector.shape_cast %1461 : vector<1x16x16xf32> to vector<16x16xf32>
    %1463 = vector.broadcast %1460 : f32 to vector<16x16xf32>
    %1464 = arith.mulf %1463, %1462 : vector<16x16xf32>
    %1465 = arith.addf %1459, %1464 : vector<16x16xf32>
    %c83_829 = arith.constant 83 : index
    %1466 = memref.load %arg4[%c83_829] : memref<144xf32, #tpu.memory_space<smem>>
    %c1_830 = arith.constant 1 : index
    %c0_831 = arith.constant 0 : index
    %c2_832 = arith.constant 2 : index
    %1467 = vector.load %arg8[%c1_830, %c0_831, %c2_832] : memref<4x18x18xf32, #tpu.memory_space<vmem>>, vector<1x16x16xf32>
    %1468 = vector.shape_cast %1467 : vector<1x16x16xf32> to vector<16x16xf32>
    %1469 = vector.broadcast %1466 : f32 to vector<16x16xf32>
    %1470 = arith.mulf %1469, %1468 : vector<16x16xf32>
    %1471 = arith.addf %1465, %1470 : vector<16x16xf32>
    %c84_833 = arith.constant 84 : index
    %1472 = memref.load %arg4[%c84_833] : memref<144xf32, #tpu.memory_space<smem>>
    %c1_834 = arith.constant 1 : index
    %c1_835 = arith.constant 1 : index
    %c0_836 = arith.constant 0 : index
    %1473 = vector.load %arg8[%c1_834, %c1_835, %c0_836] : memref<4x18x18xf32, #tpu.memory_space<vmem>>, vector<1x16x16xf32>
    %1474 = vector.shape_cast %1473 : vector<1x16x16xf32> to vector<16x16xf32>
    %1475 = vector.broadcast %1472 : f32 to vector<16x16xf32>
    %1476 = arith.mulf %1475, %1474 : vector<16x16xf32>
    %1477 = arith.addf %1471, %1476 : vector<16x16xf32>
    %c85_837 = arith.constant 85 : index
    %1478 = memref.load %arg4[%c85_837] : memref<144xf32, #tpu.memory_space<smem>>
    %c1_838 = arith.constant 1 : index
    %c1_839 = arith.constant 1 : index
    %c1_840 = arith.constant 1 : index
    %1479 = vector.load %arg8[%c1_838, %c1_839, %c1_840] : memref<4x18x18xf32, #tpu.memory_space<vmem>>, vector<1x16x16xf32>
    %1480 = vector.shape_cast %1479 : vector<1x16x16xf32> to vector<16x16xf32>
    %1481 = vector.broadcast %1478 : f32 to vector<16x16xf32>
    %1482 = arith.mulf %1481, %1480 : vector<16x16xf32>
    %1483 = arith.addf %1477, %1482 : vector<16x16xf32>
    %c86_841 = arith.constant 86 : index
    %1484 = memref.load %arg4[%c86_841] : memref<144xf32, #tpu.memory_space<smem>>
    %c1_842 = arith.constant 1 : index
    %c1_843 = arith.constant 1 : index
    %c2_844 = arith.constant 2 : index
    %1485 = vector.load %arg8[%c1_842, %c1_843, %c2_844] : memref<4x18x18xf32, #tpu.memory_space<vmem>>, vector<1x16x16xf32>
    %1486 = vector.shape_cast %1485 : vector<1x16x16xf32> to vector<16x16xf32>
    %1487 = vector.broadcast %1484 : f32 to vector<16x16xf32>
    %1488 = arith.mulf %1487, %1486 : vector<16x16xf32>
    %1489 = arith.addf %1483, %1488 : vector<16x16xf32>
    %c87_845 = arith.constant 87 : index
    %1490 = memref.load %arg4[%c87_845] : memref<144xf32, #tpu.memory_space<smem>>
    %c1_846 = arith.constant 1 : index
    %c2_847 = arith.constant 2 : index
    %c0_848 = arith.constant 0 : index
    %1491 = vector.load %arg8[%c1_846, %c2_847, %c0_848] : memref<4x18x18xf32, #tpu.memory_space<vmem>>, vector<1x16x16xf32>
    %1492 = vector.shape_cast %1491 : vector<1x16x16xf32> to vector<16x16xf32>
    %1493 = vector.broadcast %1490 : f32 to vector<16x16xf32>
    %1494 = arith.mulf %1493, %1492 : vector<16x16xf32>
    %1495 = arith.addf %1489, %1494 : vector<16x16xf32>
    %c88_849 = arith.constant 88 : index
    %1496 = memref.load %arg4[%c88_849] : memref<144xf32, #tpu.memory_space<smem>>
    %c1_850 = arith.constant 1 : index
    %c2_851 = arith.constant 2 : index
    %c1_852 = arith.constant 1 : index
    %1497 = vector.load %arg8[%c1_850, %c2_851, %c1_852] : memref<4x18x18xf32, #tpu.memory_space<vmem>>, vector<1x16x16xf32>
    %1498 = vector.shape_cast %1497 : vector<1x16x16xf32> to vector<16x16xf32>
    %1499 = vector.broadcast %1496 : f32 to vector<16x16xf32>
    %1500 = arith.mulf %1499, %1498 : vector<16x16xf32>
    %1501 = arith.addf %1495, %1500 : vector<16x16xf32>
    %c89_853 = arith.constant 89 : index
    %1502 = memref.load %arg4[%c89_853] : memref<144xf32, #tpu.memory_space<smem>>
    %c1_854 = arith.constant 1 : index
    %c2_855 = arith.constant 2 : index
    %c2_856 = arith.constant 2 : index
    %1503 = vector.load %arg8[%c1_854, %c2_855, %c2_856] : memref<4x18x18xf32, #tpu.memory_space<vmem>>, vector<1x16x16xf32>
    %1504 = vector.shape_cast %1503 : vector<1x16x16xf32> to vector<16x16xf32>
    %1505 = vector.broadcast %1502 : f32 to vector<16x16xf32>
    %1506 = arith.mulf %1505, %1504 : vector<16x16xf32>
    %1507 = arith.addf %1501, %1506 : vector<16x16xf32>
    %c90_857 = arith.constant 90 : index
    %1508 = memref.load %arg4[%c90_857] : memref<144xf32, #tpu.memory_space<smem>>
    %c2_858 = arith.constant 2 : index
    %c0_859 = arith.constant 0 : index
    %c0_860 = arith.constant 0 : index
    %1509 = vector.load %arg8[%c2_858, %c0_859, %c0_860] : memref<4x18x18xf32, #tpu.memory_space<vmem>>, vector<1x16x16xf32>
    %1510 = vector.shape_cast %1509 : vector<1x16x16xf32> to vector<16x16xf32>
    %1511 = vector.broadcast %1508 : f32 to vector<16x16xf32>
    %1512 = arith.mulf %1511, %1510 : vector<16x16xf32>
    %1513 = arith.addf %1507, %1512 : vector<16x16xf32>
    %c91_861 = arith.constant 91 : index
    %1514 = memref.load %arg4[%c91_861] : memref<144xf32, #tpu.memory_space<smem>>
    %c2_862 = arith.constant 2 : index
    %c0_863 = arith.constant 0 : index
    %c1_864 = arith.constant 1 : index
    %1515 = vector.load %arg8[%c2_862, %c0_863, %c1_864] : memref<4x18x18xf32, #tpu.memory_space<vmem>>, vector<1x16x16xf32>
    %1516 = vector.shape_cast %1515 : vector<1x16x16xf32> to vector<16x16xf32>
    %1517 = vector.broadcast %1514 : f32 to vector<16x16xf32>
    %1518 = arith.mulf %1517, %1516 : vector<16x16xf32>
    %1519 = arith.addf %1513, %1518 : vector<16x16xf32>
    %c92_865 = arith.constant 92 : index
    %1520 = memref.load %arg4[%c92_865] : memref<144xf32, #tpu.memory_space<smem>>
    %c2_866 = arith.constant 2 : index
    %c0_867 = arith.constant 0 : index
    %c2_868 = arith.constant 2 : index
    %1521 = vector.load %arg8[%c2_866, %c0_867, %c2_868] : memref<4x18x18xf32, #tpu.memory_space<vmem>>, vector<1x16x16xf32>
    %1522 = vector.shape_cast %1521 : vector<1x16x16xf32> to vector<16x16xf32>
    %1523 = vector.broadcast %1520 : f32 to vector<16x16xf32>
    %1524 = arith.mulf %1523, %1522 : vector<16x16xf32>
    %1525 = arith.addf %1519, %1524 : vector<16x16xf32>
    %c93_869 = arith.constant 93 : index
    %1526 = memref.load %arg4[%c93_869] : memref<144xf32, #tpu.memory_space<smem>>
    %c2_870 = arith.constant 2 : index
    %c1_871 = arith.constant 1 : index
    %c0_872 = arith.constant 0 : index
    %1527 = vector.load %arg8[%c2_870, %c1_871, %c0_872] : memref<4x18x18xf32, #tpu.memory_space<vmem>>, vector<1x16x16xf32>
    %1528 = vector.shape_cast %1527 : vector<1x16x16xf32> to vector<16x16xf32>
    %1529 = vector.broadcast %1526 : f32 to vector<16x16xf32>
    %1530 = arith.mulf %1529, %1528 : vector<16x16xf32>
    %1531 = arith.addf %1525, %1530 : vector<16x16xf32>
    %c94_873 = arith.constant 94 : index
    %1532 = memref.load %arg4[%c94_873] : memref<144xf32, #tpu.memory_space<smem>>
    %c2_874 = arith.constant 2 : index
    %c1_875 = arith.constant 1 : index
    %c1_876 = arith.constant 1 : index
    %1533 = vector.load %arg8[%c2_874, %c1_875, %c1_876] : memref<4x18x18xf32, #tpu.memory_space<vmem>>, vector<1x16x16xf32>
    %1534 = vector.shape_cast %1533 : vector<1x16x16xf32> to vector<16x16xf32>
    %1535 = vector.broadcast %1532 : f32 to vector<16x16xf32>
    %1536 = arith.mulf %1535, %1534 : vector<16x16xf32>
    %1537 = arith.addf %1531, %1536 : vector<16x16xf32>
    %c95_877 = arith.constant 95 : index
    %1538 = memref.load %arg4[%c95_877] : memref<144xf32, #tpu.memory_space<smem>>
    %c2_878 = arith.constant 2 : index
    %c1_879 = arith.constant 1 : index
    %c2_880 = arith.constant 2 : index
    %1539 = vector.load %arg8[%c2_878, %c1_879, %c2_880] : memref<4x18x18xf32, #tpu.memory_space<vmem>>, vector<1x16x16xf32>
    %1540 = vector.shape_cast %1539 : vector<1x16x16xf32> to vector<16x16xf32>
    %1541 = vector.broadcast %1538 : f32 to vector<16x16xf32>
    %1542 = arith.mulf %1541, %1540 : vector<16x16xf32>
    %1543 = arith.addf %1537, %1542 : vector<16x16xf32>
    %c96_881 = arith.constant 96 : index
    %1544 = memref.load %arg4[%c96_881] : memref<144xf32, #tpu.memory_space<smem>>
    %c2_882 = arith.constant 2 : index
    %c2_883 = arith.constant 2 : index
    %c0_884 = arith.constant 0 : index
    %1545 = vector.load %arg8[%c2_882, %c2_883, %c0_884] : memref<4x18x18xf32, #tpu.memory_space<vmem>>, vector<1x16x16xf32>
    %1546 = vector.shape_cast %1545 : vector<1x16x16xf32> to vector<16x16xf32>
    %1547 = vector.broadcast %1544 : f32 to vector<16x16xf32>
    %1548 = arith.mulf %1547, %1546 : vector<16x16xf32>
    %1549 = arith.addf %1543, %1548 : vector<16x16xf32>
    %c97_885 = arith.constant 97 : index
    %1550 = memref.load %arg4[%c97_885] : memref<144xf32, #tpu.memory_space<smem>>
    %c2_886 = arith.constant 2 : index
    %c2_887 = arith.constant 2 : index
    %c1_888 = arith.constant 1 : index
    %1551 = vector.load %arg8[%c2_886, %c2_887, %c1_888] : memref<4x18x18xf32, #tpu.memory_space<vmem>>, vector<1x16x16xf32>
    %1552 = vector.shape_cast %1551 : vector<1x16x16xf32> to vector<16x16xf32>
    %1553 = vector.broadcast %1550 : f32 to vector<16x16xf32>
    %1554 = arith.mulf %1553, %1552 : vector<16x16xf32>
    %1555 = arith.addf %1549, %1554 : vector<16x16xf32>
    %c98_889 = arith.constant 98 : index
    %1556 = memref.load %arg4[%c98_889] : memref<144xf32, #tpu.memory_space<smem>>
    %c2_890 = arith.constant 2 : index
    %c2_891 = arith.constant 2 : index
    %c2_892 = arith.constant 2 : index
    %1557 = vector.load %arg8[%c2_890, %c2_891, %c2_892] : memref<4x18x18xf32, #tpu.memory_space<vmem>>, vector<1x16x16xf32>
    %1558 = vector.shape_cast %1557 : vector<1x16x16xf32> to vector<16x16xf32>
    %1559 = vector.broadcast %1556 : f32 to vector<16x16xf32>
    %1560 = arith.mulf %1559, %1558 : vector<16x16xf32>
    %1561 = arith.addf %1555, %1560 : vector<16x16xf32>
    %c99_893 = arith.constant 99 : index
    %1562 = memref.load %arg4[%c99_893] : memref<144xf32, #tpu.memory_space<smem>>
    %c3_894 = arith.constant 3 : index
    %c0_895 = arith.constant 0 : index
    %c0_896 = arith.constant 0 : index
    %1563 = vector.load %arg8[%c3_894, %c0_895, %c0_896] : memref<4x18x18xf32, #tpu.memory_space<vmem>>, vector<1x16x16xf32>
    %1564 = vector.shape_cast %1563 : vector<1x16x16xf32> to vector<16x16xf32>
    %1565 = vector.broadcast %1562 : f32 to vector<16x16xf32>
    %1566 = arith.mulf %1565, %1564 : vector<16x16xf32>
    %1567 = arith.addf %1561, %1566 : vector<16x16xf32>
    %c100_897 = arith.constant 100 : index
    %1568 = memref.load %arg4[%c100_897] : memref<144xf32, #tpu.memory_space<smem>>
    %c3_898 = arith.constant 3 : index
    %c0_899 = arith.constant 0 : index
    %c1_900 = arith.constant 1 : index
    %1569 = vector.load %arg8[%c3_898, %c0_899, %c1_900] : memref<4x18x18xf32, #tpu.memory_space<vmem>>, vector<1x16x16xf32>
    %1570 = vector.shape_cast %1569 : vector<1x16x16xf32> to vector<16x16xf32>
    %1571 = vector.broadcast %1568 : f32 to vector<16x16xf32>
    %1572 = arith.mulf %1571, %1570 : vector<16x16xf32>
    %1573 = arith.addf %1567, %1572 : vector<16x16xf32>
    %c101_901 = arith.constant 101 : index
    %1574 = memref.load %arg4[%c101_901] : memref<144xf32, #tpu.memory_space<smem>>
    %c3_902 = arith.constant 3 : index
    %c0_903 = arith.constant 0 : index
    %c2_904 = arith.constant 2 : index
    %1575 = vector.load %arg8[%c3_902, %c0_903, %c2_904] : memref<4x18x18xf32, #tpu.memory_space<vmem>>, vector<1x16x16xf32>
    %1576 = vector.shape_cast %1575 : vector<1x16x16xf32> to vector<16x16xf32>
    %1577 = vector.broadcast %1574 : f32 to vector<16x16xf32>
    %1578 = arith.mulf %1577, %1576 : vector<16x16xf32>
    %1579 = arith.addf %1573, %1578 : vector<16x16xf32>
    %c102_905 = arith.constant 102 : index
    %1580 = memref.load %arg4[%c102_905] : memref<144xf32, #tpu.memory_space<smem>>
    %c3_906 = arith.constant 3 : index
    %c1_907 = arith.constant 1 : index
    %c0_908 = arith.constant 0 : index
    %1581 = vector.load %arg8[%c3_906, %c1_907, %c0_908] : memref<4x18x18xf32, #tpu.memory_space<vmem>>, vector<1x16x16xf32>
    %1582 = vector.shape_cast %1581 : vector<1x16x16xf32> to vector<16x16xf32>
    %1583 = vector.broadcast %1580 : f32 to vector<16x16xf32>
    %1584 = arith.mulf %1583, %1582 : vector<16x16xf32>
    %1585 = arith.addf %1579, %1584 : vector<16x16xf32>
    %c103_909 = arith.constant 103 : index
    %1586 = memref.load %arg4[%c103_909] : memref<144xf32, #tpu.memory_space<smem>>
    %c3_910 = arith.constant 3 : index
    %c1_911 = arith.constant 1 : index
    %c1_912 = arith.constant 1 : index
    %1587 = vector.load %arg8[%c3_910, %c1_911, %c1_912] : memref<4x18x18xf32, #tpu.memory_space<vmem>>, vector<1x16x16xf32>
    %1588 = vector.shape_cast %1587 : vector<1x16x16xf32> to vector<16x16xf32>
    %1589 = vector.broadcast %1586 : f32 to vector<16x16xf32>
    %1590 = arith.mulf %1589, %1588 : vector<16x16xf32>
    %1591 = arith.addf %1585, %1590 : vector<16x16xf32>
    %c104_913 = arith.constant 104 : index
    %1592 = memref.load %arg4[%c104_913] : memref<144xf32, #tpu.memory_space<smem>>
    %c3_914 = arith.constant 3 : index
    %c1_915 = arith.constant 1 : index
    %c2_916 = arith.constant 2 : index
    %1593 = vector.load %arg8[%c3_914, %c1_915, %c2_916] : memref<4x18x18xf32, #tpu.memory_space<vmem>>, vector<1x16x16xf32>
    %1594 = vector.shape_cast %1593 : vector<1x16x16xf32> to vector<16x16xf32>
    %1595 = vector.broadcast %1592 : f32 to vector<16x16xf32>
    %1596 = arith.mulf %1595, %1594 : vector<16x16xf32>
    %1597 = arith.addf %1591, %1596 : vector<16x16xf32>
    %c105_917 = arith.constant 105 : index
    %1598 = memref.load %arg4[%c105_917] : memref<144xf32, #tpu.memory_space<smem>>
    %c3_918 = arith.constant 3 : index
    %c2_919 = arith.constant 2 : index
    %c0_920 = arith.constant 0 : index
    %1599 = vector.load %arg8[%c3_918, %c2_919, %c0_920] : memref<4x18x18xf32, #tpu.memory_space<vmem>>, vector<1x16x16xf32>
    %1600 = vector.shape_cast %1599 : vector<1x16x16xf32> to vector<16x16xf32>
    %1601 = vector.broadcast %1598 : f32 to vector<16x16xf32>
    %1602 = arith.mulf %1601, %1600 : vector<16x16xf32>
    %1603 = arith.addf %1597, %1602 : vector<16x16xf32>
    %c106_921 = arith.constant 106 : index
    %1604 = memref.load %arg4[%c106_921] : memref<144xf32, #tpu.memory_space<smem>>
    %c3_922 = arith.constant 3 : index
    %c2_923 = arith.constant 2 : index
    %c1_924 = arith.constant 1 : index
    %1605 = vector.load %arg8[%c3_922, %c2_923, %c1_924] : memref<4x18x18xf32, #tpu.memory_space<vmem>>, vector<1x16x16xf32>
    %1606 = vector.shape_cast %1605 : vector<1x16x16xf32> to vector<16x16xf32>
    %1607 = vector.broadcast %1604 : f32 to vector<16x16xf32>
    %1608 = arith.mulf %1607, %1606 : vector<16x16xf32>
    %1609 = arith.addf %1603, %1608 : vector<16x16xf32>
    %c107_925 = arith.constant 107 : index
    %1610 = memref.load %arg4[%c107_925] : memref<144xf32, #tpu.memory_space<smem>>
    %c3_926 = arith.constant 3 : index
    %c2_927 = arith.constant 2 : index
    %c2_928 = arith.constant 2 : index
    %1611 = vector.load %arg8[%c3_926, %c2_927, %c2_928] : memref<4x18x18xf32, #tpu.memory_space<vmem>>, vector<1x16x16xf32>
    %1612 = vector.shape_cast %1611 : vector<1x16x16xf32> to vector<16x16xf32>
    %1613 = vector.broadcast %1610 : f32 to vector<16x16xf32>
    %1614 = arith.mulf %1613, %1612 : vector<16x16xf32>
    %1615 = arith.addf %1609, %1614 : vector<16x16xf32>
    %c2_929 = arith.constant 2 : index
    %1616 = memref.load %arg5[%c2_929] : memref<4xf32, #tpu.memory_space<smem>>
    %1617 = vector.broadcast %1616 : f32 to vector<16x16xf32>
    %1618 = arith.addf %1615, %1617 : vector<16x16xf32>
    %1619 = vector.extract_strided_slice %5 {offsets = [2, 0, 0], sizes = [1, 16, 16], strides = [1, 1, 1]} : vector<4x16x16xf32> to vector<1x16x16xf32>
    %1620 = vector.shape_cast %1619 : vector<1x16x16xf32> to vector<16x16xf32>
    %1621 = arith.addf %1618, %1620 : vector<16x16xf32>
    %cst_930 = arith.constant 0.000000e+00 : f32
    %1622 = vector.broadcast %cst_930 : f32 to vector<16x16xf32>
    %1623 = arith.subf %1622, %1621 : vector<16x16xf32>
    %1624 = math.exp %1623 : vector<16x16xf32>
    %cst_931 = arith.constant 1.000000e+00 : f32
    %1625 = vector.broadcast %cst_931 : f32 to vector<16x16xf32>
    %1626 = arith.addf %1625, %1624 : vector<16x16xf32>
    %cst_932 = arith.constant 1.000000e+00 : f32
    %1627 = vector.broadcast %cst_932 : f32 to vector<16x16xf32>
    %1628 = arith.divf %1627, %1626 : vector<16x16xf32>
    %1629 = arith.mulf %1621, %1628 : vector<16x16xf32>
    %c0_933 = arith.constant 0 : index
    %c2_934 = arith.constant 2 : index
    %c0_935 = arith.constant 0 : index
    %c0_936 = arith.constant 0 : index
    %1630 = vector.load %arg6[%c0_933, %c2_934, %c0_935, %c0_936] : memref<1x4x16x16xf32, #tpu.memory_space<vmem>>, vector<1x1x16x16xf32>
    %1631 = vector.shape_cast %1630 : vector<1x1x16x16xf32> to vector<16x16xf32>
    %1632 = vector.shape_cast %1629 : vector<16x16xf32> to vector<1x1x16x16xf32>
    tpu.vector_store %arg6[%c0_933, %c2_934, %c0_935, %c0_936], %1632 {strides = array<i32>} : memref<1x4x16x16xf32, #tpu.memory_space<vmem>>, vector<1x1x16x16xf32>,
    %cst_937 = arith.constant 0.000000e+00 : f32
    %1633 = vector.broadcast %cst_937 : f32 to vector<16x16xf32>
    %c108_938 = arith.constant 108 : index
    %1634 = memref.load %arg4[%c108_938] : memref<144xf32, #tpu.memory_space<smem>>
    %c0_939 = arith.constant 0 : index
    %c0_940 = arith.constant 0 : index
    %c0_941 = arith.constant 0 : index
    %1635 = vector.load %arg8[%c0_939, %c0_940, %c0_941] : memref<4x18x18xf32, #tpu.memory_space<vmem>>, vector<1x16x16xf32>
    %1636 = vector.shape_cast %1635 : vector<1x16x16xf32> to vector<16x16xf32>
    %1637 = vector.broadcast %1634 : f32 to vector<16x16xf32>
    %1638 = arith.mulf %1637, %1636 : vector<16x16xf32>
    %1639 = arith.addf %1633, %1638 : vector<16x16xf32>
    %c109_942 = arith.constant 109 : index
    %1640 = memref.load %arg4[%c109_942] : memref<144xf32, #tpu.memory_space<smem>>
    %c0_943 = arith.constant 0 : index
    %c0_944 = arith.constant 0 : index
    %c1_945 = arith.constant 1 : index
    %1641 = vector.load %arg8[%c0_943, %c0_944, %c1_945] : memref<4x18x18xf32, #tpu.memory_space<vmem>>, vector<1x16x16xf32>
    %1642 = vector.shape_cast %1641 : vector<1x16x16xf32> to vector<16x16xf32>
    %1643 = vector.broadcast %1640 : f32 to vector<16x16xf32>
    %1644 = arith.mulf %1643, %1642 : vector<16x16xf32>
    %1645 = arith.addf %1639, %1644 : vector<16x16xf32>
    %c110_946 = arith.constant 110 : index
    %1646 = memref.load %arg4[%c110_946] : memref<144xf32, #tpu.memory_space<smem>>
    %c0_947 = arith.constant 0 : index
    %c0_948 = arith.constant 0 : index
    %c2_949 = arith.constant 2 : index
    %1647 = vector.load %arg8[%c0_947, %c0_948, %c2_949] : memref<4x18x18xf32, #tpu.memory_space<vmem>>, vector<1x16x16xf32>
    %1648 = vector.shape_cast %1647 : vector<1x16x16xf32> to vector<16x16xf32>
    %1649 = vector.broadcast %1646 : f32 to vector<16x16xf32>
    %1650 = arith.mulf %1649, %1648 : vector<16x16xf32>
    %1651 = arith.addf %1645, %1650 : vector<16x16xf32>
    %c111_950 = arith.constant 111 : index
    %1652 = memref.load %arg4[%c111_950] : memref<144xf32, #tpu.memory_space<smem>>
    %c0_951 = arith.constant 0 : index
    %c1_952 = arith.constant 1 : index
    %c0_953 = arith.constant 0 : index
    %1653 = vector.load %arg8[%c0_951, %c1_952, %c0_953] : memref<4x18x18xf32, #tpu.memory_space<vmem>>, vector<1x16x16xf32>
    %1654 = vector.shape_cast %1653 : vector<1x16x16xf32> to vector<16x16xf32>
    %1655 = vector.broadcast %1652 : f32 to vector<16x16xf32>
    %1656 = arith.mulf %1655, %1654 : vector<16x16xf32>
    %1657 = arith.addf %1651, %1656 : vector<16x16xf32>
    %c112_954 = arith.constant 112 : index
    %1658 = memref.load %arg4[%c112_954] : memref<144xf32, #tpu.memory_space<smem>>
    %c0_955 = arith.constant 0 : index
    %c1_956 = arith.constant 1 : index
    %c1_957 = arith.constant 1 : index
    %1659 = vector.load %arg8[%c0_955, %c1_956, %c1_957] : memref<4x18x18xf32, #tpu.memory_space<vmem>>, vector<1x16x16xf32>
    %1660 = vector.shape_cast %1659 : vector<1x16x16xf32> to vector<16x16xf32>
    %1661 = vector.broadcast %1658 : f32 to vector<16x16xf32>
    %1662 = arith.mulf %1661, %1660 : vector<16x16xf32>
    %1663 = arith.addf %1657, %1662 : vector<16x16xf32>
    %c113_958 = arith.constant 113 : index
    %1664 = memref.load %arg4[%c113_958] : memref<144xf32, #tpu.memory_space<smem>>
    %c0_959 = arith.constant 0 : index
    %c1_960 = arith.constant 1 : index
    %c2_961 = arith.constant 2 : index
    %1665 = vector.load %arg8[%c0_959, %c1_960, %c2_961] : memref<4x18x18xf32, #tpu.memory_space<vmem>>, vector<1x16x16xf32>
    %1666 = vector.shape_cast %1665 : vector<1x16x16xf32> to vector<16x16xf32>
    %1667 = vector.broadcast %1664 : f32 to vector<16x16xf32>
    %1668 = arith.mulf %1667, %1666 : vector<16x16xf32>
    %1669 = arith.addf %1663, %1668 : vector<16x16xf32>
    %c114_962 = arith.constant 114 : index
    %1670 = memref.load %arg4[%c114_962] : memref<144xf32, #tpu.memory_space<smem>>
    %c0_963 = arith.constant 0 : index
    %c2_964 = arith.constant 2 : index
    %c0_965 = arith.constant 0 : index
    %1671 = vector.load %arg8[%c0_963, %c2_964, %c0_965] : memref<4x18x18xf32, #tpu.memory_space<vmem>>, vector<1x16x16xf32>
    %1672 = vector.shape_cast %1671 : vector<1x16x16xf32> to vector<16x16xf32>
    %1673 = vector.broadcast %1670 : f32 to vector<16x16xf32>
    %1674 = arith.mulf %1673, %1672 : vector<16x16xf32>
    %1675 = arith.addf %1669, %1674 : vector<16x16xf32>
    %c115_966 = arith.constant 115 : index
    %1676 = memref.load %arg4[%c115_966] : memref<144xf32, #tpu.memory_space<smem>>
    %c0_967 = arith.constant 0 : index
    %c2_968 = arith.constant 2 : index
    %c1_969 = arith.constant 1 : index
    %1677 = vector.load %arg8[%c0_967, %c2_968, %c1_969] : memref<4x18x18xf32, #tpu.memory_space<vmem>>, vector<1x16x16xf32>
    %1678 = vector.shape_cast %1677 : vector<1x16x16xf32> to vector<16x16xf32>
    %1679 = vector.broadcast %1676 : f32 to vector<16x16xf32>
    %1680 = arith.mulf %1679, %1678 : vector<16x16xf32>
    %1681 = arith.addf %1675, %1680 : vector<16x16xf32>
    %c116_970 = arith.constant 116 : index
    %1682 = memref.load %arg4[%c116_970] : memref<144xf32, #tpu.memory_space<smem>>
    %c0_971 = arith.constant 0 : index
    %c2_972 = arith.constant 2 : index
    %c2_973 = arith.constant 2 : index
    %1683 = vector.load %arg8[%c0_971, %c2_972, %c2_973] : memref<4x18x18xf32, #tpu.memory_space<vmem>>, vector<1x16x16xf32>
    %1684 = vector.shape_cast %1683 : vector<1x16x16xf32> to vector<16x16xf32>
    %1685 = vector.broadcast %1682 : f32 to vector<16x16xf32>
    %1686 = arith.mulf %1685, %1684 : vector<16x16xf32>
    %1687 = arith.addf %1681, %1686 : vector<16x16xf32>
    %c117_974 = arith.constant 117 : index
    %1688 = memref.load %arg4[%c117_974] : memref<144xf32, #tpu.memory_space<smem>>
    %c1_975 = arith.constant 1 : index
    %c0_976 = arith.constant 0 : index
    %c0_977 = arith.constant 0 : index
    %1689 = vector.load %arg8[%c1_975, %c0_976, %c0_977] : memref<4x18x18xf32, #tpu.memory_space<vmem>>, vector<1x16x16xf32>
    %1690 = vector.shape_cast %1689 : vector<1x16x16xf32> to vector<16x16xf32>
    %1691 = vector.broadcast %1688 : f32 to vector<16x16xf32>
    %1692 = arith.mulf %1691, %1690 : vector<16x16xf32>
    %1693 = arith.addf %1687, %1692 : vector<16x16xf32>
    %c118_978 = arith.constant 118 : index
    %1694 = memref.load %arg4[%c118_978] : memref<144xf32, #tpu.memory_space<smem>>
    %c1_979 = arith.constant 1 : index
    %c0_980 = arith.constant 0 : index
    %c1_981 = arith.constant 1 : index
    %1695 = vector.load %arg8[%c1_979, %c0_980, %c1_981] : memref<4x18x18xf32, #tpu.memory_space<vmem>>, vector<1x16x16xf32>
    %1696 = vector.shape_cast %1695 : vector<1x16x16xf32> to vector<16x16xf32>
    %1697 = vector.broadcast %1694 : f32 to vector<16x16xf32>
    %1698 = arith.mulf %1697, %1696 : vector<16x16xf32>
    %1699 = arith.addf %1693, %1698 : vector<16x16xf32>
    %c119_982 = arith.constant 119 : index
    %1700 = memref.load %arg4[%c119_982] : memref<144xf32, #tpu.memory_space<smem>>
    %c1_983 = arith.constant 1 : index
    %c0_984 = arith.constant 0 : index
    %c2_985 = arith.constant 2 : index
    %1701 = vector.load %arg8[%c1_983, %c0_984, %c2_985] : memref<4x18x18xf32, #tpu.memory_space<vmem>>, vector<1x16x16xf32>
    %1702 = vector.shape_cast %1701 : vector<1x16x16xf32> to vector<16x16xf32>
    %1703 = vector.broadcast %1700 : f32 to vector<16x16xf32>
    %1704 = arith.mulf %1703, %1702 : vector<16x16xf32>
    %1705 = arith.addf %1699, %1704 : vector<16x16xf32>
    %c120_986 = arith.constant 120 : index
    %1706 = memref.load %arg4[%c120_986] : memref<144xf32, #tpu.memory_space<smem>>
    %c1_987 = arith.constant 1 : index
    %c1_988 = arith.constant 1 : index
    %c0_989 = arith.constant 0 : index
    %1707 = vector.load %arg8[%c1_987, %c1_988, %c0_989] : memref<4x18x18xf32, #tpu.memory_space<vmem>>, vector<1x16x16xf32>
    %1708 = vector.shape_cast %1707 : vector<1x16x16xf32> to vector<16x16xf32>
    %1709 = vector.broadcast %1706 : f32 to vector<16x16xf32>
    %1710 = arith.mulf %1709, %1708 : vector<16x16xf32>
    %1711 = arith.addf %1705, %1710 : vector<16x16xf32>
    %c121_990 = arith.constant 121 : index
    %1712 = memref.load %arg4[%c121_990] : memref<144xf32, #tpu.memory_space<smem>>
    %c1_991 = arith.constant 1 : index
    %c1_992 = arith.constant 1 : index
    %c1_993 = arith.constant 1 : index
    %1713 = vector.load %arg8[%c1_991, %c1_992, %c1_993] : memref<4x18x18xf32, #tpu.memory_space<vmem>>, vector<1x16x16xf32>
    %1714 = vector.shape_cast %1713 : vector<1x16x16xf32> to vector<16x16xf32>
    %1715 = vector.broadcast %1712 : f32 to vector<16x16xf32>
    %1716 = arith.mulf %1715, %1714 : vector<16x16xf32>
    %1717 = arith.addf %1711, %1716 : vector<16x16xf32>
    %c122_994 = arith.constant 122 : index
    %1718 = memref.load %arg4[%c122_994] : memref<144xf32, #tpu.memory_space<smem>>
    %c1_995 = arith.constant 1 : index
    %c1_996 = arith.constant 1 : index
    %c2_997 = arith.constant 2 : index
    %1719 = vector.load %arg8[%c1_995, %c1_996, %c2_997] : memref<4x18x18xf32, #tpu.memory_space<vmem>>, vector<1x16x16xf32>
    %1720 = vector.shape_cast %1719 : vector<1x16x16xf32> to vector<16x16xf32>
    %1721 = vector.broadcast %1718 : f32 to vector<16x16xf32>
    %1722 = arith.mulf %1721, %1720 : vector<16x16xf32>
    %1723 = arith.addf %1717, %1722 : vector<16x16xf32>
    %c123_998 = arith.constant 123 : index
    %1724 = memref.load %arg4[%c123_998] : memref<144xf32, #tpu.memory_space<smem>>
    %c1_999 = arith.constant 1 : index
    %c2_1000 = arith.constant 2 : index
    %c0_1001 = arith.constant 0 : index
    %1725 = vector.load %arg8[%c1_999, %c2_1000, %c0_1001] : memref<4x18x18xf32, #tpu.memory_space<vmem>>, vector<1x16x16xf32>
    %1726 = vector.shape_cast %1725 : vector<1x16x16xf32> to vector<16x16xf32>
    %1727 = vector.broadcast %1724 : f32 to vector<16x16xf32>
    %1728 = arith.mulf %1727, %1726 : vector<16x16xf32>
    %1729 = arith.addf %1723, %1728 : vector<16x16xf32>
    %c124_1002 = arith.constant 124 : index
    %1730 = memref.load %arg4[%c124_1002] : memref<144xf32, #tpu.memory_space<smem>>
    %c1_1003 = arith.constant 1 : index
    %c2_1004 = arith.constant 2 : index
    %c1_1005 = arith.constant 1 : index
    %1731 = vector.load %arg8[%c1_1003, %c2_1004, %c1_1005] : memref<4x18x18xf32, #tpu.memory_space<vmem>>, vector<1x16x16xf32>
    %1732 = vector.shape_cast %1731 : vector<1x16x16xf32> to vector<16x16xf32>
    %1733 = vector.broadcast %1730 : f32 to vector<16x16xf32>
    %1734 = arith.mulf %1733, %1732 : vector<16x16xf32>
    %1735 = arith.addf %1729, %1734 : vector<16x16xf32>
    %c125_1006 = arith.constant 125 : index
    %1736 = memref.load %arg4[%c125_1006] : memref<144xf32, #tpu.memory_space<smem>>
    %c1_1007 = arith.constant 1 : index
    %c2_1008 = arith.constant 2 : index
    %c2_1009 = arith.constant 2 : index
    %1737 = vector.load %arg8[%c1_1007, %c2_1008, %c2_1009] : memref<4x18x18xf32, #tpu.memory_space<vmem>>, vector<1x16x16xf32>
    %1738 = vector.shape_cast %1737 : vector<1x16x16xf32> to vector<16x16xf32>
    %1739 = vector.broadcast %1736 : f32 to vector<16x16xf32>
    %1740 = arith.mulf %1739, %1738 : vector<16x16xf32>
    %1741 = arith.addf %1735, %1740 : vector<16x16xf32>
    %c126_1010 = arith.constant 126 : index
    %1742 = memref.load %arg4[%c126_1010] : memref<144xf32, #tpu.memory_space<smem>>
    %c2_1011 = arith.constant 2 : index
    %c0_1012 = arith.constant 0 : index
    %c0_1013 = arith.constant 0 : index
    %1743 = vector.load %arg8[%c2_1011, %c0_1012, %c0_1013] : memref<4x18x18xf32, #tpu.memory_space<vmem>>, vector<1x16x16xf32>
    %1744 = vector.shape_cast %1743 : vector<1x16x16xf32> to vector<16x16xf32>
    %1745 = vector.broadcast %1742 : f32 to vector<16x16xf32>
    %1746 = arith.mulf %1745, %1744 : vector<16x16xf32>
    %1747 = arith.addf %1741, %1746 : vector<16x16xf32>
    %c127_1014 = arith.constant 127 : index
    %1748 = memref.load %arg4[%c127_1014] : memref<144xf32, #tpu.memory_space<smem>>
    %c2_1015 = arith.constant 2 : index
    %c0_1016 = arith.constant 0 : index
    %c1_1017 = arith.constant 1 : index
    %1749 = vector.load %arg8[%c2_1015, %c0_1016, %c1_1017] : memref<4x18x18xf32, #tpu.memory_space<vmem>>, vector<1x16x16xf32>
    %1750 = vector.shape_cast %1749 : vector<1x16x16xf32> to vector<16x16xf32>
    %1751 = vector.broadcast %1748 : f32 to vector<16x16xf32>
    %1752 = arith.mulf %1751, %1750 : vector<16x16xf32>
    %1753 = arith.addf %1747, %1752 : vector<16x16xf32>
    %c128_1018 = arith.constant 128 : index
    %1754 = memref.load %arg4[%c128_1018] : memref<144xf32, #tpu.memory_space<smem>>
    %c2_1019 = arith.constant 2 : index
    %c0_1020 = arith.constant 0 : index
    %c2_1021 = arith.constant 2 : index
    %1755 = vector.load %arg8[%c2_1019, %c0_1020, %c2_1021] : memref<4x18x18xf32, #tpu.memory_space<vmem>>, vector<1x16x16xf32>
    %1756 = vector.shape_cast %1755 : vector<1x16x16xf32> to vector<16x16xf32>
    %1757 = vector.broadcast %1754 : f32 to vector<16x16xf32>
    %1758 = arith.mulf %1757, %1756 : vector<16x16xf32>
    %1759 = arith.addf %1753, %1758 : vector<16x16xf32>
    %c129_1022 = arith.constant 129 : index
    %1760 = memref.load %arg4[%c129_1022] : memref<144xf32, #tpu.memory_space<smem>>
    %c2_1023 = arith.constant 2 : index
    %c1_1024 = arith.constant 1 : index
    %c0_1025 = arith.constant 0 : index
    %1761 = vector.load %arg8[%c2_1023, %c1_1024, %c0_1025] : memref<4x18x18xf32, #tpu.memory_space<vmem>>, vector<1x16x16xf32>
    %1762 = vector.shape_cast %1761 : vector<1x16x16xf32> to vector<16x16xf32>
    %1763 = vector.broadcast %1760 : f32 to vector<16x16xf32>
    %1764 = arith.mulf %1763, %1762 : vector<16x16xf32>
    %1765 = arith.addf %1759, %1764 : vector<16x16xf32>
    %c130_1026 = arith.constant 130 : index
    %1766 = memref.load %arg4[%c130_1026] : memref<144xf32, #tpu.memory_space<smem>>
    %c2_1027 = arith.constant 2 : index
    %c1_1028 = arith.constant 1 : index
    %c1_1029 = arith.constant 1 : index
    %1767 = vector.load %arg8[%c2_1027, %c1_1028, %c1_1029] : memref<4x18x18xf32, #tpu.memory_space<vmem>>, vector<1x16x16xf32>
    %1768 = vector.shape_cast %1767 : vector<1x16x16xf32> to vector<16x16xf32>
    %1769 = vector.broadcast %1766 : f32 to vector<16x16xf32>
    %1770 = arith.mulf %1769, %1768 : vector<16x16xf32>
    %1771 = arith.addf %1765, %1770 : vector<16x16xf32>
    %c131_1030 = arith.constant 131 : index
    %1772 = memref.load %arg4[%c131_1030] : memref<144xf32, #tpu.memory_space<smem>>
    %c2_1031 = arith.constant 2 : index
    %c1_1032 = arith.constant 1 : index
    %c2_1033 = arith.constant 2 : index
    %1773 = vector.load %arg8[%c2_1031, %c1_1032, %c2_1033] : memref<4x18x18xf32, #tpu.memory_space<vmem>>, vector<1x16x16xf32>
    %1774 = vector.shape_cast %1773 : vector<1x16x16xf32> to vector<16x16xf32>
    %1775 = vector.broadcast %1772 : f32 to vector<16x16xf32>
    %1776 = arith.mulf %1775, %1774 : vector<16x16xf32>
    %1777 = arith.addf %1771, %1776 : vector<16x16xf32>
    %c132_1034 = arith.constant 132 : index
    %1778 = memref.load %arg4[%c132_1034] : memref<144xf32, #tpu.memory_space<smem>>
    %c2_1035 = arith.constant 2 : index
    %c2_1036 = arith.constant 2 : index
    %c0_1037 = arith.constant 0 : index
    %1779 = vector.load %arg8[%c2_1035, %c2_1036, %c0_1037] : memref<4x18x18xf32, #tpu.memory_space<vmem>>, vector<1x16x16xf32>
    %1780 = vector.shape_cast %1779 : vector<1x16x16xf32> to vector<16x16xf32>
    %1781 = vector.broadcast %1778 : f32 to vector<16x16xf32>
    %1782 = arith.mulf %1781, %1780 : vector<16x16xf32>
    %1783 = arith.addf %1777, %1782 : vector<16x16xf32>
    %c133_1038 = arith.constant 133 : index
    %1784 = memref.load %arg4[%c133_1038] : memref<144xf32, #tpu.memory_space<smem>>
    %c2_1039 = arith.constant 2 : index
    %c2_1040 = arith.constant 2 : index
    %c1_1041 = arith.constant 1 : index
    %1785 = vector.load %arg8[%c2_1039, %c2_1040, %c1_1041] : memref<4x18x18xf32, #tpu.memory_space<vmem>>, vector<1x16x16xf32>
    %1786 = vector.shape_cast %1785 : vector<1x16x16xf32> to vector<16x16xf32>
    %1787 = vector.broadcast %1784 : f32 to vector<16x16xf32>
    %1788 = arith.mulf %1787, %1786 : vector<16x16xf32>
    %1789 = arith.addf %1783, %1788 : vector<16x16xf32>
    %c134_1042 = arith.constant 134 : index
    %1790 = memref.load %arg4[%c134_1042] : memref<144xf32, #tpu.memory_space<smem>>
    %c2_1043 = arith.constant 2 : index
    %c2_1044 = arith.constant 2 : index
    %c2_1045 = arith.constant 2 : index
    %1791 = vector.load %arg8[%c2_1043, %c2_1044, %c2_1045] : memref<4x18x18xf32, #tpu.memory_space<vmem>>, vector<1x16x16xf32>
    %1792 = vector.shape_cast %1791 : vector<1x16x16xf32> to vector<16x16xf32>
    %1793 = vector.broadcast %1790 : f32 to vector<16x16xf32>
    %1794 = arith.mulf %1793, %1792 : vector<16x16xf32>
    %1795 = arith.addf %1789, %1794 : vector<16x16xf32>
    %c135_1046 = arith.constant 135 : index
    %1796 = memref.load %arg4[%c135_1046] : memref<144xf32, #tpu.memory_space<smem>>
    %c3_1047 = arith.constant 3 : index
    %c0_1048 = arith.constant 0 : index
    %c0_1049 = arith.constant 0 : index
    %1797 = vector.load %arg8[%c3_1047, %c0_1048, %c0_1049] : memref<4x18x18xf32, #tpu.memory_space<vmem>>, vector<1x16x16xf32>
    %1798 = vector.shape_cast %1797 : vector<1x16x16xf32> to vector<16x16xf32>
    %1799 = vector.broadcast %1796 : f32 to vector<16x16xf32>
    %1800 = arith.mulf %1799, %1798 : vector<16x16xf32>
    %1801 = arith.addf %1795, %1800 : vector<16x16xf32>
    %c136_1050 = arith.constant 136 : index
    %1802 = memref.load %arg4[%c136_1050] : memref<144xf32, #tpu.memory_space<smem>>
    %c3_1051 = arith.constant 3 : index
    %c0_1052 = arith.constant 0 : index
    %c1_1053 = arith.constant 1 : index
    %1803 = vector.load %arg8[%c3_1051, %c0_1052, %c1_1053] : memref<4x18x18xf32, #tpu.memory_space<vmem>>, vector<1x16x16xf32>
    %1804 = vector.shape_cast %1803 : vector<1x16x16xf32> to vector<16x16xf32>
    %1805 = vector.broadcast %1802 : f32 to vector<16x16xf32>
    %1806 = arith.mulf %1805, %1804 : vector<16x16xf32>
    %1807 = arith.addf %1801, %1806 : vector<16x16xf32>
    %c137_1054 = arith.constant 137 : index
    %1808 = memref.load %arg4[%c137_1054] : memref<144xf32, #tpu.memory_space<smem>>
    %c3_1055 = arith.constant 3 : index
    %c0_1056 = arith.constant 0 : index
    %c2_1057 = arith.constant 2 : index
    %1809 = vector.load %arg8[%c3_1055, %c0_1056, %c2_1057] : memref<4x18x18xf32, #tpu.memory_space<vmem>>, vector<1x16x16xf32>
    %1810 = vector.shape_cast %1809 : vector<1x16x16xf32> to vector<16x16xf32>
    %1811 = vector.broadcast %1808 : f32 to vector<16x16xf32>
    %1812 = arith.mulf %1811, %1810 : vector<16x16xf32>
    %1813 = arith.addf %1807, %1812 : vector<16x16xf32>
    %c138_1058 = arith.constant 138 : index
    %1814 = memref.load %arg4[%c138_1058] : memref<144xf32, #tpu.memory_space<smem>>
    %c3_1059 = arith.constant 3 : index
    %c1_1060 = arith.constant 1 : index
    %c0_1061 = arith.constant 0 : index
    %1815 = vector.load %arg8[%c3_1059, %c1_1060, %c0_1061] : memref<4x18x18xf32, #tpu.memory_space<vmem>>, vector<1x16x16xf32>
    %1816 = vector.shape_cast %1815 : vector<1x16x16xf32> to vector<16x16xf32>
    %1817 = vector.broadcast %1814 : f32 to vector<16x16xf32>
    %1818 = arith.mulf %1817, %1816 : vector<16x16xf32>
    %1819 = arith.addf %1813, %1818 : vector<16x16xf32>
    %c139_1062 = arith.constant 139 : index
    %1820 = memref.load %arg4[%c139_1062] : memref<144xf32, #tpu.memory_space<smem>>
    %c3_1063 = arith.constant 3 : index
    %c1_1064 = arith.constant 1 : index
    %c1_1065 = arith.constant 1 : index
    %1821 = vector.load %arg8[%c3_1063, %c1_1064, %c1_1065] : memref<4x18x18xf32, #tpu.memory_space<vmem>>, vector<1x16x16xf32>
    %1822 = vector.shape_cast %1821 : vector<1x16x16xf32> to vector<16x16xf32>
    %1823 = vector.broadcast %1820 : f32 to vector<16x16xf32>
    %1824 = arith.mulf %1823, %1822 : vector<16x16xf32>
    %1825 = arith.addf %1819, %1824 : vector<16x16xf32>
    %c140_1066 = arith.constant 140 : index
    %1826 = memref.load %arg4[%c140_1066] : memref<144xf32, #tpu.memory_space<smem>>
    %c3_1067 = arith.constant 3 : index
    %c1_1068 = arith.constant 1 : index
    %c2_1069 = arith.constant 2 : index
    %1827 = vector.load %arg8[%c3_1067, %c1_1068, %c2_1069] : memref<4x18x18xf32, #tpu.memory_space<vmem>>, vector<1x16x16xf32>
    %1828 = vector.shape_cast %1827 : vector<1x16x16xf32> to vector<16x16xf32>
    %1829 = vector.broadcast %1826 : f32 to vector<16x16xf32>
    %1830 = arith.mulf %1829, %1828 : vector<16x16xf32>
    %1831 = arith.addf %1825, %1830 : vector<16x16xf32>
    %c141_1070 = arith.constant 141 : index
    %1832 = memref.load %arg4[%c141_1070] : memref<144xf32, #tpu.memory_space<smem>>
    %c3_1071 = arith.constant 3 : index
    %c2_1072 = arith.constant 2 : index
    %c0_1073 = arith.constant 0 : index
    %1833 = vector.load %arg8[%c3_1071, %c2_1072, %c0_1073] : memref<4x18x18xf32, #tpu.memory_space<vmem>>, vector<1x16x16xf32>
    %1834 = vector.shape_cast %1833 : vector<1x16x16xf32> to vector<16x16xf32>
    %1835 = vector.broadcast %1832 : f32 to vector<16x16xf32>
    %1836 = arith.mulf %1835, %1834 : vector<16x16xf32>
    %1837 = arith.addf %1831, %1836 : vector<16x16xf32>
    %c142_1074 = arith.constant 142 : index
    %1838 = memref.load %arg4[%c142_1074] : memref<144xf32, #tpu.memory_space<smem>>
    %c3_1075 = arith.constant 3 : index
    %c2_1076 = arith.constant 2 : index
    %c1_1077 = arith.constant 1 : index
    %1839 = vector.load %arg8[%c3_1075, %c2_1076, %c1_1077] : memref<4x18x18xf32, #tpu.memory_space<vmem>>, vector<1x16x16xf32>
    %1840 = vector.shape_cast %1839 : vector<1x16x16xf32> to vector<16x16xf32>
    %1841 = vector.broadcast %1838 : f32 to vector<16x16xf32>
    %1842 = arith.mulf %1841, %1840 : vector<16x16xf32>
    %1843 = arith.addf %1837, %1842 : vector<16x16xf32>
    %c143_1078 = arith.constant 143 : index
    %1844 = memref.load %arg4[%c143_1078] : memref<144xf32, #tpu.memory_space<smem>>
    %c3_1079 = arith.constant 3 : index
    %c2_1080 = arith.constant 2 : index
    %c2_1081 = arith.constant 2 : index
    %1845 = vector.load %arg8[%c3_1079, %c2_1080, %c2_1081] : memref<4x18x18xf32, #tpu.memory_space<vmem>>, vector<1x16x16xf32>
    %1846 = vector.shape_cast %1845 : vector<1x16x16xf32> to vector<16x16xf32>
    %1847 = vector.broadcast %1844 : f32 to vector<16x16xf32>
    %1848 = arith.mulf %1847, %1846 : vector<16x16xf32>
    %1849 = arith.addf %1843, %1848 : vector<16x16xf32>
    %c3_1082 = arith.constant 3 : index
    %1850 = memref.load %arg5[%c3_1082] : memref<4xf32, #tpu.memory_space<smem>>
    %1851 = vector.broadcast %1850 : f32 to vector<16x16xf32>
    %1852 = arith.addf %1849, %1851 : vector<16x16xf32>
    %1853 = vector.extract_strided_slice %5 {offsets = [3, 0, 0], sizes = [1, 16, 16], strides = [1, 1, 1]} : vector<4x16x16xf32> to vector<1x16x16xf32>
    %1854 = vector.shape_cast %1853 : vector<1x16x16xf32> to vector<16x16xf32>
    %1855 = arith.addf %1852, %1854 : vector<16x16xf32>
    %cst_1083 = arith.constant 0.000000e+00 : f32
    %1856 = vector.broadcast %cst_1083 : f32 to vector<16x16xf32>
    %1857 = arith.subf %1856, %1855 : vector<16x16xf32>
    %1858 = math.exp %1857 : vector<16x16xf32>
    %cst_1084 = arith.constant 1.000000e+00 : f32
    %1859 = vector.broadcast %cst_1084 : f32 to vector<16x16xf32>
    %1860 = arith.addf %1859, %1858 : vector<16x16xf32>
    %cst_1085 = arith.constant 1.000000e+00 : f32
    %1861 = vector.broadcast %cst_1085 : f32 to vector<16x16xf32>
    %1862 = arith.divf %1861, %1860 : vector<16x16xf32>
    %1863 = arith.mulf %1855, %1862 : vector<16x16xf32>
    %c0_1086 = arith.constant 0 : index
    %c3_1087 = arith.constant 3 : index
    %c0_1088 = arith.constant 0 : index
    %c0_1089 = arith.constant 0 : index
    %1864 = vector.load %arg6[%c0_1086, %c3_1087, %c0_1088, %c0_1089] : memref<1x4x16x16xf32, #tpu.memory_space<vmem>>, vector<1x1x16x16xf32>
    %1865 = vector.shape_cast %1864 : vector<1x1x16x16xf32> to vector<16x16xf32>
    %1866 = vector.shape_cast %1863 : vector<16x16xf32> to vector<1x1x16x16xf32>
    tpu.vector_store %arg6[%c0_1086, %c3_1087, %c0_1088, %c0_1089], %1866 {strides = array<i32>} : memref<1x4x16x16xf32, #tpu.memory_space<vmem>>, vector<1x1x16x16xf32>,
    return
  }
  func.func @transform_0(%arg0: i32) -> (i32, i32, i32, i32) {
    %c0_i32 = arith.constant 0 : i32
    %c0_i32_0 = arith.constant 0 : i32
    %c0_i32_1 = arith.constant 0 : i32
    %c0_i32_2 = arith.constant 0 : i32
    return %arg0, %c0_i32, %c0_i32_0, %c0_i32_1 : i32, i32, i32, i32
  }
  func.func @transform_1(%arg0: i32) -> i32 {
    %c0_i32 = arith.constant 0 : i32
    %c0_i32_0 = arith.constant 0 : i32
    return %c0_i32 : i32
  }
  func.func @transform_2(%arg0: i32) -> i32 {
    %c0_i32 = arith.constant 0 : i32
    %c0_i32_0 = arith.constant 0 : i32
    return %c0_i32 : i32
  }
  func.func @transform_3(%arg0: i32) -> i32 {
    %c0_i32 = arith.constant 0 : i32
    %c0_i32_0 = arith.constant 0 : i32
    return %c0_i32 : i32
  }
  func.func @transform_4(%arg0: i32) -> i32 {
    %c0_i32 = arith.constant 0 : i32
    %c0_i32_0 = arith.constant 0 : i32
    return %c0_i32 : i32
  }
  func.func @transform_5(%arg0: i32) -> (i32, i32, i32, i32) {
    %c0_i32 = arith.constant 0 : i32
    %c0_i32_0 = arith.constant 0 : i32
    %c0_i32_1 = arith.constant 0 : i32
    %c0_i32_2 = arith.constant 0 : i32
    return %arg0, %c0_i32, %c0_i32_0, %c0_i32_1 : i32, i32, i32, i32
  }
}

</mosaic_0001>

<llo_original>
// kernel: tpu_custom_call.1
$region0: #{tpu_custom_call.1}
  #allocation0 [shape = 'u32[]', space=smem, size = 0x4, offset = 0x4, fixed_abs, tag = 'smem constant byte address 0x4 - core index']
  #allocation1 [shape = 'u32[144,128]{1,0:T(1,128)}', space=vmem, size = 0x12000, scoped, tag = 'internal scratch']
  #allocation2 [shape = 'f32[4,18,18]{2,1,0:T(8,128)}', space=vmem, size = 0xc000, scoped, tag = 'scratch operand']
  #allocation3 [shape = 'f32[4,18,18]{2,1,0:T(8,128)}', space=vmem, size = 0xc000, scoped, tag = 'scratch operand']
  %s0 = inlined_call_operand.hbm [shape: f32[2,4,16,16], index: 0, kind: input, shape index: {}]
  %s1 = inlined_call_operand.vmem [shape: f32[144], index: 1, kind: input, shape index: {}]
  %s2 = inlined_call_operand.vmem [shape: f32[4], index: 2, kind: input, shape index: {}]
  %s3 = inlined_call_operand.vmem [shape: f32[144], index: 3, kind: input, shape index: {}]
  %s4 = inlined_call_operand.vmem [shape: f32[4], index: 4, kind: input, shape index: {}]
  %s5 = inlined_call_operand.hbm [shape: f32[2,4,16,16], index: 5, kind: output, shape index: {}]
  %s6 = sld [smem:[#allocation0]]
  $region73: #{tpu_custom_call.1} parent=0
    _
  %s8 = ssub.s32 1, %s6
  %s9 = scalar_select 0, %s8, %s6
  $region1: #{tpu_custom_call.1} parent=0
    #allocation4 [shape = 'u8[65536]{0}', space=vmem, size = 0x10000, scoped, tag = 'input window, operand 0']
    #allocation5 [shape = 's32[2]{0}', space=sflag, size = 0x8, scoped, tag = 'scoped memory for tpu_custom_call.1']
    #allocation6 [shape = 's32[2]{0}', space=sflag, size = 0x8, scoped, tag = 'scoped memory for tpu_custom_call.1']
    #allocation7 [shape = 's32[2]{0}', space=sflag, size = 0x8, scoped, tag = 'scoped memory for tpu_custom_call.1']
    #allocation8 [shape = 'u8[1024]{0}', space=smem, size = 0x400, scoped, tag = 'input window, operand 1, single buffered']
    #allocation9 [shape = 'u8[512]{0}', space=smem, size = 0x200, scoped, tag = 'input window, operand 2, single buffered']
    #allocation10 [shape = 's32[1]{0}', space=sflag, size = 0x4, scoped, tag = 'scoped memory for tpu_custom_call.1']
    #allocation11 [shape = 'u8[1024]{0}', space=smem, size = 0x400, scoped, tag = 'input window, operand 3, single buffered']
    #allocation12 [shape = 'u8[512]{0}', space=smem, size = 0x200, scoped, tag = 'input window, operand 4, single buffered']
    #allocation13 [shape = 's32[1]{0}', space=sflag, size = 0x4, scoped, tag = 'scoped memory for tpu_custom_call.1']
    #allocation14 [shape = 'u8[65536]{0}', space=vmem, size = 0x10000, scoped, tag = 'output window, operand 0']
    %10 = vsyncpa [#allocation5], 0
    %s11 = scalar_lea.sflag [#allocation5], 1
    %12 = vsyncpa %s11, 0
    %13 = vsyncpa [#allocation7], 0
    %14 = vsyncpa [#allocation10], 0
    %15 = vsyncpa [#allocation13], 0
    %16 = vsyncpa [#allocation6], 0
    %s17 = scalar_lea.sflag [#allocation6], 1
    %18 = vsyncpa %s17, 0
    loop: start=0, step=1, limit=4
    $region2: #{tpu_custom_call.1} parent=1 // loop_pre_header
      _
    $region3: #{tpu_custom_call.1} parent=1 // loop_header
      %s20 = sphi 0, %s24
      %p21 = scmp.ge.s32.totalorder %s20, 4
      %s30 = sphi 0, %s32
      %s33 = sphi 0, %s30
      %s34 = sphi 0, %s33
      %s50 = sphi 0, %s34
      %s54 = sphi 0, %s54
      %s56 = sphi 0, %s54
      %s57 = sphi 0, %s56
      %s71 = sphi 0, %s57
      %s75 = sphi 0, %s75
      %s77 = sphi 0, %s75
      %s78 = sphi 0, %s77
      %s92 = sphi 0, %s78
      %s96 = sphi 0, %s96
      %s98 = sphi 0, %s96
      %s99 = sphi 0, %s98
      %s113 = sphi 0, %s99
      %s117 = sphi 0, %s117
      %s119 = sphi 0, %s117
      %s120 = sphi 0, %s119
      %s134 = sphi 0, %s120
      %s140 = sphi 0, %s142
      %s143 = sphi 0, %s140
      %s144 = sphi 0, %s143
      %s160 = sphi 0, %s144
    $region4: #{tpu_custom_call.1} parent=1 // loop_header_branch
      %23 = sbr.rel (%p21) target = $region8
    $region5: #{tpu_custom_call.1} parent=1 // loop_body
      %s25 = ssub.s32 %s20, 1
      %s26 = ssub.s32 %s20, 2
      %s27 = sadd.s32 %s20, 1
      %s28 = ssub.s32 %s20, %s27
      %p29 = scmp.eq.s32.totalorder %s28, 0
      %s31 = sadd.s32 %s30, 1
      %s32 = scalar_select %p29, %s30, %s31
      %p35 = pneg %p29
      %p36 = scmp.eq.s32.totalorder %s20, 1
      %p37 = por %p35, %p36
      %p38 = scmp.ne.s32.totalorder %s30, %s33
      %p39 = scmp.eq.s32.totalorder %s20, 0
      %p40 = por %p38, %p39
      %p41 = scmp.ne.s32.totalorder %s30, %s33
      %p42 = scmp.eq.s32.totalorder %s25, 1
      %p43 = por %p41, %p42
      %p44 = scmp.ne.s32.totalorder %s33, %s34
      %p45 = scmp.eq.s32.totalorder %s25, 0
      %p46 = por %p44, %p45
      %p47 = scmp.ne.s32.totalorder %s33, %s34
      %p48 = scmp.eq.s32.totalorder %s26, 1
      %p49 = por %p47, %p48
      %p51 = scmp.ne.s32.totalorder %s34, %s50
      %p52 = scmp.eq.s32.totalorder %s26, 0
      %p53 = por %p51, %p52
      %s55 = sadd.s32 %s54, 1
      %p58 = scmp.eq.s32.totalorder %s20, 1
      %p59 = scmp.ne.s32.totalorder %s54, %s56
      %p60 = scmp.eq.s32.totalorder %s20, 0
      %p61 = por %p59, %p60
      %p62 = scmp.ne.s32.totalorder %s54, %s56
      %p63 = scmp.eq.s32.totalorder %s25, 1
      %p64 = por %p62, %p63
      %p65 = scmp.ne.s32.totalorder %s56, %s57
      %p66 = scmp.eq.s32.totalorder %s25, 0
      %p67 = por %p65, %p66
      %p68 = scmp.ne.s32.totalorder %s56, %s57
      %p69 = scmp.eq.s32.totalorder %s26, 1
      %p70 = por %p68, %p69
      %p72 = scmp.ne.s32.totalorder %s57, %s71
      %p73 = scmp.eq.s32.totalorder %s26, 0
      %p74 = por %p72, %p73
      %s76 = sadd.s32 %s75, 1
      %p79 = scmp.eq.s32.totalorder %s20, 1
      %p80 = scmp.ne.s32.totalorder %s75, %s77
      %p81 = scmp.eq.s32.totalorder %s20, 0
      %p82 = por %p80, %p81
      %p83 = scmp.ne.s32.totalorder %s75, %s77
      %p84 = scmp.eq.s32.totalorder %s25, 1
      %p85 = por %p83, %p84
      %p86 = scmp.ne.s32.totalorder %s77, %s78
      %p87 = scmp.eq.s32.totalorder %s25, 0
      %p88 = por %p86, %p87
      %p89 = scmp.ne.s32.totalorder %s77, %s78
      %p90 = scmp.eq.s32.totalorder %s26, 1
      %p91 = por %p89, %p90
      %p93 = scmp.ne.s32.totalorder %s78, %s92
      %p94 = scmp.eq.s32.totalorder %s26, 0
      %p95 = por %p93, %p94
      %s97 = sadd.s32 %s96, 1
      %p100 = scmp.eq.s32.totalorder %s20, 1
      %p101 = scmp.ne.s32.totalorder %s96, %s98
      %p102 = scmp.eq.s32.totalorder %s20, 0
      %p103 = por %p101, %p102
      %p104 = scmp.ne.s32.totalorder %s96, %s98
      %p105 = scmp.eq.s32.totalorder %s25, 1
      %p106 = por %p104, %p105
      %p107 = scmp.ne.s32.totalorder %s98, %s99
      %p108 = scmp.eq.s32.totalorder %s25, 0
      %p109 = por %p107, %p108
      %p110 = scmp.ne.s32.totalorder %s98, %s99
      %p111 = scmp.eq.s32.totalorder %s26, 1
      %p112 = por %p110, %p111
      %p114 = scmp.ne.s32.totalorder %s99, %s113
      %p115 = scmp.eq.s32.totalorder %s26, 0
      %p116 = por %p114, %p115
      %s118 = sadd.s32 %s117, 1
      %p121 = scmp.eq.s32.totalorder %s20, 1
      %p122 = scmp.ne.s32.totalorder %s117, %s119
      %p123 = scmp.eq.s32.totalorder %s20, 0
      %p124 = por %p122, %p123
      %p125 = scmp.ne.s32.totalorder %s117, %s119
      %p126 = scmp.eq.s32.totalorder %s25, 1
      %p127 = por %p125, %p126
      %p128 = scmp.ne.s32.totalorder %s119, %s120
      %p129 = scmp.eq.s32.totalorder %s25, 0
      %p130 = por %p128, %p129
      %p131 = scmp.ne.s32.totalorder %s119, %s120
      %p132 = scmp.eq.s32.totalorder %s26, 1
      %p133 = por %p131, %p132
      %p135 = scmp.ne.s32.totalorder %s120, %s134
      %p136 = scmp.eq.s32.totalorder %s26, 0
      %p137 = por %p135, %p136
      %s138 = ssub.s32 %s20, %s27
      %p139 = scmp.eq.s32.totalorder %s138, 0
      %s141 = sadd.s32 %s140, 1
      %s142 = scalar_select %p139, %s140, %s141
      %p145 = pneg %p139
      %p146 = scmp.eq.s32.totalorder %s20, 1
      %p147 = por %p145, %p146
      %p148 = scmp.ne.s32.totalorder %s140, %s143
      %p149 = scmp.eq.s32.totalorder %s20, 0
      %p150 = por %p148, %p149
      %p151 = scmp.ne.s32.totalorder %s140, %s143
      %p152 = scmp.eq.s32.totalorder %s25, 1
      %p153 = por %p151, %p152
      %p154 = scmp.ne.s32.totalorder %s143, %s144
      %p155 = scmp.eq.s32.totalorder %s25, 0
      %p156 = por %p154, %p155
      %p157 = scmp.ne.s32.totalorder %s143, %s144
      %p158 = scmp.eq.s32.totalorder %s26, 1
      %p159 = por %p157, %p158
      %p161 = scmp.ne.s32.totalorder %s144, %s160
      %p162 = scmp.eq.s32.totalorder %s26, 0
      %p163 = por %p161, %p162
      %p164 = scmp.le.s32.totalorder 1, %s20
      %p165 = scmp.lt.s32.totalorder %s20, 3
      %p166 = pnand %p164, %p165
      %p167 = pneg %p166
      // Predicated region
      $region9: #{tpu_custom_call.1} parent=5 // pred_check
        _
      $region10: #{tpu_custom_call.1} parent=5 // pred_check_branch
        %169 = sbr.rel (%p166) target = $region12
      $region11: #{tpu_custom_call.1} parent=5 // pred_region
        %s170 = ssub.s32 %s20, 1
        // Predicated region
        $region13: #{tpu_custom_call.1} parent=11 // pred_check
          %p171 = pneg %p67
        $region14: #{tpu_custom_call.1} parent=11 // pred_check_branch
          %173 = sbr.rel (%p171) target = $region16
        $region15: #{tpu_custom_call.1} parent=11 // pred_region
          %s175 = ssub.s32 32, 32
          %176 = vsyncadd [#allocation7], %s175
          %s178 = sshll.u32 %s1, 4
          %s179 = int_to_ptr.vmem [resolvable:$true] %s178
          %181 = dma.vmem_to_smem %s179, 32, [#allocation8], [#allocation7]
        $region16: #{tpu_custom_call.1} parent=11 // pred_fallthru
          _
        // Predicated region
        $region17: #{tpu_custom_call.1} parent=11 // pred_check
          %p182 = pneg %p88
        $region18: #{tpu_custom_call.1} parent=11 // pred_check_branch
          %184 = sbr.rel (%p182) target = $region20
        $region19: #{tpu_custom_call.1} parent=11 // pred_region
          %s186 = ssub.s32 16, 16
          %187 = vsyncadd [#allocation10], %s186
          %s189 = sshll.u32 %s2, 4
          %s190 = int_to_ptr.vmem [resolvable:$true] %s189
          %192 = dma.vmem_to_smem %s190, 16, [#allocation9], [#allocation10]
        $region20: #{tpu_custom_call.1} parent=11 // pred_fallthru
          _
        // Predicated region
        $region21: #{tpu_custom_call.1} parent=11 // pred_check
          %p193 = pneg %p109
        $region22: #{tpu_custom_call.1} parent=11 // pred_check_branch
          %195 = sbr.rel (%p193) target = $region24
        $region23: #{tpu_custom_call.1} parent=11 // pred_region
          %s197 = ssub.s32 32, 32
          %198 = vsyncadd [#allocation10], %s197
          %s200 = sshll.u32 %s3, 4
          %s201 = int_to_ptr.vmem [resolvable:$true] %s200
          %203 = dma.vmem_to_smem %s201, 32, [#allocation11], [#allocation10]
        $region24: #{tpu_custom_call.1} parent=11 // pred_fallthru
          _
        // Predicated region
        $region25: #{tpu_custom_call.1} parent=11 // pred_check
          %p204 = pneg %p130
        $region26: #{tpu_custom_call.1} parent=11 // pred_check_branch
          %206 = sbr.rel (%p204) target = $region28
        $region27: #{tpu_custom_call.1} parent=11 // pred_region
          %s208 = ssub.s32 16, 16
          %209 = vsyncadd [#allocation13], %s208
          %s211 = sshll.u32 %s4, 4
          %s212 = int_to_ptr.vmem [resolvable:$true] %s211
          %214 = dma.vmem_to_smem %s212, 16, [#allocation12], [#allocation13]
        $region28: #{tpu_custom_call.1} parent=11 // pred_fallthru
          _
      $region12: #{tpu_custom_call.1} parent=5 // pred_fallthru
        _
      %p215 = scmp.lt.s32.totalorder %s20, 2
      // Predicated region
      $region29: #{tpu_custom_call.1} parent=5 // pred_check
        %p216 = pneg %p215
      $region30: #{tpu_custom_call.1} parent=5 // pred_check_branch
        %218 = sbr.rel (%p216) target = $region32
      $region31: #{tpu_custom_call.1} parent=5 // pred_region
        // Predicated region
        $region33: #{tpu_custom_call.1} parent=31 // pred_check
          %p219 = pneg %p40
        $region34: #{tpu_custom_call.1} parent=31 // pred_check_branch
          %221 = sbr.rel (%p219) target = $region36
        $region35: #{tpu_custom_call.1} parent=31 // pred_region
          %s222 = sand.u32 %s30, 1
          %s223 = scalar_lea.sflag [#allocation5], %s222
          %s224 = sand.u32 %s30, 1
          %s225 = smul.addr %s224, 64
          %s226 = scalar_lea.vmem [#allocation4], %s225
          %s228 = ssub.s32 1024, 1024
          %229 = vsyncadd %s223, %s228
          %s230 = smul.addr %s20, 8
          %s231 = smul.addr %s230, 128
          %s232 = scalar_lea.hbm %s0, %s231
          %s233 = sshll.u32 %s226, 4
          %s234 = int_to_ptr.vmem [resolvable:$true] %s233
          %239 = dma.hbm_to_vmem [thread:$0]  %s232, 1024, %s234, %s223, 128, 128, 8
        $region36: #{tpu_custom_call.1} parent=31 // pred_fallthru
          _
      $region32: #{tpu_custom_call.1} parent=5 // pred_fallthru
        _
      %p240 = scmp.le.s32.totalorder 1, %s20
      %p241 = scmp.lt.s32.totalorder %s20, 3
      %p242 = pnand %p240, %p241
      %p243 = pneg %p242
      // Predicated region
      $region37: #{tpu_custom_call.1} parent=5 // pred_check
        _
      $region38: #{tpu_custom_call.1} parent=5 // pred_check_branch
        %245 = sbr.rel (%p242) target = $region40
      $region39: #{tpu_custom_call.1} parent=5 // pred_region
        %s246 = ssub.s32 %s20, 1
        %s247 = sand.u32 %s33, 1
        %s248 = scalar_lea.sflag [#allocation5], %s247
        %s249 = sand.u32 %s33, 1
        %s250 = smul.addr %s249, 64
        %s251 = scalar_lea.vmem [#allocation4], %s250
        // Predicated region
        $region41: #{tpu_custom_call.1} parent=39 // pred_check
          %p252 = pneg %p46
        $region42: #{tpu_custom_call.1} parent=39 // pred_check_branch
          %254 = sbr.rel (%p252) target = $region44
        $region43: #{tpu_custom_call.1} parent=39 // pred_region
          %255 = dma.done %s248, 1024
        $region44: #{tpu_custom_call.1} parent=39 // pred_fallthru
          _
        // Predicated region
        $region45: #{tpu_custom_call.1} parent=39 // pred_check
          %p256 = pneg %p67
        $region46: #{tpu_custom_call.1} parent=39 // pred_check_branch
          %258 = sbr.rel (%p256) target = $region48
        $region47: #{tpu_custom_call.1} parent=39 // pred_region
          %259 = dma.done [#allocation7], 32
        $region48: #{tpu_custom_call.1} parent=39 // pred_fallthru
          _
        // Predicated region
        $region49: #{tpu_custom_call.1} parent=39 // pred_check
          %p260 = pneg %p88
        $region50: #{tpu_custom_call.1} parent=39 // pred_check_branch
          %262 = sbr.rel (%p260) target = $region52
        $region51: #{tpu_custom_call.1} parent=39 // pred_region
          %263 = dma.done [#allocation10], 16
        $region52: #{tpu_custom_call.1} parent=39 // pred_fallthru
          _
        // Predicated region
        $region53: #{tpu_custom_call.1} parent=39 // pred_check
          %p264 = pneg %p109
        $region54: #{tpu_custom_call.1} parent=39 // pred_check_branch
          %266 = sbr.rel (%p264) target = $region56
        $region55: #{tpu_custom_call.1} parent=39 // pred_region
          %267 = dma.done [#allocation10], 32
        $region56: #{tpu_custom_call.1} parent=39 // pred_fallthru
          _
        // Predicated region
        $region57: #{tpu_custom_call.1} parent=39 // pred_check
          %p268 = pneg %p130
        $region58: #{tpu_custom_call.1} parent=39 // pred_check_branch
          %270 = sbr.rel (%p268) target = $region60
        $region59: #{tpu_custom_call.1} parent=39 // pred_region
          %271 = dma.done [#allocation13], 16
        $region60: #{tpu_custom_call.1} parent=39 // pred_fallthru
          _
        %272 = sfence
        %s273 = sand.u32 %s33, 1
        %s274 = scalar_lea.sflag [#allocation5], %s273
        %s275 = sand.u32 %s33, 1
        %s276 = smul.addr %s275, 64
        %s277 = scalar_lea.vmem [#allocation4], %s276
        %p278 = pneg %p46
        %p279 = pneg %p43
        %p280 = pneg %p67
        %p281 = pneg %p64
        %p282 = pneg %p88
        %p283 = pneg %p85
        %p284 = pneg %p109
        %p285 = pneg %p106
        %p286 = pneg %p130
        %p287 = pneg %p127
        %p288 = pneg %p156
        %p289 = pneg %p153
        %s290 = sand.u32 %s143, 1
        %s291 = scalar_lea.sflag [#allocation6], %s290
        %s292 = sand.u32 %s143, 1
        %s293 = smul.addr %s292, 64
        %s294 = scalar_lea.vmem [#allocation14], %s293
        %vm295 = vcmask 146432
        %296 = vst.msk [vmem:[#allocation2] sm:$0xff] %vm295, 0.0
        %297 = vst.msk [vmem:[#allocation2 + $0x8] sm:$0xff] %vm295, 0.0
        %vm298 = vcmask 140288
        %299 = vst.msk [vmem:[#allocation2 + $0x10] sm:$0x3] %vm298, 0.0
        %300 = vst.msk [vmem:[#allocation2 + $0x18] sm:$0xff] %vm295, 0.0
        %301 = vst.msk [vmem:[#allocation2 + $0x20] sm:$0xff] %vm295, 0.0
        %302 = vst.msk [vmem:[#allocation2 + $0x28] sm:$0x3] %vm298, 0.0
        %303 = vst.msk [vmem:[#allocation2 + $0x30] sm:$0xff] %vm295, 0.0
        %304 = vst.msk [vmem:[#allocation2 + $0x38] sm:$0xff] %vm295, 0.0
        %305 = vst.msk [vmem:[#allocation2 + $0x40] sm:$0x3] %vm298, 0.0
        %306 = vst.msk [vmem:[#allocation2 + $0x48] sm:$0xff] %vm295, 0.0
        %307 = vst.msk [vmem:[#allocation2 + $0x50] sm:$0xff] %vm295, 0.0
        %308 = vst.msk [vmem:[#allocation2 + $0x58] sm:$0x3] %vm298, 0.0
        %309 = vst.msk [vmem:[#allocation3] sm:$0xff] %vm295, 0.0
        %310 = vst.msk [vmem:[#allocation3 + $0x8] sm:$0xff] %vm295, 0.0
        %311 = vst.msk [vmem:[#allocation3 + $0x10] sm:$0x3] %vm298, 0.0
        %312 = vst.msk [vmem:[#allocation3 + $0x18] sm:$0xff] %vm295, 0.0
        %313 = vst.msk [vmem:[#allocation3 + $0x20] sm:$0xff] %vm295, 0.0
        %314 = vst.msk [vmem:[#allocation3 + $0x28] sm:$0x3] %vm298, 0.0
        %315 = vst.msk [vmem:[#allocation3 + $0x30] sm:$0xff] %vm295, 0.0
        %316 = vst.msk [vmem:[#allocation3 + $0x38] sm:$0xff] %vm295, 0.0
        %317 = vst.msk [vmem:[#allocation3 + $0x40] sm:$0x3] %vm298, 0.0
        %318 = vst.msk [vmem:[#allocation3 + $0x48] sm:$0xff] %vm295, 0.0
        %319 = vst.msk [vmem:[#allocation3 + $0x50] sm:$0xff] %vm295, 0.0
        %320 = vst.msk [vmem:[#allocation3 + $0x58] sm:$0x3] %vm298, 0.0
        %v321 = vld [vmem:[%s251] sm:$0xff]
        %v322 = vld [vmem:[%s251 + $0x8] sm:$0xff]
        %v323 = vld [vmem:[%s251 + $0x10] sm:$0xff]
        %v324 = vld [vmem:[%s251 + $0x18] sm:$0xff]
        %v325 = vld [vmem:[%s251 + $0x20] sm:$0xff]
        %v326 = vld [vmem:[%s251 + $0x28] sm:$0xff]
        %v327 = vld [vmem:[%s251 + $0x30] sm:$0xff]
        %v328 = vld [vmem:[%s251 + $0x38] sm:$0xff]
        %337 = vrot.lane.b32.xlu0 %v321, 1
        %v338 = vpop.permute.xlu0 %337
        %339 = vrot.lane.b32.xlu0 %v322, 1
        %v340 = vpop.permute.xlu0 %339
        %341 = vrot.lane.b32.xlu0 %v323, 1
        %v342 = vpop.permute.xlu0 %341
        %343 = vrot.lane.b32.xlu0 %v324, 1
        %v344 = vpop.permute.xlu0 %343
        %345 = vrot.lane.b32.xlu0 %v325, 1
        %v346 = vpop.permute.xlu0 %345
        %347 = vrot.lane.b32.xlu0 %v326, 1
        %v348 = vpop.permute.xlu0 %347
        %349 = vrot.lane.b32.xlu0 %v327, 1
        %v350 = vpop.permute.xlu0 %349
        %351 = vrot.lane.b32.xlu0 %v328, 1
        %v352 = vpop.permute.xlu0 %351
        %vm361 = vcmask 138248
        %362 = vst.msk [vmem:[#allocation2 + $0x1] sm:$0xff] %vm361, %v338
        %363 = vst.msk [vmem:[#allocation2 + $0x9] sm:$0xff] %vm361, %v340
        %364 = vst.msk [vmem:[#allocation2 + $0x19] sm:$0xff] %vm361, %v342
        %365 = vst.msk [vmem:[#allocation2 + $0x21] sm:$0xff] %vm361, %v344
        %366 = vst.msk [vmem:[#allocation2 + $0x31] sm:$0xff] %vm361, %v346
        %367 = vst.msk [vmem:[#allocation2 + $0x39] sm:$0xff] %vm361, %v348
        %368 = vst.msk [vmem:[#allocation2 + $0x49] sm:$0xff] %vm361, %v350
        %369 = vst.msk [vmem:[#allocation2 + $0x51] sm:$0xff] %vm361, %v352
        %s370 = sld [smem:[#allocation8]]
        %v371 = vld [vmem:[#allocation2] sm:$0xff]
        %v372 = vld [vmem:[#allocation2 + $0x8] sm:$0xff]
        %v373 = vstv %s370
        %v374 = vmul.f32 %v373, %v371
        %v375 = vmul.f32 %v373, %v372
        %v376 = vadd.f32 %v374, 0.0
        %v377 = vadd.f32 %v375, 0.0
        %s378 = sld [smem:[#allocation8 + $0x1]]
        %v379 = vstv %s378
        %v380 = vmul.f32 %v379, %v371
        %v381 = vmul.f32 %v379, %v372
        %384 = vrot.lane.b32.xlu0 %v380, 127
        %v385 = vpop.permute.xlu0 %384
        %386 = vrot.lane.b32.xlu0 %v381, 127
        %v387 = vpop.permute.xlu0 %386
        %v390 = vadd.f32 %v376, %v385
        %v391 = vadd.f32 %v377, %v387
        %s392 = sld [smem:[#allocation8 + $0x2]]
        %v393 = vstv %s392
        %v394 = vmul.f32 %v393, %v371
        %v395 = vmul.f32 %v393, %v372
        %398 = vrot.lane.b32.xlu0 %v394, 126
        %v399 = vpop.permute.xlu0 %398
        %400 = vrot.lane.b32.xlu0 %v395, 126
        %v401 = vpop.permute.xlu0 %400
        %v404 = vadd.f32 %v390, %v399
        %v405 = vadd.f32 %v391, %v401
        %s406 = sld [smem:[#allocation8 + $0x3]]
        %v407 = vld [vmem:[#allocation2 + $0x1] sm:$0xff]
        %v408 = vld [vmem:[#allocation2 + $0x9] sm:$0xff]
        %v409 = vstv %s406
        %v410 = vmul.f32 %v409, %v407
        %v411 = vmul.f32 %v409, %v408
        %v412 = vadd.f32 %v404, %v410
        %v413 = vadd.f32 %v405, %v411
        %s414 = sld [smem:[#allocation8 + $0x4]]
        %v415 = vstv %s414
        %v416 = vmul.f32 %v415, %v407
        %v417 = vmul.f32 %v415, %v408
        %420 = vrot.lane.b32.xlu0 %v416, 127
        %v421 = vpop.permute.xlu0 %420
        %422 = vrot.lane.b32.xlu0 %v417, 127
        %v423 = vpop.permute.xlu0 %422
        %v426 = vadd.f32 %v412, %v421
        %v427 = vadd.f32 %v413, %v423
        %s428 = sld [smem:[#allocation8 + $0x5]]
        %v429 = vstv %s428
        %v430 = vmul.f32 %v429, %v407
        %v431 = vmul.f32 %v429, %v408
        %434 = vrot.lane.b32.xlu0 %v430, 126
        %v435 = vpop.permute.xlu0 %434
        %436 = vrot.lane.b32.xlu0 %v431, 126
        %v437 = vpop.permute.xlu0 %436
        %v440 = vadd.f32 %v426, %v435
        %v441 = vadd.f32 %v427, %v437
        %s442 = sld [smem:[#allocation8 + $0x6]]
        %v443 = vld [vmem:[#allocation2 + $0x2] sm:$0xff]
        %v444 = vld [vmem:[#allocation2 + $0xa] sm:$0xff]
        %v445 = vstv %s442
        %v446 = vmul.f32 %v445, %v443
        %v447 = vmul.f32 %v445, %v444
        %v448 = vadd.f32 %v440, %v446
        %v449 = vadd.f32 %v441, %v447
        %s450 = sld [smem:[#allocation8 + $0x7]]
        %v451 = vstv %s450
        %v452 = vmul.f32 %v451, %v443
        %v453 = vmul.f32 %v451, %v444
        %456 = vrot.lane.b32.xlu0 %v452, 127
        %v457 = vpop.permute.xlu0 %456
        %458 = vrot.lane.b32.xlu0 %v453, 127
        %v459 = vpop.permute.xlu0 %458
        %v462 = vadd.f32 %v448, %v457
        %v463 = vadd.f32 %v449, %v459
        %s464 = sld [smem:[#allocation8 + $0x8]]
        %v465 = vstv %s464
        %v466 = vmul.f32 %v465, %v443
        %v467 = vmul.f32 %v465, %v444
        %470 = vrot.lane.b32.xlu0 %v466, 126
        %v471 = vpop.permute.xlu0 %470
        %472 = vrot.lane.b32.xlu0 %v467, 126
        %v473 = vpop.permute.xlu0 %472
        %v476 = vadd.f32 %v462, %v471
        %v477 = vadd.f32 %v463, %v473
        %s478 = sld [smem:[#allocation8 + $0x9]]
        %s479 = scalar_lea.vmem [#allocation2], 24
        %v480 = vld [vmem:[%s479] sm:$0xff]
        %v481 = vld [vmem:[%s479 + $0x8] sm:$0xff]
        %v482 = vstv %s478
        %v483 = vmul.f32 %v482, %v480
        %v484 = vmul.f32 %v482, %v481
        %v485 = vadd.f32 %v476, %v483
        %v486 = vadd.f32 %v477, %v484
        %s487 = sld [smem:[#allocation8 + $0xa]]
        %v488 = vstv %s487
        %v489 = vmul.f32 %v488, %v480
        %v490 = vmul.f32 %v488, %v481
        %493 = vrot.lane.b32.xlu0 %v489, 127
        %v494 = vpop.permute.xlu0 %493
        %495 = vrot.lane.b32.xlu0 %v490, 127
        %v496 = vpop.permute.xlu0 %495
        %v499 = vadd.f32 %v485, %v494
        %v500 = vadd.f32 %v486, %v496
        %s501 = sld [smem:[#allocation8 + $0xb]]
        %v502 = vstv %s501
        %v503 = vmul.f32 %v502, %v480
        %v504 = vmul.f32 %v502, %v481
        %507 = vrot.lane.b32.xlu0 %v503, 126
        %v508 = vpop.permute.xlu0 %507
        %509 = vrot.lane.b32.xlu0 %v504, 126
        %v510 = vpop.permute.xlu0 %509
        %v513 = vadd.f32 %v499, %v508
        %v514 = vadd.f32 %v500, %v510
        %s515 = sld [smem:[#allocation8 + $0xc]]
        %v516 = vld [vmem:[%s479 + $0x1] sm:$0xff]
        %v517 = vld [vmem:[%s479 + $0x9] sm:$0xff]
        %v518 = vstv %s515
        %v519 = vmul.f32 %v518, %v516
        %v520 = vmul.f32 %v518, %v517
        %v521 = vadd.f32 %v513, %v519
        %v522 = vadd.f32 %v514, %v520
        %s523 = sld [smem:[#allocation8 + $0xd]]
        %v524 = vstv %s523
        %v525 = vmul.f32 %v524, %v516
        %v526 = vmul.f32 %v524, %v517
        %529 = vrot.lane.b32.xlu0 %v525, 127
        %v530 = vpop.permute.xlu0 %529
        %531 = vrot.lane.b32.xlu0 %v526, 127
        %v532 = vpop.permute.xlu0 %531
        %v535 = vadd.f32 %v521, %v530
        %v536 = vadd.f32 %v522, %v532
        %s537 = sld [smem:[#allocation8 + $0xe]]
        %v538 = vstv %s537
        %v539 = vmul.f32 %v538, %v516
        %v540 = vmul.f32 %v538, %v517
        %543 = vrot.lane.b32.xlu0 %v539, 126
        %v544 = vpop.permute.xlu0 %543
        %545 = vrot.lane.b32.xlu0 %v540, 126
        %v546 = vpop.permute.xlu0 %545
        %v549 = vadd.f32 %v535, %v544
        %v550 = vadd.f32 %v536, %v546
        %s551 = sld [smem:[#allocation8 + $0xf]]
        %v552 = vld [vmem:[%s479 + $0x2] sm:$0xff]
        %v553 = vld [vmem:[%s479 + $0xa] sm:$0xff]
        %v554 = vstv %s551
        %v555 = vmul.f32 %v554, %v552
        %v556 = vmul.f32 %v554, %v553
        %v557 = vadd.f32 %v549, %v555
        %v558 = vadd.f32 %v550, %v556
        %s559 = sld [smem:[#allocation8 + $0x10]]
        %v560 = vstv %s559
        %v561 = vmul.f32 %v560, %v552
        %v562 = vmul.f32 %v560, %v553
        %565 = vrot.lane.b32.xlu0 %v561, 127
        %v566 = vpop.permute.xlu0 %565
        %567 = vrot.lane.b32.xlu0 %v562, 127
        %v568 = vpop.permute.xlu0 %567
        %v571 = vadd.f32 %v557, %v566
        %v572 = vadd.f32 %v558, %v568
        %s573 = sld [smem:[#allocation8 + $0x11]]
        %v574 = vstv %s573
        %v575 = vmul.f32 %v574, %v552
        %v576 = vmul.f32 %v574, %v553
        %579 = vrot.lane.b32.xlu0 %v575, 126
        %v580 = vpop.permute.xlu0 %579
        %581 = vrot.lane.b32.xlu0 %v576, 126
        %v582 = vpop.permute.xlu0 %581
        %v585 = vadd.f32 %v571, %v580
        %v586 = vadd.f32 %v572, %v582
        %s587 = sld [smem:[#allocation8 + $0x12]]
        %s588 = scalar_lea.vmem [#allocation2], 48
        %v589 = vld [vmem:[%s588] sm:$0xff]
        %v590 = vld [vmem:[%s588 + $0x8] sm:$0xff]
        %v591 = vstv %s587
        %v592 = vmul.f32 %v591, %v589
        %v593 = vmul.f32 %v591, %v590
        %v594 = vadd.f32 %v585, %v592
        %v595 = vadd.f32 %v586, %v593
        %s596 = sld [smem:[#allocation8 + $0x13]]
        %v597 = vstv %s596
        %v598 = vmul.f32 %v597, %v589
        %v599 = vmul.f32 %v597, %v590
        %602 = vrot.lane.b32.xlu0 %v598, 127
        %v603 = vpop.permute.xlu0 %602
        %604 = vrot.lane.b32.xlu0 %v599, 127
        %v605 = vpop.permute.xlu0 %604
        %v608 = vadd.f32 %v594, %v603
        %v609 = vadd.f32 %v595, %v605
        %s610 = sld [smem:[#allocation8 + $0x14]]
        %v611 = vstv %s610
        %v612 = vmul.f32 %v611, %v589
        %v613 = vmul.f32 %v611, %v590
        %616 = vrot.lane.b32.xlu0 %v612, 126
        %v617 = vpop.permute.xlu0 %616
        %618 = vrot.lane.b32.xlu0 %v613, 126
        %v619 = vpop.permute.xlu0 %618
        %v622 = vadd.f32 %v608, %v617
        %v623 = vadd.f32 %v609, %v619
        %s624 = sld [smem:[#allocation8 + $0x15]]
        %v625 = vld [vmem:[%s588 + $0x1] sm:$0xff]
        %v626 = vld [vmem:[%s588 + $0x9] sm:$0xff]
        %v627 = vstv %s624
        %v628 = vmul.f32 %v627, %v625
        %v629 = vmul.f32 %v627, %v626
        %v630 = vadd.f32 %v622, %v628
        %v631 = vadd.f32 %v623, %v629
        %s632 = sld [smem:[#allocation8 + $0x16]]
        %v633 = vstv %s632
        %v634 = vmul.f32 %v633, %v625
        %v635 = vmul.f32 %v633, %v626
        %638 = vrot.lane.b32.xlu0 %v634, 127
        %v639 = vpop.permute.xlu0 %638
        %640 = vrot.lane.b32.xlu0 %v635, 127
        %v641 = vpop.permute.xlu0 %640
        %v644 = vadd.f32 %v630, %v639
        %v645 = vadd.f32 %v631, %v641
        %s646 = sld [smem:[#allocation8 + $0x17]]
        %v647 = vstv %s646
        %v648 = vmul.f32 %v647, %v625
        %v649 = vmul.f32 %v647, %v626
        %652 = vrot.lane.b32.xlu0 %v648, 126
        %v653 = vpop.permute.xlu0 %652
        %654 = vrot.lane.b32.xlu0 %v649, 126
        %v655 = vpop.permute.xlu0 %654
        %v658 = vadd.f32 %v644, %v653
        %v659 = vadd.f32 %v645, %v655
        %s660 = sld [smem:[#allocation8 + $0x18]]
        %v661 = vld [vmem:[%s588 + $0x2] sm:$0xff]
        %v662 = vld [vmem:[%s588 + $0xa] sm:$0xff]
        %v663 = vstv %s660
        %v664 = vmul.f32 %v663, %v661
        %v665 = vmul.f32 %v663, %v662
        %v666 = vadd.f32 %v658, %v664
        %v667 = vadd.f32 %v659, %v665
        %s668 = sld [smem:[#allocation8 + $0x19]]
        %v669 = vstv %s668
        %v670 = vmul.f32 %v669, %v661
        %v671 = vmul.f32 %v669, %v662
        %674 = vrot.lane.b32.xlu0 %v670, 127
        %v675 = vpop.permute.xlu0 %674
        %676 = vrot.lane.b32.xlu0 %v671, 127
        %v677 = vpop.permute.xlu0 %676
        %v680 = vadd.f32 %v666, %v675
        %v681 = vadd.f32 %v667, %v677
        %s682 = sld [smem:[#allocation8 + $0x1a]]
        %v683 = vstv %s682
        %v684 = vmul.f32 %v683, %v661
        %v685 = vmul.f32 %v683, %v662
        %688 = vrot.lane.b32.xlu0 %v684, 126
        %v689 = vpop.permute.xlu0 %688
        %690 = vrot.lane.b32.xlu0 %v685, 126
        %v691 = vpop.permute.xlu0 %690
        %v694 = vadd.f32 %v680, %v689
        %v695 = vadd.f32 %v681, %v691
        %s696 = sld [smem:[#allocation8 + $0x1b]]
        %s697 = scalar_lea.vmem [#allocation2], 72
        %v698 = vld [vmem:[%s697] sm:$0xff]
        %v699 = vld [vmem:[%s697 + $0x8] sm:$0xff]
        %v700 = vstv %s696
        %v701 = vmul.f32 %v700, %v698
        %v702 = vmul.f32 %v700, %v699
        %v703 = vadd.f32 %v694, %v701
        %v704 = vadd.f32 %v695, %v702
        %s705 = sld [smem:[#allocation8 + $0x1c]]
        %v706 = vstv %s705
        %v707 = vmul.f32 %v706, %v698
        %v708 = vmul.f32 %v706, %v699
        %711 = vrot.lane.b32.xlu0 %v707, 127
        %v712 = vpop.permute.xlu0 %711
        %713 = vrot.lane.b32.xlu0 %v708, 127
        %v714 = vpop.permute.xlu0 %713
        %v717 = vadd.f32 %v703, %v712
        %v718 = vadd.f32 %v704, %v714
        %s719 = sld [smem:[#allocation8 + $0x1d]]
        %v720 = vstv %s719
        %v721 = vmul.f32 %v720, %v698
        %v722 = vmul.f32 %v720, %v699
        %725 = vrot.lane.b32.xlu0 %v721, 126
        %v726 = vpop.permute.xlu0 %725
        %727 = vrot.lane.b32.xlu0 %v722, 126
        %v728 = vpop.permute.xlu0 %727
        %v731 = vadd.f32 %v717, %v726
        %v732 = vadd.f32 %v718, %v728
        %s733 = sld [smem:[#allocation8 + $0x1e]]
        %v734 = vld [vmem:[%s697 + $0x1] sm:$0xff]
        %v735 = vld [vmem:[%s697 + $0x9] sm:$0xff]
        %v736 = vstv %s733
        %v737 = vmul.f32 %v736, %v734
        %v738 = vmul.f32 %v736, %v735
        %v739 = vadd.f32 %v731, %v737
        %v740 = vadd.f32 %v732, %v738
        %s741 = sld [smem:[#allocation8 + $0x1f]]
        %v742 = vstv %s741
        %v743 = vmul.f32 %v742, %v734
        %v744 = vmul.f32 %v742, %v735
        %747 = vrot.lane.b32.xlu0 %v743, 127
        %v748 = vpop.permute.xlu0 %747
        %749 = vrot.lane.b32.xlu0 %v744, 127
        %v750 = vpop.permute.xlu0 %749
        %v753 = vadd.f32 %v739, %v748
        %v754 = vadd.f32 %v740, %v750
        %s755 = sld [smem:[#allocation8 + $0x20]]
        %v756 = vstv %s755
        %v757 = vmul.f32 %v756, %v734
        %v758 = vmul.f32 %v756, %v735
        %761 = vrot.lane.b32.xlu0 %v757, 126
        %v762 = vpop.permute.xlu0 %761
        %763 = vrot.lane.b32.xlu0 %v758, 126
        %v764 = vpop.permute.xlu0 %763
        %v767 = vadd.f32 %v753, %v762
        %v768 = vadd.f32 %v754, %v764
        %s769 = sld [smem:[#allocation8 + $0x21]]
        %v770 = vld [vmem:[%s697 + $0x2] sm:$0xff]
        %v771 = vld [vmem:[%s697 + $0xa] sm:$0xff]
        %v772 = vstv %s769
        %v773 = vmul.f32 %v772, %v770
        %v774 = vmul.f32 %v772, %v771
        %v775 = vadd.f32 %v767, %v773
        %v776 = vadd.f32 %v768, %v774
        %s777 = sld [smem:[#allocation8 + $0x22]]
        %v778 = vstv %s777
        %v779 = vmul.f32 %v778, %v770
        %v780 = vmul.f32 %v778, %v771
        %783 = vrot.lane.b32.xlu0 %v779, 127
        %v784 = vpop.permute.xlu0 %783
        %785 = vrot.lane.b32.xlu0 %v780, 127
        %v786 = vpop.permute.xlu0 %785
        %v789 = vadd.f32 %v775, %v784
        %v790 = vadd.f32 %v776, %v786
        %s791 = sld [smem:[#allocation8 + $0x23]]
        %v792 = vstv %s791
        %v793 = vmul.f32 %v792, %v770
        %v794 = vmul.f32 %v792, %v771
        %797 = vrot.lane.b32.xlu0 %v793, 126
        %v798 = vpop.permute.xlu0 %797
        %799 = vrot.lane.b32.xlu0 %v794, 126
        %v800 = vpop.permute.xlu0 %799
        %v803 = vadd.f32 %v789, %v798
        %v804 = vadd.f32 %v790, %v800
        %s805 = sld [smem:[#allocation9]]
        %v806 = vstv %s805
        %v807 = vadd.f32 %v803, %v806
        %v808 = vadd.f32 %v804, %v806
        %v809 = vsub.f32 0.0, %v807
        %v810 = vsub.f32 0.0, %v808
        %v811 = vmul.f32 %v809, 1.442695
        %v812 = vpow.pop %v811
        %v813 = vmul.f32 %v810, 1.442695
        %v814 = vpow.pop %v813
        %v815 = vadd.f32 %v812, 1.0
        %v816 = vadd.f32 %v814, 1.0
        %v817 = vrcp.pop %v815
        %v818 = vmul.f32 1.0, %v817
        %v819 = vrcp.pop %v816
        %v820 = vmul.f32 1.0, %v819
        %v821 = vmul.f32 %v807, %v818
        %v822 = vmul.f32 %v808, %v820
        %825 = vrot.lane.b32.xlu0 %v821, 1
        %v826 = vpop.permute.xlu0 %825
        %827 = vrot.lane.b32.xlu0 %v822, 1
        %v828 = vpop.permute.xlu0 %827
        %831 = vst.msk [vmem:[#allocation3 + $0x1] sm:$0xff] %vm361, %v826
        %832 = vst.msk [vmem:[#allocation3 + $0x9] sm:$0xff] %vm361, %v828
        %s833 = sld [smem:[#allocation8 + $0x24]]
        %v834 = vld [vmem:[#allocation2] sm:$0xff]
        %v835 = vld [vmem:[#allocation2 + $0x8] sm:$0xff]
        %v836 = vstv %s833
        %v837 = vmul.f32 %v836, %v834
        %v838 = vmul.f32 %v836, %v835
        %v839 = vadd.f32 %v837, 0.0
        %v840 = vadd.f32 %v838, 0.0
        %s841 = sld [smem:[#allocation8 + $0x25]]
        %v842 = vstv %s841
        %v843 = vmul.f32 %v842, %v834
        %v844 = vmul.f32 %v842, %v835
        %847 = vrot.lane.b32.xlu0 %v843, 127
        %v848 = vpop.permute.xlu0 %847
        %849 = vrot.lane.b32.xlu0 %v844, 127
        %v850 = vpop.permute.xlu0 %849
        %v853 = vadd.f32 %v839, %v848
        %v854 = vadd.f32 %v840, %v850
        %s855 = sld [smem:[#allocation8 + $0x26]]
        %v856 = vstv %s855
        %v857 = vmul.f32 %v856, %v834
        %v858 = vmul.f32 %v856, %v835
        %861 = vrot.lane.b32.xlu0 %v857, 126
        %v862 = vpop.permute.xlu0 %861
        %863 = vrot.lane.b32.xlu0 %v858, 126
        %v864 = vpop.permute.xlu0 %863
        %v867 = vadd.f32 %v853, %v862
        %v868 = vadd.f32 %v854, %v864
        %s869 = sld [smem:[#allocation8 + $0x27]]
        %v870 = vld [vmem:[#allocation2 + $0x1] sm:$0xff]
        %v871 = vld [vmem:[#allocation2 + $0x9] sm:$0xff]
        %v872 = vstv %s869
        %v873 = vmul.f32 %v872, %v870
        %v874 = vmul.f32 %v872, %v871
        %v875 = vadd.f32 %v867, %v873
        %v876 = vadd.f32 %v868, %v874
        %s877 = sld [smem:[#allocation8 + $0x28]]
        %v878 = vstv %s877
        %v879 = vmul.f32 %v878, %v870
        %v880 = vmul.f32 %v878, %v871
        %883 = vrot.lane.b32.xlu0 %v879, 127
        %v884 = vpop.permute.xlu0 %883
        %885 = vrot.lane.b32.xlu0 %v880, 127
        %v886 = vpop.permute.xlu0 %885
        %v889 = vadd.f32 %v875, %v884
        %v890 = vadd.f32 %v876, %v886
        %s891 = sld [smem:[#allocation8 + $0x29]]
        %v892 = vstv %s891
        %v893 = vmul.f32 %v892, %v870
        %v894 = vmul.f32 %v892, %v871
        %897 = vrot.lane.b32.xlu0 %v893, 126
        %v898 = vpop.permute.xlu0 %897
        %899 = vrot.lane.b32.xlu0 %v894, 126
        %v900 = vpop.permute.xlu0 %899
        %v903 = vadd.f32 %v889, %v898
        %v904 = vadd.f32 %v890, %v900
        %s905 = sld [smem:[#allocation8 + $0x2a]]
        %v906 = vld [vmem:[#allocation2 + $0x2] sm:$0xff]
        %v907 = vld [vmem:[#allocation2 + $0xa] sm:$0xff]
        %v908 = vstv %s905
        %v909 = vmul.f32 %v908, %v906
        %v910 = vmul.f32 %v908, %v907
        %v911 = vadd.f32 %v903, %v909
        %v912 = vadd.f32 %v904, %v910
        %s913 = sld [smem:[#allocation8 + $0x2b]]
        %v914 = vstv %s913
        %v915 = vmul.f32 %v914, %v906
        %v916 = vmul.f32 %v914, %v907
        %919 = vrot.lane.b32.xlu0 %v915, 127
        %v920 = vpop.permute.xlu0 %919
        %921 = vrot.lane.b32.xlu0 %v916, 127
        %v922 = vpop.permute.xlu0 %921
        %v925 = vadd.f32 %v911, %v920
        %v926 = vadd.f32 %v912, %v922
        %s927 = sld [smem:[#allocation8 + $0x2c]]
        %v928 = vstv %s927
        %v929 = vmul.f32 %v928, %v906
        %v930 = vmul.f32 %v928, %v907
        %933 = vrot.lane.b32.xlu0 %v929, 126
        %v934 = vpop.permute.xlu0 %933
        %935 = vrot.lane.b32.xlu0 %v930, 126
        %v936 = vpop.permute.xlu0 %935
        %v939 = vadd.f32 %v925, %v934
        %v940 = vadd.f32 %v926, %v936
        %s941 = sld [smem:[#allocation8 + $0x2d]]
        %v942 = vld [vmem:[%s479] sm:$0xff]
        %v943 = vld [vmem:[%s479 + $0x8] sm:$0xff]
        %v944 = vstv %s941
        %v945 = vmul.f32 %v944, %v942
        %v946 = vmul.f32 %v944, %v943
        %v947 = vadd.f32 %v939, %v945
        %v948 = vadd.f32 %v940, %v946
        %s949 = sld [smem:[#allocation8 + $0x2e]]
        %v950 = vstv %s949
        %v951 = vmul.f32 %v950, %v942
        %v952 = vmul.f32 %v950, %v943
        %955 = vrot.lane.b32.xlu0 %v951, 127
        %v956 = vpop.permute.xlu0 %955
        %957 = vrot.lane.b32.xlu0 %v952, 127
        %v958 = vpop.permute.xlu0 %957
        %v961 = vadd.f32 %v947, %v956
        %v962 = vadd.f32 %v948, %v958
        %s963 = sld [smem:[#allocation8 + $0x2f]]
        %v964 = vstv %s963
        %v965 = vmul.f32 %v964, %v942
        %v966 = vmul.f32 %v964, %v943
        %969 = vrot.lane.b32.xlu0 %v965, 126
        %v970 = vpop.permute.xlu0 %969
        %971 = vrot.lane.b32.xlu0 %v966, 126
        %v972 = vpop.permute.xlu0 %971
        %v975 = vadd.f32 %v961, %v970
        %v976 = vadd.f32 %v962, %v972
        %s977 = sld [smem:[#allocation8 + $0x30]]
        %v978 = vld [vmem:[%s479 + $0x1] sm:$0xff]
        %v979 = vld [vmem:[%s479 + $0x9] sm:$0xff]
        %v980 = vstv %s977
        %v981 = vmul.f32 %v980, %v978
        %v982 = vmul.f32 %v980, %v979
        %v983 = vadd.f32 %v975, %v981
        %v984 = vadd.f32 %v976, %v982
        %s985 = sld [smem:[#allocation8 + $0x31]]
        %v986 = vstv %s985
        %v987 = vmul.f32 %v986, %v978
        %v988 = vmul.f32 %v986, %v979
        %991 = vrot.lane.b32.xlu0 %v987, 127
        %v992 = vpop.permute.xlu0 %991
        %993 = vrot.lane.b32.xlu0 %v988, 127
        %v994 = vpop.permute.xlu0 %993
        %v997 = vadd.f32 %v983, %v992
        %v998 = vadd.f32 %v984, %v994
        %s999 = sld [smem:[#allocation8 + $0x32]]
        %v1000 = vstv %s999
        %v1001 = vmul.f32 %v1000, %v978
        %v1002 = vmul.f32 %v1000, %v979
        %1005 = vrot.lane.b32.xlu0 %v1001, 126
        %v1006 = vpop.permute.xlu0 %1005
        %1007 = vrot.lane.b32.xlu0 %v1002, 126
        %v1008 = vpop.permute.xlu0 %1007
        %v1011 = vadd.f32 %v997, %v1006
        %v1012 = vadd.f32 %v998, %v1008
        %s1013 = sld [smem:[#allocation8 + $0x33]]
        %v1014 = vld [vmem:[%s479 + $0x2] sm:$0xff]
        %v1015 = vld [vmem:[%s479 + $0xa] sm:$0xff]
        %v1016 = vstv %s1013
        %v1017 = vmul.f32 %v1016, %v1014
        %v1018 = vmul.f32 %v1016, %v1015
        %v1019 = vadd.f32 %v1011, %v1017
        %v1020 = vadd.f32 %v1012, %v1018
        %s1021 = sld [smem:[#allocation8 + $0x34]]
        %v1022 = vstv %s1021
        %v1023 = vmul.f32 %v1022, %v1014
        %v1024 = vmul.f32 %v1022, %v1015
        %1027 = vrot.lane.b32.xlu0 %v1023, 127
        %v1028 = vpop.permute.xlu0 %1027
        %1029 = vrot.lane.b32.xlu0 %v1024, 127
        %v1030 = vpop.permute.xlu0 %1029
        %v1033 = vadd.f32 %v1019, %v1028
        %v1034 = vadd.f32 %v1020, %v1030
        %s1035 = sld [smem:[#allocation8 + $0x35]]
        %v1036 = vstv %s1035
        %v1037 = vmul.f32 %v1036, %v1014
        %v1038 = vmul.f32 %v1036, %v1015
        %1041 = vrot.lane.b32.xlu0 %v1037, 126
        %v1042 = vpop.permute.xlu0 %1041
        %1043 = vrot.lane.b32.xlu0 %v1038, 126
        %v1044 = vpop.permute.xlu0 %1043
        %v1047 = vadd.f32 %v1033, %v1042
        %v1048 = vadd.f32 %v1034, %v1044
        %s1049 = sld [smem:[#allocation8 + $0x36]]
        %v1050 = vld [vmem:[%s588] sm:$0xff]
        %v1051 = vld [vmem:[%s588 + $0x8] sm:$0xff]
        %v1052 = vstv %s1049
        %v1053 = vmul.f32 %v1052, %v1050
        %v1054 = vmul.f32 %v1052, %v1051
        %v1055 = vadd.f32 %v1047, %v1053
        %v1056 = vadd.f32 %v1048, %v1054
        %s1057 = sld [smem:[#allocation8 + $0x37]]
        %v1058 = vstv %s1057
        %v1059 = vmul.f32 %v1058, %v1050
        %v1060 = vmul.f32 %v1058, %v1051
        %1063 = vrot.lane.b32.xlu0 %v1059, 127
        %v1064 = vpop.permute.xlu0 %1063
        %1065 = vrot.lane.b32.xlu0 %v1060, 127
        %v1066 = vpop.permute.xlu0 %1065
        %v1069 = vadd.f32 %v1055, %v1064
        %v1070 = vadd.f32 %v1056, %v1066
        %s1071 = sld [smem:[#allocation8 + $0x38]]
        %v1072 = vstv %s1071
        %v1073 = vmul.f32 %v1072, %v1050
        %v1074 = vmul.f32 %v1072, %v1051
        %1077 = vrot.lane.b32.xlu0 %v1073, 126
        %v1078 = vpop.permute.xlu0 %1077
        %1079 = vrot.lane.b32.xlu0 %v1074, 126
        %v1080 = vpop.permute.xlu0 %1079
        %v1083 = vadd.f32 %v1069, %v1078
        %v1084 = vadd.f32 %v1070, %v1080
        %s1085 = sld [smem:[#allocation8 + $0x39]]
        %v1086 = vld [vmem:[%s588 + $0x1] sm:$0xff]
        %v1087 = vld [vmem:[%s588 + $0x9] sm:$0xff]
        %v1088 = vstv %s1085
        %v1089 = vmul.f32 %v1088, %v1086
        %v1090 = vmul.f32 %v1088, %v1087
        %v1091 = vadd.f32 %v1083, %v1089
        %v1092 = vadd.f32 %v1084, %v1090
        %s1093 = sld [smem:[#allocation8 + $0x3a]]
        %v1094 = vstv %s1093
        %v1095 = vmul.f32 %v1094, %v1086
        %v1096 = vmul.f32 %v1094, %v1087
        %1099 = vrot.lane.b32.xlu0 %v1095, 127
        %v1100 = vpop.permute.xlu0 %1099
        %1101 = vrot.lane.b32.xlu0 %v1096, 127
        %v1102 = vpop.permute.xlu0 %1101
        %v1105 = vadd.f32 %v1091, %v1100
        %v1106 = vadd.f32 %v1092, %v1102
        %s1107 = sld [smem:[#allocation8 + $0x3b]]
        %v1108 = vstv %s1107
        %v1109 = vmul.f32 %v1108, %v1086
        %v1110 = vmul.f32 %v1108, %v1087
        %1113 = vrot.lane.b32.xlu0 %v1109, 126
        %v1114 = vpop.permute.xlu0 %1113
        %1115 = vrot.lane.b32.xlu0 %v1110, 126
        %v1116 = vpop.permute.xlu0 %1115
        %v1119 = vadd.f32 %v1105, %v1114
        %v1120 = vadd.f32 %v1106, %v1116
        %s1121 = sld [smem:[#allocation8 + $0x3c]]
        %v1122 = vld [vmem:[%s588 + $0x2] sm:$0xff]
        %v1123 = vld [vmem:[%s588 + $0xa] sm:$0xff]
        %v1124 = vstv %s1121
        %v1125 = vmul.f32 %v1124, %v1122
        %v1126 = vmul.f32 %v1124, %v1123
        %v1127 = vadd.f32 %v1119, %v1125
        %v1128 = vadd.f32 %v1120, %v1126
        %s1129 = sld [smem:[#allocation8 + $0x3d]]
        %v1130 = vstv %s1129
        %v1131 = vmul.f32 %v1130, %v1122
        %v1132 = vmul.f32 %v1130, %v1123
        %1135 = vrot.lane.b32.xlu0 %v1131, 127
        %v1136 = vpop.permute.xlu0 %1135
        %1137 = vrot.lane.b32.xlu0 %v1132, 127
        %v1138 = vpop.permute.xlu0 %1137
        %v1141 = vadd.f32 %v1127, %v1136
        %v1142 = vadd.f32 %v1128, %v1138
        %s1143 = sld [smem:[#allocation8 + $0x3e]]
        %v1144 = vstv %s1143
        %v1145 = vmul.f32 %v1144, %v1122
        %v1146 = vmul.f32 %v1144, %v1123
        %1149 = vrot.lane.b32.xlu0 %v1145, 126
        %v1150 = vpop.permute.xlu0 %1149
        %1151 = vrot.lane.b32.xlu0 %v1146, 126
        %v1152 = vpop.permute.xlu0 %1151
        %v1155 = vadd.f32 %v1141, %v1150
        %v1156 = vadd.f32 %v1142, %v1152
        %s1157 = sld [smem:[#allocation8 + $0x3f]]
        %v1158 = vld [vmem:[%s697] sm:$0xff]
        %v1159 = vld [vmem:[%s697 + $0x8] sm:$0xff]
        %v1160 = vstv %s1157
        %v1161 = vmul.f32 %v1160, %v1158
        %v1162 = vmul.f32 %v1160, %v1159
        %v1163 = vadd.f32 %v1155, %v1161
        %v1164 = vadd.f32 %v1156, %v1162
        %s1165 = sld [smem:[#allocation8 + $0x40]]
        %v1166 = vstv %s1165
        %v1167 = vmul.f32 %v1166, %v1158
        %v1168 = vmul.f32 %v1166, %v1159
        %1171 = vrot.lane.b32.xlu0 %v1167, 127
        %v1172 = vpop.permute.xlu0 %1171
        %1173 = vrot.lane.b32.xlu0 %v1168, 127
        %v1174 = vpop.permute.xlu0 %1173
        %v1177 = vadd.f32 %v1163, %v1172
        %v1178 = vadd.f32 %v1164, %v1174
        %s1179 = sld [smem:[#allocation8 + $0x41]]
        %v1180 = vstv %s1179
        %v1181 = vmul.f32 %v1180, %v1158
        %v1182 = vmul.f32 %v1180, %v1159
        %1185 = vrot.lane.b32.xlu0 %v1181, 126
        %v1186 = vpop.permute.xlu0 %1185
        %1187 = vrot.lane.b32.xlu0 %v1182, 126
        %v1188 = vpop.permute.xlu0 %1187
        %v1191 = vadd.f32 %v1177, %v1186
        %v1192 = vadd.f32 %v1178, %v1188
        %s1193 = sld [smem:[#allocation8 + $0x42]]
        %v1194 = vld [vmem:[%s697 + $0x1] sm:$0xff]
        %v1195 = vld [vmem:[%s697 + $0x9] sm:$0xff]
        %v1196 = vstv %s1193
        %v1197 = vmul.f32 %v1196, %v1194
        %v1198 = vmul.f32 %v1196, %v1195
        %v1199 = vadd.f32 %v1191, %v1197
        %v1200 = vadd.f32 %v1192, %v1198
        %s1201 = sld [smem:[#allocation8 + $0x43]]
        %v1202 = vstv %s1201
        %v1203 = vmul.f32 %v1202, %v1194
        %v1204 = vmul.f32 %v1202, %v1195
        %1207 = vrot.lane.b32.xlu0 %v1203, 127
        %v1208 = vpop.permute.xlu0 %1207
        %1209 = vrot.lane.b32.xlu0 %v1204, 127
        %v1210 = vpop.permute.xlu0 %1209
        %v1213 = vadd.f32 %v1199, %v1208
        %v1214 = vadd.f32 %v1200, %v1210
        %s1215 = sld [smem:[#allocation8 + $0x44]]
        %v1216 = vstv %s1215
        %v1217 = vmul.f32 %v1216, %v1194
        %v1218 = vmul.f32 %v1216, %v1195
        %1221 = vrot.lane.b32.xlu0 %v1217, 126
        %v1222 = vpop.permute.xlu0 %1221
        %1223 = vrot.lane.b32.xlu0 %v1218, 126
        %v1224 = vpop.permute.xlu0 %1223
        %v1227 = vadd.f32 %v1213, %v1222
        %v1228 = vadd.f32 %v1214, %v1224
        %s1229 = sld [smem:[#allocation8 + $0x45]]
        %v1230 = vld [vmem:[%s697 + $0x2] sm:$0xff]
        %v1231 = vld [vmem:[%s697 + $0xa] sm:$0xff]
        %v1232 = vstv %s1229
        %v1233 = vmul.f32 %v1232, %v1230
        %v1234 = vmul.f32 %v1232, %v1231
        %v1235 = vadd.f32 %v1227, %v1233
        %v1236 = vadd.f32 %v1228, %v1234
        %s1237 = sld [smem:[#allocation8 + $0x46]]
        %v1238 = vstv %s1237
        %v1239 = vmul.f32 %v1238, %v1230
        %v1240 = vmul.f32 %v1238, %v1231
        %1243 = vrot.lane.b32.xlu0 %v1239, 127
        %v1244 = vpop.permute.xlu0 %1243
        %1245 = vrot.lane.b32.xlu0 %v1240, 127
        %v1246 = vpop.permute.xlu0 %1245
        %v1249 = vadd.f32 %v1235, %v1244
        %v1250 = vadd.f32 %v1236, %v1246
        %s1251 = sld [smem:[#allocation8 + $0x47]]
        %v1252 = vstv %s1251
        %v1253 = vmul.f32 %v1252, %v1230
        %v1254 = vmul.f32 %v1252, %v1231
        %1257 = vrot.lane.b32.xlu0 %v1253, 126
        %v1258 = vpop.permute.xlu0 %1257
        %1259 = vrot.lane.b32.xlu0 %v1254, 126
        %v1260 = vpop.permute.xlu0 %1259
        %v1263 = vadd.f32 %v1249, %v1258
        %v1264 = vadd.f32 %v1250, %v1260
        %s1265 = sld [smem:[#allocation9 + $0x1]]
        %v1266 = vstv %s1265
        %v1267 = vadd.f32 %v1263, %v1266
        %v1268 = vadd.f32 %v1264, %v1266
        %v1269 = vsub.f32 0.0, %v1267
        %v1270 = vsub.f32 0.0, %v1268
        %v1271 = vmul.f32 %v1269, 1.442695
        %v1272 = vpow.pop %v1271
        %v1273 = vmul.f32 %v1270, 1.442695
        %v1274 = vpow.pop %v1273
        %v1275 = vadd.f32 %v1272, 1.0
        %v1276 = vadd.f32 %v1274, 1.0
        %v1277 = vrcp.pop %v1275
        %v1278 = vmul.f32 1.0, %v1277
        %v1279 = vrcp.pop %v1276
        %v1280 = vmul.f32 1.0, %v1279
        %v1281 = vmul.f32 %v1267, %v1278
        %v1282 = vmul.f32 %v1268, %v1280
        %1285 = vrot.lane.b32.xlu0 %v1281, 1
        %v1286 = vpop.permute.xlu0 %1285
        %1287 = vrot.lane.b32.xlu0 %v1282, 1
        %v1288 = vpop.permute.xlu0 %1287
        %s1291 = scalar_lea.vmem [#allocation3], 24
        %1292 = vst.msk [vmem:[%s1291 + $0x1] sm:$0xff] %vm361, %v1286
        %1293 = vst.msk [vmem:[%s1291 + $0x9] sm:$0xff] %vm361, %v1288
        %s1294 = sld [smem:[#allocation8 + $0x48]]
        %v1295 = vld [vmem:[#allocation2] sm:$0xff]
        %v1296 = vld [vmem:[#allocation2 + $0x8] sm:$0xff]
        %v1297 = vstv %s1294
        %v1298 = vmul.f32 %v1297, %v1295
        %v1299 = vmul.f32 %v1297, %v1296
        %v1300 = vadd.f32 %v1298, 0.0
        %v1301 = vadd.f32 %v1299, 0.0
        %s1302 = sld [smem:[#allocation8 + $0x49]]
        %v1303 = vstv %s1302
        %v1304 = vmul.f32 %v1303, %v1295
        %v1305 = vmul.f32 %v1303, %v1296
        %1308 = vrot.lane.b32.xlu0 %v1304, 127
        %v1309 = vpop.permute.xlu0 %1308
        %1310 = vrot.lane.b32.xlu0 %v1305, 127
        %v1311 = vpop.permute.xlu0 %1310
        %v1314 = vadd.f32 %v1300, %v1309
        %v1315 = vadd.f32 %v1301, %v1311
        %s1316 = sld [smem:[#allocation8 + $0x4a]]
        %v1317 = vstv %s1316
        %v1318 = vmul.f32 %v1317, %v1295
        %v1319 = vmul.f32 %v1317, %v1296
        %1322 = vrot.lane.b32.xlu0 %v1318, 126
        %v1323 = vpop.permute.xlu0 %1322
        %1324 = vrot.lane.b32.xlu0 %v1319, 126
        %v1325 = vpop.permute.xlu0 %1324
        %v1328 = vadd.f32 %v1314, %v1323
        %v1329 = vadd.f32 %v1315, %v1325
        %s1330 = sld [smem:[#allocation8 + $0x4b]]
        %v1331 = vld [vmem:[#allocation2 + $0x1] sm:$0xff]
        %v1332 = vld [vmem:[#allocation2 + $0x9] sm:$0xff]
        %v1333 = vstv %s1330
        %v1334 = vmul.f32 %v1333, %v1331
        %v1335 = vmul.f32 %v1333, %v1332
        %v1336 = vadd.f32 %v1328, %v1334
        %v1337 = vadd.f32 %v1329, %v1335
        %s1338 = sld [smem:[#allocation8 + $0x4c]]
        %v1339 = vstv %s1338
        %v1340 = vmul.f32 %v1339, %v1331
        %v1341 = vmul.f32 %v1339, %v1332
        %1344 = vrot.lane.b32.xlu0 %v1340, 127
        %v1345 = vpop.permute.xlu0 %1344
        %1346 = vrot.lane.b32.xlu0 %v1341, 127
        %v1347 = vpop.permute.xlu0 %1346
        %v1350 = vadd.f32 %v1336, %v1345
        %v1351 = vadd.f32 %v1337, %v1347
        %s1352 = sld [smem:[#allocation8 + $0x4d]]
        %v1353 = vstv %s1352
        %v1354 = vmul.f32 %v1353, %v1331
        %v1355 = vmul.f32 %v1353, %v1332
        %1358 = vrot.lane.b32.xlu0 %v1354, 126
        %v1359 = vpop.permute.xlu0 %1358
        %1360 = vrot.lane.b32.xlu0 %v1355, 126
        %v1361 = vpop.permute.xlu0 %1360
        %v1364 = vadd.f32 %v1350, %v1359
        %v1365 = vadd.f32 %v1351, %v1361
        %s1366 = sld [smem:[#allocation8 + $0x4e]]
        %v1367 = vld [vmem:[#allocation2 + $0x2] sm:$0xff]
        %v1368 = vld [vmem:[#allocation2 + $0xa] sm:$0xff]
        %v1369 = vstv %s1366
        %v1370 = vmul.f32 %v1369, %v1367
        %v1371 = vmul.f32 %v1369, %v1368
        %v1372 = vadd.f32 %v1364, %v1370
        %v1373 = vadd.f32 %v1365, %v1371
        %s1374 = sld [smem:[#allocation8 + $0x4f]]
        %v1375 = vstv %s1374
        %v1376 = vmul.f32 %v1375, %v1367
        %v1377 = vmul.f32 %v1375, %v1368
        %1380 = vrot.lane.b32.xlu0 %v1376, 127
        %v1381 = vpop.permute.xlu0 %1380
        %1382 = vrot.lane.b32.xlu0 %v1377, 127
        %v1383 = vpop.permute.xlu0 %1382
        %v1386 = vadd.f32 %v1372, %v1381
        %v1387 = vadd.f32 %v1373, %v1383
        %s1388 = sld [smem:[#allocation8 + $0x50]]
        %v1389 = vstv %s1388
        %v1390 = vmul.f32 %v1389, %v1367
        %v1391 = vmul.f32 %v1389, %v1368
        %1394 = vrot.lane.b32.xlu0 %v1390, 126
        %v1395 = vpop.permute.xlu0 %1394
        %1396 = vrot.lane.b32.xlu0 %v1391, 126
        %v1397 = vpop.permute.xlu0 %1396
        %v1400 = vadd.f32 %v1386, %v1395
        %v1401 = vadd.f32 %v1387, %v1397
        %s1402 = sld [smem:[#allocation8 + $0x51]]
        %v1403 = vld [vmem:[%s479] sm:$0xff]
        %v1404 = vld [vmem:[%s479 + $0x8] sm:$0xff]
        %v1405 = vstv %s1402
        %v1406 = vmul.f32 %v1405, %v1403
        %v1407 = vmul.f32 %v1405, %v1404
        %v1408 = vadd.f32 %v1400, %v1406
        %v1409 = vadd.f32 %v1401, %v1407
        %s1410 = sld [smem:[#allocation8 + $0x52]]
        %v1411 = vstv %s1410
        %v1412 = vmul.f32 %v1411, %v1403
        %v1413 = vmul.f32 %v1411, %v1404
        %1416 = vrot.lane.b32.xlu0 %v1412, 127
        %v1417 = vpop.permute.xlu0 %1416
        %1418 = vrot.lane.b32.xlu0 %v1413, 127
        %v1419 = vpop.permute.xlu0 %1418
        %v1422 = vadd.f32 %v1408, %v1417
        %v1423 = vadd.f32 %v1409, %v1419
        %s1424 = sld [smem:[#allocation8 + $0x53]]
        %v1425 = vstv %s1424
        %v1426 = vmul.f32 %v1425, %v1403
        %v1427 = vmul.f32 %v1425, %v1404
        %1430 = vrot.lane.b32.xlu0 %v1426, 126
        %v1431 = vpop.permute.xlu0 %1430
        %1432 = vrot.lane.b32.xlu0 %v1427, 126
        %v1433 = vpop.permute.xlu0 %1432
        %v1436 = vadd.f32 %v1422, %v1431
        %v1437 = vadd.f32 %v1423, %v1433
        %s1438 = sld [smem:[#allocation8 + $0x54]]
        %v1439 = vld [vmem:[%s479 + $0x1] sm:$0xff]
        %v1440 = vld [vmem:[%s479 + $0x9] sm:$0xff]
        %v1441 = vstv %s1438
        %v1442 = vmul.f32 %v1441, %v1439
        %v1443 = vmul.f32 %v1441, %v1440
        %v1444 = vadd.f32 %v1436, %v1442
        %v1445 = vadd.f32 %v1437, %v1443
        %s1446 = sld [smem:[#allocation8 + $0x55]]
        %v1447 = vstv %s1446
        %v1448 = vmul.f32 %v1447, %v1439
        %v1449 = vmul.f32 %v1447, %v1440
        %1452 = vrot.lane.b32.xlu0 %v1448, 127
        %v1453 = vpop.permute.xlu0 %1452
        %1454 = vrot.lane.b32.xlu0 %v1449, 127
        %v1455 = vpop.permute.xlu0 %1454
        %v1458 = vadd.f32 %v1444, %v1453
        %v1459 = vadd.f32 %v1445, %v1455
        %s1460 = sld [smem:[#allocation8 + $0x56]]
        %v1461 = vstv %s1460
        %v1462 = vmul.f32 %v1461, %v1439
        %v1463 = vmul.f32 %v1461, %v1440
        %1466 = vrot.lane.b32.xlu0 %v1462, 126
        %v1467 = vpop.permute.xlu0 %1466
        %1468 = vrot.lane.b32.xlu0 %v1463, 126
        %v1469 = vpop.permute.xlu0 %1468
        %v1472 = vadd.f32 %v1458, %v1467
        %v1473 = vadd.f32 %v1459, %v1469
        %s1474 = sld [smem:[#allocation8 + $0x57]]
        %v1475 = vld [vmem:[%s479 + $0x2] sm:$0xff]
        %v1476 = vld [vmem:[%s479 + $0xa] sm:$0xff]
        %v1477 = vstv %s1474
        %v1478 = vmul.f32 %v1477, %v1475
        %v1479 = vmul.f32 %v1477, %v1476
        %v1480 = vadd.f32 %v1472, %v1478
        %v1481 = vadd.f32 %v1473, %v1479
        %s1482 = sld [smem:[#allocation8 + $0x58]]
        %v1483 = vstv %s1482
        %v1484 = vmul.f32 %v1483, %v1475
        %v1485 = vmul.f32 %v1483, %v1476
        %1488 = vrot.lane.b32.xlu0 %v1484, 127
        %v1489 = vpop.permute.xlu0 %1488
        %1490 = vrot.lane.b32.xlu0 %v1485, 127
        %v1491 = vpop.permute.xlu0 %1490
        %v1494 = vadd.f32 %v1480, %v1489
        %v1495 = vadd.f32 %v1481, %v1491
        %s1496 = sld [smem:[#allocation8 + $0x59]]
        %v1497 = vstv %s1496
        %v1498 = vmul.f32 %v1497, %v1475
        %v1499 = vmul.f32 %v1497, %v1476
        %1502 = vrot.lane.b32.xlu0 %v1498, 126
        %v1503 = vpop.permute.xlu0 %1502
        %1504 = vrot.lane.b32.xlu0 %v1499, 126
        %v1505 = vpop.permute.xlu0 %1504
        %v1508 = vadd.f32 %v1494, %v1503
        %v1509 = vadd.f32 %v1495, %v1505
        %s1510 = sld [smem:[#allocation8 + $0x5a]]
        %v1511 = vld [vmem:[%s588] sm:$0xff]
        %v1512 = vld [vmem:[%s588 + $0x8] sm:$0xff]
        %v1513 = vstv %s1510
        %v1514 = vmul.f32 %v1513, %v1511
        %v1515 = vmul.f32 %v1513, %v1512
        %v1516 = vadd.f32 %v1508, %v1514
        %v1517 = vadd.f32 %v1509, %v1515
        %s1518 = sld [smem:[#allocation8 + $0x5b]]
        %v1519 = vstv %s1518
        %v1520 = vmul.f32 %v1519, %v1511
        %v1521 = vmul.f32 %v1519, %v1512
        %1524 = vrot.lane.b32.xlu0 %v1520, 127
        %v1525 = vpop.permute.xlu0 %1524
        %1526 = vrot.lane.b32.xlu0 %v1521, 127
        %v1527 = vpop.permute.xlu0 %1526
        %v1530 = vadd.f32 %v1516, %v1525
        %v1531 = vadd.f32 %v1517, %v1527
        %s1532 = sld [smem:[#allocation8 + $0x5c]]
        %v1533 = vstv %s1532
        %v1534 = vmul.f32 %v1533, %v1511
        %v1535 = vmul.f32 %v1533, %v1512
        %1538 = vrot.lane.b32.xlu0 %v1534, 126
        %v1539 = vpop.permute.xlu0 %1538
        %1540 = vrot.lane.b32.xlu0 %v1535, 126
        %v1541 = vpop.permute.xlu0 %1540
        %v1544 = vadd.f32 %v1530, %v1539
        %v1545 = vadd.f32 %v1531, %v1541
        %s1546 = sld [smem:[#allocation8 + $0x5d]]
        %v1547 = vld [vmem:[%s588 + $0x1] sm:$0xff]
        %v1548 = vld [vmem:[%s588 + $0x9] sm:$0xff]
        %v1549 = vstv %s1546
        %v1550 = vmul.f32 %v1549, %v1547
        %v1551 = vmul.f32 %v1549, %v1548
        %v1552 = vadd.f32 %v1544, %v1550
        %v1553 = vadd.f32 %v1545, %v1551
        %s1554 = sld [smem:[#allocation8 + $0x5e]]
        %v1555 = vstv %s1554
        %v1556 = vmul.f32 %v1555, %v1547
        %v1557 = vmul.f32 %v1555, %v1548
        %1560 = vrot.lane.b32.xlu0 %v1556, 127
        %v1561 = vpop.permute.xlu0 %1560
        %1562 = vrot.lane.b32.xlu0 %v1557, 127
        %v1563 = vpop.permute.xlu0 %1562
        %v1566 = vadd.f32 %v1552, %v1561
        %v1567 = vadd.f32 %v1553, %v1563
        %s1568 = sld [smem:[#allocation8 + $0x5f]]
        %v1569 = vstv %s1568
        %v1570 = vmul.f32 %v1569, %v1547
        %v1571 = vmul.f32 %v1569, %v1548
        %1574 = vrot.lane.b32.xlu0 %v1570, 126
        %v1575 = vpop.permute.xlu0 %1574
        %1576 = vrot.lane.b32.xlu0 %v1571, 126
        %v1577 = vpop.permute.xlu0 %1576
        %v1580 = vadd.f32 %v1566, %v1575
        %v1581 = vadd.f32 %v1567, %v1577
        %s1582 = sld [smem:[#allocation8 + $0x60]]
        %v1583 = vld [vmem:[%s588 + $0x2] sm:$0xff]
        %v1584 = vld [vmem:[%s588 + $0xa] sm:$0xff]
        %v1585 = vstv %s1582
        %v1586 = vmul.f32 %v1585, %v1583
        %v1587 = vmul.f32 %v1585, %v1584
        %v1588 = vadd.f32 %v1580, %v1586
        %v1589 = vadd.f32 %v1581, %v1587
        %s1590 = sld [smem:[#allocation8 + $0x61]]
        %v1591 = vstv %s1590
        %v1592 = vmul.f32 %v1591, %v1583
        %v1593 = vmul.f32 %v1591, %v1584
        %1596 = vrot.lane.b32.xlu0 %v1592, 127
        %v1597 = vpop.permute.xlu0 %1596
        %1598 = vrot.lane.b32.xlu0 %v1593, 127
        %v1599 = vpop.permute.xlu0 %1598
        %v1602 = vadd.f32 %v1588, %v1597
        %v1603 = vadd.f32 %v1589, %v1599
        %s1604 = sld [smem:[#allocation8 + $0x62]]
        %v1605 = vstv %s1604
        %v1606 = vmul.f32 %v1605, %v1583
        %v1607 = vmul.f32 %v1605, %v1584
        %1610 = vrot.lane.b32.xlu0 %v1606, 126
        %v1611 = vpop.permute.xlu0 %1610
        %1612 = vrot.lane.b32.xlu0 %v1607, 126
        %v1613 = vpop.permute.xlu0 %1612
        %v1616 = vadd.f32 %v1602, %v1611
        %v1617 = vadd.f32 %v1603, %v1613
        %s1618 = sld [smem:[#allocation8 + $0x63]]
        %v1619 = vld [vmem:[%s697] sm:$0xff]
        %v1620 = vld [vmem:[%s697 + $0x8] sm:$0xff]
        %v1621 = vstv %s1618
        %v1622 = vmul.f32 %v1621, %v1619
        %v1623 = vmul.f32 %v1621, %v1620
        %v1624 = vadd.f32 %v1616, %v1622
        %v1625 = vadd.f32 %v1617, %v1623
        %s1626 = sld [smem:[#allocation8 + $0x64]]
        %v1627 = vstv %s1626
        %v1628 = vmul.f32 %v1627, %v1619
        %v1629 = vmul.f32 %v1627, %v1620
        %1632 = vrot.lane.b32.xlu0 %v1628, 127
        %v1633 = vpop.permute.xlu0 %1632
        %1634 = vrot.lane.b32.xlu0 %v1629, 127
        %v1635 = vpop.permute.xlu0 %1634
        %v1638 = vadd.f32 %v1624, %v1633
        %v1639 = vadd.f32 %v1625, %v1635
        %s1640 = sld [smem:[#allocation8 + $0x65]]
        %v1641 = vstv %s1640
        %v1642 = vmul.f32 %v1641, %v1619
        %v1643 = vmul.f32 %v1641, %v1620
        %1646 = vrot.lane.b32.xlu0 %v1642, 126
        %v1647 = vpop.permute.xlu0 %1646
        %1648 = vrot.lane.b32.xlu0 %v1643, 126
        %v1649 = vpop.permute.xlu0 %1648
        %v1652 = vadd.f32 %v1638, %v1647
        %v1653 = vadd.f32 %v1639, %v1649
        %s1654 = sld [smem:[#allocation8 + $0x66]]
        %v1655 = vld [vmem:[%s697 + $0x1] sm:$0xff]
        %v1656 = vld [vmem:[%s697 + $0x9] sm:$0xff]
        %v1657 = vstv %s1654
        %v1658 = vmul.f32 %v1657, %v1655
        %v1659 = vmul.f32 %v1657, %v1656
        %v1660 = vadd.f32 %v1652, %v1658
        %v1661 = vadd.f32 %v1653, %v1659
        %s1662 = sld [smem:[#allocation8 + $0x67]]
        %v1663 = vstv %s1662
        %v1664 = vmul.f32 %v1663, %v1655
        %v1665 = vmul.f32 %v1663, %v1656
        %1668 = vrot.lane.b32.xlu0 %v1664, 127
        %v1669 = vpop.permute.xlu0 %1668
        %1670 = vrot.lane.b32.xlu0 %v1665, 127
        %v1671 = vpop.permute.xlu0 %1670
        %v1674 = vadd.f32 %v1660, %v1669
        %v1675 = vadd.f32 %v1661, %v1671
        %s1676 = sld [smem:[#allocation8 + $0x68]]
        %v1677 = vstv %s1676
        %v1678 = vmul.f32 %v1677, %v1655
        %v1679 = vmul.f32 %v1677, %v1656
        %1682 = vrot.lane.b32.xlu0 %v1678, 126
        %v1683 = vpop.permute.xlu0 %1682
        %1684 = vrot.lane.b32.xlu0 %v1679, 126
        %v1685 = vpop.permute.xlu0 %1684
        %v1688 = vadd.f32 %v1674, %v1683
        %v1689 = vadd.f32 %v1675, %v1685
        %s1690 = sld [smem:[#allocation8 + $0x69]]
        %v1691 = vld [vmem:[%s697 + $0x2] sm:$0xff]
        %v1692 = vld [vmem:[%s697 + $0xa] sm:$0xff]
        %v1693 = vstv %s1690
        %v1694 = vmul.f32 %v1693, %v1691
        %v1695 = vmul.f32 %v1693, %v1692
        %v1696 = vadd.f32 %v1688, %v1694
        %v1697 = vadd.f32 %v1689, %v1695
        %s1698 = sld [smem:[#allocation8 + $0x6a]]
        %v1699 = vstv %s1698
        %v1700 = vmul.f32 %v1699, %v1691
        %v1701 = vmul.f32 %v1699, %v1692
        %1704 = vrot.lane.b32.xlu0 %v1700, 127
        %v1705 = vpop.permute.xlu0 %1704
        %1706 = vrot.lane.b32.xlu0 %v1701, 127
        %v1707 = vpop.permute.xlu0 %1706
        %v1710 = vadd.f32 %v1696, %v1705
        %v1711 = vadd.f32 %v1697, %v1707
        %s1712 = sld [smem:[#allocation8 + $0x6b]]
        %v1713 = vstv %s1712
        %v1714 = vmul.f32 %v1713, %v1691
        %v1715 = vmul.f32 %v1713, %v1692
        %1718 = vrot.lane.b32.xlu0 %v1714, 126
        %v1719 = vpop.permute.xlu0 %1718
        %1720 = vrot.lane.b32.xlu0 %v1715, 126
        %v1721 = vpop.permute.xlu0 %1720
        %v1724 = vadd.f32 %v1710, %v1719
        %v1725 = vadd.f32 %v1711, %v1721
        %s1726 = sld [smem:[#allocation9 + $0x2]]
        %v1727 = vstv %s1726
        %v1728 = vadd.f32 %v1724, %v1727
        %v1729 = vadd.f32 %v1725, %v1727
        %v1730 = vsub.f32 0.0, %v1728
        %v1731 = vsub.f32 0.0, %v1729
        %v1732 = vmul.f32 %v1730, 1.442695
        %v1733 = vpow.pop %v1732
        %v1734 = vmul.f32 %v1731, 1.442695
        %v1735 = vpow.pop %v1734
        %v1736 = vadd.f32 %v1733, 1.0
        %v1737 = vadd.f32 %v1735, 1.0
        %v1738 = vrcp.pop %v1736
        %v1739 = vmul.f32 1.0, %v1738
        %v1740 = vrcp.pop %v1737
        %v1741 = vmul.f32 1.0, %v1740
        %v1742 = vmul.f32 %v1728, %v1739
        %v1743 = vmul.f32 %v1729, %v1741
        %1746 = vrot.lane.b32.xlu0 %v1742, 1
        %v1747 = vpop.permute.xlu0 %1746
        %1748 = vrot.lane.b32.xlu0 %v1743, 1
        %v1749 = vpop.permute.xlu0 %1748
        %s1752 = scalar_lea.vmem [#allocation3], 48
        %1753 = vst.msk [vmem:[%s1752 + $0x1] sm:$0xff] %vm361, %v1747
        %1754 = vst.msk [vmem:[%s1752 + $0x9] sm:$0xff] %vm361, %v1749
        %s1755 = sld [smem:[#allocation8 + $0x6c]]
        %v1756 = vld [vmem:[#allocation2] sm:$0xff]
        %v1757 = vld [vmem:[#allocation2 + $0x8] sm:$0xff]
        %v1758 = vstv %s1755
        %v1759 = vmul.f32 %v1758, %v1756
        %v1760 = vmul.f32 %v1758, %v1757
        %v1761 = vadd.f32 %v1759, 0.0
        %v1762 = vadd.f32 %v1760, 0.0
        %s1763 = sld [smem:[#allocation8 + $0x6d]]
        %v1764 = vstv %s1763
        %v1765 = vmul.f32 %v1764, %v1756
        %v1766 = vmul.f32 %v1764, %v1757
        %1769 = vrot.lane.b32.xlu0 %v1765, 127
        %v1770 = vpop.permute.xlu0 %1769
        %1771 = vrot.lane.b32.xlu0 %v1766, 127
        %v1772 = vpop.permute.xlu0 %1771
        %v1775 = vadd.f32 %v1761, %v1770
        %v1776 = vadd.f32 %v1762, %v1772
        %s1777 = sld [smem:[#allocation8 + $0x6e]]
        %v1778 = vstv %s1777
        %v1779 = vmul.f32 %v1778, %v1756
        %v1780 = vmul.f32 %v1778, %v1757
        %1783 = vrot.lane.b32.xlu0 %v1779, 126
        %v1784 = vpop.permute.xlu0 %1783
        %1785 = vrot.lane.b32.xlu0 %v1780, 126
        %v1786 = vpop.permute.xlu0 %1785
        %v1789 = vadd.f32 %v1775, %v1784
        %v1790 = vadd.f32 %v1776, %v1786
        %s1791 = sld [smem:[#allocation8 + $0x6f]]
        %v1792 = vld [vmem:[#allocation2 + $0x1] sm:$0xff]
        %v1793 = vld [vmem:[#allocation2 + $0x9] sm:$0xff]
        %v1794 = vstv %s1791
        %v1795 = vmul.f32 %v1794, %v1792
        %v1796 = vmul.f32 %v1794, %v1793
        %v1797 = vadd.f32 %v1789, %v1795
        %v1798 = vadd.f32 %v1790, %v1796
        %s1799 = sld [smem:[#allocation8 + $0x70]]
        %v1800 = vstv %s1799
        %v1801 = vmul.f32 %v1800, %v1792
        %v1802 = vmul.f32 %v1800, %v1793
        %1805 = vrot.lane.b32.xlu0 %v1801, 127
        %v1806 = vpop.permute.xlu0 %1805
        %1807 = vrot.lane.b32.xlu0 %v1802, 127
        %v1808 = vpop.permute.xlu0 %1807
        %v1811 = vadd.f32 %v1797, %v1806
        %v1812 = vadd.f32 %v1798, %v1808
        %s1813 = sld [smem:[#allocation8 + $0x71]]
        %v1814 = vstv %s1813
        %v1815 = vmul.f32 %v1814, %v1792
        %v1816 = vmul.f32 %v1814, %v1793
        %1819 = vrot.lane.b32.xlu0 %v1815, 126
        %v1820 = vpop.permute.xlu0 %1819
        %1821 = vrot.lane.b32.xlu0 %v1816, 126
        %v1822 = vpop.permute.xlu0 %1821
        %v1825 = vadd.f32 %v1811, %v1820
        %v1826 = vadd.f32 %v1812, %v1822
        %s1827 = sld [smem:[#allocation8 + $0x72]]
        %v1828 = vld [vmem:[#allocation2 + $0x2] sm:$0xff]
        %v1829 = vld [vmem:[#allocation2 + $0xa] sm:$0xff]
        %v1830 = vstv %s1827
        %v1831 = vmul.f32 %v1830, %v1828
        %v1832 = vmul.f32 %v1830, %v1829
        %v1833 = vadd.f32 %v1825, %v1831
        %v1834 = vadd.f32 %v1826, %v1832
        %s1835 = sld [smem:[#allocation8 + $0x73]]
        %v1836 = vstv %s1835
        %v1837 = vmul.f32 %v1836, %v1828
        %v1838 = vmul.f32 %v1836, %v1829
        %1841 = vrot.lane.b32.xlu0 %v1837, 127
        %v1842 = vpop.permute.xlu0 %1841
        %1843 = vrot.lane.b32.xlu0 %v1838, 127
        %v1844 = vpop.permute.xlu0 %1843
        %v1847 = vadd.f32 %v1833, %v1842
        %v1848 = vadd.f32 %v1834, %v1844
        %s1849 = sld [smem:[#allocation8 + $0x74]]
        %v1850 = vstv %s1849
        %v1851 = vmul.f32 %v1850, %v1828
        %v1852 = vmul.f32 %v1850, %v1829
        %1855 = vrot.lane.b32.xlu0 %v1851, 126
        %v1856 = vpop.permute.xlu0 %1855
        %1857 = vrot.lane.b32.xlu0 %v1852, 126
        %v1858 = vpop.permute.xlu0 %1857
        %v1861 = vadd.f32 %v1847, %v1856
        %v1862 = vadd.f32 %v1848, %v1858
        %s1863 = sld [smem:[#allocation8 + $0x75]]
        %v1864 = vld [vmem:[%s479] sm:$0xff]
        %v1865 = vld [vmem:[%s479 + $0x8] sm:$0xff]
        %v1866 = vstv %s1863
        %v1867 = vmul.f32 %v1866, %v1864
        %v1868 = vmul.f32 %v1866, %v1865
        %v1869 = vadd.f32 %v1861, %v1867
        %v1870 = vadd.f32 %v1862, %v1868
        %s1871 = sld [smem:[#allocation8 + $0x76]]
        %v1872 = vstv %s1871
        %v1873 = vmul.f32 %v1872, %v1864
        %v1874 = vmul.f32 %v1872, %v1865
        %1877 = vrot.lane.b32.xlu0 %v1873, 127
        %v1878 = vpop.permute.xlu0 %1877
        %1879 = vrot.lane.b32.xlu0 %v1874, 127
        %v1880 = vpop.permute.xlu0 %1879
        %v1883 = vadd.f32 %v1869, %v1878
        %v1884 = vadd.f32 %v1870, %v1880
        %s1885 = sld [smem:[#allocation8 + $0x77]]
        %v1886 = vstv %s1885
        %v1887 = vmul.f32 %v1886, %v1864
        %v1888 = vmul.f32 %v1886, %v1865
        %1891 = vrot.lane.b32.xlu0 %v1887, 126
        %v1892 = vpop.permute.xlu0 %1891
        %1893 = vrot.lane.b32.xlu0 %v1888, 126
        %v1894 = vpop.permute.xlu0 %1893
        %v1897 = vadd.f32 %v1883, %v1892
        %v1898 = vadd.f32 %v1884, %v1894
        %s1899 = sld [smem:[#allocation8 + $0x78]]
        %v1900 = vld [vmem:[%s479 + $0x1] sm:$0xff]
        %v1901 = vld [vmem:[%s479 + $0x9] sm:$0xff]
        %v1902 = vstv %s1899
        %v1903 = vmul.f32 %v1902, %v1900
        %v1904 = vmul.f32 %v1902, %v1901
        %v1905 = vadd.f32 %v1897, %v1903
        %v1906 = vadd.f32 %v1898, %v1904
        %s1907 = sld [smem:[#allocation8 + $0x79]]
        %v1908 = vstv %s1907
        %v1909 = vmul.f32 %v1908, %v1900
        %v1910 = vmul.f32 %v1908, %v1901
        %1913 = vrot.lane.b32.xlu0 %v1909, 127
        %v1914 = vpop.permute.xlu0 %1913
        %1915 = vrot.lane.b32.xlu0 %v1910, 127
        %v1916 = vpop.permute.xlu0 %1915
        %v1919 = vadd.f32 %v1905, %v1914
        %v1920 = vadd.f32 %v1906, %v1916
        %s1921 = sld [smem:[#allocation8 + $0x7a]]
        %v1922 = vstv %s1921
        %v1923 = vmul.f32 %v1922, %v1900
        %v1924 = vmul.f32 %v1922, %v1901
        %1927 = vrot.lane.b32.xlu0 %v1923, 126
        %v1928 = vpop.permute.xlu0 %1927
        %1929 = vrot.lane.b32.xlu0 %v1924, 126
        %v1930 = vpop.permute.xlu0 %1929
        %v1933 = vadd.f32 %v1919, %v1928
        %v1934 = vadd.f32 %v1920, %v1930
        %s1935 = sld [smem:[#allocation8 + $0x7b]]
        %v1936 = vld [vmem:[%s479 + $0x2] sm:$0xff]
        %v1937 = vld [vmem:[%s479 + $0xa] sm:$0xff]
        %v1938 = vstv %s1935
        %v1939 = vmul.f32 %v1938, %v1936
        %v1940 = vmul.f32 %v1938, %v1937
        %v1941 = vadd.f32 %v1933, %v1939
        %v1942 = vadd.f32 %v1934, %v1940
        %s1943 = sld [smem:[#allocation8 + $0x7c]]
        %v1944 = vstv %s1943
        %v1945 = vmul.f32 %v1944, %v1936
        %v1946 = vmul.f32 %v1944, %v1937
        %1949 = vrot.lane.b32.xlu0 %v1945, 127
        %v1950 = vpop.permute.xlu0 %1949
        %1951 = vrot.lane.b32.xlu0 %v1946, 127
        %v1952 = vpop.permute.xlu0 %1951
        %v1955 = vadd.f32 %v1941, %v1950
        %v1956 = vadd.f32 %v1942, %v1952
        %s1957 = sld [smem:[#allocation8 + $0x7d]]
        %v1958 = vstv %s1957
        %v1959 = vmul.f32 %v1958, %v1936
        %v1960 = vmul.f32 %v1958, %v1937
        %1963 = vrot.lane.b32.xlu0 %v1959, 126
        %v1964 = vpop.permute.xlu0 %1963
        %1965 = vrot.lane.b32.xlu0 %v1960, 126
        %v1966 = vpop.permute.xlu0 %1965
        %v1969 = vadd.f32 %v1955, %v1964
        %v1970 = vadd.f32 %v1956, %v1966
        %s1971 = sld [smem:[#allocation8 + $0x7e]]
        %v1972 = vld [vmem:[%s588] sm:$0xff]
        %v1973 = vld [vmem:[%s588 + $0x8] sm:$0xff]
        %v1974 = vstv %s1971
        %v1975 = vmul.f32 %v1974, %v1972
        %v1976 = vmul.f32 %v1974, %v1973
        %v1977 = vadd.f32 %v1969, %v1975
        %v1978 = vadd.f32 %v1970, %v1976
        %s1979 = sld [smem:[#allocation8 + $0x7f]]
        %v1980 = vstv %s1979
        %v1981 = vmul.f32 %v1980, %v1972
        %v1982 = vmul.f32 %v1980, %v1973
        %1985 = vrot.lane.b32.xlu0 %v1981, 127
        %v1986 = vpop.permute.xlu0 %1985
        %1987 = vrot.lane.b32.xlu0 %v1982, 127
        %v1988 = vpop.permute.xlu0 %1987
        %v1991 = vadd.f32 %v1977, %v1986
        %v1992 = vadd.f32 %v1978, %v1988
        %s1993 = sld [smem:[#allocation8 + $0x80]]
        %v1994 = vstv %s1993
        %v1995 = vmul.f32 %v1994, %v1972
        %v1996 = vmul.f32 %v1994, %v1973
        %1999 = vrot.lane.b32.xlu0 %v1995, 126
        %v2000 = vpop.permute.xlu0 %1999
        %2001 = vrot.lane.b32.xlu0 %v1996, 126
        %v2002 = vpop.permute.xlu0 %2001
        %v2005 = vadd.f32 %v1991, %v2000
        %v2006 = vadd.f32 %v1992, %v2002
        %s2007 = sld [smem:[#allocation8 + $0x81]]
        %v2008 = vld [vmem:[%s588 + $0x1] sm:$0xff]
        %v2009 = vld [vmem:[%s588 + $0x9] sm:$0xff]
        %v2010 = vstv %s2007
        %v2011 = vmul.f32 %v2010, %v2008
        %v2012 = vmul.f32 %v2010, %v2009
        %v2013 = vadd.f32 %v2005, %v2011
        %v2014 = vadd.f32 %v2006, %v2012
        %s2015 = sld [smem:[#allocation8 + $0x82]]
        %v2016 = vstv %s2015
        %v2017 = vmul.f32 %v2016, %v2008
        %v2018 = vmul.f32 %v2016, %v2009
        %2021 = vrot.lane.b32.xlu0 %v2017, 127
        %v2022 = vpop.permute.xlu0 %2021
        %2023 = vrot.lane.b32.xlu0 %v2018, 127
        %v2024 = vpop.permute.xlu0 %2023
        %v2027 = vadd.f32 %v2013, %v2022
        %v2028 = vadd.f32 %v2014, %v2024
        %s2029 = sld [smem:[#allocation8 + $0x83]]
        %v2030 = vstv %s2029
        %v2031 = vmul.f32 %v2030, %v2008
        %v2032 = vmul.f32 %v2030, %v2009
        %2035 = vrot.lane.b32.xlu0 %v2031, 126
        %v2036 = vpop.permute.xlu0 %2035
        %2037 = vrot.lane.b32.xlu0 %v2032, 126
        %v2038 = vpop.permute.xlu0 %2037
        %v2041 = vadd.f32 %v2027, %v2036
        %v2042 = vadd.f32 %v2028, %v2038
        %s2043 = sld [smem:[#allocation8 + $0x84]]
        %v2044 = vld [vmem:[%s588 + $0x2] sm:$0xff]
        %v2045 = vld [vmem:[%s588 + $0xa] sm:$0xff]
        %v2046 = vstv %s2043
        %v2047 = vmul.f32 %v2046, %v2044
        %v2048 = vmul.f32 %v2046, %v2045
        %v2049 = vadd.f32 %v2041, %v2047
        %v2050 = vadd.f32 %v2042, %v2048
        %s2051 = sld [smem:[#allocation8 + $0x85]]
        %v2052 = vstv %s2051
        %v2053 = vmul.f32 %v2052, %v2044
        %v2054 = vmul.f32 %v2052, %v2045
        %2057 = vrot.lane.b32.xlu0 %v2053, 127
        %v2058 = vpop.permute.xlu0 %2057
        %2059 = vrot.lane.b32.xlu0 %v2054, 127
        %v2060 = vpop.permute.xlu0 %2059
        %v2063 = vadd.f32 %v2049, %v2058
        %v2064 = vadd.f32 %v2050, %v2060
        %s2065 = sld [smem:[#allocation8 + $0x86]]
        %v2066 = vstv %s2065
        %v2067 = vmul.f32 %v2066, %v2044
        %v2068 = vmul.f32 %v2066, %v2045
        %2071 = vrot.lane.b32.xlu0 %v2067, 126
        %v2072 = vpop.permute.xlu0 %2071
        %2073 = vrot.lane.b32.xlu0 %v2068, 126
        %v2074 = vpop.permute.xlu0 %2073
        %v2077 = vadd.f32 %v2063, %v2072
        %v2078 = vadd.f32 %v2064, %v2074
        %s2079 = sld [smem:[#allocation8 + $0x87]]
        %v2080 = vld [vmem:[%s697] sm:$0xff]
        %v2081 = vld [vmem:[%s697 + $0x8] sm:$0xff]
        %v2082 = vstv %s2079
        %v2083 = vmul.f32 %v2082, %v2080
        %v2084 = vmul.f32 %v2082, %v2081
        %v2085 = vadd.f32 %v2077, %v2083
        %v2086 = vadd.f32 %v2078, %v2084
        %s2087 = sld [smem:[#allocation8 + $0x88]]
        %v2088 = vstv %s2087
        %v2089 = vmul.f32 %v2088, %v2080
        %v2090 = vmul.f32 %v2088, %v2081
        %2093 = vrot.lane.b32.xlu0 %v2089, 127
        %v2094 = vpop.permute.xlu0 %2093
        %2095 = vrot.lane.b32.xlu0 %v2090, 127
        %v2096 = vpop.permute.xlu0 %2095
        %v2099 = vadd.f32 %v2085, %v2094
        %v2100 = vadd.f32 %v2086, %v2096
        %s2101 = sld [smem:[#allocation8 + $0x89]]
        %v2102 = vstv %s2101
        %v2103 = vmul.f32 %v2102, %v2080
        %v2104 = vmul.f32 %v2102, %v2081
        %2107 = vrot.lane.b32.xlu0 %v2103, 126
        %v2108 = vpop.permute.xlu0 %2107
        %2109 = vrot.lane.b32.xlu0 %v2104, 126
        %v2110 = vpop.permute.xlu0 %2109
        %v2113 = vadd.f32 %v2099, %v2108
        %v2114 = vadd.f32 %v2100, %v2110
        %s2115 = sld [smem:[#allocation8 + $0x8a]]
        %v2116 = vld [vmem:[%s697 + $0x1] sm:$0xff]
        %v2117 = vld [vmem:[%s697 + $0x9] sm:$0xff]
        %v2118 = vstv %s2115
        %v2119 = vmul.f32 %v2118, %v2116
        %v2120 = vmul.f32 %v2118, %v2117
        %v2121 = vadd.f32 %v2113, %v2119
        %v2122 = vadd.f32 %v2114, %v2120
        %s2123 = sld [smem:[#allocation8 + $0x8b]]
        %v2124 = vstv %s2123
        %v2125 = vmul.f32 %v2124, %v2116
        %v2126 = vmul.f32 %v2124, %v2117
        %2129 = vrot.lane.b32.xlu0 %v2125, 127
        %v2130 = vpop.permute.xlu0 %2129
        %2131 = vrot.lane.b32.xlu0 %v2126, 127
        %v2132 = vpop.permute.xlu0 %2131
        %v2135 = vadd.f32 %v2121, %v2130
        %v2136 = vadd.f32 %v2122, %v2132
        %s2137 = sld [smem:[#allocation8 + $0x8c]]
        %v2138 = vstv %s2137
        %v2139 = vmul.f32 %v2138, %v2116
        %v2140 = vmul.f32 %v2138, %v2117
        %2143 = vrot.lane.b32.xlu0 %v2139, 126
        %v2144 = vpop.permute.xlu0 %2143
        %2145 = vrot.lane.b32.xlu0 %v2140, 126
        %v2146 = vpop.permute.xlu0 %2145
        %v2149 = vadd.f32 %v2135, %v2144
        %v2150 = vadd.f32 %v2136, %v2146
        %s2151 = sld [smem:[#allocation8 + $0x8d]]
        %v2152 = vld [vmem:[%s697 + $0x2] sm:$0xff]
        %v2153 = vld [vmem:[%s697 + $0xa] sm:$0xff]
        %v2154 = vstv %s2151
        %v2155 = vmul.f32 %v2154, %v2152
        %v2156 = vmul.f32 %v2154, %v2153
        %v2157 = vadd.f32 %v2149, %v2155
        %v2158 = vadd.f32 %v2150, %v2156
        %s2159 = sld [smem:[#allocation8 + $0x8e]]
        %v2160 = vstv %s2159
        %v2161 = vmul.f32 %v2160, %v2152
        %v2162 = vmul.f32 %v2160, %v2153
        %2165 = vrot.lane.b32.xlu0 %v2161, 127
        %v2166 = vpop.permute.xlu0 %2165
        %2167 = vrot.lane.b32.xlu0 %v2162, 127
        %v2168 = vpop.permute.xlu0 %2167
        %v2171 = vadd.f32 %v2157, %v2166
        %v2172 = vadd.f32 %v2158, %v2168
        %s2173 = sld [smem:[#allocation8 + $0x8f]]
        %v2174 = vstv %s2173
        %v2175 = vmul.f32 %v2174, %v2152
        %v2176 = vmul.f32 %v2174, %v2153
        %2179 = vrot.lane.b32.xlu0 %v2175, 126
        %v2180 = vpop.permute.xlu0 %2179
        %2181 = vrot.lane.b32.xlu0 %v2176, 126
        %v2182 = vpop.permute.xlu0 %2181
        %v2185 = vadd.f32 %v2171, %v2180
        %v2186 = vadd.f32 %v2172, %v2182
        %s2187 = sld [smem:[#allocation9 + $0x3]]
        %v2188 = vstv %s2187
        %v2189 = vadd.f32 %v2185, %v2188
        %v2190 = vadd.f32 %v2186, %v2188
        %v2191 = vsub.f32 0.0, %v2189
        %v2192 = vsub.f32 0.0, %v2190
        %v2193 = vmul.f32 %v2191, 1.442695
        %v2194 = vpow.pop %v2193
        %v2195 = vmul.f32 %v2192, 1.442695
        %v2196 = vpow.pop %v2195
        %v2197 = vadd.f32 %v2194, 1.0
        %v2198 = vadd.f32 %v2196, 1.0
        %v2199 = vrcp.pop %v2197
        %v2200 = vmul.f32 1.0, %v2199
        %v2201 = vrcp.pop %v2198
        %v2202 = vmul.f32 1.0, %v2201
        %v2203 = vmul.f32 %v2189, %v2200
        %v2204 = vmul.f32 %v2190, %v2202
        %2207 = vrot.lane.b32.xlu0 %v2203, 1
        %v2208 = vpop.permute.xlu0 %2207
        %2209 = vrot.lane.b32.xlu0 %v2204, 1
        %v2210 = vpop.permute.xlu0 %2209
        %s2213 = scalar_lea.vmem [#allocation3], 72
        %2214 = vst.msk [vmem:[%s2213 + $0x1] sm:$0xff] %vm361, %v2208
        %2215 = vst.msk [vmem:[%s2213 + $0x9] sm:$0xff] %vm361, %v2210
        %s2216 = sld [smem:[#allocation11]]
        %v2217 = vld [vmem:[#allocation3] sm:$0xff]
        %v2218 = vld [vmem:[#allocation3 + $0x8] sm:$0xff]
        %v2219 = vstv %s2216
        %v2220 = vmul.f32 %v2219, %v2217
        %v2221 = vmul.f32 %v2219, %v2218
        %v2222 = vadd.f32 %v2220, 0.0
        %v2223 = vadd.f32 %v2221, 0.0
        %s2224 = sld [smem:[#allocation11 + $0x1]]
        %v2225 = vstv %s2224
        %v2226 = vmul.f32 %v2225, %v2217
        %v2227 = vmul.f32 %v2225, %v2218
        %2230 = vrot.lane.b32.xlu0 %v2226, 127
        %v2231 = vpop.permute.xlu0 %2230
        %2232 = vrot.lane.b32.xlu0 %v2227, 127
        %v2233 = vpop.permute.xlu0 %2232
        %v2236 = vadd.f32 %v2222, %v2231
        %v2237 = vadd.f32 %v2223, %v2233
        %s2238 = sld [smem:[#allocation11 + $0x2]]
        %v2239 = vstv %s2238
        %v2240 = vmul.f32 %v2239, %v2217
        %v2241 = vmul.f32 %v2239, %v2218
        %2244 = vrot.lane.b32.xlu0 %v2240, 126
        %v2245 = vpop.permute.xlu0 %2244
        %2246 = vrot.lane.b32.xlu0 %v2241, 126
        %v2247 = vpop.permute.xlu0 %2246
        %v2250 = vadd.f32 %v2236, %v2245
        %v2251 = vadd.f32 %v2237, %v2247
        %s2252 = sld [smem:[#allocation11 + $0x3]]
        %v2253 = vld [vmem:[#allocation3 + $0x1] sm:$0xff]
        %v2254 = vld [vmem:[#allocation3 + $0x9] sm:$0xff]
        %v2255 = vstv %s2252
        %v2256 = vmul.f32 %v2255, %v2253
        %v2257 = vmul.f32 %v2255, %v2254
        %v2258 = vadd.f32 %v2250, %v2256
        %v2259 = vadd.f32 %v2251, %v2257
        %s2260 = sld [smem:[#allocation11 + $0x4]]
        %v2261 = vstv %s2260
        %v2262 = vmul.f32 %v2261, %v2253
        %v2263 = vmul.f32 %v2261, %v2254
        %2266 = vrot.lane.b32.xlu0 %v2262, 127
        %v2267 = vpop.permute.xlu0 %2266
        %2268 = vrot.lane.b32.xlu0 %v2263, 127
        %v2269 = vpop.permute.xlu0 %2268
        %v2272 = vadd.f32 %v2258, %v2267
        %v2273 = vadd.f32 %v2259, %v2269
        %s2274 = sld [smem:[#allocation11 + $0x5]]
        %v2275 = vstv %s2274
        %v2276 = vmul.f32 %v2275, %v2253
        %v2277 = vmul.f32 %v2275, %v2254
        %2280 = vrot.lane.b32.xlu0 %v2276, 126
        %v2281 = vpop.permute.xlu0 %2280
        %2282 = vrot.lane.b32.xlu0 %v2277, 126
        %v2283 = vpop.permute.xlu0 %2282
        %v2286 = vadd.f32 %v2272, %v2281
        %v2287 = vadd.f32 %v2273, %v2283
        %s2288 = sld [smem:[#allocation11 + $0x6]]
        %v2289 = vld [vmem:[#allocation3 + $0x2] sm:$0xff]
        %v2290 = vld [vmem:[#allocation3 + $0xa] sm:$0xff]
        %v2291 = vstv %s2288
        %v2292 = vmul.f32 %v2291, %v2289
        %v2293 = vmul.f32 %v2291, %v2290
        %v2294 = vadd.f32 %v2286, %v2292
        %v2295 = vadd.f32 %v2287, %v2293
        %s2296 = sld [smem:[#allocation11 + $0x7]]
        %v2297 = vstv %s2296
        %v2298 = vmul.f32 %v2297, %v2289
        %v2299 = vmul.f32 %v2297, %v2290
        %2302 = vrot.lane.b32.xlu0 %v2298, 127
        %v2303 = vpop.permute.xlu0 %2302
        %2304 = vrot.lane.b32.xlu0 %v2299, 127
        %v2305 = vpop.permute.xlu0 %2304
        %v2308 = vadd.f32 %v2294, %v2303
        %v2309 = vadd.f32 %v2295, %v2305
        %s2310 = sld [smem:[#allocation11 + $0x8]]
        %v2311 = vstv %s2310
        %v2312 = vmul.f32 %v2311, %v2289
        %v2313 = vmul.f32 %v2311, %v2290
        %2316 = vrot.lane.b32.xlu0 %v2312, 126
        %v2317 = vpop.permute.xlu0 %2316
        %2318 = vrot.lane.b32.xlu0 %v2313, 126
        %v2319 = vpop.permute.xlu0 %2318
        %v2322 = vadd.f32 %v2308, %v2317
        %v2323 = vadd.f32 %v2309, %v2319
        %s2324 = sld [smem:[#allocation11 + $0x9]]
        %v2325 = vld [vmem:[%s1291] sm:$0xff]
        %v2326 = vld [vmem:[%s1291 + $0x8] sm:$0xff]
        %v2327 = vstv %s2324
        %v2328 = vmul.f32 %v2327, %v2325
        %v2329 = vmul.f32 %v2327, %v2326
        %v2330 = vadd.f32 %v2322, %v2328
        %v2331 = vadd.f32 %v2323, %v2329
        %s2332 = sld [smem:[#allocation11 + $0xa]]
        %v2333 = vstv %s2332
        %v2334 = vmul.f32 %v2333, %v2325
        %v2335 = vmul.f32 %v2333, %v2326
        %2338 = vrot.lane.b32.xlu0 %v2334, 127
        %v2339 = vpop.permute.xlu0 %2338
        %2340 = vrot.lane.b32.xlu0 %v2335, 127
        %v2341 = vpop.permute.xlu0 %2340
        %v2344 = vadd.f32 %v2330, %v2339
        %v2345 = vadd.f32 %v2331, %v2341
        %s2346 = sld [smem:[#allocation11 + $0xb]]
        %v2347 = vstv %s2346
        %v2348 = vmul.f32 %v2347, %v2325
        %v2349 = vmul.f32 %v2347, %v2326
        %2352 = vrot.lane.b32.xlu0 %v2348, 126
        %v2353 = vpop.permute.xlu0 %2352
        %2354 = vrot.lane.b32.xlu0 %v2349, 126
        %v2355 = vpop.permute.xlu0 %2354
        %v2358 = vadd.f32 %v2344, %v2353
        %v2359 = vadd.f32 %v2345, %v2355
        %s2360 = sld [smem:[#allocation11 + $0xc]]
        %v2361 = vld [vmem:[%s1291 + $0x1] sm:$0xff]
        %v2362 = vld [vmem:[%s1291 + $0x9] sm:$0xff]
        %v2363 = vstv %s2360
        %v2364 = vmul.f32 %v2363, %v2361
        %v2365 = vmul.f32 %v2363, %v2362
        %v2366 = vadd.f32 %v2358, %v2364
        %v2367 = vadd.f32 %v2359, %v2365
        %s2368 = sld [smem:[#allocation11 + $0xd]]
        %v2369 = vstv %s2368
        %v2370 = vmul.f32 %v2369, %v2361
        %v2371 = vmul.f32 %v2369, %v2362
        %2374 = vrot.lane.b32.xlu0 %v2370, 127
        %v2375 = vpop.permute.xlu0 %2374
        %2376 = vrot.lane.b32.xlu0 %v2371, 127
        %v2377 = vpop.permute.xlu0 %2376
        %v2380 = vadd.f32 %v2366, %v2375
        %v2381 = vadd.f32 %v2367, %v2377
        %s2382 = sld [smem:[#allocation11 + $0xe]]
        %v2383 = vstv %s2382
        %v2384 = vmul.f32 %v2383, %v2361
        %v2385 = vmul.f32 %v2383, %v2362
        %2388 = vrot.lane.b32.xlu0 %v2384, 126
        %v2389 = vpop.permute.xlu0 %2388
        %2390 = vrot.lane.b32.xlu0 %v2385, 126
        %v2391 = vpop.permute.xlu0 %2390
        %v2394 = vadd.f32 %v2380, %v2389
        %v2395 = vadd.f32 %v2381, %v2391
        %s2396 = sld [smem:[#allocation11 + $0xf]]
        %v2397 = vld [vmem:[%s1291 + $0x2] sm:$0xff]
        %v2398 = vld [vmem:[%s1291 + $0xa] sm:$0xff]
        %v2399 = vstv %s2396
        %v2400 = vmul.f32 %v2399, %v2397
        %v2401 = vmul.f32 %v2399, %v2398
        %v2402 = vadd.f32 %v2394, %v2400
        %v2403 = vadd.f32 %v2395, %v2401
        %s2404 = sld [smem:[#allocation11 + $0x10]]
        %v2405 = vstv %s2404
        %v2406 = vmul.f32 %v2405, %v2397
        %v2407 = vmul.f32 %v2405, %v2398
        %2410 = vrot.lane.b32.xlu0 %v2406, 127
        %v2411 = vpop.permute.xlu0 %2410
        %2412 = vrot.lane.b32.xlu0 %v2407, 127
        %v2413 = vpop.permute.xlu0 %2412
        %v2416 = vadd.f32 %v2402, %v2411
        %v2417 = vadd.f32 %v2403, %v2413
        %s2418 = sld [smem:[#allocation11 + $0x11]]
        %v2419 = vstv %s2418
        %v2420 = vmul.f32 %v2419, %v2397
        %v2421 = vmul.f32 %v2419, %v2398
        %2424 = vrot.lane.b32.xlu0 %v2420, 126
        %v2425 = vpop.permute.xlu0 %2424
        %2426 = vrot.lane.b32.xlu0 %v2421, 126
        %v2427 = vpop.permute.xlu0 %2426
        %v2430 = vadd.f32 %v2416, %v2425
        %v2431 = vadd.f32 %v2417, %v2427
        %s2432 = sld [smem:[#allocation11 + $0x12]]
        %v2433 = vld [vmem:[%s1752] sm:$0xff]
        %v2434 = vld [vmem:[%s1752 + $0x8] sm:$0xff]
        %v2435 = vstv %s2432
        %v2436 = vmul.f32 %v2435, %v2433
        %v2437 = vmul.f32 %v2435, %v2434
        %v2438 = vadd.f32 %v2430, %v2436
        %v2439 = vadd.f32 %v2431, %v2437
        %s2440 = sld [smem:[#allocation11 + $0x13]]
        %v2441 = vstv %s2440
        %v2442 = vmul.f32 %v2441, %v2433
        %v2443 = vmul.f32 %v2441, %v2434
        %2446 = vrot.lane.b32.xlu0 %v2442, 127
        %v2447 = vpop.permute.xlu0 %2446
        %2448 = vrot.lane.b32.xlu0 %v2443, 127
        %v2449 = vpop.permute.xlu0 %2448
        %v2452 = vadd.f32 %v2438, %v2447
        %v2453 = vadd.f32 %v2439, %v2449
        %s2454 = sld [smem:[#allocation11 + $0x14]]
        %v2455 = vstv %s2454
        %v2456 = vmul.f32 %v2455, %v2433
        %v2457 = vmul.f32 %v2455, %v2434
        %2460 = vrot.lane.b32.xlu0 %v2456, 126
        %v2461 = vpop.permute.xlu0 %2460
        %2462 = vrot.lane.b32.xlu0 %v2457, 126
        %v2463 = vpop.permute.xlu0 %2462
        %v2466 = vadd.f32 %v2452, %v2461
        %v2467 = vadd.f32 %v2453, %v2463
        %s2468 = sld [smem:[#allocation11 + $0x15]]
        %v2469 = vld [vmem:[%s1752 + $0x1] sm:$0xff]
        %v2470 = vld [vmem:[%s1752 + $0x9] sm:$0xff]
        %v2471 = vstv %s2468
        %v2472 = vmul.f32 %v2471, %v2469
        %v2473 = vmul.f32 %v2471, %v2470
        %v2474 = vadd.f32 %v2466, %v2472
        %v2475 = vadd.f32 %v2467, %v2473
        %s2476 = sld [smem:[#allocation11 + $0x16]]
        %v2477 = vstv %s2476
        %v2478 = vmul.f32 %v2477, %v2469
        %v2479 = vmul.f32 %v2477, %v2470
        %2482 = vrot.lane.b32.xlu0 %v2478, 127
        %v2483 = vpop.permute.xlu0 %2482
        %2484 = vrot.lane.b32.xlu0 %v2479, 127
        %v2485 = vpop.permute.xlu0 %2484
        %v2488 = vadd.f32 %v2474, %v2483
        %v2489 = vadd.f32 %v2475, %v2485
        %s2490 = sld [smem:[#allocation11 + $0x17]]
        %v2491 = vstv %s2490
        %v2492 = vmul.f32 %v2491, %v2469
        %v2493 = vmul.f32 %v2491, %v2470
        %2496 = vrot.lane.b32.xlu0 %v2492, 126
        %v2497 = vpop.permute.xlu0 %2496
        %2498 = vrot.lane.b32.xlu0 %v2493, 126
        %v2499 = vpop.permute.xlu0 %2498
        %v2502 = vadd.f32 %v2488, %v2497
        %v2503 = vadd.f32 %v2489, %v2499
        %s2504 = sld [smem:[#allocation11 + $0x18]]
        %v2505 = vld [vmem:[%s1752 + $0x2] sm:$0xff]
        %v2506 = vld [vmem:[%s1752 + $0xa] sm:$0xff]
        %v2507 = vstv %s2504
        %v2508 = vmul.f32 %v2507, %v2505
        %v2509 = vmul.f32 %v2507, %v2506
        %v2510 = vadd.f32 %v2502, %v2508
        %v2511 = vadd.f32 %v2503, %v2509
        %s2512 = sld [smem:[#allocation11 + $0x19]]
        %v2513 = vstv %s2512
        %v2514 = vmul.f32 %v2513, %v2505
        %v2515 = vmul.f32 %v2513, %v2506
        %2518 = vrot.lane.b32.xlu0 %v2514, 127
        %v2519 = vpop.permute.xlu0 %2518
        %2520 = vrot.lane.b32.xlu0 %v2515, 127
        %v2521 = vpop.permute.xlu0 %2520
        %v2524 = vadd.f32 %v2510, %v2519
        %v2525 = vadd.f32 %v2511, %v2521
        %s2526 = sld [smem:[#allocation11 + $0x1a]]
        %v2527 = vstv %s2526
        %v2528 = vmul.f32 %v2527, %v2505
        %v2529 = vmul.f32 %v2527, %v2506
        %2532 = vrot.lane.b32.xlu0 %v2528, 126
        %v2533 = vpop.permute.xlu0 %2532
        %2534 = vrot.lane.b32.xlu0 %v2529, 126
        %v2535 = vpop.permute.xlu0 %2534
        %v2538 = vadd.f32 %v2524, %v2533
        %v2539 = vadd.f32 %v2525, %v2535
        %s2540 = sld [smem:[#allocation11 + $0x1b]]
        %v2541 = vld [vmem:[%s2213] sm:$0xff]
        %v2542 = vld [vmem:[%s2213 + $0x8] sm:$0xff]
        %v2543 = vstv %s2540
        %v2544 = vmul.f32 %v2543, %v2541
        %v2545 = vmul.f32 %v2543, %v2542
        %v2546 = vadd.f32 %v2538, %v2544
        %v2547 = vadd.f32 %v2539, %v2545
        %s2548 = sld [smem:[#allocation11 + $0x1c]]
        %v2549 = vstv %s2548
        %v2550 = vmul.f32 %v2549, %v2541
        %v2551 = vmul.f32 %v2549, %v2542
        %2554 = vrot.lane.b32.xlu0 %v2550, 127
        %v2555 = vpop.permute.xlu0 %2554
        %2556 = vrot.lane.b32.xlu0 %v2551, 127
        %v2557 = vpop.permute.xlu0 %2556
        %v2560 = vadd.f32 %v2546, %v2555
        %v2561 = vadd.f32 %v2547, %v2557
        %s2562 = sld [smem:[#allocation11 + $0x1d]]
        %v2563 = vstv %s2562
        %v2564 = vmul.f32 %v2563, %v2541
        %v2565 = vmul.f32 %v2563, %v2542
        %2568 = vrot.lane.b32.xlu0 %v2564, 126
        %v2569 = vpop.permute.xlu0 %2568
        %2570 = vrot.lane.b32.xlu0 %v2565, 126
        %v2571 = vpop.permute.xlu0 %2570
        %v2574 = vadd.f32 %v2560, %v2569
        %v2575 = vadd.f32 %v2561, %v2571
        %s2576 = sld [smem:[#allocation11 + $0x1e]]
        %v2577 = vld [vmem:[%s2213 + $0x1] sm:$0xff]
        %v2578 = vld [vmem:[%s2213 + $0x9] sm:$0xff]
        %v2579 = vstv %s2576
        %v2580 = vmul.f32 %v2579, %v2577
        %v2581 = vmul.f32 %v2579, %v2578
        %v2582 = vadd.f32 %v2574, %v2580
        %v2583 = vadd.f32 %v2575, %v2581
        %s2584 = sld [smem:[#allocation11 + $0x1f]]
        %v2585 = vstv %s2584
        %v2586 = vmul.f32 %v2585, %v2577
        %v2587 = vmul.f32 %v2585, %v2578
        %2590 = vrot.lane.b32.xlu0 %v2586, 127
        %v2591 = vpop.permute.xlu0 %2590
        %2592 = vrot.lane.b32.xlu0 %v2587, 127
        %v2593 = vpop.permute.xlu0 %2592
        %v2596 = vadd.f32 %v2582, %v2591
        %v2597 = vadd.f32 %v2583, %v2593
        %s2598 = sld [smem:[#allocation11 + $0x20]]
        %v2599 = vstv %s2598
        %v2600 = vmul.f32 %v2599, %v2577
        %v2601 = vmul.f32 %v2599, %v2578
        %2604 = vrot.lane.b32.xlu0 %v2600, 126
        %v2605 = vpop.permute.xlu0 %2604
        %2606 = vrot.lane.b32.xlu0 %v2601, 126
        %v2607 = vpop.permute.xlu0 %2606
        %v2610 = vadd.f32 %v2596, %v2605
        %v2611 = vadd.f32 %v2597, %v2607
        %s2612 = sld [smem:[#allocation11 + $0x21]]
        %v2613 = vld [vmem:[%s2213 + $0x2] sm:$0xff]
        %v2614 = vld [vmem:[%s2213 + $0xa] sm:$0xff]
        %v2615 = vstv %s2612
        %v2616 = vmul.f32 %v2615, %v2613
        %v2617 = vmul.f32 %v2615, %v2614
        %v2618 = vadd.f32 %v2610, %v2616
        %v2619 = vadd.f32 %v2611, %v2617
        %s2620 = sld [smem:[#allocation11 + $0x22]]
        %v2621 = vstv %s2620
        %v2622 = vmul.f32 %v2621, %v2613
        %v2623 = vmul.f32 %v2621, %v2614
        %2626 = vrot.lane.b32.xlu0 %v2622, 127
        %v2627 = vpop.permute.xlu0 %2626
        %2628 = vrot.lane.b32.xlu0 %v2623, 127
        %v2629 = vpop.permute.xlu0 %2628
        %v2632 = vadd.f32 %v2618, %v2627
        %v2633 = vadd.f32 %v2619, %v2629
        %s2634 = sld [smem:[#allocation11 + $0x23]]
        %v2635 = vstv %s2634
        %v2636 = vmul.f32 %v2635, %v2613
        %v2637 = vmul.f32 %v2635, %v2614
        %2640 = vrot.lane.b32.xlu0 %v2636, 126
        %v2641 = vpop.permute.xlu0 %2640
        %2642 = vrot.lane.b32.xlu0 %v2637, 126
        %v2643 = vpop.permute.xlu0 %2642
        %v2646 = vadd.f32 %v2632, %v2641
        %v2647 = vadd.f32 %v2633, %v2643
        %s2648 = sld [smem:[#allocation12]]
        %v2649 = vstv %s2648
        %v2650 = vadd.f32 %v2646, %v2649
        %v2651 = vadd.f32 %v2647, %v2649
        %v2652 = vadd.f32 %v2650, %v321
        %v2653 = vadd.f32 %v2651, %v322
        %v2654 = vsub.f32 0.0, %v2652
        %v2655 = vsub.f32 0.0, %v2653
        %v2656 = vmul.f32 %v2654, 1.442695
        %v2657 = vpow.pop %v2656
        %v2658 = vmul.f32 %v2655, 1.442695
        %v2659 = vpow.pop %v2658
        %v2660 = vadd.f32 %v2657, 1.0
        %v2661 = vadd.f32 %v2659, 1.0
        %v2662 = vrcp.pop %v2660
        %v2663 = vmul.f32 1.0, %v2662
        %v2664 = vrcp.pop %v2661
        %v2665 = vmul.f32 1.0, %v2664
        %v2666 = vmul.f32 %v2652, %v2663
        %v2667 = vmul.f32 %v2653, %v2665
        %vm2668 = vcmask 130048
        %2669 = vst.msk [vmem:[%s294] sm:$0xff] %vm2668, %v2666
        %2670 = vst.msk [vmem:[%s294 + $0x8] sm:$0xff] %vm2668, %v2667
        %s2671 = sld [smem:[#allocation11 + $0x24]]
        %v2672 = vld [vmem:[#allocation3] sm:$0xff]
        %v2673 = vld [vmem:[#allocation3 + $0x8] sm:$0xff]
        %v2674 = vstv %s2671
        %v2675 = vmul.f32 %v2674, %v2672
        %v2676 = vmul.f32 %v2674, %v2673
        %v2677 = vadd.f32 %v2675, 0.0
        %v2678 = vadd.f32 %v2676, 0.0
        %s2679 = sld [smem:[#allocation11 + $0x25]]
        %v2680 = vstv %s2679
        %v2681 = vmul.f32 %v2680, %v2672
        %v2682 = vmul.f32 %v2680, %v2673
        %2685 = vrot.lane.b32.xlu0 %v2681, 127
        %v2686 = vpop.permute.xlu0 %2685
        %2687 = vrot.lane.b32.xlu0 %v2682, 127
        %v2688 = vpop.permute.xlu0 %2687
        %v2691 = vadd.f32 %v2677, %v2686
        %v2692 = vadd.f32 %v2678, %v2688
        %s2693 = sld [smem:[#allocation11 + $0x26]]
        %v2694 = vstv %s2693
        %v2695 = vmul.f32 %v2694, %v2672
        %v2696 = vmul.f32 %v2694, %v2673
        %2699 = vrot.lane.b32.xlu0 %v2695, 126
        %v2700 = vpop.permute.xlu0 %2699
        %2701 = vrot.lane.b32.xlu0 %v2696, 126
        %v2702 = vpop.permute.xlu0 %2701
        %v2705 = vadd.f32 %v2691, %v2700
        %v2706 = vadd.f32 %v2692, %v2702
        %s2707 = sld [smem:[#allocation11 + $0x27]]
        %v2708 = vld [vmem:[#allocation3 + $0x1] sm:$0xff]
        %v2709 = vld [vmem:[#allocation3 + $0x9] sm:$0xff]
        %v2710 = vstv %s2707
        %v2711 = vmul.f32 %v2710, %v2708
        %v2712 = vmul.f32 %v2710, %v2709
        %v2713 = vadd.f32 %v2705, %v2711
        %v2714 = vadd.f32 %v2706, %v2712
        %s2715 = sld [smem:[#allocation11 + $0x28]]
        %v2716 = vstv %s2715
        %v2717 = vmul.f32 %v2716, %v2708
        %v2718 = vmul.f32 %v2716, %v2709
        %2721 = vrot.lane.b32.xlu0 %v2717, 127
        %v2722 = vpop.permute.xlu0 %2721
        %2723 = vrot.lane.b32.xlu0 %v2718, 127
        %v2724 = vpop.permute.xlu0 %2723
        %v2727 = vadd.f32 %v2713, %v2722
        %v2728 = vadd.f32 %v2714, %v2724
        %s2729 = sld [smem:[#allocation11 + $0x29]]
        %v2730 = vstv %s2729
        %v2731 = vmul.f32 %v2730, %v2708
        %v2732 = vmul.f32 %v2730, %v2709
        %2735 = vrot.lane.b32.xlu0 %v2731, 126
        %v2736 = vpop.permute.xlu0 %2735
        %2737 = vrot.lane.b32.xlu0 %v2732, 126
        %v2738 = vpop.permute.xlu0 %2737
        %v2741 = vadd.f32 %v2727, %v2736
        %v2742 = vadd.f32 %v2728, %v2738
        %s2743 = sld [smem:[#allocation11 + $0x2a]]
        %v2744 = vld [vmem:[#allocation3 + $0x2] sm:$0xff]
        %v2745 = vld [vmem:[#allocation3 + $0xa] sm:$0xff]
        %v2746 = vstv %s2743
        %v2747 = vmul.f32 %v2746, %v2744
        %v2748 = vmul.f32 %v2746, %v2745
        %v2749 = vadd.f32 %v2741, %v2747
        %v2750 = vadd.f32 %v2742, %v2748
        %s2751 = sld [smem:[#allocation11 + $0x2b]]
        %v2752 = vstv %s2751
        %v2753 = vmul.f32 %v2752, %v2744
        %v2754 = vmul.f32 %v2752, %v2745
        %2757 = vrot.lane.b32.xlu0 %v2753, 127
        %v2758 = vpop.permute.xlu0 %2757
        %2759 = vrot.lane.b32.xlu0 %v2754, 127
        %v2760 = vpop.permute.xlu0 %2759
        %v2763 = vadd.f32 %v2749, %v2758
        %v2764 = vadd.f32 %v2750, %v2760
        %s2765 = sld [smem:[#allocation11 + $0x2c]]
        %v2766 = vstv %s2765
        %v2767 = vmul.f32 %v2766, %v2744
        %v2768 = vmul.f32 %v2766, %v2745
        %2771 = vrot.lane.b32.xlu0 %v2767, 126
        %v2772 = vpop.permute.xlu0 %2771
        %2773 = vrot.lane.b32.xlu0 %v2768, 126
        %v2774 = vpop.permute.xlu0 %2773
        %v2777 = vadd.f32 %v2763, %v2772
        %v2778 = vadd.f32 %v2764, %v2774
        %s2779 = sld [smem:[#allocation11 + $0x2d]]
        %v2780 = vld [vmem:[%s1291] sm:$0xff]
        %v2781 = vld [vmem:[%s1291 + $0x8] sm:$0xff]
        %v2782 = vstv %s2779
        %v2783 = vmul.f32 %v2782, %v2780
        %v2784 = vmul.f32 %v2782, %v2781
        %v2785 = vadd.f32 %v2777, %v2783
        %v2786 = vadd.f32 %v2778, %v2784
        %s2787 = sld [smem:[#allocation11 + $0x2e]]
        %v2788 = vstv %s2787
        %v2789 = vmul.f32 %v2788, %v2780
        %v2790 = vmul.f32 %v2788, %v2781
        %2793 = vrot.lane.b32.xlu0 %v2789, 127
        %v2794 = vpop.permute.xlu0 %2793
        %2795 = vrot.lane.b32.xlu0 %v2790, 127
        %v2796 = vpop.permute.xlu0 %2795
        %v2799 = vadd.f32 %v2785, %v2794
        %v2800 = vadd.f32 %v2786, %v2796
        %s2801 = sld [smem:[#allocation11 + $0x2f]]
        %v2802 = vstv %s2801
        %v2803 = vmul.f32 %v2802, %v2780
        %v2804 = vmul.f32 %v2802, %v2781
        %2807 = vrot.lane.b32.xlu0 %v2803, 126
        %v2808 = vpop.permute.xlu0 %2807
        %2809 = vrot.lane.b32.xlu0 %v2804, 126
        %v2810 = vpop.permute.xlu0 %2809
        %v2813 = vadd.f32 %v2799, %v2808
        %v2814 = vadd.f32 %v2800, %v2810
        %s2815 = sld [smem:[#allocation11 + $0x30]]
        %v2816 = vld [vmem:[%s1291 + $0x1] sm:$0xff]
        %v2817 = vld [vmem:[%s1291 + $0x9] sm:$0xff]
        %v2818 = vstv %s2815
        %v2819 = vmul.f32 %v2818, %v2816
        %v2820 = vmul.f32 %v2818, %v2817
        %v2821 = vadd.f32 %v2813, %v2819
        %v2822 = vadd.f32 %v2814, %v2820
        %s2823 = sld [smem:[#allocation11 + $0x31]]
        %v2824 = vstv %s2823
        %v2825 = vmul.f32 %v2824, %v2816
        %v2826 = vmul.f32 %v2824, %v2817
        %2829 = vrot.lane.b32.xlu0 %v2825, 127
        %v2830 = vpop.permute.xlu0 %2829
        %2831 = vrot.lane.b32.xlu0 %v2826, 127
        %v2832 = vpop.permute.xlu0 %2831
        %v2835 = vadd.f32 %v2821, %v2830
        %v2836 = vadd.f32 %v2822, %v2832
        %s2837 = sld [smem:[#allocation11 + $0x32]]
        %v2838 = vstv %s2837
        %v2839 = vmul.f32 %v2838, %v2816
        %v2840 = vmul.f32 %v2838, %v2817
        %2843 = vrot.lane.b32.xlu0 %v2839, 126
        %v2844 = vpop.permute.xlu0 %2843
        %2845 = vrot.lane.b32.xlu0 %v2840, 126
        %v2846 = vpop.permute.xlu0 %2845
        %v2849 = vadd.f32 %v2835, %v2844
        %v2850 = vadd.f32 %v2836, %v2846
        %s2851 = sld [smem:[#allocation11 + $0x33]]
        %v2852 = vld [vmem:[%s1291 + $0x2] sm:$0xff]
        %v2853 = vld [vmem:[%s1291 + $0xa] sm:$0xff]
        %v2854 = vstv %s2851
        %v2855 = vmul.f32 %v2854, %v2852
        %v2856 = vmul.f32 %v2854, %v2853
        %v2857 = vadd.f32 %v2849, %v2855
        %v2858 = vadd.f32 %v2850, %v2856
        %s2859 = sld [smem:[#allocation11 + $0x34]]
        %v2860 = vstv %s2859
        %v2861 = vmul.f32 %v2860, %v2852
        %v2862 = vmul.f32 %v2860, %v2853
        %2865 = vrot.lane.b32.xlu0 %v2861, 127
        %v2866 = vpop.permute.xlu0 %2865
        %2867 = vrot.lane.b32.xlu0 %v2862, 127
        %v2868 = vpop.permute.xlu0 %2867
        %v2871 = vadd.f32 %v2857, %v2866
        %v2872 = vadd.f32 %v2858, %v2868
        %s2873 = sld [smem:[#allocation11 + $0x35]]
        %v2874 = vstv %s2873
        %v2875 = vmul.f32 %v2874, %v2852
        %v2876 = vmul.f32 %v2874, %v2853
        %2879 = vrot.lane.b32.xlu0 %v2875, 126
        %v2880 = vpop.permute.xlu0 %2879
        %2881 = vrot.lane.b32.xlu0 %v2876, 126
        %v2882 = vpop.permute.xlu0 %2881
        %v2885 = vadd.f32 %v2871, %v2880
        %v2886 = vadd.f32 %v2872, %v2882
        %s2887 = sld [smem:[#allocation11 + $0x36]]
        %v2888 = vld [vmem:[%s1752] sm:$0xff]
        %v2889 = vld [vmem:[%s1752 + $0x8] sm:$0xff]
        %v2890 = vstv %s2887
        %v2891 = vmul.f32 %v2890, %v2888
        %v2892 = vmul.f32 %v2890, %v2889
        %v2893 = vadd.f32 %v2885, %v2891
        %v2894 = vadd.f32 %v2886, %v2892
        %s2895 = sld [smem:[#allocation11 + $0x37]]
        %v2896 = vstv %s2895
        %v2897 = vmul.f32 %v2896, %v2888
        %v2898 = vmul.f32 %v2896, %v2889
        %2901 = vrot.lane.b32.xlu0 %v2897, 127
        %v2902 = vpop.permute.xlu0 %2901
        %2903 = vrot.lane.b32.xlu0 %v2898, 127
        %v2904 = vpop.permute.xlu0 %2903
        %v2907 = vadd.f32 %v2893, %v2902
        %v2908 = vadd.f32 %v2894, %v2904
        %s2909 = sld [smem:[#allocation11 + $0x38]]
        %v2910 = vstv %s2909
        %v2911 = vmul.f32 %v2910, %v2888
        %v2912 = vmul.f32 %v2910, %v2889
        %2915 = vrot.lane.b32.xlu0 %v2911, 126
        %v2916 = vpop.permute.xlu0 %2915
        %2917 = vrot.lane.b32.xlu0 %v2912, 126
        %v2918 = vpop.permute.xlu0 %2917
        %v2921 = vadd.f32 %v2907, %v2916
        %v2922 = vadd.f32 %v2908, %v2918
        %s2923 = sld [smem:[#allocation11 + $0x39]]
        %v2924 = vld [vmem:[%s1752 + $0x1] sm:$0xff]
        %v2925 = vld [vmem:[%s1752 + $0x9] sm:$0xff]
        %v2926 = vstv %s2923
        %v2927 = vmul.f32 %v2926, %v2924
        %v2928 = vmul.f32 %v2926, %v2925
        %v2929 = vadd.f32 %v2921, %v2927
        %v2930 = vadd.f32 %v2922, %v2928
        %s2931 = sld [smem:[#allocation11 + $0x3a]]
        %v2932 = vstv %s2931
        %v2933 = vmul.f32 %v2932, %v2924
        %v2934 = vmul.f32 %v2932, %v2925
        %2937 = vrot.lane.b32.xlu0 %v2933, 127
        %v2938 = vpop.permute.xlu0 %2937
        %2939 = vrot.lane.b32.xlu0 %v2934, 127
        %v2940 = vpop.permute.xlu0 %2939
        %v2943 = vadd.f32 %v2929, %v2938
        %v2944 = vadd.f32 %v2930, %v2940
        %s2945 = sld [smem:[#allocation11 + $0x3b]]
        %v2946 = vstv %s2945
        %v2947 = vmul.f32 %v2946, %v2924
        %v2948 = vmul.f32 %v2946, %v2925
        %2951 = vrot.lane.b32.xlu0 %v2947, 126
        %v2952 = vpop.permute.xlu0 %2951
        %2953 = vrot.lane.b32.xlu0 %v2948, 126
        %v2954 = vpop.permute.xlu0 %2953
        %v2957 = vadd.f32 %v2943, %v2952
        %v2958 = vadd.f32 %v2944, %v2954
        %s2959 = sld [smem:[#allocation11 + $0x3c]]
        %v2960 = vld [vmem:[%s1752 + $0x2] sm:$0xff]
        %v2961 = vld [vmem:[%s1752 + $0xa] sm:$0xff]
        %v2962 = vstv %s2959
        %v2963 = vmul.f32 %v2962, %v2960
        %v2964 = vmul.f32 %v2962, %v2961
        %v2965 = vadd.f32 %v2957, %v2963
        %v2966 = vadd.f32 %v2958, %v2964
        %s2967 = sld [smem:[#allocation11 + $0x3d]]
        %v2968 = vstv %s2967
        %v2969 = vmul.f32 %v2968, %v2960
        %v2970 = vmul.f32 %v2968, %v2961
        %2973 = vrot.lane.b32.xlu0 %v2969, 127
        %v2974 = vpop.permute.xlu0 %2973
        %2975 = vrot.lane.b32.xlu0 %v2970, 127
        %v2976 = vpop.permute.xlu0 %2975
        %v2979 = vadd.f32 %v2965, %v2974
        %v2980 = vadd.f32 %v2966, %v2976
        %s2981 = sld [smem:[#allocation11 + $0x3e]]
        %v2982 = vstv %s2981
        %v2983 = vmul.f32 %v2982, %v2960
        %v2984 = vmul.f32 %v2982, %v2961
        %2987 = vrot.lane.b32.xlu0 %v2983, 126
        %v2988 = vpop.permute.xlu0 %2987
        %2989 = vrot.lane.b32.xlu0 %v2984, 126
        %v2990 = vpop.permute.xlu0 %2989
        %v2993 = vadd.f32 %v2979, %v2988
        %v2994 = vadd.f32 %v2980, %v2990
        %s2995 = sld [smem:[#allocation11 + $0x3f]]
        %v2996 = vld [vmem:[%s2213] sm:$0xff]
        %v2997 = vld [vmem:[%s2213 + $0x8] sm:$0xff]
        %v2998 = vstv %s2995
        %v2999 = vmul.f32 %v2998, %v2996
        %v3000 = vmul.f32 %v2998, %v2997
        %v3001 = vadd.f32 %v2993, %v2999
        %v3002 = vadd.f32 %v2994, %v3000
        %s3003 = sld [smem:[#allocation11 + $0x40]]
        %v3004 = vstv %s3003
        %v3005 = vmul.f32 %v3004, %v2996
        %v3006 = vmul.f32 %v3004, %v2997
        %3009 = vrot.lane.b32.xlu0 %v3005, 127
        %v3010 = vpop.permute.xlu0 %3009
        %3011 = vrot.lane.b32.xlu0 %v3006, 127
        %v3012 = vpop.permute.xlu0 %3011
        %v3015 = vadd.f32 %v3001, %v3010
        %v3016 = vadd.f32 %v3002, %v3012
        %s3017 = sld [smem:[#allocation11 + $0x41]]
        %v3018 = vstv %s3017
        %v3019 = vmul.f32 %v3018, %v2996
        %v3020 = vmul.f32 %v3018, %v2997
        %3023 = vrot.lane.b32.xlu0 %v3019, 126
        %v3024 = vpop.permute.xlu0 %3023
        %3025 = vrot.lane.b32.xlu0 %v3020, 126
        %v3026 = vpop.permute.xlu0 %3025
        %v3029 = vadd.f32 %v3015, %v3024
        %v3030 = vadd.f32 %v3016, %v3026
        %s3031 = sld [smem:[#allocation11 + $0x42]]
        %v3032 = vld [vmem:[%s2213 + $0x1] sm:$0xff]
        %v3033 = vld [vmem:[%s2213 + $0x9] sm:$0xff]
        %v3034 = vstv %s3031
        %v3035 = vmul.f32 %v3034, %v3032
        %v3036 = vmul.f32 %v3034, %v3033
        %v3037 = vadd.f32 %v3029, %v3035
        %v3038 = vadd.f32 %v3030, %v3036
        %s3039 = sld [smem:[#allocation11 + $0x43]]
        %v3040 = vstv %s3039
        %v3041 = vmul.f32 %v3040, %v3032
        %v3042 = vmul.f32 %v3040, %v3033
        %3045 = vrot.lane.b32.xlu0 %v3041, 127
        %v3046 = vpop.permute.xlu0 %3045
        %3047 = vrot.lane.b32.xlu0 %v3042, 127
        %v3048 = vpop.permute.xlu0 %3047
        %v3051 = vadd.f32 %v3037, %v3046
        %v3052 = vadd.f32 %v3038, %v3048
        %s3053 = sld [smem:[#allocation11 + $0x44]]
        %v3054 = vstv %s3053
        %v3055 = vmul.f32 %v3054, %v3032
        %v3056 = vmul.f32 %v3054, %v3033
        %3059 = vrot.lane.b32.xlu0 %v3055, 126
        %v3060 = vpop.permute.xlu0 %3059
        %3061 = vrot.lane.b32.xlu0 %v3056, 126
        %v3062 = vpop.permute.xlu0 %3061
        %v3065 = vadd.f32 %v3051, %v3060
        %v3066 = vadd.f32 %v3052, %v3062
        %s3067 = sld [smem:[#allocation11 + $0x45]]
        %v3068 = vld [vmem:[%s2213 + $0x2] sm:$0xff]
        %v3069 = vld [vmem:[%s2213 + $0xa] sm:$0xff]
        %v3070 = vstv %s3067
        %v3071 = vmul.f32 %v3070, %v3068
        %v3072 = vmul.f32 %v3070, %v3069
        %v3073 = vadd.f32 %v3065, %v3071
        %v3074 = vadd.f32 %v3066, %v3072
        %s3075 = sld [smem:[#allocation11 + $0x46]]
        %v3076 = vstv %s3075
        %v3077 = vmul.f32 %v3076, %v3068
        %v3078 = vmul.f32 %v3076, %v3069
        %3081 = vrot.lane.b32.xlu0 %v3077, 127
        %v3082 = vpop.permute.xlu0 %3081
        %3083 = vrot.lane.b32.xlu0 %v3078, 127
        %v3084 = vpop.permute.xlu0 %3083
        %v3087 = vadd.f32 %v3073, %v3082
        %v3088 = vadd.f32 %v3074, %v3084
        %s3089 = sld [smem:[#allocation11 + $0x47]]
        %v3090 = vstv %s3089
        %v3091 = vmul.f32 %v3090, %v3068
        %v3092 = vmul.f32 %v3090, %v3069
        %3095 = vrot.lane.b32.xlu0 %v3091, 126
        %v3096 = vpop.permute.xlu0 %3095
        %3097 = vrot.lane.b32.xlu0 %v3092, 126
        %v3098 = vpop.permute.xlu0 %3097
        %v3101 = vadd.f32 %v3087, %v3096
        %v3102 = vadd.f32 %v3088, %v3098
        %s3103 = sld [smem:[#allocation12 + $0x1]]
        %v3104 = vstv %s3103
        %v3105 = vadd.f32 %v3101, %v3104
        %v3106 = vadd.f32 %v3102, %v3104
        %v3107 = vadd.f32 %v3105, %v323
        %v3108 = vadd.f32 %v3106, %v324
        %v3109 = vsub.f32 0.0, %v3107
        %v3110 = vsub.f32 0.0, %v3108
        %v3111 = vmul.f32 %v3109, 1.442695
        %v3112 = vpow.pop %v3111
        %v3113 = vmul.f32 %v3110, 1.442695
        %v3114 = vpow.pop %v3113
        %v3115 = vadd.f32 %v3112, 1.0
        %v3116 = vadd.f32 %v3114, 1.0
        %v3117 = vrcp.pop %v3115
        %v3118 = vmul.f32 1.0, %v3117
        %v3119 = vrcp.pop %v3116
        %v3120 = vmul.f32 1.0, %v3119
        %v3121 = vmul.f32 %v3107, %v3118
        %v3122 = vmul.f32 %v3108, %v3120
        %s3123 = scalar_lea.vmem %s294, 16 [#allocation14]
        %3124 = vst.msk [vmem:[%s3123] sm:$0xff] %vm2668, %v3121
        %3125 = vst.msk [vmem:[%s3123 + $0x8] sm:$0xff] %vm2668, %v3122
        %s3126 = sld [smem:[#allocation11 + $0x48]]
        %v3127 = vld [vmem:[#allocation3] sm:$0xff]
        %v3128 = vld [vmem:[#allocation3 + $0x8] sm:$0xff]
        %v3129 = vstv %s3126
        %v3130 = vmul.f32 %v3129, %v3127
        %v3131 = vmul.f32 %v3129, %v3128
        %v3132 = vadd.f32 %v3130, 0.0
        %v3133 = vadd.f32 %v3131, 0.0
        %s3134 = sld [smem:[#allocation11 + $0x49]]
        %v3135 = vstv %s3134
        %v3136 = vmul.f32 %v3135, %v3127
        %v3137 = vmul.f32 %v3135, %v3128
        %3140 = vrot.lane.b32.xlu0 %v3136, 127
        %v3141 = vpop.permute.xlu0 %3140
        %3142 = vrot.lane.b32.xlu0 %v3137, 127
        %v3143 = vpop.permute.xlu0 %3142
        %v3146 = vadd.f32 %v3132, %v3141
        %v3147 = vadd.f32 %v3133, %v3143
        %s3148 = sld [smem:[#allocation11 + $0x4a]]
        %v3149 = vstv %s3148
        %v3150 = vmul.f32 %v3149, %v3127
        %v3151 = vmul.f32 %v3149, %v3128
        %3154 = vrot.lane.b32.xlu0 %v3150, 126
        %v3155 = vpop.permute.xlu0 %3154
        %3156 = vrot.lane.b32.xlu0 %v3151, 126
        %v3157 = vpop.permute.xlu0 %3156
        %v3160 = vadd.f32 %v3146, %v3155
        %v3161 = vadd.f32 %v3147, %v3157
        %s3162 = sld [smem:[#allocation11 + $0x4b]]
        %v3163 = vld [vmem:[#allocation3 + $0x1] sm:$0xff]
        %v3164 = vld [vmem:[#allocation3 + $0x9] sm:$0xff]
        %v3165 = vstv %s3162
        %v3166 = vmul.f32 %v3165, %v3163
        %v3167 = vmul.f32 %v3165, %v3164
        %v3168 = vadd.f32 %v3160, %v3166
        %v3169 = vadd.f32 %v3161, %v3167
        %s3170 = sld [smem:[#allocation11 + $0x4c]]
        %v3171 = vstv %s3170
        %v3172 = vmul.f32 %v3171, %v3163
        %v3173 = vmul.f32 %v3171, %v3164
        %3176 = vrot.lane.b32.xlu0 %v3172, 127
        %v3177 = vpop.permute.xlu0 %3176
        %3178 = vrot.lane.b32.xlu0 %v3173, 127
        %v3179 = vpop.permute.xlu0 %3178
        %v3182 = vadd.f32 %v3168, %v3177
        %v3183 = vadd.f32 %v3169, %v3179
        %s3184 = sld [smem:[#allocation11 + $0x4d]]
        %v3185 = vstv %s3184
        %v3186 = vmul.f32 %v3185, %v3163
        %v3187 = vmul.f32 %v3185, %v3164
        %3190 = vrot.lane.b32.xlu0 %v3186, 126
        %v3191 = vpop.permute.xlu0 %3190
        %3192 = vrot.lane.b32.xlu0 %v3187, 126
        %v3193 = vpop.permute.xlu0 %3192
        %v3196 = vadd.f32 %v3182, %v3191
        %v3197 = vadd.f32 %v3183, %v3193
        %s3198 = sld [smem:[#allocation11 + $0x4e]]
        %v3199 = vld [vmem:[#allocation3 + $0x2] sm:$0xff]
        %v3200 = vld [vmem:[#allocation3 + $0xa] sm:$0xff]
        %v3201 = vstv %s3198
        %v3202 = vmul.f32 %v3201, %v3199
        %v3203 = vmul.f32 %v3201, %v3200
        %v3204 = vadd.f32 %v3196, %v3202
        %v3205 = vadd.f32 %v3197, %v3203
        %s3206 = sld [smem:[#allocation11 + $0x4f]]
        %v3207 = vstv %s3206
        %v3208 = vmul.f32 %v3207, %v3199
        %v3209 = vmul.f32 %v3207, %v3200
        %3212 = vrot.lane.b32.xlu0 %v3208, 127
        %v3213 = vpop.permute.xlu0 %3212
        %3214 = vrot.lane.b32.xlu0 %v3209, 127
        %v3215 = vpop.permute.xlu0 %3214
        %v3218 = vadd.f32 %v3204, %v3213
        %v3219 = vadd.f32 %v3205, %v3215
        %s3220 = sld [smem:[#allocation11 + $0x50]]
        %v3221 = vstv %s3220
        %v3222 = vmul.f32 %v3221, %v3199
        %v3223 = vmul.f32 %v3221, %v3200
        %3226 = vrot.lane.b32.xlu0 %v3222, 126
        %v3227 = vpop.permute.xlu0 %3226
        %3228 = vrot.lane.b32.xlu0 %v3223, 126
        %v3229 = vpop.permute.xlu0 %3228
        %v3232 = vadd.f32 %v3218, %v3227
        %v3233 = vadd.f32 %v3219, %v3229
        %s3234 = sld [smem:[#allocation11 + $0x51]]
        %v3235 = vld [vmem:[%s1291] sm:$0xff]
        %v3236 = vld [vmem:[%s1291 + $0x8] sm:$0xff]
        %v3237 = vstv %s3234
        %v3238 = vmul.f32 %v3237, %v3235
        %v3239 = vmul.f32 %v3237, %v3236
        %v3240 = vadd.f32 %v3232, %v3238
        %v3241 = vadd.f32 %v3233, %v3239
        %s3242 = sld [smem:[#allocation11 + $0x52]]
        %v3243 = vstv %s3242
        %v3244 = vmul.f32 %v3243, %v3235
        %v3245 = vmul.f32 %v3243, %v3236
        %3248 = vrot.lane.b32.xlu0 %v3244, 127
        %v3249 = vpop.permute.xlu0 %3248
        %3250 = vrot.lane.b32.xlu0 %v3245, 127
        %v3251 = vpop.permute.xlu0 %3250
        %v3254 = vadd.f32 %v3240, %v3249
        %v3255 = vadd.f32 %v3241, %v3251
        %s3256 = sld [smem:[#allocation11 + $0x53]]
        %v3257 = vstv %s3256
        %v3258 = vmul.f32 %v3257, %v3235
        %v3259 = vmul.f32 %v3257, %v3236
        %3262 = vrot.lane.b32.xlu0 %v3258, 126
        %v3263 = vpop.permute.xlu0 %3262
        %3264 = vrot.lane.b32.xlu0 %v3259, 126
        %v3265 = vpop.permute.xlu0 %3264
        %v3268 = vadd.f32 %v3254, %v3263
        %v3269 = vadd.f32 %v3255, %v3265
        %s3270 = sld [smem:[#allocation11 + $0x54]]
        %v3271 = vld [vmem:[%s1291 + $0x1] sm:$0xff]
        %v3272 = vld [vmem:[%s1291 + $0x9] sm:$0xff]
        %v3273 = vstv %s3270
        %v3274 = vmul.f32 %v3273, %v3271
        %v3275 = vmul.f32 %v3273, %v3272
        %v3276 = vadd.f32 %v3268, %v3274
        %v3277 = vadd.f32 %v3269, %v3275
        %s3278 = sld [smem:[#allocation11 + $0x55]]
        %v3279 = vstv %s3278
        %v3280 = vmul.f32 %v3279, %v3271
        %v3281 = vmul.f32 %v3279, %v3272
        %3284 = vrot.lane.b32.xlu0 %v3280, 127
        %v3285 = vpop.permute.xlu0 %3284
        %3286 = vrot.lane.b32.xlu0 %v3281, 127
        %v3287 = vpop.permute.xlu0 %3286
        %v3290 = vadd.f32 %v3276, %v3285
        %v3291 = vadd.f32 %v3277, %v3287
        %s3292 = sld [smem:[#allocation11 + $0x56]]
        %v3293 = vstv %s3292
        %v3294 = vmul.f32 %v3293, %v3271
        %v3295 = vmul.f32 %v3293, %v3272
        %3298 = vrot.lane.b32.xlu0 %v3294, 126
        %v3299 = vpop.permute.xlu0 %3298
        %3300 = vrot.lane.b32.xlu0 %v3295, 126
        %v3301 = vpop.permute.xlu0 %3300
        %v3304 = vadd.f32 %v3290, %v3299
        %v3305 = vadd.f32 %v3291, %v3301
        %s3306 = sld [smem:[#allocation11 + $0x57]]
        %v3307 = vld [vmem:[%s1291 + $0x2] sm:$0xff]
        %v3308 = vld [vmem:[%s1291 + $0xa] sm:$0xff]
        %v3309 = vstv %s3306
        %v3310 = vmul.f32 %v3309, %v3307
        %v3311 = vmul.f32 %v3309, %v3308
        %v3312 = vadd.f32 %v3304, %v3310
        %v3313 = vadd.f32 %v3305, %v3311
        %s3314 = sld [smem:[#allocation11 + $0x58]]
        %v3315 = vstv %s3314
        %v3316 = vmul.f32 %v3315, %v3307
        %v3317 = vmul.f32 %v3315, %v3308
        %3320 = vrot.lane.b32.xlu0 %v3316, 127
        %v3321 = vpop.permute.xlu0 %3320
        %3322 = vrot.lane.b32.xlu0 %v3317, 127
        %v3323 = vpop.permute.xlu0 %3322
        %v3326 = vadd.f32 %v3312, %v3321
        %v3327 = vadd.f32 %v3313, %v3323
        %s3328 = sld [smem:[#allocation11 + $0x59]]
        %v3329 = vstv %s3328
        %v3330 = vmul.f32 %v3329, %v3307
        %v3331 = vmul.f32 %v3329, %v3308
        %3334 = vrot.lane.b32.xlu0 %v3330, 126
        %v3335 = vpop.permute.xlu0 %3334
        %3336 = vrot.lane.b32.xlu0 %v3331, 126
        %v3337 = vpop.permute.xlu0 %3336
        %v3340 = vadd.f32 %v3326, %v3335
        %v3341 = vadd.f32 %v3327, %v3337
        %s3342 = sld [smem:[#allocation11 + $0x5a]]
        %v3343 = vld [vmem:[%s1752] sm:$0xff]
        %v3344 = vld [vmem:[%s1752 + $0x8] sm:$0xff]
        %v3345 = vstv %s3342
        %v3346 = vmul.f32 %v3345, %v3343
        %v3347 = vmul.f32 %v3345, %v3344
        %v3348 = vadd.f32 %v3340, %v3346
        %v3349 = vadd.f32 %v3341, %v3347
        %s3350 = sld [smem:[#allocation11 + $0x5b]]
        %v3351 = vstv %s3350
        %v3352 = vmul.f32 %v3351, %v3343
        %v3353 = vmul.f32 %v3351, %v3344
        %3356 = vrot.lane.b32.xlu0 %v3352, 127
        %v3357 = vpop.permute.xlu0 %3356
        %3358 = vrot.lane.b32.xlu0 %v3353, 127
        %v3359 = vpop.permute.xlu0 %3358
        %v3362 = vadd.f32 %v3348, %v3357
        %v3363 = vadd.f32 %v3349, %v3359
        %s3364 = sld [smem:[#allocation11 + $0x5c]]
        %v3365 = vstv %s3364
        %v3366 = vmul.f32 %v3365, %v3343
        %v3367 = vmul.f32 %v3365, %v3344
        %3370 = vrot.lane.b32.xlu0 %v3366, 126
        %v3371 = vpop.permute.xlu0 %3370
        %3372 = vrot.lane.b32.xlu0 %v3367, 126
        %v3373 = vpop.permute.xlu0 %3372
        %v3376 = vadd.f32 %v3362, %v3371
        %v3377 = vadd.f32 %v3363, %v3373
        %s3378 = sld [smem:[#allocation11 + $0x5d]]
        %v3379 = vld [vmem:[%s1752 + $0x1] sm:$0xff]
        %v3380 = vld [vmem:[%s1752 + $0x9] sm:$0xff]
        %v3381 = vstv %s3378
        %v3382 = vmul.f32 %v3381, %v3379
        %v3383 = vmul.f32 %v3381, %v3380
        %v3384 = vadd.f32 %v3376, %v3382
        %v3385 = vadd.f32 %v3377, %v3383
        %s3386 = sld [smem:[#allocation11 + $0x5e]]
        %v3387 = vstv %s3386
        %v3388 = vmul.f32 %v3387, %v3379
        %v3389 = vmul.f32 %v3387, %v3380
        %3392 = vrot.lane.b32.xlu0 %v3388, 127
        %v3393 = vpop.permute.xlu0 %3392
        %3394 = vrot.lane.b32.xlu0 %v3389, 127
        %v3395 = vpop.permute.xlu0 %3394
        %v3398 = vadd.f32 %v3384, %v3393
        %v3399 = vadd.f32 %v3385, %v3395
        %s3400 = sld [smem:[#allocation11 + $0x5f]]
        %v3401 = vstv %s3400
        %v3402 = vmul.f32 %v3401, %v3379
        %v3403 = vmul.f32 %v3401, %v3380
        %3406 = vrot.lane.b32.xlu0 %v3402, 126
        %v3407 = vpop.permute.xlu0 %3406
        %3408 = vrot.lane.b32.xlu0 %v3403, 126
        %v3409 = vpop.permute.xlu0 %3408
        %v3412 = vadd.f32 %v3398, %v3407
        %v3413 = vadd.f32 %v3399, %v3409
        %s3414 = sld [smem:[#allocation11 + $0x60]]
        %v3415 = vld [vmem:[%s1752 + $0x2] sm:$0xff]
        %v3416 = vld [vmem:[%s1752 + $0xa] sm:$0xff]
        %v3417 = vstv %s3414
        %v3418 = vmul.f32 %v3417, %v3415
        %v3419 = vmul.f32 %v3417, %v3416
        %v3420 = vadd.f32 %v3412, %v3418
        %v3421 = vadd.f32 %v3413, %v3419
        %s3422 = sld [smem:[#allocation11 + $0x61]]
        %v3423 = vstv %s3422
        %v3424 = vmul.f32 %v3423, %v3415
        %v3425 = vmul.f32 %v3423, %v3416
        %3428 = vrot.lane.b32.xlu0 %v3424, 127
        %v3429 = vpop.permute.xlu0 %3428
        %3430 = vrot.lane.b32.xlu0 %v3425, 127
        %v3431 = vpop.permute.xlu0 %3430
        %v3434 = vadd.f32 %v3420, %v3429
        %v3435 = vadd.f32 %v3421, %v3431
        %s3436 = sld [smem:[#allocation11 + $0x62]]
        %v3437 = vstv %s3436
        %v3438 = vmul.f32 %v3437, %v3415
        %v3439 = vmul.f32 %v3437, %v3416
        %3442 = vrot.lane.b32.xlu0 %v3438, 126
        %v3443 = vpop.permute.xlu0 %3442
        %3444 = vrot.lane.b32.xlu0 %v3439, 126
        %v3445 = vpop.permute.xlu0 %3444
        %v3448 = vadd.f32 %v3434, %v3443
        %v3449 = vadd.f32 %v3435, %v3445
        %s3450 = sld [smem:[#allocation11 + $0x63]]
        %v3451 = vld [vmem:[%s2213] sm:$0xff]
        %v3452 = vld [vmem:[%s2213 + $0x8] sm:$0xff]
        %v3453 = vstv %s3450
        %v3454 = vmul.f32 %v3453, %v3451
        %v3455 = vmul.f32 %v3453, %v3452
        %v3456 = vadd.f32 %v3448, %v3454
        %v3457 = vadd.f32 %v3449, %v3455
        %s3458 = sld [smem:[#allocation11 + $0x64]]
        %v3459 = vstv %s3458
        %v3460 = vmul.f32 %v3459, %v3451
        %v3461 = vmul.f32 %v3459, %v3452
        %3464 = vrot.lane.b32.xlu0 %v3460, 127
        %v3465 = vpop.permute.xlu0 %3464
        %3466 = vrot.lane.b32.xlu0 %v3461, 127
        %v3467 = vpop.permute.xlu0 %3466
        %v3470 = vadd.f32 %v3456, %v3465
        %v3471 = vadd.f32 %v3457, %v3467
        %s3472 = sld [smem:[#allocation11 + $0x65]]
        %v3473 = vstv %s3472
        %v3474 = vmul.f32 %v3473, %v3451
        %v3475 = vmul.f32 %v3473, %v3452
        %3478 = vrot.lane.b32.xlu0 %v3474, 126
        %v3479 = vpop.permute.xlu0 %3478
        %3480 = vrot.lane.b32.xlu0 %v3475, 126
        %v3481 = vpop.permute.xlu0 %3480
        %v3484 = vadd.f32 %v3470, %v3479
        %v3485 = vadd.f32 %v3471, %v3481
        %s3486 = sld [smem:[#allocation11 + $0x66]]
        %v3487 = vld [vmem:[%s2213 + $0x1] sm:$0xff]
        %v3488 = vld [vmem:[%s2213 + $0x9] sm:$0xff]
        %v3489 = vstv %s3486
        %v3490 = vmul.f32 %v3489, %v3487
        %v3491 = vmul.f32 %v3489, %v3488
        %v3492 = vadd.f32 %v3484, %v3490
        %v3493 = vadd.f32 %v3485, %v3491
        %s3494 = sld [smem:[#allocation11 + $0x67]]
        %v3495 = vstv %s3494
        %v3496 = vmul.f32 %v3495, %v3487
        %v3497 = vmul.f32 %v3495, %v3488
        %3500 = vrot.lane.b32.xlu0 %v3496, 127
        %v3501 = vpop.permute.xlu0 %3500
        %3502 = vrot.lane.b32.xlu0 %v3497, 127
        %v3503 = vpop.permute.xlu0 %3502
        %v3506 = vadd.f32 %v3492, %v3501
        %v3507 = vadd.f32 %v3493, %v3503
        %s3508 = sld [smem:[#allocation11 + $0x68]]
        %v3509 = vstv %s3508
        %v3510 = vmul.f32 %v3509, %v3487
        %v3511 = vmul.f32 %v3509, %v3488
        %3514 = vrot.lane.b32.xlu0 %v3510, 126
        %v3515 = vpop.permute.xlu0 %3514
        %3516 = vrot.lane.b32.xlu0 %v3511, 126
        %v3517 = vpop.permute.xlu0 %3516
        %v3520 = vadd.f32 %v3506, %v3515
        %v3521 = vadd.f32 %v3507, %v3517
        %s3522 = sld [smem:[#allocation11 + $0x69]]
        %v3523 = vld [vmem:[%s2213 + $0x2] sm:$0xff]
        %v3524 = vld [vmem:[%s2213 + $0xa] sm:$0xff]
        %v3525 = vstv %s3522
        %v3526 = vmul.f32 %v3525, %v3523
        %v3527 = vmul.f32 %v3525, %v3524
        %v3528 = vadd.f32 %v3520, %v3526
        %v3529 = vadd.f32 %v3521, %v3527
        %s3530 = sld [smem:[#allocation11 + $0x6a]]
        %v3531 = vstv %s3530
        %v3532 = vmul.f32 %v3531, %v3523
        %v3533 = vmul.f32 %v3531, %v3524
        %3536 = vrot.lane.b32.xlu0 %v3532, 127
        %v3537 = vpop.permute.xlu0 %3536
        %3538 = vrot.lane.b32.xlu0 %v3533, 127
        %v3539 = vpop.permute.xlu0 %3538
        %v3542 = vadd.f32 %v3528, %v3537
        %v3543 = vadd.f32 %v3529, %v3539
        %s3544 = sld [smem:[#allocation11 + $0x6b]]
        %v3545 = vstv %s3544
        %v3546 = vmul.f32 %v3545, %v3523
        %v3547 = vmul.f32 %v3545, %v3524
        %3550 = vrot.lane.b32.xlu0 %v3546, 126
        %v3551 = vpop.permute.xlu0 %3550
        %3552 = vrot.lane.b32.xlu0 %v3547, 126
        %v3553 = vpop.permute.xlu0 %3552
        %v3556 = vadd.f32 %v3542, %v3551
        %v3557 = vadd.f32 %v3543, %v3553
        %s3558 = sld [smem:[#allocation12 + $0x2]]
        %v3559 = vstv %s3558
        %v3560 = vadd.f32 %v3556, %v3559
        %v3561 = vadd.f32 %v3557, %v3559
        %v3562 = vadd.f32 %v3560, %v325
        %v3563 = vadd.f32 %v3561, %v326
        %v3564 = vsub.f32 0.0, %v3562
        %v3565 = vsub.f32 0.0, %v3563
        %v3566 = vmul.f32 %v3564, 1.442695
        %v3567 = vpow.pop %v3566
        %v3568 = vmul.f32 %v3565, 1.442695
        %v3569 = vpow.pop %v3568
        %v3570 = vadd.f32 %v3567, 1.0
        %v3571 = vadd.f32 %v3569, 1.0
        %v3572 = vrcp.pop %v3570
        %v3573 = vmul.f32 1.0, %v3572
        %v3574 = vrcp.pop %v3571
        %v3575 = vmul.f32 1.0, %v3574
        %v3576 = vmul.f32 %v3562, %v3573
        %v3577 = vmul.f32 %v3563, %v3575
        %s3578 = scalar_lea.vmem %s294, 32 [#allocation14]
        %3579 = vst.msk [vmem:[%s3578] sm:$0xff] %vm2668, %v3576
        %3580 = vst.msk [vmem:[%s3578 + $0x8] sm:$0xff] %vm2668, %v3577
        %s3581 = sld [smem:[#allocation11 + $0x6c]]
        %v3582 = vld [vmem:[#allocation3] sm:$0xff]
        %v3583 = vld [vmem:[#allocation3 + $0x8] sm:$0xff]
        %v3584 = vstv %s3581
        %v3585 = vmul.f32 %v3584, %v3582
        %v3586 = vmul.f32 %v3584, %v3583
        %v3587 = vadd.f32 %v3585, 0.0
        %v3588 = vadd.f32 %v3586, 0.0
        %s3589 = sld [smem:[#allocation11 + $0x6d]]
        %v3590 = vstv %s3589
        %v3591 = vmul.f32 %v3590, %v3582
        %v3592 = vmul.f32 %v3590, %v3583
        %3595 = vrot.lane.b32.xlu0 %v3591, 127
        %v3596 = vpop.permute.xlu0 %3595
        %3597 = vrot.lane.b32.xlu0 %v3592, 127
        %v3598 = vpop.permute.xlu0 %3597
        %v3601 = vadd.f32 %v3587, %v3596
        %v3602 = vadd.f32 %v3588, %v3598
        %s3603 = sld [smem:[#allocation11 + $0x6e]]
        %v3604 = vstv %s3603
        %v3605 = vmul.f32 %v3604, %v3582
        %v3606 = vmul.f32 %v3604, %v3583
        %3609 = vrot.lane.b32.xlu0 %v3605, 126
        %v3610 = vpop.permute.xlu0 %3609
        %3611 = vrot.lane.b32.xlu0 %v3606, 126
        %v3612 = vpop.permute.xlu0 %3611
        %v3615 = vadd.f32 %v3601, %v3610
        %v3616 = vadd.f32 %v3602, %v3612
        %s3617 = sld [smem:[#allocation11 + $0x6f]]
        %v3618 = vld [vmem:[#allocation3 + $0x1] sm:$0xff]
        %v3619 = vld [vmem:[#allocation3 + $0x9] sm:$0xff]
        %v3620 = vstv %s3617
        %v3621 = vmul.f32 %v3620, %v3618
        %v3622 = vmul.f32 %v3620, %v3619
        %v3623 = vadd.f32 %v3615, %v3621
        %v3624 = vadd.f32 %v3616, %v3622
        %s3625 = sld [smem:[#allocation11 + $0x70]]
        %v3626 = vstv %s3625
        %v3627 = vmul.f32 %v3626, %v3618
        %v3628 = vmul.f32 %v3626, %v3619
        %3631 = vrot.lane.b32.xlu0 %v3627, 127
        %v3632 = vpop.permute.xlu0 %3631
        %3633 = vrot.lane.b32.xlu0 %v3628, 127
        %v3634 = vpop.permute.xlu0 %3633
        %v3637 = vadd.f32 %v3623, %v3632
        %v3638 = vadd.f32 %v3624, %v3634
        %s3639 = sld [smem:[#allocation11 + $0x71]]
        %v3640 = vstv %s3639
        %v3641 = vmul.f32 %v3640, %v3618
        %v3642 = vmul.f32 %v3640, %v3619
        %3645 = vrot.lane.b32.xlu0 %v3641, 126
        %v3646 = vpop.permute.xlu0 %3645
        %3647 = vrot.lane.b32.xlu0 %v3642, 126
        %v3648 = vpop.permute.xlu0 %3647
        %v3651 = vadd.f32 %v3637, %v3646
        %v3652 = vadd.f32 %v3638, %v3648
        %s3653 = sld [smem:[#allocation11 + $0x72]]
        %v3654 = vld [vmem:[#allocation3 + $0x2] sm:$0xff]
        %v3655 = vld [vmem:[#allocation3 + $0xa] sm:$0xff]
        %v3656 = vstv %s3653
        %v3657 = vmul.f32 %v3656, %v3654
        %v3658 = vmul.f32 %v3656, %v3655
        %v3659 = vadd.f32 %v3651, %v3657
        %v3660 = vadd.f32 %v3652, %v3658
        %s3661 = sld [smem:[#allocation11 + $0x73]]
        %v3662 = vstv %s3661
        %v3663 = vmul.f32 %v3662, %v3654
        %v3664 = vmul.f32 %v3662, %v3655
        %3667 = vrot.lane.b32.xlu0 %v3663, 127
        %v3668 = vpop.permute.xlu0 %3667
        %3669 = vrot.lane.b32.xlu0 %v3664, 127
        %v3670 = vpop.permute.xlu0 %3669
        %v3673 = vadd.f32 %v3659, %v3668
        %v3674 = vadd.f32 %v3660, %v3670
        %s3675 = sld [smem:[#allocation11 + $0x74]]
        %v3676 = vstv %s3675
        %v3677 = vmul.f32 %v3676, %v3654
        %v3678 = vmul.f32 %v3676, %v3655
        %3681 = vrot.lane.b32.xlu0 %v3677, 126
        %v3682 = vpop.permute.xlu0 %3681
        %3683 = vrot.lane.b32.xlu0 %v3678, 126
        %v3684 = vpop.permute.xlu0 %3683
        %v3687 = vadd.f32 %v3673, %v3682
        %v3688 = vadd.f32 %v3674, %v3684
        %s3689 = sld [smem:[#allocation11 + $0x75]]
        %v3690 = vld [vmem:[%s1291] sm:$0xff]
        %v3691 = vld [vmem:[%s1291 + $0x8] sm:$0xff]
        %v3692 = vstv %s3689
        %v3693 = vmul.f32 %v3692, %v3690
        %v3694 = vmul.f32 %v3692, %v3691
        %v3695 = vadd.f32 %v3687, %v3693
        %v3696 = vadd.f32 %v3688, %v3694
        %s3697 = sld [smem:[#allocation11 + $0x76]]
        %v3698 = vstv %s3697
        %v3699 = vmul.f32 %v3698, %v3690
        %v3700 = vmul.f32 %v3698, %v3691
        %3703 = vrot.lane.b32.xlu0 %v3699, 127
        %v3704 = vpop.permute.xlu0 %3703
        %3705 = vrot.lane.b32.xlu0 %v3700, 127
        %v3706 = vpop.permute.xlu0 %3705
        %v3709 = vadd.f32 %v3695, %v3704
        %v3710 = vadd.f32 %v3696, %v3706
        %s3711 = sld [smem:[#allocation11 + $0x77]]
        %v3712 = vstv %s3711
        %v3713 = vmul.f32 %v3712, %v3690
        %v3714 = vmul.f32 %v3712, %v3691
        %3717 = vrot.lane.b32.xlu0 %v3713, 126
        %v3718 = vpop.permute.xlu0 %3717
        %3719 = vrot.lane.b32.xlu0 %v3714, 126
        %v3720 = vpop.permute.xlu0 %3719
        %v3723 = vadd.f32 %v3709, %v3718
        %v3724 = vadd.f32 %v3710, %v3720
        %s3725 = sld [smem:[#allocation11 + $0x78]]
        %v3726 = vld [vmem:[%s1291 + $0x1] sm:$0xff]
        %v3727 = vld [vmem:[%s1291 + $0x9] sm:$0xff]
        %v3728 = vstv %s3725
        %v3729 = vmul.f32 %v3728, %v3726
        %v3730 = vmul.f32 %v3728, %v3727
        %v3731 = vadd.f32 %v3723, %v3729
        %v3732 = vadd.f32 %v3724, %v3730
        %s3733 = sld [smem:[#allocation11 + $0x79]]
        %v3734 = vstv %s3733
        %v3735 = vmul.f32 %v3734, %v3726
        %v3736 = vmul.f32 %v3734, %v3727
        %3739 = vrot.lane.b32.xlu0 %v3735, 127
        %v3740 = vpop.permute.xlu0 %3739
        %3741 = vrot.lane.b32.xlu0 %v3736, 127
        %v3742 = vpop.permute.xlu0 %3741
        %v3745 = vadd.f32 %v3731, %v3740
        %v3746 = vadd.f32 %v3732, %v3742
        %s3747 = sld [smem:[#allocation11 + $0x7a]]
        %v3748 = vstv %s3747
        %v3749 = vmul.f32 %v3748, %v3726
        %v3750 = vmul.f32 %v3748, %v3727
        %3753 = vrot.lane.b32.xlu0 %v3749, 126
        %v3754 = vpop.permute.xlu0 %3753
        %3755 = vrot.lane.b32.xlu0 %v3750, 126
        %v3756 = vpop.permute.xlu0 %3755
        %v3759 = vadd.f32 %v3745, %v3754
        %v3760 = vadd.f32 %v3746, %v3756
        %s3761 = sld [smem:[#allocation11 + $0x7b]]
        %v3762 = vld [vmem:[%s1291 + $0x2] sm:$0xff]
        %v3763 = vld [vmem:[%s1291 + $0xa] sm:$0xff]
        %v3764 = vstv %s3761
        %v3765 = vmul.f32 %v3764, %v3762
        %v3766 = vmul.f32 %v3764, %v3763
        %v3767 = vadd.f32 %v3759, %v3765
        %v3768 = vadd.f32 %v3760, %v3766
        %s3769 = sld [smem:[#allocation11 + $0x7c]]
        %v3770 = vstv %s3769
        %v3771 = vmul.f32 %v3770, %v3762
        %v3772 = vmul.f32 %v3770, %v3763
        %3775 = vrot.lane.b32.xlu0 %v3771, 127
        %v3776 = vpop.permute.xlu0 %3775
        %3777 = vrot.lane.b32.xlu0 %v3772, 127
        %v3778 = vpop.permute.xlu0 %3777
        %v3781 = vadd.f32 %v3767, %v3776
        %v3782 = vadd.f32 %v3768, %v3778
        %s3783 = sld [smem:[#allocation11 + $0x7d]]
        %v3784 = vstv %s3783
        %v3785 = vmul.f32 %v3784, %v3762
        %v3786 = vmul.f32 %v3784, %v3763
        %3789 = vrot.lane.b32.xlu0 %v3785, 126
        %v3790 = vpop.permute.xlu0 %3789
        %3791 = vrot.lane.b32.xlu0 %v3786, 126
        %v3792 = vpop.permute.xlu0 %3791
        %v3795 = vadd.f32 %v3781, %v3790
        %v3796 = vadd.f32 %v3782, %v3792
        %s3797 = sld [smem:[#allocation11 + $0x7e]]
        %v3798 = vld [vmem:[%s1752] sm:$0xff]
        %v3799 = vld [vmem:[%s1752 + $0x8] sm:$0xff]
        %v3800 = vstv %s3797
        %v3801 = vmul.f32 %v3800, %v3798
        %v3802 = vmul.f32 %v3800, %v3799
        %v3803 = vadd.f32 %v3795, %v3801
        %v3804 = vadd.f32 %v3796, %v3802
        %s3805 = sld [smem:[#allocation11 + $0x7f]]
        %v3806 = vstv %s3805
        %v3807 = vmul.f32 %v3806, %v3798
        %v3808 = vmul.f32 %v3806, %v3799
        %3811 = vrot.lane.b32.xlu0 %v3807, 127
        %v3812 = vpop.permute.xlu0 %3811
        %3813 = vrot.lane.b32.xlu0 %v3808, 127
        %v3814 = vpop.permute.xlu0 %3813
        %v3817 = vadd.f32 %v3803, %v3812
        %v3818 = vadd.f32 %v3804, %v3814
        %s3819 = sld [smem:[#allocation11 + $0x80]]
        %v3820 = vstv %s3819
        %v3821 = vmul.f32 %v3820, %v3798
        %v3822 = vmul.f32 %v3820, %v3799
        %3825 = vrot.lane.b32.xlu0 %v3821, 126
        %v3826 = vpop.permute.xlu0 %3825
        %3827 = vrot.lane.b32.xlu0 %v3822, 126
        %v3828 = vpop.permute.xlu0 %3827
        %v3831 = vadd.f32 %v3817, %v3826
        %v3832 = vadd.f32 %v3818, %v3828
        %s3833 = sld [smem:[#allocation11 + $0x81]]
        %v3834 = vld [vmem:[%s1752 + $0x1] sm:$0xff]
        %v3835 = vld [vmem:[%s1752 + $0x9] sm:$0xff]
        %v3836 = vstv %s3833
        %v3837 = vmul.f32 %v3836, %v3834
        %v3838 = vmul.f32 %v3836, %v3835
        %v3839 = vadd.f32 %v3831, %v3837
        %v3840 = vadd.f32 %v3832, %v3838
        %s3841 = sld [smem:[#allocation11 + $0x82]]
        %v3842 = vstv %s3841
        %v3843 = vmul.f32 %v3842, %v3834
        %v3844 = vmul.f32 %v3842, %v3835
        %3847 = vrot.lane.b32.xlu0 %v3843, 127
        %v3848 = vpop.permute.xlu0 %3847
        %3849 = vrot.lane.b32.xlu0 %v3844, 127
        %v3850 = vpop.permute.xlu0 %3849
        %v3853 = vadd.f32 %v3839, %v3848
        %v3854 = vadd.f32 %v3840, %v3850
        %s3855 = sld [smem:[#allocation11 + $0x83]]
        %v3856 = vstv %s3855
        %v3857 = vmul.f32 %v3856, %v3834
        %v3858 = vmul.f32 %v3856, %v3835
        %3861 = vrot.lane.b32.xlu0 %v3857, 126
        %v3862 = vpop.permute.xlu0 %3861
        %3863 = vrot.lane.b32.xlu0 %v3858, 126
        %v3864 = vpop.permute.xlu0 %3863
        %v3867 = vadd.f32 %v3853, %v3862
        %v3868 = vadd.f32 %v3854, %v3864
        %s3869 = sld [smem:[#allocation11 + $0x84]]
        %v3870 = vld [vmem:[%s1752 + $0x2] sm:$0xff]
        %v3871 = vld [vmem:[%s1752 + $0xa] sm:$0xff]
        %v3872 = vstv %s3869
        %v3873 = vmul.f32 %v3872, %v3870
        %v3874 = vmul.f32 %v3872, %v3871
        %v3875 = vadd.f32 %v3867, %v3873
        %v3876 = vadd.f32 %v3868, %v3874
        %s3877 = sld [smem:[#allocation11 + $0x85]]
        %v3878 = vstv %s3877
        %v3879 = vmul.f32 %v3878, %v3870
        %v3880 = vmul.f32 %v3878, %v3871
        %3883 = vrot.lane.b32.xlu0 %v3879, 127
        %v3884 = vpop.permute.xlu0 %3883
        %3885 = vrot.lane.b32.xlu0 %v3880, 127
        %v3886 = vpop.permute.xlu0 %3885
        %v3889 = vadd.f32 %v3875, %v3884
        %v3890 = vadd.f32 %v3876, %v3886
        %s3891 = sld [smem:[#allocation11 + $0x86]]
        %v3892 = vstv %s3891
        %v3893 = vmul.f32 %v3892, %v3870
        %v3894 = vmul.f32 %v3892, %v3871
        %3897 = vrot.lane.b32.xlu0 %v3893, 126
        %v3898 = vpop.permute.xlu0 %3897
        %3899 = vrot.lane.b32.xlu0 %v3894, 126
        %v3900 = vpop.permute.xlu0 %3899
        %v3903 = vadd.f32 %v3889, %v3898
        %v3904 = vadd.f32 %v3890, %v3900
        %s3905 = sld [smem:[#allocation11 + $0x87]]
        %v3906 = vld [vmem:[%s2213] sm:$0xff]
        %v3907 = vld [vmem:[%s2213 + $0x8] sm:$0xff]
        %v3908 = vstv %s3905
        %v3909 = vmul.f32 %v3908, %v3906
        %v3910 = vmul.f32 %v3908, %v3907
        %v3911 = vadd.f32 %v3903, %v3909
        %v3912 = vadd.f32 %v3904, %v3910
        %s3913 = sld [smem:[#allocation11 + $0x88]]
        %v3914 = vstv %s3913
        %v3915 = vmul.f32 %v3914, %v3906
        %v3916 = vmul.f32 %v3914, %v3907
        %3919 = vrot.lane.b32.xlu0 %v3915, 127
        %v3920 = vpop.permute.xlu0 %3919
        %3921 = vrot.lane.b32.xlu0 %v3916, 127
        %v3922 = vpop.permute.xlu0 %3921
        %v3925 = vadd.f32 %v3911, %v3920
        %v3926 = vadd.f32 %v3912, %v3922
        %s3927 = sld [smem:[#allocation11 + $0x89]]
        %v3928 = vstv %s3927
        %v3929 = vmul.f32 %v3928, %v3906
        %v3930 = vmul.f32 %v3928, %v3907
        %3933 = vrot.lane.b32.xlu0 %v3929, 126
        %v3934 = vpop.permute.xlu0 %3933
        %3935 = vrot.lane.b32.xlu0 %v3930, 126
        %v3936 = vpop.permute.xlu0 %3935
        %v3939 = vadd.f32 %v3925, %v3934
        %v3940 = vadd.f32 %v3926, %v3936
        %s3941 = sld [smem:[#allocation11 + $0x8a]]
        %v3942 = vld [vmem:[%s2213 + $0x1] sm:$0xff]
        %v3943 = vld [vmem:[%s2213 + $0x9] sm:$0xff]
        %v3944 = vstv %s3941
        %v3945 = vmul.f32 %v3944, %v3942
        %v3946 = vmul.f32 %v3944, %v3943
        %v3947 = vadd.f32 %v3939, %v3945
        %v3948 = vadd.f32 %v3940, %v3946
        %s3949 = sld [smem:[#allocation11 + $0x8b]]
        %v3950 = vstv %s3949
        %v3951 = vmul.f32 %v3950, %v3942
        %v3952 = vmul.f32 %v3950, %v3943
        %3955 = vrot.lane.b32.xlu0 %v3951, 127
        %v3956 = vpop.permute.xlu0 %3955
        %3957 = vrot.lane.b32.xlu0 %v3952, 127
        %v3958 = vpop.permute.xlu0 %3957
        %v3961 = vadd.f32 %v3947, %v3956
        %v3962 = vadd.f32 %v3948, %v3958
        %s3963 = sld [smem:[#allocation11 + $0x8c]]
        %v3964 = vstv %s3963
        %v3965 = vmul.f32 %v3964, %v3942
        %v3966 = vmul.f32 %v3964, %v3943
        %3969 = vrot.lane.b32.xlu0 %v3965, 126
        %v3970 = vpop.permute.xlu0 %3969
        %3971 = vrot.lane.b32.xlu0 %v3966, 126
        %v3972 = vpop.permute.xlu0 %3971
        %v3975 = vadd.f32 %v3961, %v3970
        %v3976 = vadd.f32 %v3962, %v3972
        %s3977 = sld [smem:[#allocation11 + $0x8d]]
        %v3978 = vld [vmem:[%s2213 + $0x2] sm:$0xff]
        %v3979 = vld [vmem:[%s2213 + $0xa] sm:$0xff]
        %v3980 = vstv %s3977
        %v3981 = vmul.f32 %v3980, %v3978
        %v3982 = vmul.f32 %v3980, %v3979
        %v3983 = vadd.f32 %v3975, %v3981
        %v3984 = vadd.f32 %v3976, %v3982
        %s3985 = sld [smem:[#allocation11 + $0x8e]]
        %v3986 = vstv %s3985
        %v3987 = vmul.f32 %v3986, %v3978
        %v3988 = vmul.f32 %v3986, %v3979
        %3991 = vrot.lane.b32.xlu0 %v3987, 127
        %v3992 = vpop.permute.xlu0 %3991
        %3993 = vrot.lane.b32.xlu0 %v3988, 127
        %v3994 = vpop.permute.xlu0 %3993
        %v3997 = vadd.f32 %v3983, %v3992
        %v3998 = vadd.f32 %v3984, %v3994
        %s3999 = sld [smem:[#allocation11 + $0x8f]]
        %v4000 = vstv %s3999
        %v4001 = vmul.f32 %v4000, %v3978
        %v4002 = vmul.f32 %v4000, %v3979
        %4005 = vrot.lane.b32.xlu0 %v4001, 126
        %v4006 = vpop.permute.xlu0 %4005
        %4007 = vrot.lane.b32.xlu0 %v4002, 126
        %v4008 = vpop.permute.xlu0 %4007
        %v4011 = vadd.f32 %v3997, %v4006
        %v4012 = vadd.f32 %v3998, %v4008
        %s4013 = sld [smem:[#allocation12 + $0x3]]
        %v4014 = vstv %s4013
        %v4015 = vadd.f32 %v4011, %v4014
        %v4016 = vadd.f32 %v4012, %v4014
        %v4017 = vadd.f32 %v4015, %v327
        %v4018 = vadd.f32 %v4016, %v328
        %v4019 = vsub.f32 0.0, %v4017
        %v4020 = vsub.f32 0.0, %v4018
        %v4021 = vmul.f32 %v4019, 1.442695
        %v4022 = vpow.pop %v4021
        %v4023 = vmul.f32 %v4020, 1.442695
        %v4024 = vpow.pop %v4023
        %v4025 = vadd.f32 %v4022, 1.0
        %v4026 = vadd.f32 %v4024, 1.0
        %v4027 = vrcp.pop %v4025
        %v4028 = vmul.f32 1.0, %v4027
        %v4029 = vrcp.pop %v4026
        %v4030 = vmul.f32 1.0, %v4029
        %v4031 = vmul.f32 %v4017, %v4028
        %v4032 = vmul.f32 %v4018, %v4030
        %s4033 = scalar_lea.vmem %s294, 48 [#allocation14]
        %4034 = vst.msk [vmem:[%s4033] sm:$0xff] %vm2668, %v4031
        %4035 = vst.msk [vmem:[%s4033 + $0x8] sm:$0xff] %vm2668, %v4032
        %s4036 = sand.u32 %s143, 1
        %s4037 = scalar_lea.sflag [#allocation6], %s4036
        %s4038 = sand.u32 %s143, 1
        %s4039 = smul.addr %s4038, 64
        %s4040 = scalar_lea.vmem [#allocation14], %s4039
        // Predicated region
        $region61: #{tpu_custom_call.1} parent=39 // pred_check
          %p4041 = pneg %p153
        $region62: #{tpu_custom_call.1} parent=39 // pred_check_branch
          %4043 = sbr.rel (%p4041) target = $region64
        $region63: #{tpu_custom_call.1} parent=39 // pred_region
          %s4045 = ssub.s32 1024, 1024
          %4046 = vsyncadd %s4037, %s4045
          %s4047 = smul.addr %s25, 8
          %s4048 = smul.addr %s4047, 128
          %s4049 = scalar_lea.hbm %s5, %s4048
          %s4050 = sshll.u32 %s4040, 4
          %s4051 = int_to_ptr.vmem [resolvable:$true] %s4050
          %4056 = dma.vmem_to_hbm [thread:$0]  %s4051, 1024, %s4049, %s4037, 128, 128, 8
        $region64: #{tpu_custom_call.1} parent=39 // pred_fallthru
          _
      $region40: #{tpu_custom_call.1} parent=5 // pred_fallthru
        _
      %p4057 = scmp.le.s32.totalorder 2, %s20
      // Predicated region
      $region65: #{tpu_custom_call.1} parent=5 // pred_check
        %p4058 = pneg %p4057
      $region66: #{tpu_custom_call.1} parent=5 // pred_check_branch
        %4060 = sbr.rel (%p4058) target = $region68
      $region67: #{tpu_custom_call.1} parent=5 // pred_region
        %s4061 = ssub.s32 %s20, 2
        // Predicated region
        $region69: #{tpu_custom_call.1} parent=67 // pred_check
          %p4062 = pneg %p159
        $region70: #{tpu_custom_call.1} parent=67 // pred_check_branch
          %4064 = sbr.rel (%p4062) target = $region72
        $region71: #{tpu_custom_call.1} parent=67 // pred_region
          %s4065 = sand.u32 %s144, 1
          %s4066 = scalar_lea.sflag [#allocation6], %s4065
          %s4067 = sand.u32 %s144, 1
          %s4068 = smul.addr %s4067, 64
          %s4069 = scalar_lea.vmem [#allocation14], %s4068
          %4070 = dma.done %s4066, 1024
        $region72: #{tpu_custom_call.1} parent=67 // pred_fallthru
          _
      $region68: #{tpu_custom_call.1} parent=5 // pred_fallthru
        _
    $region6: #{tpu_custom_call.1} parent=1 // loop_footer
      %s24 = sadd.s32 1, %s20
    $region7: #{tpu_custom_call.1} parent=1 // loop_footer_branch
      %19 = sbr.rel target = $region3
    $region8: #{tpu_custom_call.1} parent=1 // loop_exit
      _
    %4071 = vsyncpa [#allocation5], 1
    %s4072 = scalar_lea.sflag [#allocation5], 1
    %4073 = vsyncpa %s4072, 1
    %4074 = vsyncpa [#allocation6], 1
    %s4075 = scalar_lea.sflag [#allocation6], 1
    %4076 = vsyncpa %s4075, 1
    %4077 = vsyncpa [#allocation7], 1
    %s4078 = scalar_lea.sflag [#allocation7], 1
    %4079 = vsyncpa %s4078, 1
    %4080 = vsyncpa [#allocation10], 1
    %4081 = vsyncpa [#allocation13], 1

</llo_original>
